<compile_context>
chip_gen: v7x
topology: tpu7x:2x2x1
jax: 0.10.0
libtpu: 0.0.40
codegen_flags: <defaults>
</compile_context>

<pallas_src>
import math
from functools import partial

import jax
import jax.numpy as jnp
from jax.experimental import pallas as pl
from jax.experimental.pallas import tpu as pltpu


def _round_up(x: int, m: int) -> int:
    return (x + m - 1) // m * m


def _encode_kernel(p_ref, pf_ref, o_ref, *, ndim: int, bands: int):
    """Compute one (tile_n, C) block of the Fourier position encoding.

    p_ref : (tile_n, ndim)  positions in [-1, 1]
    pf_ref: (ndim, bands)   pi * frequency bands per spatial dim (kernel INPUT, not a
                            captured constant)
    o_ref : (tile_n, C)     C = ndim * (2*bands + 1); channel layout [pos | sin | cos]
    """
    # raw positions -> first `ndim` channels
    o_ref[:, 0:ndim] = p_ref[...]
    for i in range(ndim):
        pf = pf_ref[i:i + 1, :]                     # (1, bands)
        fg = p_ref[:, i:i + 1] * pf                 # (tile_n, bands) = p_i * (pi * f_i)
        s0 = ndim + i * bands
        c0 = ndim + ndim * bands + i * bands
        o_ref[:, s0:s0 + bands] = jnp.sin(fg)
        o_ref[:, c0:c0 + bands] = jnp.cos(fg)


def _repeat_kernel(enc_ref, o_ref):
    """forward(b): pure batch-repeat store of the cached encoding block.

    enc_ref: (tile_n, C) cached encoding slab block
    o_ref  : (tile_n, C) one (batch, N-tile) output block (batch dim squeezed via None)
    """
    o_ref[...] = enc_ref[...]


class FourierPositionEncoding:
    """JAX/Pallas port of perceiver FourierPositionEncoding."""

    def __init__(self, spatial_shape, num_frequency_bands: int, *,
                 tile_n: int = 4096, out_dtype=jnp.float32):
        self.spatial_shape = tuple(int(s) for s in spatial_shape)
        self.num_frequency_bands = int(num_frequency_bands)
        self.ndim = len(self.spatial_shape)
        self.out_dtype = out_dtype

        # --- init-time glue: coordinate grid (torch.meshgrid 'ij' + stack + flatten) ---
        coords = [jnp.linspace(-1.0, 1.0, s, dtype=jnp.float32)
                  for s in self.spatial_shape]
        grid = jnp.stack(jnp.meshgrid(*coords, indexing="ij"), axis=-1)   # (*shape, ndim)
        self.positions = grid.reshape(-1, self.ndim)                      # (N, ndim)

        # --- init-time glue: frequency bands (as in the PyTorch module) ---
        freqs = [jnp.linspace(1.0, s / 2.0, self.num_frequency_bands, dtype=jnp.float32)
                 for s in self.spatial_shape]
        self.frequencies = jnp.stack(freqs, axis=0)                       # (ndim, bands)
        self.pi_frequencies = (math.pi * self.frequencies).astype(jnp.float32)

        N = int(self.positions.shape[0])
        self.seq_len = N
        self.tile_n = self._pick_tile(N, int(tile_n))

        # --- memoized buffer: compute ONCE with the Pallas encode kernel ---
        self.position_encoding = self._compute_encoding()                 # (N, C) float32
        self._enc_out = (self.position_encoding if out_dtype == jnp.float32
                         else self.position_encoding.astype(out_dtype))

    # ---------------------------------------------------------------- helpers

    @staticmethod
    def _pick_tile(N: int, requested: int) -> int:
        t = min(max(int(requested), 8), N)
        if t < N:
            t = max(8, (t // 8) * 8)          # sublane-aligned tile
        # Ensure >= 2 entries on the "parallel" tile axis so both v7x TensorCores get
        # work (no-op on single-TC v5e/v6e); skip for tiny N.
        if t >= N and N >= 256:
            t = _round_up((N + 1) // 2, 8)
        return t

    def num_position_encoding_channels(self, include_positions: bool = True) -> int:
        return self.ndim * (2 * self.num_frequency_bands + int(include_positions))

    # ------------------------------------------------------- init-time kernel

    def _compute_encoding(self):
        N, D = self.positions.shape
        bands = self.num_frequency_bands
        C = self.num_position_encoding_channels()
        t = self.tile_n
        n_tiles = pl.cdiv(N, t)

        blk = _round_up(t, 8) * _round_up(C, 128) * 4
        vmem_limit = int(min(max(6 * blk, 4 << 20), 32 << 20))

        kernel = partial(_encode_kernel, ndim=D, bands=bands)
        return pl.pallas_call(
            kernel,
            out_shape=jax.ShapeDtypeStruct((N, C), jnp.float32),
            grid=(n_tiles,),
            in_specs=[
                pl.BlockSpec((t, D), lambda i: (i, 0)),
                pl.BlockSpec((D, bands), lambda i: (0, 0)),   # tiny, fetched once
            ],
            out_specs=pl.BlockSpec((t, C), lambda i: (i, 0)),
            compiler_params=pltpu.CompilerParams(
                dimension_semantics=("parallel",),
                vmem_limit_bytes=vmem_limit,
            ),
        )(self.positions, self.pi_frequencies)

    # ----------------------------------------------------------- forward pass

    def __call__(self, b: int):
        b = int(b)
        N = self.seq_len
        C = self.num_position_encoding_channels()
        t = self.tile_n
        n_tiles = pl.cdiv(N, t)

        itemsize = jnp.dtype(self.out_dtype).itemsize
        blk = _round_up(t, 8) * _round_up(C, 128) * max(itemsize, 4)
        vmem_limit = int(min(max(4 * blk, 4 << 20), 32 << 20))

        # grid = (n_tiles, b): batch innermost -> the input block index is constant
        # across batch steps, so the slab is DMA'd once per tile; every grid step is a
        # pure lane-dense (t, C) store, i.e. the kernel sits on the HBM-write roofline.
        return pl.pallas_call(
            _repeat_kernel,
            out_shape=jax.ShapeDtypeStruct((b, N, C), self.out_dtype),
            grid=(n_tiles, b),
            in_specs=[pl.BlockSpec((t, C), lambda i, j: (i, 0))],
            out_specs=pl.BlockSpec((None, t, C), lambda i, j: (j, i, 0)),
            compiler_params=pltpu.CompilerParams(
                dimension_semantics=("parallel", "arbitrary"),
                vmem_limit_bytes=vmem_limit,
            ),
        )(self._enc_out)


# --------------------------------------------------------------------- testing

def _reference(pe: FourierPositionEncoding, b: int):
    """Pure-JAX reference mirroring the PyTorch module (same constants as the kernel)."""
    p = pe.positions                      # (N, D)
    pf = pe.pi_frequencies                # (D, bands) = pi * frequencies
    sins, coss = [], []
    for i in range(pe.ndim):
        fg = p[:, i:i + 1] * pf[i][None, :]
        sins.append(jnp.sin(fg))
        coss.append(jnp.cos(fg))
    enc = jnp.concatenate([p] + sins + coss, axis=-1)
    return jnp.broadcast_to(enc[None], (b,) + enc.shape).astype(pe.out_dtype)


if __name__ == "__main__":
    # Small deterministic config: 16x16 grid, 4 frequency bands, batch 2.
    spatial_shape = (16, 16)
    num_frequency_bands = 4
    batch = 2

    # Module has no learnable parameters / tensor inputs (buffer is analytic); key kept
    # for the deterministic-setup convention.
    _ = jax.random.PRNGKey(0)

    # tile_n=128 exercises the multi-tile (2-tile) grid path at this small size.
    pe = FourierPositionEncoding(spatial_shape, num_frequency_bands, tile_n=128)
    out = jax.block_until_ready(pe(batch))

    ref = _reference(pe, batch)
    N = math.prod(spatial_shape)
    C = pe.num_position_encoding_channels()
    assert out.shape == (batch, N, C), out.shape
    max_err = float(jnp.abs(out.astype(jnp.float32) - ref.astype(jnp.float32)).max())
    assert jnp.allclose(out, ref, atol=1e-4, rtol=1e-4), max_err

    # memoized buffer matches the reference buffer too
    assert jnp.allclose(pe.position_encoding, ref[0], atol=1e-4, rtol=1e-4)

    print("KERNEL_OK")
</pallas_src>

<mosaic_0001>
module attributes {stable_mosaic.version = 11 : i64} {
  func.func @_encode_kernel(%arg0: i32, %arg1: memref<128x2xf32, #tpu.memory_space<vmem>>, %arg2: memref<2x4xf32, #tpu.memory_space<vmem>>, %arg3: memref<128x18xf32, #tpu.memory_space<vmem>>) attributes {dimension_semantics = [#tpu.dimension_semantics<parallel>], iteration_bounds = array<i64: 2>, scalar_prefetch = 0 : i64, scratch_operands = 0 : i64, tpu.core_type = #tpu.core_type<tc>, window_params = [{transform_indices = @transform_0, window_bounds = array<i64: 128, 2>}, {pipeline_mode = #tpu.pipeline_mode<synchronous>, transform_indices = @transform_1, window_bounds = array<i64: 2, 4>}, {transform_indices = @transform_2, window_bounds = array<i64: 128, 18>}]} {
    %c0 = arith.constant 0 : index
    %c0_0 = arith.constant 0 : index
    %0 = vector.load %arg1[%c0, %c0_0] : memref<128x2xf32, #tpu.memory_space<vmem>>, vector<128x2xf32>
    %c0_1 = arith.constant 0 : index
    %c0_2 = arith.constant 0 : index
    %1 = vector.load %arg3[%c0_1, %c0_2] : memref<128x18xf32, #tpu.memory_space<vmem>>, vector<128x2xf32>
    tpu.vector_store %arg3[%c0_1, %c0_2], %0 {strides = array<i32>} : memref<128x18xf32, #tpu.memory_space<vmem>>, vector<128x2xf32>,
    %c0_3 = arith.constant 0 : index
    %c0_4 = arith.constant 0 : index
    %2 = vector.load %arg2[%c0_3, %c0_4] : memref<2x4xf32, #tpu.memory_space<vmem>>, vector<1x4xf32>
    %c0_5 = arith.constant 0 : index
    %c0_6 = arith.constant 0 : index
    %3 = vector.load %arg1[%c0_5, %c0_6] : memref<128x2xf32, #tpu.memory_space<vmem>>, vector<128x1xf32>
    %4 = vector.broadcast %3 : vector<128x1xf32> to vector<128x4xf32>
    %5 = vector.broadcast %2 : vector<1x4xf32> to vector<128x4xf32>
    %6 = arith.mulf %4, %5 : vector<128x4xf32>
    %7 = math.sin %6 : vector<128x4xf32>
    %c0_7 = arith.constant 0 : index
    %c2 = arith.constant 2 : index
    %8 = vector.load %arg3[%c0_7, %c2] : memref<128x18xf32, #tpu.memory_space<vmem>>, vector<128x4xf32>
    tpu.vector_store %arg3[%c0_7, %c2], %7 {strides = array<i32>} : memref<128x18xf32, #tpu.memory_space<vmem>>, vector<128x4xf32>,
    %9 = math.cos %6 : vector<128x4xf32>
    %c0_8 = arith.constant 0 : index
    %c10 = arith.constant 10 : index
    %10 = vector.load %arg3[%c0_8, %c10] : memref<128x18xf32, #tpu.memory_space<vmem>>, vector<128x4xf32>
    tpu.vector_store %arg3[%c0_8, %c10], %9 {strides = array<i32>} : memref<128x18xf32, #tpu.memory_space<vmem>>, vector<128x4xf32>,
    %c1 = arith.constant 1 : index
    %c0_9 = arith.constant 0 : index
    %11 = vector.load %arg2[%c1, %c0_9] : memref<2x4xf32, #tpu.memory_space<vmem>>, vector<1x4xf32>
    %c0_10 = arith.constant 0 : index
    %c1_11 = arith.constant 1 : index
    %12 = vector.load %arg1[%c0_10, %c1_11] : memref<128x2xf32, #tpu.memory_space<vmem>>, vector<128x1xf32>
    %13 = vector.broadcast %12 : vector<128x1xf32> to vector<128x4xf32>
    %14 = vector.broadcast %11 : vector<1x4xf32> to vector<128x4xf32>
    %15 = arith.mulf %13, %14 : vector<128x4xf32>
    %16 = math.sin %15 : vector<128x4xf32>
    %c0_12 = arith.constant 0 : index
    %c6 = arith.constant 6 : index
    %17 = vector.load %arg3[%c0_12, %c6] : memref<128x18xf32, #tpu.memory_space<vmem>>, vector<128x4xf32>
    tpu.vector_store %arg3[%c0_12, %c6], %16 {strides = array<i32>} : memref<128x18xf32, #tpu.memory_space<vmem>>, vector<128x4xf32>,
    %18 = math.cos %15 : vector<128x4xf32>
    %c0_13 = arith.constant 0 : index
    %c14 = arith.constant 14 : index
    %19 = vector.load %arg3[%c0_13, %c14] : memref<128x18xf32, #tpu.memory_space<vmem>>, vector<128x4xf32>
    tpu.vector_store %arg3[%c0_13, %c14], %18 {strides = array<i32>} : memref<128x18xf32, #tpu.memory_space<vmem>>, vector<128x4xf32>,
    return
  }
  func.func @transform_0(%arg0: i32) -> (i32, i32) {
    %c0_i32 = arith.constant 0 : i32
    %c0_i32_0 = arith.constant 0 : i32
    return %arg0, %c0_i32 : i32, i32
  }
  func.func @transform_1(%arg0: i32) -> (i32, i32) {
    %c0_i32 = arith.constant 0 : i32
    %c0_i32_0 = arith.constant 0 : i32
    %c0_i32_1 = arith.constant 0 : i32
    return %c0_i32, %c0_i32_0 : i32, i32
  }
  func.func @transform_2(%arg0: i32) -> (i32, i32) {
    %c0_i32 = arith.constant 0 : i32
    %c0_i32_0 = arith.constant 0 : i32
    return %arg0, %c0_i32 : i32, i32
  }
}

</mosaic_0001>

<llo_original>
// kernel: tpu_custom_call.1
$region0: #{tpu_custom_call.1}
  #allocation0 [shape = 'u32[]', space=smem, size = 0x4, offset = 0x4, fixed_abs, tag = 'smem constant byte address 0x4 - core index']
  #allocation1 [shape = 'u32[144,128]{1,0:T(1,128)}', space=vmem, size = 0x12000, scoped, tag = 'internal scratch']
  %s0 = inlined_call_operand.vmem [shape: f32[256,2], index: 0, kind: input, shape index: {}]
  %s1 = inlined_call_operand.vmem [shape: f32[2,4], index: 1, kind: input, shape index: {}]
  %s2 = inlined_call_operand.vmem [shape: f32[256,18], index: 2, kind: output, shape index: {}]
  %s3 = sld [smem:[#allocation0]]
  $region41: #{tpu_custom_call.1} parent=0
    _
  %s5 = ssub.s32 1, %s3
  %s6 = scalar_select 0, %s5, %s3
  loop: start=0, step=1, limit=4
  $region2: #{tpu_custom_call.1} parent=0 // loop_pre_header
    _
  $region3: #{tpu_custom_call.1} parent=0 // loop_header
    %s8 = sphi 0, %s12
    %p9 = scmp.ge.s32.totalorder %s8, 4
    %s18 = sphi 0, %s20
    %s21 = sphi 0, %s18
    %s22 = sphi 0, %s21
    %s38 = sphi 0, %s22
    %s42 = sphi 0, %s42
    %s44 = sphi 0, %s42
    %s45 = sphi 0, %s44
    %s59 = sphi 0, %s45
    %s65 = sphi 0, %s67
    %s68 = sphi 0, %s65
    %s69 = sphi 0, %s68
    %s85 = sphi 0, %s69
  $region4: #{tpu_custom_call.1} parent=0 // loop_header_branch
    %11 = sbr.rel (%p9) target = $region8
  $region5: #{tpu_custom_call.1} parent=0 // loop_body
    %s13 = ssub.s32 %s8, 1
    %s14 = ssub.s32 %s8, 2
    %s15 = sadd.s32 %s8, 1
    %s16 = ssub.s32 %s8, %s15
    %p17 = scmp.eq.s32.totalorder %s16, 0
    %s19 = sadd.s32 %s18, 1
    %s20 = scalar_select %p17, %s18, %s19
    %p23 = pneg %p17
    %p24 = scmp.eq.s32.totalorder %s8, 1
    %p25 = por %p23, %p24
    %p26 = scmp.ne.s32.totalorder %s18, %s21
    %p27 = scmp.eq.s32.totalorder %s8, 0
    %p28 = por %p26, %p27
    %p29 = scmp.ne.s32.totalorder %s18, %s21
    %p30 = scmp.eq.s32.totalorder %s13, 1
    %p31 = por %p29, %p30
    %p32 = scmp.ne.s32.totalorder %s21, %s22
    %p33 = scmp.eq.s32.totalorder %s13, 0
    %p34 = por %p32, %p33
    %p35 = scmp.ne.s32.totalorder %s21, %s22
    %p36 = scmp.eq.s32.totalorder %s14, 1
    %p37 = por %p35, %p36
    %p39 = scmp.ne.s32.totalorder %s22, %s38
    %p40 = scmp.eq.s32.totalorder %s14, 0
    %p41 = por %p39, %p40
    %s43 = sadd.s32 %s42, 1
    %p46 = scmp.eq.s32.totalorder %s8, 1
    %p47 = scmp.ne.s32.totalorder %s42, %s44
    %p48 = scmp.eq.s32.totalorder %s8, 0
    %p49 = por %p47, %p48
    %p50 = scmp.ne.s32.totalorder %s42, %s44
    %p51 = scmp.eq.s32.totalorder %s13, 1
    %p52 = por %p50, %p51
    %p53 = scmp.ne.s32.totalorder %s44, %s45
    %p54 = scmp.eq.s32.totalorder %s13, 0
    %p55 = por %p53, %p54
    %p56 = scmp.ne.s32.totalorder %s44, %s45
    %p57 = scmp.eq.s32.totalorder %s14, 1
    %p58 = por %p56, %p57
    %p60 = scmp.ne.s32.totalorder %s45, %s59
    %p61 = scmp.eq.s32.totalorder %s14, 0
    %p62 = por %p60, %p61
    %s63 = ssub.s32 %s8, %s15
    %p64 = scmp.eq.s32.totalorder %s63, 0
    %s66 = sadd.s32 %s65, 1
    %s67 = scalar_select %p64, %s65, %s66
    %p70 = pneg %p64
    %p71 = scmp.eq.s32.totalorder %s8, 1
    %p72 = por %p70, %p71
    %p73 = scmp.ne.s32.totalorder %s65, %s68
    %p74 = scmp.eq.s32.totalorder %s8, 0
    %p75 = por %p73, %p74
    %p76 = scmp.ne.s32.totalorder %s65, %s68
    %p77 = scmp.eq.s32.totalorder %s13, 1
    %p78 = por %p76, %p77
    %p79 = scmp.ne.s32.totalorder %s68, %s69
    %p80 = scmp.eq.s32.totalorder %s13, 0
    %p81 = por %p79, %p80
    %p82 = scmp.ne.s32.totalorder %s68, %s69
    %p83 = scmp.eq.s32.totalorder %s14, 1
    %p84 = por %p82, %p83
    %p86 = scmp.ne.s32.totalorder %s69, %s85
    %p87 = scmp.eq.s32.totalorder %s14, 0
    %p88 = por %p86, %p87
    %p89 = scmp.le.s32.totalorder 1, %s8
    %p90 = scmp.lt.s32.totalorder %s8, 3
    %p91 = pnand %p89, %p90
    %p92 = pneg %p91
    // Predicated region
    $region9: #{tpu_custom_call.1} parent=5 // pred_check
      _
    $region10: #{tpu_custom_call.1} parent=5 // pred_check_branch
      %94 = sbr.rel (%p91) target = $region12
    $region11: #{tpu_custom_call.1} parent=5 // pred_region
      %s95 = ssub.s32 %s8, 1
      // Predicated region
      $region13: #{tpu_custom_call.1} parent=11 // pred_check
        %p96 = pneg %p55
      $region14: #{tpu_custom_call.1} parent=11 // pred_check_branch
        %98 = sbr.rel (%p96) target = $region16
      $region15: #{tpu_custom_call.1} parent=11 // pred_region
        _
      $region16: #{tpu_custom_call.1} parent=11 // pred_fallthru
        _
    $region12: #{tpu_custom_call.1} parent=5 // pred_fallthru
      _
    %p99 = scmp.lt.s32.totalorder %s8, 2
    // Predicated region
    $region17: #{tpu_custom_call.1} parent=5 // pred_check
      %p100 = pneg %p99
    $region18: #{tpu_custom_call.1} parent=5 // pred_check_branch
      %102 = sbr.rel (%p100) target = $region20
    $region19: #{tpu_custom_call.1} parent=5 // pred_region
      // Predicated region
      $region21: #{tpu_custom_call.1} parent=19 // pred_check
        %p103 = pneg %p28
      $region22: #{tpu_custom_call.1} parent=19 // pred_check_branch
        %105 = sbr.rel (%p103) target = $region24
      $region23: #{tpu_custom_call.1} parent=19 // pred_region
        %s106 = smul.u32 16, %s8
        %p107 = scmp.lt.s32.totalorder %s106, 31
        %s108 = scalar_select %p107, %s106, 31
        %s109 = smul.addr %s108, 8
        %s110 = scalar_lea.vmem %s0, %s109
        %s111 = smul.u32 16, %s8
      $region24: #{tpu_custom_call.1} parent=19 // pred_fallthru
        _
    $region20: #{tpu_custom_call.1} parent=5 // pred_fallthru
      _
    %p112 = scmp.le.s32.totalorder 1, %s8
    %p113 = scmp.lt.s32.totalorder %s8, 3
    %p114 = pnand %p112, %p113
    %p115 = pneg %p114
    // Predicated region
    $region25: #{tpu_custom_call.1} parent=5 // pred_check
      _
    $region26: #{tpu_custom_call.1} parent=5 // pred_check_branch
      %117 = sbr.rel (%p114) target = $region28
    $region27: #{tpu_custom_call.1} parent=5 // pred_region
      %s118 = ssub.s32 %s8, 1
      %s119 = smul.u32 16, %s13
      %p120 = scmp.lt.s32.totalorder %s119, 31
      %s121 = scalar_select %p120, %s119, 31
      %s122 = smul.addr %s121, 8
      %s123 = scalar_lea.vmem %s0, %s122
      %p124 = pneg %p34
      %p125 = pneg %p31
      %p126 = pneg %p55
      %p127 = pneg %p52
      %p128 = pneg %p81
      %p129 = pneg %p78
      %s130 = smul.u32 16, %s13
      %p131 = scmp.lt.s32.totalorder %s130, 31
      %s132 = scalar_select %p131, %s130, 31
      %s133 = smul.addr %s132, 8
      %s134 = scalar_lea.vmem %s2, %s133
      %s135 = smul.u32 16, %s13
      %p136 = scmp.lt.s32.totalorder %s135, 31
      %s137 = scalar_select %p136, %s135, 31
      %s138 = smul.addr %s137, 8
      %s139 = scalar_lea.vmem %s0, %s138
      %s140 = smul.u32 16, %s13
      %s141 = smul.u32 16, %s13
      %p142 = scmp.lt.s32.totalorder %s141, 31
      %s143 = scalar_select %p142, %s141, 31
      %s144 = smul.addr %s143, 8
      %s145 = scalar_lea.vmem %s2, %s144
      %s146 = smul.u32 16, %s13
      %v147 = vld [vmem:[%s139] sm:$0xff]
      %v148 = vld [vmem:[%s139 + $0x8] sm:$0xff]
      %v149 = vld [vmem:[%s139 + $0x10] sm:$0xff]
      %v150 = vld [vmem:[%s139 + $0x18] sm:$0xff]
      %v151 = vld [vmem:[%s139 + $0x20] sm:$0xff]
      %v152 = vld [vmem:[%s139 + $0x28] sm:$0xff]
      %v153 = vld [vmem:[%s139 + $0x30] sm:$0xff]
      %v154 = vld [vmem:[%s139 + $0x38] sm:$0xff]
      %v155 = vld [vmem:[%s139 + $0x40] sm:$0xff]
      %v156 = vld [vmem:[%s139 + $0x48] sm:$0xff]
      %v157 = vld [vmem:[%s139 + $0x50] sm:$0xff]
      %v158 = vld [vmem:[%s139 + $0x58] sm:$0xff]
      %v159 = vld [vmem:[%s139 + $0x60] sm:$0xff]
      %v160 = vld [vmem:[%s139 + $0x68] sm:$0xff]
      %v161 = vld [vmem:[%s139 + $0x70] sm:$0xff]
      %v162 = vld [vmem:[%s139 + $0x78] sm:$0xff]
      %vm163 = vcmask 15360
      %164 = vst.msk [vmem:[%s145] sm:$0xff] %vm163, %v147
      %165 = vst.msk [vmem:[%s145 + $0x8] sm:$0xff] %vm163, %v148
      %166 = vst.msk [vmem:[%s145 + $0x10] sm:$0xff] %vm163, %v149
      %167 = vst.msk [vmem:[%s145 + $0x18] sm:$0xff] %vm163, %v150
      %168 = vst.msk [vmem:[%s145 + $0x20] sm:$0xff] %vm163, %v151
      %169 = vst.msk [vmem:[%s145 + $0x28] sm:$0xff] %vm163, %v152
      %170 = vst.msk [vmem:[%s145 + $0x30] sm:$0xff] %vm163, %v153
      %171 = vst.msk [vmem:[%s145 + $0x38] sm:$0xff] %vm163, %v154
      %172 = vst.msk [vmem:[%s145 + $0x40] sm:$0xff] %vm163, %v155
      %173 = vst.msk [vmem:[%s145 + $0x48] sm:$0xff] %vm163, %v156
      %174 = vst.msk [vmem:[%s145 + $0x50] sm:$0xff] %vm163, %v157
      %175 = vst.msk [vmem:[%s145 + $0x58] sm:$0xff] %vm163, %v158
      %176 = vst.msk [vmem:[%s145 + $0x60] sm:$0xff] %vm163, %v159
      %177 = vst.msk [vmem:[%s145 + $0x68] sm:$0xff] %vm163, %v160
      %178 = vst.msk [vmem:[%s145 + $0x70] sm:$0xff] %vm163, %v161
      %179 = vst.msk [vmem:[%s145 + $0x78] sm:$0xff] %vm163, %v162
      %v180 = vld [vmem:[%s1] sm:$0x1]
      %v181 = vld [vmem:[%s139] sm:$0xff]
      %v182 = vld [vmem:[%s139 + $0x8] sm:$0xff]
      %v183 = vld [vmem:[%s139 + $0x10] sm:$0xff]
      %v184 = vld [vmem:[%s139 + $0x18] sm:$0xff]
      %v185 = vld [vmem:[%s139 + $0x20] sm:$0xff]
      %v186 = vld [vmem:[%s139 + $0x28] sm:$0xff]
      %v187 = vld [vmem:[%s139 + $0x30] sm:$0xff]
      %v188 = vld [vmem:[%s139 + $0x38] sm:$0xff]
      %v189 = vld [vmem:[%s139 + $0x40] sm:$0xff]
      %v190 = vld [vmem:[%s139 + $0x48] sm:$0xff]
      %v191 = vld [vmem:[%s139 + $0x50] sm:$0xff]
      %v192 = vld [vmem:[%s139 + $0x58] sm:$0xff]
      %v193 = vld [vmem:[%s139 + $0x60] sm:$0xff]
      %v194 = vld [vmem:[%s139 + $0x68] sm:$0xff]
      %v195 = vld [vmem:[%s139 + $0x70] sm:$0xff]
      %v196 = vld [vmem:[%s139 + $0x78] sm:$0xff]
      %198 = vset.pattern.permute.xlu0 0
      %199 = vperm.xlu0 %198, %v181
      %v200 = vpop.permute.xlu0 %199
      %203 = vset.pattern.permute.xlu0 0
      %204 = vperm.xlu0 %203, %v182
      %v205 = vpop.permute.xlu0 %204
      %208 = vset.pattern.permute.xlu0 0
      %209 = vperm.xlu0 %208, %v183
      %v210 = vpop.permute.xlu0 %209
      %213 = vset.pattern.permute.xlu0 0
      %214 = vperm.xlu0 %213, %v184
      %v215 = vpop.permute.xlu0 %214
      %218 = vset.pattern.permute.xlu0 0
      %219 = vperm.xlu0 %218, %v185
      %v220 = vpop.permute.xlu0 %219
      %223 = vset.pattern.permute.xlu0 0
      %224 = vperm.xlu0 %223, %v186
      %v225 = vpop.permute.xlu0 %224
      %228 = vset.pattern.permute.xlu0 0
      %229 = vperm.xlu0 %228, %v187
      %v230 = vpop.permute.xlu0 %229
      %233 = vset.pattern.permute.xlu0 0
      %234 = vperm.xlu0 %233, %v188
      %v235 = vpop.permute.xlu0 %234
      %238 = vset.pattern.permute.xlu0 0
      %239 = vperm.xlu0 %238, %v189
      %v240 = vpop.permute.xlu0 %239
      %243 = vset.pattern.permute.xlu0 0
      %244 = vperm.xlu0 %243, %v190
      %v245 = vpop.permute.xlu0 %244
      %248 = vset.pattern.permute.xlu0 0
      %249 = vperm.xlu0 %248, %v191
      %v250 = vpop.permute.xlu0 %249
      %253 = vset.pattern.permute.xlu0 0
      %254 = vperm.xlu0 %253, %v192
      %v255 = vpop.permute.xlu0 %254
      %258 = vset.pattern.permute.xlu0 0
      %259 = vperm.xlu0 %258, %v193
      %v260 = vpop.permute.xlu0 %259
      %263 = vset.pattern.permute.xlu0 0
      %264 = vperm.xlu0 %263, %v194
      %v265 = vpop.permute.xlu0 %264
      %268 = vset.pattern.permute.xlu0 0
      %269 = vperm.xlu0 %268, %v195
      %v270 = vpop.permute.xlu0 %269
      %273 = vset.pattern.permute.xlu0 0
      %274 = vperm.xlu0 %273, %v196
      %v275 = vpop.permute.xlu0 %274
      %v277 = vlaneseq
      %v278 = vshrl.u32 %v277, 7
      %v279 = vsub.s32 0, %v278
      %v280 = vrot.slane %v180, %v279
      %v281 = vmul.f32 %v200, %v280
      %v282 = vmul.f32 %v205, %v280
      %v283 = vmul.f32 %v210, %v280
      %v284 = vmul.f32 %v215, %v280
      %v285 = vmul.f32 %v220, %v280
      %v286 = vmul.f32 %v225, %v280
      %v287 = vmul.f32 %v230, %v280
      %v288 = vmul.f32 %v235, %v280
      %v289 = vmul.f32 %v240, %v280
      %v290 = vmul.f32 %v245, %v280
      %v291 = vmul.f32 %v250, %v280
      %v292 = vmul.f32 %v255, %v280
      %v293 = vmul.f32 %v260, %v280
      %v294 = vmul.f32 %v265, %v280
      %v295 = vmul.f32 %v270, %v280
      %v296 = vmul.f32 %v275, %v280
      %v297 = vand.u32 2147483647, %v281
      %vm298 = vcmp.le.f32.partialorder %v297, 0.7853982
      %vm299 = vcmp.lt.s32.totalorder %v281, 0
      %v300 = vand.u32 %v281, 2139095040
      %v301 = vshrl.u32 %v300, 23
      %v302 = vsub.s32 %v301, 127
      %v303 = vand.u32 2147483647, %v281
      %v304 = vand.u32 %v303, 8388607
      %v305 = vor.u32 %v304, 8388608
      %v306 = vsub.s32 0, %v305
      %v307 = vadd.s32 %v302, 1
      %vm308 = vcmp.gt.s32.totalorder %v307, 0
      %v309 = vsel %vm308, %v307, 0
      %v310 = vshrl.u32 %v309, 5
      %v311 = vand.u32 %v309, 31
      %v312 = vsub.s32 32, %v311
      %v313 = vshrl.u32 683565275, %v312
      %v314 = vshll.u32 683565275, %v311
      %v315 = vshrl.u32 2475754826, %v312
      %v316 = vor.u32 %v314, %v315
      %v317 = vshll.u32 2475754826, %v311
      %v318 = vshrl.u32 2131351028, %v312
      %v319 = vor.u32 %v317, %v318
      %v320 = vshll.u32 2131351028, %v311
      %v321 = vshrl.u32 2102212464, %v312
      %v322 = vor.u32 %v320, %v321
      %v323 = vshll.u32 2102212464, %v311
      %v324 = vshrl.u32 920167782, %v312
      %v325 = vor.u32 %v323, %v324
      %v326 = vshll.u32 920167782, %v311
      %v327 = vshrl.u32 1326507024, %v312
      %v328 = vor.u32 %v326, %v327
      %vm329 = vcmp.lt.s32.totalorder %v310, 1
      %vm330 = vcmp.lt.s32.totalorder %v310, 2
      %vm331 = vcmp.lt.s32.totalorder %v310, 3
      %vm332 = vcmp.lt.s32.totalorder %v310, 4
      %v333 = vsel %vm329, %v313, %v316
      %v334 = vsel %vm332, %v322, 2102212464
      %v335 = vsel %vm331, %v319, %v334
      %v336 = vsel %vm330, %v333, %v335
      %v337 = vsel %vm329, %v316, %v319
      %v338 = vsel %vm332, %v325, 920167782
      %v339 = vsel %vm331, %v322, %v338
      %v340 = vsel %vm330, %v337, %v339
      %v341 = vsel %vm329, %v319, %v322
      %v342 = vsel %vm332, %v328, 1326507024
      %v343 = vsel %vm331, %v325, %v342
      %v344 = vsel %vm330, %v341, %v343
      %v345 = vshll.u32 %v305, 8
      %v346 = vmul.u32.u64.compose %v345, %v344
      %v347 = vextract.low.u32 %v346
      %v348 = vextract.high.u32 %v346
      %v349 = vmul.u32.u64.compose %v345, %v340
      %v350 = vextract.low.u32 %v349
      %v351 = vextract.high.u32 %v349
      %v352 = vmul.u32 %v345, %v336
      %v353 = vadd.s32 %v348, %v350
      %vm354 = vc.u32 %v348, %v350
      %v355 = vadd.s32 %v351, 1
      %v356 = vsel %vm354, %v355, %v351
      %v357 = vadd.s32 %v352, %v356
      %v358 = vadd.s32 %v357, 536870912
      %v359 = vshrl.u32 %v358, 30
      %v360 = vshll.u32 %v359, 30
      %v361 = vsub.s32 %v357, %v360
      %vm362 = vcmp.lt.s32.totalorder %v361, 0
      %v363 = vsub.s32 0, %v361
      %v364 = vsel %vm362, %v363, %v361
      %v365 = vclz %v364
      %v366 = vsub.s32 %v365, 2
      %vm367 = vcmp.gt.s32.totalorder 0, %v366
      %v368 = vsel %vm367, 0, %v366
      %v369 = vsub.s32 32, %v368
      %v370 = vshll.u32 %v361, %v368
      %v371 = vshrl.u32 %v353, %v369
      %v372 = vor.u32 %v370, %v371
      %v373 = vsub.s32 4294967266, %v368
      %v374 = vadd.s32 %v373, 127
      %v375 = vshll.u32 %v374, 23
      %v376 = vor.u32 4788187, %v375
      %v377 = vand.u32 2147483647, %v376
      %v379 = vcvt.s32.f32 %v372
      %v380 = vmul.f32 %v379, %v377
      %v381 = vxor.u32 %v380, 2147483648
      %v382 = vsel %vm299, %v381, %v380
      %v383 = vsub.s32 4, %v359
      %v384 = vsel %vm299, %v383, %v359
      %v385 = vsel %vm298, %v281, %v382
      %v386 = vsel %vm298, 0, %v384
      %v387 = vcosq.f32.pop %v385
      %v388 = vsinq.f32.pop %v385
      %vm389 = vweird.f32 %v281
      %v390 = vadd.s32 %v386, 3
      %v391 = vand.u32 %v390, 3
      %vm392 = vcmp.lt.s32.totalorder %v391, 2
      %vm393 = vcmp.eq.s32.totalorder %v391, 0
      %v394 = vxor.u32 %v388, 2147483648
      %v395 = vsel %vm393, %v387, %v394
      %vm396 = vcmp.eq.s32.totalorder %v391, 2
      %v397 = vxor.u32 %v387, 2147483648
      %v398 = vsel %vm396, %v397, %v388
      %v399 = vsel %vm392, %v395, %v398
      %v400 = vsel %vm389, nan, %v399
      %v401 = vand.u32 2147483647, %v282
      %vm402 = vcmp.le.f32.partialorder %v401, 0.7853982
      %vm403 = vcmp.lt.s32.totalorder %v282, 0
      %v404 = vand.u32 %v282, 2139095040
      %v405 = vshrl.u32 %v404, 23
      %v406 = vsub.s32 %v405, 127
      %v407 = vand.u32 2147483647, %v282
      %v408 = vand.u32 %v407, 8388607
      %v409 = vor.u32 %v408, 8388608
      %v410 = vsub.s32 0, %v409
      %v411 = vadd.s32 %v406, 1
      %vm412 = vcmp.gt.s32.totalorder %v411, 0
      %v413 = vsel %vm412, %v411, 0
      %v414 = vshrl.u32 %v413, 5
      %v415 = vand.u32 %v413, 31
      %v416 = vsub.s32 32, %v415
      %v417 = vshrl.u32 683565275, %v416
      %v418 = vshll.u32 683565275, %v415
      %v419 = vshrl.u32 2475754826, %v416
      %v420 = vor.u32 %v418, %v419
      %v421 = vshll.u32 2475754826, %v415
      %v422 = vshrl.u32 2131351028, %v416
      %v423 = vor.u32 %v421, %v422
      %v424 = vshll.u32 2131351028, %v415
      %v425 = vshrl.u32 2102212464, %v416
      %v426 = vor.u32 %v424, %v425
      %v427 = vshll.u32 2102212464, %v415
      %v428 = vshrl.u32 920167782, %v416
      %v429 = vor.u32 %v427, %v428
      %v430 = vshll.u32 920167782, %v415
      %v431 = vshrl.u32 1326507024, %v416
      %v432 = vor.u32 %v430, %v431
      %vm433 = vcmp.lt.s32.totalorder %v414, 1
      %vm434 = vcmp.lt.s32.totalorder %v414, 2
      %vm435 = vcmp.lt.s32.totalorder %v414, 3
      %vm436 = vcmp.lt.s32.totalorder %v414, 4
      %v437 = vsel %vm433, %v417, %v420
      %v438 = vsel %vm436, %v426, 2102212464
      %v439 = vsel %vm435, %v423, %v438
      %v440 = vsel %vm434, %v437, %v439
      %v441 = vsel %vm433, %v420, %v423
      %v442 = vsel %vm436, %v429, 920167782
      %v443 = vsel %vm435, %v426, %v442
      %v444 = vsel %vm434, %v441, %v443
      %v445 = vsel %vm433, %v423, %v426
      %v446 = vsel %vm436, %v432, 1326507024
      %v447 = vsel %vm435, %v429, %v446
      %v448 = vsel %vm434, %v445, %v447
      %v449 = vshll.u32 %v409, 8
      %v450 = vmul.u32.u64.compose %v449, %v448
      %v451 = vextract.low.u32 %v450
      %v452 = vextract.high.u32 %v450
      %v453 = vmul.u32.u64.compose %v449, %v444
      %v454 = vextract.low.u32 %v453
      %v455 = vextract.high.u32 %v453
      %v456 = vmul.u32 %v449, %v440
      %v457 = vadd.s32 %v452, %v454
      %vm458 = vc.u32 %v452, %v454
      %v459 = vadd.s32 %v455, 1
      %v460 = vsel %vm458, %v459, %v455
      %v461 = vadd.s32 %v456, %v460
      %v462 = vadd.s32 %v461, 536870912
      %v463 = vshrl.u32 %v462, 30
      %v464 = vshll.u32 %v463, 30
      %v465 = vsub.s32 %v461, %v464
      %vm466 = vcmp.lt.s32.totalorder %v465, 0
      %v467 = vsub.s32 0, %v465
      %v468 = vsel %vm466, %v467, %v465
      %v469 = vclz %v468
      %v470 = vsub.s32 %v469, 2
      %vm471 = vcmp.gt.s32.totalorder 0, %v470
      %v472 = vsel %vm471, 0, %v470
      %v473 = vsub.s32 32, %v472
      %v474 = vshll.u32 %v465, %v472
      %v475 = vshrl.u32 %v457, %v473
      %v476 = vor.u32 %v474, %v475
      %v477 = vsub.s32 4294967266, %v472
      %v478 = vadd.s32 %v477, 127
      %v479 = vshll.u32 %v478, 23
      %v480 = vor.u32 4788187, %v479
      %v481 = vand.u32 2147483647, %v480
      %v483 = vcvt.s32.f32 %v476
      %v484 = vmul.f32 %v483, %v481
      %v485 = vxor.u32 %v484, 2147483648
      %v486 = vsel %vm403, %v485, %v484
      %v487 = vsub.s32 4, %v463
      %v488 = vsel %vm403, %v487, %v463
      %v489 = vsel %vm402, %v282, %v486
      %v490 = vsel %vm402, 0, %v488
      %v491 = vcosq.f32.pop %v489
      %v492 = vsinq.f32.pop %v489
      %vm493 = vweird.f32 %v282
      %v494 = vadd.s32 %v490, 3
      %v495 = vand.u32 %v494, 3
      %vm496 = vcmp.lt.s32.totalorder %v495, 2
      %vm497 = vcmp.eq.s32.totalorder %v495, 0
      %v498 = vxor.u32 %v492, 2147483648
      %v499 = vsel %vm497, %v491, %v498
      %vm500 = vcmp.eq.s32.totalorder %v495, 2
      %v501 = vxor.u32 %v491, 2147483648
      %v502 = vsel %vm500, %v501, %v492
      %v503 = vsel %vm496, %v499, %v502
      %v504 = vsel %vm493, nan, %v503
      %v505 = vand.u32 2147483647, %v283
      %vm506 = vcmp.le.f32.partialorder %v505, 0.7853982
      %vm507 = vcmp.lt.s32.totalorder %v283, 0
      %v508 = vand.u32 %v283, 2139095040
      %v509 = vshrl.u32 %v508, 23
      %v510 = vsub.s32 %v509, 127
      %v511 = vand.u32 2147483647, %v283
      %v512 = vand.u32 %v511, 8388607
      %v513 = vor.u32 %v512, 8388608
      %v514 = vsub.s32 0, %v513
      %v515 = vadd.s32 %v510, 1
      %vm516 = vcmp.gt.s32.totalorder %v515, 0
      %v517 = vsel %vm516, %v515, 0
      %v518 = vshrl.u32 %v517, 5
      %v519 = vand.u32 %v517, 31
      %v520 = vsub.s32 32, %v519
      %v521 = vshrl.u32 683565275, %v520
      %v522 = vshll.u32 683565275, %v519
      %v523 = vshrl.u32 2475754826, %v520
      %v524 = vor.u32 %v522, %v523
      %v525 = vshll.u32 2475754826, %v519
      %v526 = vshrl.u32 2131351028, %v520
      %v527 = vor.u32 %v525, %v526
      %v528 = vshll.u32 2131351028, %v519
      %v529 = vshrl.u32 2102212464, %v520
      %v530 = vor.u32 %v528, %v529
      %v531 = vshll.u32 2102212464, %v519
      %v532 = vshrl.u32 920167782, %v520
      %v533 = vor.u32 %v531, %v532
      %v534 = vshll.u32 920167782, %v519
      %v535 = vshrl.u32 1326507024, %v520
      %v536 = vor.u32 %v534, %v535
      %vm537 = vcmp.lt.s32.totalorder %v518, 1
      %vm538 = vcmp.lt.s32.totalorder %v518, 2
      %vm539 = vcmp.lt.s32.totalorder %v518, 3
      %vm540 = vcmp.lt.s32.totalorder %v518, 4
      %v541 = vsel %vm537, %v521, %v524
      %v542 = vsel %vm540, %v530, 2102212464
      %v543 = vsel %vm539, %v527, %v542
      %v544 = vsel %vm538, %v541, %v543
      %v545 = vsel %vm537, %v524, %v527
      %v546 = vsel %vm540, %v533, 920167782
      %v547 = vsel %vm539, %v530, %v546
      %v548 = vsel %vm538, %v545, %v547
      %v549 = vsel %vm537, %v527, %v530
      %v550 = vsel %vm540, %v536, 1326507024
      %v551 = vsel %vm539, %v533, %v550
      %v552 = vsel %vm538, %v549, %v551
      %v553 = vshll.u32 %v513, 8
      %v554 = vmul.u32.u64.compose %v553, %v552
      %v555 = vextract.low.u32 %v554
      %v556 = vextract.high.u32 %v554
      %v557 = vmul.u32.u64.compose %v553, %v548
      %v558 = vextract.low.u32 %v557
      %v559 = vextract.high.u32 %v557
      %v560 = vmul.u32 %v553, %v544
      %v561 = vadd.s32 %v556, %v558
      %vm562 = vc.u32 %v556, %v558
      %v563 = vadd.s32 %v559, 1
      %v564 = vsel %vm562, %v563, %v559
      %v565 = vadd.s32 %v560, %v564
      %v566 = vadd.s32 %v565, 536870912
      %v567 = vshrl.u32 %v566, 30
      %v568 = vshll.u32 %v567, 30
      %v569 = vsub.s32 %v565, %v568
      %vm570 = vcmp.lt.s32.totalorder %v569, 0
      %v571 = vsub.s32 0, %v569
      %v572 = vsel %vm570, %v571, %v569
      %v573 = vclz %v572
      %v574 = vsub.s32 %v573, 2
      %vm575 = vcmp.gt.s32.totalorder 0, %v574
      %v576 = vsel %vm575, 0, %v574
      %v577 = vsub.s32 32, %v576
      %v578 = vshll.u32 %v569, %v576
      %v579 = vshrl.u32 %v561, %v577
      %v580 = vor.u32 %v578, %v579
      %v581 = vsub.s32 4294967266, %v576
      %v582 = vadd.s32 %v581, 127
      %v583 = vshll.u32 %v582, 23
      %v584 = vor.u32 4788187, %v583
      %v585 = vand.u32 2147483647, %v584
      %v587 = vcvt.s32.f32 %v580
      %v588 = vmul.f32 %v587, %v585
      %v589 = vxor.u32 %v588, 2147483648
      %v590 = vsel %vm507, %v589, %v588
      %v591 = vsub.s32 4, %v567
      %v592 = vsel %vm507, %v591, %v567
      %v593 = vsel %vm506, %v283, %v590
      %v594 = vsel %vm506, 0, %v592
      %v595 = vcosq.f32.pop %v593
      %v596 = vsinq.f32.pop %v593
      %vm597 = vweird.f32 %v283
      %v598 = vadd.s32 %v594, 3
      %v599 = vand.u32 %v598, 3
      %vm600 = vcmp.lt.s32.totalorder %v599, 2
      %vm601 = vcmp.eq.s32.totalorder %v599, 0
      %v602 = vxor.u32 %v596, 2147483648
      %v603 = vsel %vm601, %v595, %v602
      %vm604 = vcmp.eq.s32.totalorder %v599, 2
      %v605 = vxor.u32 %v595, 2147483648
      %v606 = vsel %vm604, %v605, %v596
      %v607 = vsel %vm600, %v603, %v606
      %v608 = vsel %vm597, nan, %v607
      %v609 = vand.u32 2147483647, %v284
      %vm610 = vcmp.le.f32.partialorder %v609, 0.7853982
      %vm611 = vcmp.lt.s32.totalorder %v284, 0
      %v612 = vand.u32 %v284, 2139095040
      %v613 = vshrl.u32 %v612, 23
      %v614 = vsub.s32 %v613, 127
      %v615 = vand.u32 2147483647, %v284
      %v616 = vand.u32 %v615, 8388607
      %v617 = vor.u32 %v616, 8388608
      %v618 = vsub.s32 0, %v617
      %v619 = vadd.s32 %v614, 1
      %vm620 = vcmp.gt.s32.totalorder %v619, 0
      %v621 = vsel %vm620, %v619, 0
      %v622 = vshrl.u32 %v621, 5
      %v623 = vand.u32 %v621, 31
      %v624 = vsub.s32 32, %v623
      %v625 = vshrl.u32 683565275, %v624
      %v626 = vshll.u32 683565275, %v623
      %v627 = vshrl.u32 2475754826, %v624
      %v628 = vor.u32 %v626, %v627
      %v629 = vshll.u32 2475754826, %v623
      %v630 = vshrl.u32 2131351028, %v624
      %v631 = vor.u32 %v629, %v630
      %v632 = vshll.u32 2131351028, %v623
      %v633 = vshrl.u32 2102212464, %v624
      %v634 = vor.u32 %v632, %v633
      %v635 = vshll.u32 2102212464, %v623
      %v636 = vshrl.u32 920167782, %v624
      %v637 = vor.u32 %v635, %v636
      %v638 = vshll.u32 920167782, %v623
      %v639 = vshrl.u32 1326507024, %v624
      %v640 = vor.u32 %v638, %v639
      %vm641 = vcmp.lt.s32.totalorder %v622, 1
      %vm642 = vcmp.lt.s32.totalorder %v622, 2
      %vm643 = vcmp.lt.s32.totalorder %v622, 3
      %vm644 = vcmp.lt.s32.totalorder %v622, 4
      %v645 = vsel %vm641, %v625, %v628
      %v646 = vsel %vm644, %v634, 2102212464
      %v647 = vsel %vm643, %v631, %v646
      %v648 = vsel %vm642, %v645, %v647
      %v649 = vsel %vm641, %v628, %v631
      %v650 = vsel %vm644, %v637, 920167782
      %v651 = vsel %vm643, %v634, %v650
      %v652 = vsel %vm642, %v649, %v651
      %v653 = vsel %vm641, %v631, %v634
      %v654 = vsel %vm644, %v640, 1326507024
      %v655 = vsel %vm643, %v637, %v654
      %v656 = vsel %vm642, %v653, %v655
      %v657 = vshll.u32 %v617, 8
      %v658 = vmul.u32.u64.compose %v657, %v656
      %v659 = vextract.low.u32 %v658
      %v660 = vextract.high.u32 %v658
      %v661 = vmul.u32.u64.compose %v657, %v652
      %v662 = vextract.low.u32 %v661
      %v663 = vextract.high.u32 %v661
      %v664 = vmul.u32 %v657, %v648
      %v665 = vadd.s32 %v660, %v662
      %vm666 = vc.u32 %v660, %v662
      %v667 = vadd.s32 %v663, 1
      %v668 = vsel %vm666, %v667, %v663
      %v669 = vadd.s32 %v664, %v668
      %v670 = vadd.s32 %v669, 536870912
      %v671 = vshrl.u32 %v670, 30
      %v672 = vshll.u32 %v671, 30
      %v673 = vsub.s32 %v669, %v672
      %vm674 = vcmp.lt.s32.totalorder %v673, 0
      %v675 = vsub.s32 0, %v673
      %v676 = vsel %vm674, %v675, %v673
      %v677 = vclz %v676
      %v678 = vsub.s32 %v677, 2
      %vm679 = vcmp.gt.s32.totalorder 0, %v678
      %v680 = vsel %vm679, 0, %v678
      %v681 = vsub.s32 32, %v680
      %v682 = vshll.u32 %v673, %v680
      %v683 = vshrl.u32 %v665, %v681
      %v684 = vor.u32 %v682, %v683
      %v685 = vsub.s32 4294967266, %v680
      %v686 = vadd.s32 %v685, 127
      %v687 = vshll.u32 %v686, 23
      %v688 = vor.u32 4788187, %v687
      %v689 = vand.u32 2147483647, %v688
      %v691 = vcvt.s32.f32 %v684
      %v692 = vmul.f32 %v691, %v689
      %v693 = vxor.u32 %v692, 2147483648
      %v694 = vsel %vm611, %v693, %v692
      %v695 = vsub.s32 4, %v671
      %v696 = vsel %vm611, %v695, %v671
      %v697 = vsel %vm610, %v284, %v694
      %v698 = vsel %vm610, 0, %v696
      %v699 = vcosq.f32.pop %v697
      %v700 = vsinq.f32.pop %v697
      %vm701 = vweird.f32 %v284
      %v702 = vadd.s32 %v698, 3
      %v703 = vand.u32 %v702, 3
      %vm704 = vcmp.lt.s32.totalorder %v703, 2
      %vm705 = vcmp.eq.s32.totalorder %v703, 0
      %v706 = vxor.u32 %v700, 2147483648
      %v707 = vsel %vm705, %v699, %v706
      %vm708 = vcmp.eq.s32.totalorder %v703, 2
      %v709 = vxor.u32 %v699, 2147483648
      %v710 = vsel %vm708, %v709, %v700
      %v711 = vsel %vm704, %v707, %v710
      %v712 = vsel %vm701, nan, %v711
      %v713 = vand.u32 2147483647, %v285
      %vm714 = vcmp.le.f32.partialorder %v713, 0.7853982
      %vm715 = vcmp.lt.s32.totalorder %v285, 0
      %v716 = vand.u32 %v285, 2139095040
      %v717 = vshrl.u32 %v716, 23
      %v718 = vsub.s32 %v717, 127
      %v719 = vand.u32 2147483647, %v285
      %v720 = vand.u32 %v719, 8388607
      %v721 = vor.u32 %v720, 8388608
      %v722 = vsub.s32 0, %v721
      %v723 = vadd.s32 %v718, 1
      %vm724 = vcmp.gt.s32.totalorder %v723, 0
      %v725 = vsel %vm724, %v723, 0
      %v726 = vshrl.u32 %v725, 5
      %v727 = vand.u32 %v725, 31
      %v728 = vsub.s32 32, %v727
      %v729 = vshrl.u32 683565275, %v728
      %v730 = vshll.u32 683565275, %v727
      %v731 = vshrl.u32 2475754826, %v728
      %v732 = vor.u32 %v730, %v731
      %v733 = vshll.u32 2475754826, %v727
      %v734 = vshrl.u32 2131351028, %v728
      %v735 = vor.u32 %v733, %v734
      %v736 = vshll.u32 2131351028, %v727
      %v737 = vshrl.u32 2102212464, %v728
      %v738 = vor.u32 %v736, %v737
      %v739 = vshll.u32 2102212464, %v727
      %v740 = vshrl.u32 920167782, %v728
      %v741 = vor.u32 %v739, %v740
      %v742 = vshll.u32 920167782, %v727
      %v743 = vshrl.u32 1326507024, %v728
      %v744 = vor.u32 %v742, %v743
      %vm745 = vcmp.lt.s32.totalorder %v726, 1
      %vm746 = vcmp.lt.s32.totalorder %v726, 2
      %vm747 = vcmp.lt.s32.totalorder %v726, 3
      %vm748 = vcmp.lt.s32.totalorder %v726, 4
      %v749 = vsel %vm745, %v729, %v732
      %v750 = vsel %vm748, %v738, 2102212464
      %v751 = vsel %vm747, %v735, %v750
      %v752 = vsel %vm746, %v749, %v751
      %v753 = vsel %vm745, %v732, %v735
      %v754 = vsel %vm748, %v741, 920167782
      %v755 = vsel %vm747, %v738, %v754
      %v756 = vsel %vm746, %v753, %v755
      %v757 = vsel %vm745, %v735, %v738
      %v758 = vsel %vm748, %v744, 1326507024
      %v759 = vsel %vm747, %v741, %v758
      %v760 = vsel %vm746, %v757, %v759
      %v761 = vshll.u32 %v721, 8
      %v762 = vmul.u32.u64.compose %v761, %v760
      %v763 = vextract.low.u32 %v762
      %v764 = vextract.high.u32 %v762
      %v765 = vmul.u32.u64.compose %v761, %v756
      %v766 = vextract.low.u32 %v765
      %v767 = vextract.high.u32 %v765
      %v768 = vmul.u32 %v761, %v752
      %v769 = vadd.s32 %v764, %v766
      %vm770 = vc.u32 %v764, %v766
      %v771 = vadd.s32 %v767, 1
      %v772 = vsel %vm770, %v771, %v767
      %v773 = vadd.s32 %v768, %v772
      %v774 = vadd.s32 %v773, 536870912
      %v775 = vshrl.u32 %v774, 30
      %v776 = vshll.u32 %v775, 30
      %v777 = vsub.s32 %v773, %v776
      %vm778 = vcmp.lt.s32.totalorder %v777, 0
      %v779 = vsub.s32 0, %v777
      %v780 = vsel %vm778, %v779, %v777
      %v781 = vclz %v780
      %v782 = vsub.s32 %v781, 2
      %vm783 = vcmp.gt.s32.totalorder 0, %v782
      %v784 = vsel %vm783, 0, %v782
      %v785 = vsub.s32 32, %v784
      %v786 = vshll.u32 %v777, %v784
      %v787 = vshrl.u32 %v769, %v785
      %v788 = vor.u32 %v786, %v787
      %v789 = vsub.s32 4294967266, %v784
      %v790 = vadd.s32 %v789, 127
      %v791 = vshll.u32 %v790, 23
      %v792 = vor.u32 4788187, %v791
      %v793 = vand.u32 2147483647, %v792
      %v795 = vcvt.s32.f32 %v788
      %v796 = vmul.f32 %v795, %v793
      %v797 = vxor.u32 %v796, 2147483648
      %v798 = vsel %vm715, %v797, %v796
      %v799 = vsub.s32 4, %v775
      %v800 = vsel %vm715, %v799, %v775
      %v801 = vsel %vm714, %v285, %v798
      %v802 = vsel %vm714, 0, %v800
      %v803 = vcosq.f32.pop %v801
      %v804 = vsinq.f32.pop %v801
      %vm805 = vweird.f32 %v285
      %v806 = vadd.s32 %v802, 3
      %v807 = vand.u32 %v806, 3
      %vm808 = vcmp.lt.s32.totalorder %v807, 2
      %vm809 = vcmp.eq.s32.totalorder %v807, 0
      %v810 = vxor.u32 %v804, 2147483648
      %v811 = vsel %vm809, %v803, %v810
      %vm812 = vcmp.eq.s32.totalorder %v807, 2
      %v813 = vxor.u32 %v803, 2147483648
      %v814 = vsel %vm812, %v813, %v804
      %v815 = vsel %vm808, %v811, %v814
      %v816 = vsel %vm805, nan, %v815
      %v817 = vand.u32 2147483647, %v286
      %vm818 = vcmp.le.f32.partialorder %v817, 0.7853982
      %vm819 = vcmp.lt.s32.totalorder %v286, 0
      %v820 = vand.u32 %v286, 2139095040
      %v821 = vshrl.u32 %v820, 23
      %v822 = vsub.s32 %v821, 127
      %v823 = vand.u32 2147483647, %v286
      %v824 = vand.u32 %v823, 8388607
      %v825 = vor.u32 %v824, 8388608
      %v826 = vsub.s32 0, %v825
      %v827 = vadd.s32 %v822, 1
      %vm828 = vcmp.gt.s32.totalorder %v827, 0
      %v829 = vsel %vm828, %v827, 0
      %v830 = vshrl.u32 %v829, 5
      %v831 = vand.u32 %v829, 31
      %v832 = vsub.s32 32, %v831
      %v833 = vshrl.u32 683565275, %v832
      %v834 = vshll.u32 683565275, %v831
      %v835 = vshrl.u32 2475754826, %v832
      %v836 = vor.u32 %v834, %v835
      %v837 = vshll.u32 2475754826, %v831
      %v838 = vshrl.u32 2131351028, %v832
      %v839 = vor.u32 %v837, %v838
      %v840 = vshll.u32 2131351028, %v831
      %v841 = vshrl.u32 2102212464, %v832
      %v842 = vor.u32 %v840, %v841
      %v843 = vshll.u32 2102212464, %v831
      %v844 = vshrl.u32 920167782, %v832
      %v845 = vor.u32 %v843, %v844
      %v846 = vshll.u32 920167782, %v831
      %v847 = vshrl.u32 1326507024, %v832
      %v848 = vor.u32 %v846, %v847
      %vm849 = vcmp.lt.s32.totalorder %v830, 1
      %vm850 = vcmp.lt.s32.totalorder %v830, 2
      %vm851 = vcmp.lt.s32.totalorder %v830, 3
      %vm852 = vcmp.lt.s32.totalorder %v830, 4
      %v853 = vsel %vm849, %v833, %v836
      %v854 = vsel %vm852, %v842, 2102212464
      %v855 = vsel %vm851, %v839, %v854
      %v856 = vsel %vm850, %v853, %v855
      %v857 = vsel %vm849, %v836, %v839
      %v858 = vsel %vm852, %v845, 920167782
      %v859 = vsel %vm851, %v842, %v858
      %v860 = vsel %vm850, %v857, %v859
      %v861 = vsel %vm849, %v839, %v842
      %v862 = vsel %vm852, %v848, 1326507024
      %v863 = vsel %vm851, %v845, %v862
      %v864 = vsel %vm850, %v861, %v863
      %v865 = vshll.u32 %v825, 8
      %v866 = vmul.u32.u64.compose %v865, %v864
      %v867 = vextract.low.u32 %v866
      %v868 = vextract.high.u32 %v866
      %v869 = vmul.u32.u64.compose %v865, %v860
      %v870 = vextract.low.u32 %v869
      %v871 = vextract.high.u32 %v869
      %v872 = vmul.u32 %v865, %v856
      %v873 = vadd.s32 %v868, %v870
      %vm874 = vc.u32 %v868, %v870
      %v875 = vadd.s32 %v871, 1
      %v876 = vsel %vm874, %v875, %v871
      %v877 = vadd.s32 %v872, %v876
      %v878 = vadd.s32 %v877, 536870912
      %v879 = vshrl.u32 %v878, 30
      %v880 = vshll.u32 %v879, 30
      %v881 = vsub.s32 %v877, %v880
      %vm882 = vcmp.lt.s32.totalorder %v881, 0
      %v883 = vsub.s32 0, %v881
      %v884 = vsel %vm882, %v883, %v881
      %v885 = vclz %v884
      %v886 = vsub.s32 %v885, 2
      %vm887 = vcmp.gt.s32.totalorder 0, %v886
      %v888 = vsel %vm887, 0, %v886
      %v889 = vsub.s32 32, %v888
      %v890 = vshll.u32 %v881, %v888
      %v891 = vshrl.u32 %v873, %v889
      %v892 = vor.u32 %v890, %v891
      %v893 = vsub.s32 4294967266, %v888
      %v894 = vadd.s32 %v893, 127
      %v895 = vshll.u32 %v894, 23
      %v896 = vor.u32 4788187, %v895
      %v897 = vand.u32 2147483647, %v896
      %v899 = vcvt.s32.f32 %v892
      %v900 = vmul.f32 %v899, %v897
      %v901 = vxor.u32 %v900, 2147483648
      %v902 = vsel %vm819, %v901, %v900
      %v903 = vsub.s32 4, %v879
      %v904 = vsel %vm819, %v903, %v879
      %v905 = vsel %vm818, %v286, %v902
      %v906 = vsel %vm818, 0, %v904
      %v907 = vcosq.f32.pop %v905
      %v908 = vsinq.f32.pop %v905
      %vm909 = vweird.f32 %v286
      %v910 = vadd.s32 %v906, 3
      %v911 = vand.u32 %v910, 3
      %vm912 = vcmp.lt.s32.totalorder %v911, 2
      %vm913 = vcmp.eq.s32.totalorder %v911, 0
      %v914 = vxor.u32 %v908, 2147483648
      %v915 = vsel %vm913, %v907, %v914
      %vm916 = vcmp.eq.s32.totalorder %v911, 2
      %v917 = vxor.u32 %v907, 2147483648
      %v918 = vsel %vm916, %v917, %v908
      %v919 = vsel %vm912, %v915, %v918
      %v920 = vsel %vm909, nan, %v919
      %v921 = vand.u32 2147483647, %v287
      %vm922 = vcmp.le.f32.partialorder %v921, 0.7853982
      %vm923 = vcmp.lt.s32.totalorder %v287, 0
      %v924 = vand.u32 %v287, 2139095040
      %v925 = vshrl.u32 %v924, 23
      %v926 = vsub.s32 %v925, 127
      %v927 = vand.u32 2147483647, %v287
      %v928 = vand.u32 %v927, 8388607
      %v929 = vor.u32 %v928, 8388608
      %v930 = vsub.s32 0, %v929
      %v931 = vadd.s32 %v926, 1
      %vm932 = vcmp.gt.s32.totalorder %v931, 0
      %v933 = vsel %vm932, %v931, 0
      %v934 = vshrl.u32 %v933, 5
      %v935 = vand.u32 %v933, 31
      %v936 = vsub.s32 32, %v935
      %v937 = vshrl.u32 683565275, %v936
      %v938 = vshll.u32 683565275, %v935
      %v939 = vshrl.u32 2475754826, %v936
      %v940 = vor.u32 %v938, %v939
      %v941 = vshll.u32 2475754826, %v935
      %v942 = vshrl.u32 2131351028, %v936
      %v943 = vor.u32 %v941, %v942
      %v944 = vshll.u32 2131351028, %v935
      %v945 = vshrl.u32 2102212464, %v936
      %v946 = vor.u32 %v944, %v945
      %v947 = vshll.u32 2102212464, %v935
      %v948 = vshrl.u32 920167782, %v936
      %v949 = vor.u32 %v947, %v948
      %v950 = vshll.u32 920167782, %v935
      %v951 = vshrl.u32 1326507024, %v936
      %v952 = vor.u32 %v950, %v951
      %vm953 = vcmp.lt.s32.totalorder %v934, 1
      %vm954 = vcmp.lt.s32.totalorder %v934, 2
      %vm955 = vcmp.lt.s32.totalorder %v934, 3
      %vm956 = vcmp.lt.s32.totalorder %v934, 4
      %v957 = vsel %vm953, %v937, %v940
      %v958 = vsel %vm956, %v946, 2102212464
      %v959 = vsel %vm955, %v943, %v958
      %v960 = vsel %vm954, %v957, %v959
      %v961 = vsel %vm953, %v940, %v943
      %v962 = vsel %vm956, %v949, 920167782
      %v963 = vsel %vm955, %v946, %v962
      %v964 = vsel %vm954, %v961, %v963
      %v965 = vsel %vm953, %v943, %v946
      %v966 = vsel %vm956, %v952, 1326507024
      %v967 = vsel %vm955, %v949, %v966
      %v968 = vsel %vm954, %v965, %v967
      %v969 = vshll.u32 %v929, 8
      %v970 = vmul.u32.u64.compose %v969, %v968
      %v971 = vextract.low.u32 %v970
      %v972 = vextract.high.u32 %v970
      %v973 = vmul.u32.u64.compose %v969, %v964
      %v974 = vextract.low.u32 %v973
      %v975 = vextract.high.u32 %v973
      %v976 = vmul.u32 %v969, %v960
      %v977 = vadd.s32 %v972, %v974
      %vm978 = vc.u32 %v972, %v974
      %v979 = vadd.s32 %v975, 1
      %v980 = vsel %vm978, %v979, %v975
      %v981 = vadd.s32 %v976, %v980
      %v982 = vadd.s32 %v981, 536870912
      %v983 = vshrl.u32 %v982, 30
      %v984 = vshll.u32 %v983, 30
      %v985 = vsub.s32 %v981, %v984
      %vm986 = vcmp.lt.s32.totalorder %v985, 0
      %v987 = vsub.s32 0, %v985
      %v988 = vsel %vm986, %v987, %v985
      %v989 = vclz %v988
      %v990 = vsub.s32 %v989, 2
      %vm991 = vcmp.gt.s32.totalorder 0, %v990
      %v992 = vsel %vm991, 0, %v990
      %v993 = vsub.s32 32, %v992
      %v994 = vshll.u32 %v985, %v992
      %v995 = vshrl.u32 %v977, %v993
      %v996 = vor.u32 %v994, %v995
      %v997 = vsub.s32 4294967266, %v992
      %v998 = vadd.s32 %v997, 127
      %v999 = vshll.u32 %v998, 23
      %v1000 = vor.u32 4788187, %v999
      %v1001 = vand.u32 2147483647, %v1000
      %v1003 = vcvt.s32.f32 %v996
      %v1004 = vmul.f32 %v1003, %v1001
      %v1005 = vxor.u32 %v1004, 2147483648
      %v1006 = vsel %vm923, %v1005, %v1004
      %v1007 = vsub.s32 4, %v983
      %v1008 = vsel %vm923, %v1007, %v983
      %v1009 = vsel %vm922, %v287, %v1006
      %v1010 = vsel %vm922, 0, %v1008
      %v1011 = vcosq.f32.pop %v1009
      %v1012 = vsinq.f32.pop %v1009
      %vm1013 = vweird.f32 %v287
      %v1014 = vadd.s32 %v1010, 3
      %v1015 = vand.u32 %v1014, 3
      %vm1016 = vcmp.lt.s32.totalorder %v1015, 2
      %vm1017 = vcmp.eq.s32.totalorder %v1015, 0
      %v1018 = vxor.u32 %v1012, 2147483648
      %v1019 = vsel %vm1017, %v1011, %v1018
      %vm1020 = vcmp.eq.s32.totalorder %v1015, 2
      %v1021 = vxor.u32 %v1011, 2147483648
      %v1022 = vsel %vm1020, %v1021, %v1012
      %v1023 = vsel %vm1016, %v1019, %v1022
      %v1024 = vsel %vm1013, nan, %v1023
      %v1025 = vand.u32 2147483647, %v288
      %vm1026 = vcmp.le.f32.partialorder %v1025, 0.7853982
      %vm1027 = vcmp.lt.s32.totalorder %v288, 0
      %v1028 = vand.u32 %v288, 2139095040
      %v1029 = vshrl.u32 %v1028, 23
      %v1030 = vsub.s32 %v1029, 127
      %v1031 = vand.u32 2147483647, %v288
      %v1032 = vand.u32 %v1031, 8388607
      %v1033 = vor.u32 %v1032, 8388608
      %v1034 = vsub.s32 0, %v1033
      %v1035 = vadd.s32 %v1030, 1
      %vm1036 = vcmp.gt.s32.totalorder %v1035, 0
      %v1037 = vsel %vm1036, %v1035, 0
      %v1038 = vshrl.u32 %v1037, 5
      %v1039 = vand.u32 %v1037, 31
      %v1040 = vsub.s32 32, %v1039
      %v1041 = vshrl.u32 683565275, %v1040
      %v1042 = vshll.u32 683565275, %v1039
      %v1043 = vshrl.u32 2475754826, %v1040
      %v1044 = vor.u32 %v1042, %v1043
      %v1045 = vshll.u32 2475754826, %v1039
      %v1046 = vshrl.u32 2131351028, %v1040
      %v1047 = vor.u32 %v1045, %v1046
      %v1048 = vshll.u32 2131351028, %v1039
      %v1049 = vshrl.u32 2102212464, %v1040
      %v1050 = vor.u32 %v1048, %v1049
      %v1051 = vshll.u32 2102212464, %v1039
      %v1052 = vshrl.u32 920167782, %v1040
      %v1053 = vor.u32 %v1051, %v1052
      %v1054 = vshll.u32 920167782, %v1039
      %v1055 = vshrl.u32 1326507024, %v1040
      %v1056 = vor.u32 %v1054, %v1055
      %vm1057 = vcmp.lt.s32.totalorder %v1038, 1
      %vm1058 = vcmp.lt.s32.totalorder %v1038, 2
      %vm1059 = vcmp.lt.s32.totalorder %v1038, 3
      %vm1060 = vcmp.lt.s32.totalorder %v1038, 4
      %v1061 = vsel %vm1057, %v1041, %v1044
      %v1062 = vsel %vm1060, %v1050, 2102212464
      %v1063 = vsel %vm1059, %v1047, %v1062
      %v1064 = vsel %vm1058, %v1061, %v1063
      %v1065 = vsel %vm1057, %v1044, %v1047
      %v1066 = vsel %vm1060, %v1053, 920167782
      %v1067 = vsel %vm1059, %v1050, %v1066
      %v1068 = vsel %vm1058, %v1065, %v1067
      %v1069 = vsel %vm1057, %v1047, %v1050
      %v1070 = vsel %vm1060, %v1056, 1326507024
      %v1071 = vsel %vm1059, %v1053, %v1070
      %v1072 = vsel %vm1058, %v1069, %v1071
      %v1073 = vshll.u32 %v1033, 8
      %v1074 = vmul.u32.u64.compose %v1073, %v1072
      %v1075 = vextract.low.u32 %v1074
      %v1076 = vextract.high.u32 %v1074
      %v1077 = vmul.u32.u64.compose %v1073, %v1068
      %v1078 = vextract.low.u32 %v1077
      %v1079 = vextract.high.u32 %v1077
      %v1080 = vmul.u32 %v1073, %v1064
      %v1081 = vadd.s32 %v1076, %v1078
      %vm1082 = vc.u32 %v1076, %v1078
      %v1083 = vadd.s32 %v1079, 1
      %v1084 = vsel %vm1082, %v1083, %v1079
      %v1085 = vadd.s32 %v1080, %v1084
      %v1086 = vadd.s32 %v1085, 536870912
      %v1087 = vshrl.u32 %v1086, 30
      %v1088 = vshll.u32 %v1087, 30
      %v1089 = vsub.s32 %v1085, %v1088
      %vm1090 = vcmp.lt.s32.totalorder %v1089, 0
      %v1091 = vsub.s32 0, %v1089
      %v1092 = vsel %vm1090, %v1091, %v1089
      %v1093 = vclz %v1092
      %v1094 = vsub.s32 %v1093, 2
      %vm1095 = vcmp.gt.s32.totalorder 0, %v1094
      %v1096 = vsel %vm1095, 0, %v1094
      %v1097 = vsub.s32 32, %v1096
      %v1098 = vshll.u32 %v1089, %v1096
      %v1099 = vshrl.u32 %v1081, %v1097
      %v1100 = vor.u32 %v1098, %v1099
      %v1101 = vsub.s32 4294967266, %v1096
      %v1102 = vadd.s32 %v1101, 127
      %v1103 = vshll.u32 %v1102, 23
      %v1104 = vor.u32 4788187, %v1103
      %v1105 = vand.u32 2147483647, %v1104
      %v1107 = vcvt.s32.f32 %v1100
      %v1108 = vmul.f32 %v1107, %v1105
      %v1109 = vxor.u32 %v1108, 2147483648
      %v1110 = vsel %vm1027, %v1109, %v1108
      %v1111 = vsub.s32 4, %v1087
      %v1112 = vsel %vm1027, %v1111, %v1087
      %v1113 = vsel %vm1026, %v288, %v1110
      %v1114 = vsel %vm1026, 0, %v1112
      %v1115 = vcosq.f32.pop %v1113
      %v1116 = vsinq.f32.pop %v1113
      %vm1117 = vweird.f32 %v288
      %v1118 = vadd.s32 %v1114, 3
      %v1119 = vand.u32 %v1118, 3
      %vm1120 = vcmp.lt.s32.totalorder %v1119, 2
      %vm1121 = vcmp.eq.s32.totalorder %v1119, 0
      %v1122 = vxor.u32 %v1116, 2147483648
      %v1123 = vsel %vm1121, %v1115, %v1122
      %vm1124 = vcmp.eq.s32.totalorder %v1119, 2
      %v1125 = vxor.u32 %v1115, 2147483648
      %v1126 = vsel %vm1124, %v1125, %v1116
      %v1127 = vsel %vm1120, %v1123, %v1126
      %v1128 = vsel %vm1117, nan, %v1127
      %v1129 = vand.u32 2147483647, %v289
      %vm1130 = vcmp.le.f32.partialorder %v1129, 0.7853982
      %vm1131 = vcmp.lt.s32.totalorder %v289, 0
      %v1132 = vand.u32 %v289, 2139095040
      %v1133 = vshrl.u32 %v1132, 23
      %v1134 = vsub.s32 %v1133, 127
      %v1135 = vand.u32 2147483647, %v289
      %v1136 = vand.u32 %v1135, 8388607
      %v1137 = vor.u32 %v1136, 8388608
      %v1138 = vsub.s32 0, %v1137
      %v1139 = vadd.s32 %v1134, 1
      %vm1140 = vcmp.gt.s32.totalorder %v1139, 0
      %v1141 = vsel %vm1140, %v1139, 0
      %v1142 = vshrl.u32 %v1141, 5
      %v1143 = vand.u32 %v1141, 31
      %v1144 = vsub.s32 32, %v1143
      %v1145 = vshrl.u32 683565275, %v1144
      %v1146 = vshll.u32 683565275, %v1143
      %v1147 = vshrl.u32 2475754826, %v1144
      %v1148 = vor.u32 %v1146, %v1147
      %v1149 = vshll.u32 2475754826, %v1143
      %v1150 = vshrl.u32 2131351028, %v1144
      %v1151 = vor.u32 %v1149, %v1150
      %v1152 = vshll.u32 2131351028, %v1143
      %v1153 = vshrl.u32 2102212464, %v1144
      %v1154 = vor.u32 %v1152, %v1153
      %v1155 = vshll.u32 2102212464, %v1143
      %v1156 = vshrl.u32 920167782, %v1144
      %v1157 = vor.u32 %v1155, %v1156
      %v1158 = vshll.u32 920167782, %v1143
      %v1159 = vshrl.u32 1326507024, %v1144
      %v1160 = vor.u32 %v1158, %v1159
      %vm1161 = vcmp.lt.s32.totalorder %v1142, 1
      %vm1162 = vcmp.lt.s32.totalorder %v1142, 2
      %vm1163 = vcmp.lt.s32.totalorder %v1142, 3
      %vm1164 = vcmp.lt.s32.totalorder %v1142, 4
      %v1165 = vsel %vm1161, %v1145, %v1148
      %v1166 = vsel %vm1164, %v1154, 2102212464
      %v1167 = vsel %vm1163, %v1151, %v1166
      %v1168 = vsel %vm1162, %v1165, %v1167
      %v1169 = vsel %vm1161, %v1148, %v1151
      %v1170 = vsel %vm1164, %v1157, 920167782
      %v1171 = vsel %vm1163, %v1154, %v1170
      %v1172 = vsel %vm1162, %v1169, %v1171
      %v1173 = vsel %vm1161, %v1151, %v1154
      %v1174 = vsel %vm1164, %v1160, 1326507024
      %v1175 = vsel %vm1163, %v1157, %v1174
      %v1176 = vsel %vm1162, %v1173, %v1175
      %v1177 = vshll.u32 %v1137, 8
      %v1178 = vmul.u32.u64.compose %v1177, %v1176
      %v1179 = vextract.low.u32 %v1178
      %v1180 = vextract.high.u32 %v1178
      %v1181 = vmul.u32.u64.compose %v1177, %v1172
      %v1182 = vextract.low.u32 %v1181
      %v1183 = vextract.high.u32 %v1181
      %v1184 = vmul.u32 %v1177, %v1168
      %v1185 = vadd.s32 %v1180, %v1182
      %vm1186 = vc.u32 %v1180, %v1182
      %v1187 = vadd.s32 %v1183, 1
      %v1188 = vsel %vm1186, %v1187, %v1183
      %v1189 = vadd.s32 %v1184, %v1188
      %v1190 = vadd.s32 %v1189, 536870912
      %v1191 = vshrl.u32 %v1190, 30
      %v1192 = vshll.u32 %v1191, 30
      %v1193 = vsub.s32 %v1189, %v1192
      %vm1194 = vcmp.lt.s32.totalorder %v1193, 0
      %v1195 = vsub.s32 0, %v1193
      %v1196 = vsel %vm1194, %v1195, %v1193
      %v1197 = vclz %v1196
      %v1198 = vsub.s32 %v1197, 2
      %vm1199 = vcmp.gt.s32.totalorder 0, %v1198
      %v1200 = vsel %vm1199, 0, %v1198
      %v1201 = vsub.s32 32, %v1200
      %v1202 = vshll.u32 %v1193, %v1200
      %v1203 = vshrl.u32 %v1185, %v1201
      %v1204 = vor.u32 %v1202, %v1203
      %v1205 = vsub.s32 4294967266, %v1200
      %v1206 = vadd.s32 %v1205, 127
      %v1207 = vshll.u32 %v1206, 23
      %v1208 = vor.u32 4788187, %v1207
      %v1209 = vand.u32 2147483647, %v1208
      %v1211 = vcvt.s32.f32 %v1204
      %v1212 = vmul.f32 %v1211, %v1209
      %v1213 = vxor.u32 %v1212, 2147483648
      %v1214 = vsel %vm1131, %v1213, %v1212
      %v1215 = vsub.s32 4, %v1191
      %v1216 = vsel %vm1131, %v1215, %v1191
      %v1217 = vsel %vm1130, %v289, %v1214
      %v1218 = vsel %vm1130, 0, %v1216
      %v1219 = vcosq.f32.pop %v1217
      %v1220 = vsinq.f32.pop %v1217
      %vm1221 = vweird.f32 %v289
      %v1222 = vadd.s32 %v1218, 3
      %v1223 = vand.u32 %v1222, 3
      %vm1224 = vcmp.lt.s32.totalorder %v1223, 2
      %vm1225 = vcmp.eq.s32.totalorder %v1223, 0
      %v1226 = vxor.u32 %v1220, 2147483648
      %v1227 = vsel %vm1225, %v1219, %v1226
      %vm1228 = vcmp.eq.s32.totalorder %v1223, 2
      %v1229 = vxor.u32 %v1219, 2147483648
      %v1230 = vsel %vm1228, %v1229, %v1220
      %v1231 = vsel %vm1224, %v1227, %v1230
      %v1232 = vsel %vm1221, nan, %v1231
      %v1233 = vand.u32 2147483647, %v290
      %vm1234 = vcmp.le.f32.partialorder %v1233, 0.7853982
      %vm1235 = vcmp.lt.s32.totalorder %v290, 0
      %v1236 = vand.u32 %v290, 2139095040
      %v1237 = vshrl.u32 %v1236, 23
      %v1238 = vsub.s32 %v1237, 127
      %v1239 = vand.u32 2147483647, %v290
      %v1240 = vand.u32 %v1239, 8388607
      %v1241 = vor.u32 %v1240, 8388608
      %v1242 = vsub.s32 0, %v1241
      %v1243 = vadd.s32 %v1238, 1
      %vm1244 = vcmp.gt.s32.totalorder %v1243, 0
      %v1245 = vsel %vm1244, %v1243, 0
      %v1246 = vshrl.u32 %v1245, 5
      %v1247 = vand.u32 %v1245, 31
      %v1248 = vsub.s32 32, %v1247
      %v1249 = vshrl.u32 683565275, %v1248
      %v1250 = vshll.u32 683565275, %v1247
      %v1251 = vshrl.u32 2475754826, %v1248
      %v1252 = vor.u32 %v1250, %v1251
      %v1253 = vshll.u32 2475754826, %v1247
      %v1254 = vshrl.u32 2131351028, %v1248
      %v1255 = vor.u32 %v1253, %v1254
      %v1256 = vshll.u32 2131351028, %v1247
      %v1257 = vshrl.u32 2102212464, %v1248
      %v1258 = vor.u32 %v1256, %v1257
      %v1259 = vshll.u32 2102212464, %v1247
      %v1260 = vshrl.u32 920167782, %v1248
      %v1261 = vor.u32 %v1259, %v1260
      %v1262 = vshll.u32 920167782, %v1247
      %v1263 = vshrl.u32 1326507024, %v1248
      %v1264 = vor.u32 %v1262, %v1263
      %vm1265 = vcmp.lt.s32.totalorder %v1246, 1
      %vm1266 = vcmp.lt.s32.totalorder %v1246, 2
      %vm1267 = vcmp.lt.s32.totalorder %v1246, 3
      %vm1268 = vcmp.lt.s32.totalorder %v1246, 4
      %v1269 = vsel %vm1265, %v1249, %v1252
      %v1270 = vsel %vm1268, %v1258, 2102212464
      %v1271 = vsel %vm1267, %v1255, %v1270
      %v1272 = vsel %vm1266, %v1269, %v1271
      %v1273 = vsel %vm1265, %v1252, %v1255
      %v1274 = vsel %vm1268, %v1261, 920167782
      %v1275 = vsel %vm1267, %v1258, %v1274
      %v1276 = vsel %vm1266, %v1273, %v1275
      %v1277 = vsel %vm1265, %v1255, %v1258
      %v1278 = vsel %vm1268, %v1264, 1326507024
      %v1279 = vsel %vm1267, %v1261, %v1278
      %v1280 = vsel %vm1266, %v1277, %v1279
      %v1281 = vshll.u32 %v1241, 8
      %v1282 = vmul.u32.u64.compose %v1281, %v1280
      %v1283 = vextract.low.u32 %v1282
      %v1284 = vextract.high.u32 %v1282
      %v1285 = vmul.u32.u64.compose %v1281, %v1276
      %v1286 = vextract.low.u32 %v1285
      %v1287 = vextract.high.u32 %v1285
      %v1288 = vmul.u32 %v1281, %v1272
      %v1289 = vadd.s32 %v1284, %v1286
      %vm1290 = vc.u32 %v1284, %v1286
      %v1291 = vadd.s32 %v1287, 1
      %v1292 = vsel %vm1290, %v1291, %v1287
      %v1293 = vadd.s32 %v1288, %v1292
      %v1294 = vadd.s32 %v1293, 536870912
      %v1295 = vshrl.u32 %v1294, 30
      %v1296 = vshll.u32 %v1295, 30
      %v1297 = vsub.s32 %v1293, %v1296
      %vm1298 = vcmp.lt.s32.totalorder %v1297, 0
      %v1299 = vsub.s32 0, %v1297
      %v1300 = vsel %vm1298, %v1299, %v1297
      %v1301 = vclz %v1300
      %v1302 = vsub.s32 %v1301, 2
      %vm1303 = vcmp.gt.s32.totalorder 0, %v1302
      %v1304 = vsel %vm1303, 0, %v1302
      %v1305 = vsub.s32 32, %v1304
      %v1306 = vshll.u32 %v1297, %v1304
      %v1307 = vshrl.u32 %v1289, %v1305
      %v1308 = vor.u32 %v1306, %v1307
      %v1309 = vsub.s32 4294967266, %v1304
      %v1310 = vadd.s32 %v1309, 127
      %v1311 = vshll.u32 %v1310, 23
      %v1312 = vor.u32 4788187, %v1311
      %v1313 = vand.u32 2147483647, %v1312
      %v1315 = vcvt.s32.f32 %v1308
      %v1316 = vmul.f32 %v1315, %v1313
      %v1317 = vxor.u32 %v1316, 2147483648
      %v1318 = vsel %vm1235, %v1317, %v1316
      %v1319 = vsub.s32 4, %v1295
      %v1320 = vsel %vm1235, %v1319, %v1295
      %v1321 = vsel %vm1234, %v290, %v1318
      %v1322 = vsel %vm1234, 0, %v1320
      %v1323 = vcosq.f32.pop %v1321
      %v1324 = vsinq.f32.pop %v1321
      %vm1325 = vweird.f32 %v290
      %v1326 = vadd.s32 %v1322, 3
      %v1327 = vand.u32 %v1326, 3
      %vm1328 = vcmp.lt.s32.totalorder %v1327, 2
      %vm1329 = vcmp.eq.s32.totalorder %v1327, 0
      %v1330 = vxor.u32 %v1324, 2147483648
      %v1331 = vsel %vm1329, %v1323, %v1330
      %vm1332 = vcmp.eq.s32.totalorder %v1327, 2
      %v1333 = vxor.u32 %v1323, 2147483648
      %v1334 = vsel %vm1332, %v1333, %v1324
      %v1335 = vsel %vm1328, %v1331, %v1334
      %v1336 = vsel %vm1325, nan, %v1335
      %v1337 = vand.u32 2147483647, %v291
      %vm1338 = vcmp.le.f32.partialorder %v1337, 0.7853982
      %vm1339 = vcmp.lt.s32.totalorder %v291, 0
      %v1340 = vand.u32 %v291, 2139095040
      %v1341 = vshrl.u32 %v1340, 23
      %v1342 = vsub.s32 %v1341, 127
      %v1343 = vand.u32 2147483647, %v291
      %v1344 = vand.u32 %v1343, 8388607
      %v1345 = vor.u32 %v1344, 8388608
      %v1346 = vsub.s32 0, %v1345
      %v1347 = vadd.s32 %v1342, 1
      %vm1348 = vcmp.gt.s32.totalorder %v1347, 0
      %v1349 = vsel %vm1348, %v1347, 0
      %v1350 = vshrl.u32 %v1349, 5
      %v1351 = vand.u32 %v1349, 31
      %v1352 = vsub.s32 32, %v1351
      %v1353 = vshrl.u32 683565275, %v1352
      %v1354 = vshll.u32 683565275, %v1351
      %v1355 = vshrl.u32 2475754826, %v1352
      %v1356 = vor.u32 %v1354, %v1355
      %v1357 = vshll.u32 2475754826, %v1351
      %v1358 = vshrl.u32 2131351028, %v1352
      %v1359 = vor.u32 %v1357, %v1358
      %v1360 = vshll.u32 2131351028, %v1351
      %v1361 = vshrl.u32 2102212464, %v1352
      %v1362 = vor.u32 %v1360, %v1361
      %v1363 = vshll.u32 2102212464, %v1351
      %v1364 = vshrl.u32 920167782, %v1352
      %v1365 = vor.u32 %v1363, %v1364
      %v1366 = vshll.u32 920167782, %v1351
      %v1367 = vshrl.u32 1326507024, %v1352
      %v1368 = vor.u32 %v1366, %v1367
      %vm1369 = vcmp.lt.s32.totalorder %v1350, 1
      %vm1370 = vcmp.lt.s32.totalorder %v1350, 2
      %vm1371 = vcmp.lt.s32.totalorder %v1350, 3
      %vm1372 = vcmp.lt.s32.totalorder %v1350, 4
      %v1373 = vsel %vm1369, %v1353, %v1356
      %v1374 = vsel %vm1372, %v1362, 2102212464
      %v1375 = vsel %vm1371, %v1359, %v1374
      %v1376 = vsel %vm1370, %v1373, %v1375
      %v1377 = vsel %vm1369, %v1356, %v1359
      %v1378 = vsel %vm1372, %v1365, 920167782
      %v1379 = vsel %vm1371, %v1362, %v1378
      %v1380 = vsel %vm1370, %v1377, %v1379
      %v1381 = vsel %vm1369, %v1359, %v1362
      %v1382 = vsel %vm1372, %v1368, 1326507024
      %v1383 = vsel %vm1371, %v1365, %v1382
      %v1384 = vsel %vm1370, %v1381, %v1383
      %v1385 = vshll.u32 %v1345, 8
      %v1386 = vmul.u32.u64.compose %v1385, %v1384
      %v1387 = vextract.low.u32 %v1386
      %v1388 = vextract.high.u32 %v1386
      %v1389 = vmul.u32.u64.compose %v1385, %v1380
      %v1390 = vextract.low.u32 %v1389
      %v1391 = vextract.high.u32 %v1389
      %v1392 = vmul.u32 %v1385, %v1376
      %v1393 = vadd.s32 %v1388, %v1390
      %vm1394 = vc.u32 %v1388, %v1390
      %v1395 = vadd.s32 %v1391, 1
      %v1396 = vsel %vm1394, %v1395, %v1391
      %v1397 = vadd.s32 %v1392, %v1396
      %v1398 = vadd.s32 %v1397, 536870912
      %v1399 = vshrl.u32 %v1398, 30
      %v1400 = vshll.u32 %v1399, 30
      %v1401 = vsub.s32 %v1397, %v1400
      %vm1402 = vcmp.lt.s32.totalorder %v1401, 0
      %v1403 = vsub.s32 0, %v1401
      %v1404 = vsel %vm1402, %v1403, %v1401
      %v1405 = vclz %v1404
      %v1406 = vsub.s32 %v1405, 2
      %vm1407 = vcmp.gt.s32.totalorder 0, %v1406
      %v1408 = vsel %vm1407, 0, %v1406
      %v1409 = vsub.s32 32, %v1408
      %v1410 = vshll.u32 %v1401, %v1408
      %v1411 = vshrl.u32 %v1393, %v1409
      %v1412 = vor.u32 %v1410, %v1411
      %v1413 = vsub.s32 4294967266, %v1408
      %v1414 = vadd.s32 %v1413, 127
      %v1415 = vshll.u32 %v1414, 23
      %v1416 = vor.u32 4788187, %v1415
      %v1417 = vand.u32 2147483647, %v1416
      %v1419 = vcvt.s32.f32 %v1412
      %v1420 = vmul.f32 %v1419, %v1417
      %v1421 = vxor.u32 %v1420, 2147483648
      %v1422 = vsel %vm1339, %v1421, %v1420
      %v1423 = vsub.s32 4, %v1399
      %v1424 = vsel %vm1339, %v1423, %v1399
      %v1425 = vsel %vm1338, %v291, %v1422
      %v1426 = vsel %vm1338, 0, %v1424
      %v1427 = vcosq.f32.pop %v1425
      %v1428 = vsinq.f32.pop %v1425
      %vm1429 = vweird.f32 %v291
      %v1430 = vadd.s32 %v1426, 3
      %v1431 = vand.u32 %v1430, 3
      %vm1432 = vcmp.lt.s32.totalorder %v1431, 2
      %vm1433 = vcmp.eq.s32.totalorder %v1431, 0
      %v1434 = vxor.u32 %v1428, 2147483648
      %v1435 = vsel %vm1433, %v1427, %v1434
      %vm1436 = vcmp.eq.s32.totalorder %v1431, 2
      %v1437 = vxor.u32 %v1427, 2147483648
      %v1438 = vsel %vm1436, %v1437, %v1428
      %v1439 = vsel %vm1432, %v1435, %v1438
      %v1440 = vsel %vm1429, nan, %v1439
      %v1441 = vand.u32 2147483647, %v292
      %vm1442 = vcmp.le.f32.partialorder %v1441, 0.7853982
      %vm1443 = vcmp.lt.s32.totalorder %v292, 0
      %v1444 = vand.u32 %v292, 2139095040
      %v1445 = vshrl.u32 %v1444, 23
      %v1446 = vsub.s32 %v1445, 127
      %v1447 = vand.u32 2147483647, %v292
      %v1448 = vand.u32 %v1447, 8388607
      %v1449 = vor.u32 %v1448, 8388608
      %v1450 = vsub.s32 0, %v1449
      %v1451 = vadd.s32 %v1446, 1
      %vm1452 = vcmp.gt.s32.totalorder %v1451, 0
      %v1453 = vsel %vm1452, %v1451, 0
      %v1454 = vshrl.u32 %v1453, 5
      %v1455 = vand.u32 %v1453, 31
      %v1456 = vsub.s32 32, %v1455
      %v1457 = vshrl.u32 683565275, %v1456
      %v1458 = vshll.u32 683565275, %v1455
      %v1459 = vshrl.u32 2475754826, %v1456
      %v1460 = vor.u32 %v1458, %v1459
      %v1461 = vshll.u32 2475754826, %v1455
      %v1462 = vshrl.u32 2131351028, %v1456
      %v1463 = vor.u32 %v1461, %v1462
      %v1464 = vshll.u32 2131351028, %v1455
      %v1465 = vshrl.u32 2102212464, %v1456
      %v1466 = vor.u32 %v1464, %v1465
      %v1467 = vshll.u32 2102212464, %v1455
      %v1468 = vshrl.u32 920167782, %v1456
      %v1469 = vor.u32 %v1467, %v1468
      %v1470 = vshll.u32 920167782, %v1455
      %v1471 = vshrl.u32 1326507024, %v1456
      %v1472 = vor.u32 %v1470, %v1471
      %vm1473 = vcmp.lt.s32.totalorder %v1454, 1
      %vm1474 = vcmp.lt.s32.totalorder %v1454, 2
      %vm1475 = vcmp.lt.s32.totalorder %v1454, 3
      %vm1476 = vcmp.lt.s32.totalorder %v1454, 4
      %v1477 = vsel %vm1473, %v1457, %v1460
      %v1478 = vsel %vm1476, %v1466, 2102212464
      %v1479 = vsel %vm1475, %v1463, %v1478
      %v1480 = vsel %vm1474, %v1477, %v1479
      %v1481 = vsel %vm1473, %v1460, %v1463
      %v1482 = vsel %vm1476, %v1469, 920167782
      %v1483 = vsel %vm1475, %v1466, %v1482
      %v1484 = vsel %vm1474, %v1481, %v1483
      %v1485 = vsel %vm1473, %v1463, %v1466
      %v1486 = vsel %vm1476, %v1472, 1326507024
      %v1487 = vsel %vm1475, %v1469, %v1486
      %v1488 = vsel %vm1474, %v1485, %v1487
      %v1489 = vshll.u32 %v1449, 8
      %v1490 = vmul.u32.u64.compose %v1489, %v1488
      %v1491 = vextract.low.u32 %v1490
      %v1492 = vextract.high.u32 %v1490
      %v1493 = vmul.u32.u64.compose %v1489, %v1484
      %v1494 = vextract.low.u32 %v1493
      %v1495 = vextract.high.u32 %v1493
      %v1496 = vmul.u32 %v1489, %v1480
      %v1497 = vadd.s32 %v1492, %v1494
      %vm1498 = vc.u32 %v1492, %v1494
      %v1499 = vadd.s32 %v1495, 1
      %v1500 = vsel %vm1498, %v1499, %v1495
      %v1501 = vadd.s32 %v1496, %v1500
      %v1502 = vadd.s32 %v1501, 536870912
      %v1503 = vshrl.u32 %v1502, 30
      %v1504 = vshll.u32 %v1503, 30
      %v1505 = vsub.s32 %v1501, %v1504
      %vm1506 = vcmp.lt.s32.totalorder %v1505, 0
      %v1507 = vsub.s32 0, %v1505
      %v1508 = vsel %vm1506, %v1507, %v1505
      %v1509 = vclz %v1508
      %v1510 = vsub.s32 %v1509, 2
      %vm1511 = vcmp.gt.s32.totalorder 0, %v1510
      %v1512 = vsel %vm1511, 0, %v1510
      %v1513 = vsub.s32 32, %v1512
      %v1514 = vshll.u32 %v1505, %v1512
      %v1515 = vshrl.u32 %v1497, %v1513
      %v1516 = vor.u32 %v1514, %v1515
      %v1517 = vsub.s32 4294967266, %v1512
      %v1518 = vadd.s32 %v1517, 127
      %v1519 = vshll.u32 %v1518, 23
      %v1520 = vor.u32 4788187, %v1519
      %v1521 = vand.u32 2147483647, %v1520
      %v1523 = vcvt.s32.f32 %v1516
      %v1524 = vmul.f32 %v1523, %v1521
      %v1525 = vxor.u32 %v1524, 2147483648
      %v1526 = vsel %vm1443, %v1525, %v1524
      %v1527 = vsub.s32 4, %v1503
      %v1528 = vsel %vm1443, %v1527, %v1503
      %v1529 = vsel %vm1442, %v292, %v1526
      %v1530 = vsel %vm1442, 0, %v1528
      %v1531 = vcosq.f32.pop %v1529
      %v1532 = vsinq.f32.pop %v1529
      %vm1533 = vweird.f32 %v292
      %v1534 = vadd.s32 %v1530, 3
      %v1535 = vand.u32 %v1534, 3
      %vm1536 = vcmp.lt.s32.totalorder %v1535, 2
      %vm1537 = vcmp.eq.s32.totalorder %v1535, 0
      %v1538 = vxor.u32 %v1532, 2147483648
      %v1539 = vsel %vm1537, %v1531, %v1538
      %vm1540 = vcmp.eq.s32.totalorder %v1535, 2
      %v1541 = vxor.u32 %v1531, 2147483648
      %v1542 = vsel %vm1540, %v1541, %v1532
      %v1543 = vsel %vm1536, %v1539, %v1542
      %v1544 = vsel %vm1533, nan, %v1543
      %v1545 = vand.u32 2147483647, %v293
      %vm1546 = vcmp.le.f32.partialorder %v1545, 0.7853982
      %vm1547 = vcmp.lt.s32.totalorder %v293, 0
      %v1548 = vand.u32 %v293, 2139095040
      %v1549 = vshrl.u32 %v1548, 23
      %v1550 = vsub.s32 %v1549, 127
      %v1551 = vand.u32 2147483647, %v293
      %v1552 = vand.u32 %v1551, 8388607
      %v1553 = vor.u32 %v1552, 8388608
      %v1554 = vsub.s32 0, %v1553
      %v1555 = vadd.s32 %v1550, 1
      %vm1556 = vcmp.gt.s32.totalorder %v1555, 0
      %v1557 = vsel %vm1556, %v1555, 0
      %v1558 = vshrl.u32 %v1557, 5
      %v1559 = vand.u32 %v1557, 31
      %v1560 = vsub.s32 32, %v1559
      %v1561 = vshrl.u32 683565275, %v1560
      %v1562 = vshll.u32 683565275, %v1559
      %v1563 = vshrl.u32 2475754826, %v1560
      %v1564 = vor.u32 %v1562, %v1563
      %v1565 = vshll.u32 2475754826, %v1559
      %v1566 = vshrl.u32 2131351028, %v1560
      %v1567 = vor.u32 %v1565, %v1566
      %v1568 = vshll.u32 2131351028, %v1559
      %v1569 = vshrl.u32 2102212464, %v1560
      %v1570 = vor.u32 %v1568, %v1569
      %v1571 = vshll.u32 2102212464, %v1559
      %v1572 = vshrl.u32 920167782, %v1560
      %v1573 = vor.u32 %v1571, %v1572
      %v1574 = vshll.u32 920167782, %v1559
      %v1575 = vshrl.u32 1326507024, %v1560
      %v1576 = vor.u32 %v1574, %v1575
      %vm1577 = vcmp.lt.s32.totalorder %v1558, 1
      %vm1578 = vcmp.lt.s32.totalorder %v1558, 2
      %vm1579 = vcmp.lt.s32.totalorder %v1558, 3
      %vm1580 = vcmp.lt.s32.totalorder %v1558, 4
      %v1581 = vsel %vm1577, %v1561, %v1564
      %v1582 = vsel %vm1580, %v1570, 2102212464
      %v1583 = vsel %vm1579, %v1567, %v1582
      %v1584 = vsel %vm1578, %v1581, %v1583
      %v1585 = vsel %vm1577, %v1564, %v1567
      %v1586 = vsel %vm1580, %v1573, 920167782
      %v1587 = vsel %vm1579, %v1570, %v1586
      %v1588 = vsel %vm1578, %v1585, %v1587
      %v1589 = vsel %vm1577, %v1567, %v1570
      %v1590 = vsel %vm1580, %v1576, 1326507024
      %v1591 = vsel %vm1579, %v1573, %v1590
      %v1592 = vsel %vm1578, %v1589, %v1591
      %v1593 = vshll.u32 %v1553, 8
      %v1594 = vmul.u32.u64.compose %v1593, %v1592
      %v1595 = vextract.low.u32 %v1594
      %v1596 = vextract.high.u32 %v1594
      %v1597 = vmul.u32.u64.compose %v1593, %v1588
      %v1598 = vextract.low.u32 %v1597
      %v1599 = vextract.high.u32 %v1597
      %v1600 = vmul.u32 %v1593, %v1584
      %v1601 = vadd.s32 %v1596, %v1598
      %vm1602 = vc.u32 %v1596, %v1598
      %v1603 = vadd.s32 %v1599, 1
      %v1604 = vsel %vm1602, %v1603, %v1599
      %v1605 = vadd.s32 %v1600, %v1604
      %v1606 = vadd.s32 %v1605, 536870912
      %v1607 = vshrl.u32 %v1606, 30
      %v1608 = vshll.u32 %v1607, 30
      %v1609 = vsub.s32 %v1605, %v1608
      %vm1610 = vcmp.lt.s32.totalorder %v1609, 0
      %v1611 = vsub.s32 0, %v1609
      %v1612 = vsel %vm1610, %v1611, %v1609
      %v1613 = vclz %v1612
      %v1614 = vsub.s32 %v1613, 2
      %vm1615 = vcmp.gt.s32.totalorder 0, %v1614
      %v1616 = vsel %vm1615, 0, %v1614
      %v1617 = vsub.s32 32, %v1616
      %v1618 = vshll.u32 %v1609, %v1616
      %v1619 = vshrl.u32 %v1601, %v1617
      %v1620 = vor.u32 %v1618, %v1619
      %v1621 = vsub.s32 4294967266, %v1616
      %v1622 = vadd.s32 %v1621, 127
      %v1623 = vshll.u32 %v1622, 23
      %v1624 = vor.u32 4788187, %v1623
      %v1625 = vand.u32 2147483647, %v1624
      %v1627 = vcvt.s32.f32 %v1620
      %v1628 = vmul.f32 %v1627, %v1625
      %v1629 = vxor.u32 %v1628, 2147483648
      %v1630 = vsel %vm1547, %v1629, %v1628
      %v1631 = vsub.s32 4, %v1607
      %v1632 = vsel %vm1547, %v1631, %v1607
      %v1633 = vsel %vm1546, %v293, %v1630
      %v1634 = vsel %vm1546, 0, %v1632
      %v1635 = vcosq.f32.pop %v1633
      %v1636 = vsinq.f32.pop %v1633
      %vm1637 = vweird.f32 %v293
      %v1638 = vadd.s32 %v1634, 3
      %v1639 = vand.u32 %v1638, 3
      %vm1640 = vcmp.lt.s32.totalorder %v1639, 2
      %vm1641 = vcmp.eq.s32.totalorder %v1639, 0
      %v1642 = vxor.u32 %v1636, 2147483648
      %v1643 = vsel %vm1641, %v1635, %v1642
      %vm1644 = vcmp.eq.s32.totalorder %v1639, 2
      %v1645 = vxor.u32 %v1635, 2147483648
      %v1646 = vsel %vm1644, %v1645, %v1636
      %v1647 = vsel %vm1640, %v1643, %v1646
      %v1648 = vsel %vm1637, nan, %v1647
      %v1649 = vand.u32 2147483647, %v294
      %vm1650 = vcmp.le.f32.partialorder %v1649, 0.7853982
      %vm1651 = vcmp.lt.s32.totalorder %v294, 0
      %v1652 = vand.u32 %v294, 2139095040
      %v1653 = vshrl.u32 %v1652, 23
      %v1654 = vsub.s32 %v1653, 127
      %v1655 = vand.u32 2147483647, %v294
      %v1656 = vand.u32 %v1655, 8388607
      %v1657 = vor.u32 %v1656, 8388608
      %v1658 = vsub.s32 0, %v1657
      %v1659 = vadd.s32 %v1654, 1
      %vm1660 = vcmp.gt.s32.totalorder %v1659, 0
      %v1661 = vsel %vm1660, %v1659, 0
      %v1662 = vshrl.u32 %v1661, 5
      %v1663 = vand.u32 %v1661, 31
      %v1664 = vsub.s32 32, %v1663
      %v1665 = vshrl.u32 683565275, %v1664
      %v1666 = vshll.u32 683565275, %v1663
      %v1667 = vshrl.u32 2475754826, %v1664
      %v1668 = vor.u32 %v1666, %v1667
      %v1669 = vshll.u32 2475754826, %v1663
      %v1670 = vshrl.u32 2131351028, %v1664
      %v1671 = vor.u32 %v1669, %v1670
      %v1672 = vshll.u32 2131351028, %v1663
      %v1673 = vshrl.u32 2102212464, %v1664
      %v1674 = vor.u32 %v1672, %v1673
      %v1675 = vshll.u32 2102212464, %v1663
      %v1676 = vshrl.u32 920167782, %v1664
      %v1677 = vor.u32 %v1675, %v1676
      %v1678 = vshll.u32 920167782, %v1663
      %v1679 = vshrl.u32 1326507024, %v1664
      %v1680 = vor.u32 %v1678, %v1679
      %vm1681 = vcmp.lt.s32.totalorder %v1662, 1
      %vm1682 = vcmp.lt.s32.totalorder %v1662, 2
      %vm1683 = vcmp.lt.s32.totalorder %v1662, 3
      %vm1684 = vcmp.lt.s32.totalorder %v1662, 4
      %v1685 = vsel %vm1681, %v1665, %v1668
      %v1686 = vsel %vm1684, %v1674, 2102212464
      %v1687 = vsel %vm1683, %v1671, %v1686
      %v1688 = vsel %vm1682, %v1685, %v1687
      %v1689 = vsel %vm1681, %v1668, %v1671
      %v1690 = vsel %vm1684, %v1677, 920167782
      %v1691 = vsel %vm1683, %v1674, %v1690
      %v1692 = vsel %vm1682, %v1689, %v1691
      %v1693 = vsel %vm1681, %v1671, %v1674
      %v1694 = vsel %vm1684, %v1680, 1326507024
      %v1695 = vsel %vm1683, %v1677, %v1694
      %v1696 = vsel %vm1682, %v1693, %v1695
      %v1697 = vshll.u32 %v1657, 8
      %v1698 = vmul.u32.u64.compose %v1697, %v1696
      %v1699 = vextract.low.u32 %v1698
      %v1700 = vextract.high.u32 %v1698
      %v1701 = vmul.u32.u64.compose %v1697, %v1692
      %v1702 = vextract.low.u32 %v1701
      %v1703 = vextract.high.u32 %v1701
      %v1704 = vmul.u32 %v1697, %v1688
      %v1705 = vadd.s32 %v1700, %v1702
      %vm1706 = vc.u32 %v1700, %v1702
      %v1707 = vadd.s32 %v1703, 1
      %v1708 = vsel %vm1706, %v1707, %v1703
      %v1709 = vadd.s32 %v1704, %v1708
      %v1710 = vadd.s32 %v1709, 536870912
      %v1711 = vshrl.u32 %v1710, 30
      %v1712 = vshll.u32 %v1711, 30
      %v1713 = vsub.s32 %v1709, %v1712
      %vm1714 = vcmp.lt.s32.totalorder %v1713, 0
      %v1715 = vsub.s32 0, %v1713
      %v1716 = vsel %vm1714, %v1715, %v1713
      %v1717 = vclz %v1716
      %v1718 = vsub.s32 %v1717, 2
      %vm1719 = vcmp.gt.s32.totalorder 0, %v1718
      %v1720 = vsel %vm1719, 0, %v1718
      %v1721 = vsub.s32 32, %v1720
      %v1722 = vshll.u32 %v1713, %v1720
      %v1723 = vshrl.u32 %v1705, %v1721
      %v1724 = vor.u32 %v1722, %v1723
      %v1725 = vsub.s32 4294967266, %v1720
      %v1726 = vadd.s32 %v1725, 127
      %v1727 = vshll.u32 %v1726, 23
      %v1728 = vor.u32 4788187, %v1727
      %v1729 = vand.u32 2147483647, %v1728
      %v1731 = vcvt.s32.f32 %v1724
      %v1732 = vmul.f32 %v1731, %v1729
      %v1733 = vxor.u32 %v1732, 2147483648
      %v1734 = vsel %vm1651, %v1733, %v1732
      %v1735 = vsub.s32 4, %v1711
      %v1736 = vsel %vm1651, %v1735, %v1711
      %v1737 = vsel %vm1650, %v294, %v1734
      %v1738 = vsel %vm1650, 0, %v1736
      %v1739 = vcosq.f32.pop %v1737
      %v1740 = vsinq.f32.pop %v1737
      %vm1741 = vweird.f32 %v294
      %v1742 = vadd.s32 %v1738, 3
      %v1743 = vand.u32 %v1742, 3
      %vm1744 = vcmp.lt.s32.totalorder %v1743, 2
      %vm1745 = vcmp.eq.s32.totalorder %v1743, 0
      %v1746 = vxor.u32 %v1740, 2147483648
      %v1747 = vsel %vm1745, %v1739, %v1746
      %vm1748 = vcmp.eq.s32.totalorder %v1743, 2
      %v1749 = vxor.u32 %v1739, 2147483648
      %v1750 = vsel %vm1748, %v1749, %v1740
      %v1751 = vsel %vm1744, %v1747, %v1750
      %v1752 = vsel %vm1741, nan, %v1751
      %v1753 = vand.u32 2147483647, %v295
      %vm1754 = vcmp.le.f32.partialorder %v1753, 0.7853982
      %vm1755 = vcmp.lt.s32.totalorder %v295, 0
      %v1756 = vand.u32 %v295, 2139095040
      %v1757 = vshrl.u32 %v1756, 23
      %v1758 = vsub.s32 %v1757, 127
      %v1759 = vand.u32 2147483647, %v295
      %v1760 = vand.u32 %v1759, 8388607
      %v1761 = vor.u32 %v1760, 8388608
      %v1762 = vsub.s32 0, %v1761
      %v1763 = vadd.s32 %v1758, 1
      %vm1764 = vcmp.gt.s32.totalorder %v1763, 0
      %v1765 = vsel %vm1764, %v1763, 0
      %v1766 = vshrl.u32 %v1765, 5
      %v1767 = vand.u32 %v1765, 31
      %v1768 = vsub.s32 32, %v1767
      %v1769 = vshrl.u32 683565275, %v1768
      %v1770 = vshll.u32 683565275, %v1767
      %v1771 = vshrl.u32 2475754826, %v1768
      %v1772 = vor.u32 %v1770, %v1771
      %v1773 = vshll.u32 2475754826, %v1767
      %v1774 = vshrl.u32 2131351028, %v1768
      %v1775 = vor.u32 %v1773, %v1774
      %v1776 = vshll.u32 2131351028, %v1767
      %v1777 = vshrl.u32 2102212464, %v1768
      %v1778 = vor.u32 %v1776, %v1777
      %v1779 = vshll.u32 2102212464, %v1767
      %v1780 = vshrl.u32 920167782, %v1768
      %v1781 = vor.u32 %v1779, %v1780
      %v1782 = vshll.u32 920167782, %v1767
      %v1783 = vshrl.u32 1326507024, %v1768
      %v1784 = vor.u32 %v1782, %v1783
      %vm1785 = vcmp.lt.s32.totalorder %v1766, 1
      %vm1786 = vcmp.lt.s32.totalorder %v1766, 2
      %vm1787 = vcmp.lt.s32.totalorder %v1766, 3
      %vm1788 = vcmp.lt.s32.totalorder %v1766, 4
      %v1789 = vsel %vm1785, %v1769, %v1772
      %v1790 = vsel %vm1788, %v1778, 2102212464
      %v1791 = vsel %vm1787, %v1775, %v1790
      %v1792 = vsel %vm1786, %v1789, %v1791
      %v1793 = vsel %vm1785, %v1772, %v1775
      %v1794 = vsel %vm1788, %v1781, 920167782
      %v1795 = vsel %vm1787, %v1778, %v1794
      %v1796 = vsel %vm1786, %v1793, %v1795
      %v1797 = vsel %vm1785, %v1775, %v1778
      %v1798 = vsel %vm1788, %v1784, 1326507024
      %v1799 = vsel %vm1787, %v1781, %v1798
      %v1800 = vsel %vm1786, %v1797, %v1799
      %v1801 = vshll.u32 %v1761, 8
      %v1802 = vmul.u32.u64.compose %v1801, %v1800
      %v1803 = vextract.low.u32 %v1802
      %v1804 = vextract.high.u32 %v1802
      %v1805 = vmul.u32.u64.compose %v1801, %v1796
      %v1806 = vextract.low.u32 %v1805
      %v1807 = vextract.high.u32 %v1805
      %v1808 = vmul.u32 %v1801, %v1792
      %v1809 = vadd.s32 %v1804, %v1806
      %vm1810 = vc.u32 %v1804, %v1806
      %v1811 = vadd.s32 %v1807, 1
      %v1812 = vsel %vm1810, %v1811, %v1807
      %v1813 = vadd.s32 %v1808, %v1812
      %v1814 = vadd.s32 %v1813, 536870912
      %v1815 = vshrl.u32 %v1814, 30
      %v1816 = vshll.u32 %v1815, 30
      %v1817 = vsub.s32 %v1813, %v1816
      %vm1818 = vcmp.lt.s32.totalorder %v1817, 0
      %v1819 = vsub.s32 0, %v1817
      %v1820 = vsel %vm1818, %v1819, %v1817
      %v1821 = vclz %v1820
      %v1822 = vsub.s32 %v1821, 2
      %vm1823 = vcmp.gt.s32.totalorder 0, %v1822
      %v1824 = vsel %vm1823, 0, %v1822
      %v1825 = vsub.s32 32, %v1824
      %v1826 = vshll.u32 %v1817, %v1824
      %v1827 = vshrl.u32 %v1809, %v1825
      %v1828 = vor.u32 %v1826, %v1827
      %v1829 = vsub.s32 4294967266, %v1824
      %v1830 = vadd.s32 %v1829, 127
      %v1831 = vshll.u32 %v1830, 23
      %v1832 = vor.u32 4788187, %v1831
      %v1833 = vand.u32 2147483647, %v1832
      %v1835 = vcvt.s32.f32 %v1828
      %v1836 = vmul.f32 %v1835, %v1833
      %v1837 = vxor.u32 %v1836, 2147483648
      %v1838 = vsel %vm1755, %v1837, %v1836
      %v1839 = vsub.s32 4, %v1815
      %v1840 = vsel %vm1755, %v1839, %v1815
      %v1841 = vsel %vm1754, %v295, %v1838
      %v1842 = vsel %vm1754, 0, %v1840
      %v1843 = vcosq.f32.pop %v1841
      %v1844 = vsinq.f32.pop %v1841
      %vm1845 = vweird.f32 %v295
      %v1846 = vadd.s32 %v1842, 3
      %v1847 = vand.u32 %v1846, 3
      %vm1848 = vcmp.lt.s32.totalorder %v1847, 2
      %vm1849 = vcmp.eq.s32.totalorder %v1847, 0
      %v1850 = vxor.u32 %v1844, 2147483648
      %v1851 = vsel %vm1849, %v1843, %v1850
      %vm1852 = vcmp.eq.s32.totalorder %v1847, 2
      %v1853 = vxor.u32 %v1843, 2147483648
      %v1854 = vsel %vm1852, %v1853, %v1844
      %v1855 = vsel %vm1848, %v1851, %v1854
      %v1856 = vsel %vm1845, nan, %v1855
      %v1857 = vand.u32 2147483647, %v296
      %vm1858 = vcmp.le.f32.partialorder %v1857, 0.7853982
      %vm1859 = vcmp.lt.s32.totalorder %v296, 0
      %v1860 = vand.u32 %v296, 2139095040
      %v1861 = vshrl.u32 %v1860, 23
      %v1862 = vsub.s32 %v1861, 127
      %v1863 = vand.u32 2147483647, %v296
      %v1864 = vand.u32 %v1863, 8388607
      %v1865 = vor.u32 %v1864, 8388608
      %v1866 = vsub.s32 0, %v1865
      %v1867 = vadd.s32 %v1862, 1
      %vm1868 = vcmp.gt.s32.totalorder %v1867, 0
      %v1869 = vsel %vm1868, %v1867, 0
      %v1870 = vshrl.u32 %v1869, 5
      %v1871 = vand.u32 %v1869, 31
      %v1872 = vsub.s32 32, %v1871
      %v1873 = vshrl.u32 683565275, %v1872
      %v1874 = vshll.u32 683565275, %v1871
      %v1875 = vshrl.u32 2475754826, %v1872
      %v1876 = vor.u32 %v1874, %v1875
      %v1877 = vshll.u32 2475754826, %v1871
      %v1878 = vshrl.u32 2131351028, %v1872
      %v1879 = vor.u32 %v1877, %v1878
      %v1880 = vshll.u32 2131351028, %v1871
      %v1881 = vshrl.u32 2102212464, %v1872
      %v1882 = vor.u32 %v1880, %v1881
      %v1883 = vshll.u32 2102212464, %v1871
      %v1884 = vshrl.u32 920167782, %v1872
      %v1885 = vor.u32 %v1883, %v1884
      %v1886 = vshll.u32 920167782, %v1871
      %v1887 = vshrl.u32 1326507024, %v1872
      %v1888 = vor.u32 %v1886, %v1887
      %vm1889 = vcmp.lt.s32.totalorder %v1870, 1
      %vm1890 = vcmp.lt.s32.totalorder %v1870, 2
      %vm1891 = vcmp.lt.s32.totalorder %v1870, 3
      %vm1892 = vcmp.lt.s32.totalorder %v1870, 4
      %v1893 = vsel %vm1889, %v1873, %v1876
      %v1894 = vsel %vm1892, %v1882, 2102212464
      %v1895 = vsel %vm1891, %v1879, %v1894
      %v1896 = vsel %vm1890, %v1893, %v1895
      %v1897 = vsel %vm1889, %v1876, %v1879
      %v1898 = vsel %vm1892, %v1885, 920167782
      %v1899 = vsel %vm1891, %v1882, %v1898
      %v1900 = vsel %vm1890, %v1897, %v1899
      %v1901 = vsel %vm1889, %v1879, %v1882
      %v1902 = vsel %vm1892, %v1888, 1326507024
      %v1903 = vsel %vm1891, %v1885, %v1902
      %v1904 = vsel %vm1890, %v1901, %v1903
      %v1905 = vshll.u32 %v1865, 8
      %v1906 = vmul.u32.u64.compose %v1905, %v1904
      %v1907 = vextract.low.u32 %v1906
      %v1908 = vextract.high.u32 %v1906
      %v1909 = vmul.u32.u64.compose %v1905, %v1900
      %v1910 = vextract.low.u32 %v1909
      %v1911 = vextract.high.u32 %v1909
      %v1912 = vmul.u32 %v1905, %v1896
      %v1913 = vadd.s32 %v1908, %v1910
      %vm1914 = vc.u32 %v1908, %v1910
      %v1915 = vadd.s32 %v1911, 1
      %v1916 = vsel %vm1914, %v1915, %v1911
      %v1917 = vadd.s32 %v1912, %v1916
      %v1918 = vadd.s32 %v1917, 536870912
      %v1919 = vshrl.u32 %v1918, 30
      %v1920 = vshll.u32 %v1919, 30
      %v1921 = vsub.s32 %v1917, %v1920
      %vm1922 = vcmp.lt.s32.totalorder %v1921, 0
      %v1923 = vsub.s32 0, %v1921
      %v1924 = vsel %vm1922, %v1923, %v1921
      %v1925 = vclz %v1924
      %v1926 = vsub.s32 %v1925, 2
      %vm1927 = vcmp.gt.s32.totalorder 0, %v1926
      %v1928 = vsel %vm1927, 0, %v1926
      %v1929 = vsub.s32 32, %v1928
      %v1930 = vshll.u32 %v1921, %v1928
      %v1931 = vshrl.u32 %v1913, %v1929
      %v1932 = vor.u32 %v1930, %v1931
      %v1933 = vsub.s32 4294967266, %v1928
      %v1934 = vadd.s32 %v1933, 127
      %v1935 = vshll.u32 %v1934, 23
      %v1936 = vor.u32 4788187, %v1935
      %v1937 = vand.u32 2147483647, %v1936
      %v1939 = vcvt.s32.f32 %v1932
      %v1940 = vmul.f32 %v1939, %v1937
      %v1941 = vxor.u32 %v1940, 2147483648
      %v1942 = vsel %vm1859, %v1941, %v1940
      %v1943 = vsub.s32 4, %v1919
      %v1944 = vsel %vm1859, %v1943, %v1919
      %v1945 = vsel %vm1858, %v296, %v1942
      %v1946 = vsel %vm1858, 0, %v1944
      %v1947 = vcosq.f32.pop %v1945
      %v1948 = vsinq.f32.pop %v1945
      %vm1949 = vweird.f32 %v296
      %v1950 = vadd.s32 %v1946, 3
      %v1951 = vand.u32 %v1950, 3
      %vm1952 = vcmp.lt.s32.totalorder %v1951, 2
      %vm1953 = vcmp.eq.s32.totalorder %v1951, 0
      %v1954 = vxor.u32 %v1948, 2147483648
      %v1955 = vsel %vm1953, %v1947, %v1954
      %vm1956 = vcmp.eq.s32.totalorder %v1951, 2
      %v1957 = vxor.u32 %v1947, 2147483648
      %v1958 = vsel %vm1956, %v1957, %v1948
      %v1959 = vsel %vm1952, %v1955, %v1958
      %v1960 = vsel %vm1949, nan, %v1959
      %1977 = vrot.lane.b32.xlu0 %v400, 2
      %v1978 = vpop.permute.xlu0 %1977
      %1979 = vrot.lane.b32.xlu0 %v504, 2
      %v1980 = vpop.permute.xlu0 %1979
      %1981 = vrot.lane.b32.xlu0 %v608, 2
      %v1982 = vpop.permute.xlu0 %1981
      %1983 = vrot.lane.b32.xlu0 %v712, 2
      %v1984 = vpop.permute.xlu0 %1983
      %1985 = vrot.lane.b32.xlu0 %v816, 2
      %v1986 = vpop.permute.xlu0 %1985
      %1987 = vrot.lane.b32.xlu0 %v920, 2
      %v1988 = vpop.permute.xlu0 %1987
      %1989 = vrot.lane.b32.xlu0 %v1024, 2
      %v1990 = vpop.permute.xlu0 %1989
      %1991 = vrot.lane.b32.xlu0 %v1128, 2
      %v1992 = vpop.permute.xlu0 %1991
      %1993 = vrot.lane.b32.xlu0 %v1232, 2
      %v1994 = vpop.permute.xlu0 %1993
      %1995 = vrot.lane.b32.xlu0 %v1336, 2
      %v1996 = vpop.permute.xlu0 %1995
      %1997 = vrot.lane.b32.xlu0 %v1440, 2
      %v1998 = vpop.permute.xlu0 %1997
      %1999 = vrot.lane.b32.xlu0 %v1544, 2
      %v2000 = vpop.permute.xlu0 %1999
      %2001 = vrot.lane.b32.xlu0 %v1648, 2
      %v2002 = vpop.permute.xlu0 %2001
      %2003 = vrot.lane.b32.xlu0 %v1752, 2
      %v2004 = vpop.permute.xlu0 %2003
      %2005 = vrot.lane.b32.xlu0 %v1856, 2
      %v2006 = vpop.permute.xlu0 %2005
      %2007 = vrot.lane.b32.xlu0 %v1960, 2
      %v2008 = vpop.permute.xlu0 %2007
      %vm2025 = vcmask 48144
      %2026 = vst.msk [vmem:[%s145] sm:$0xff] %vm2025, %v1978
      %2027 = vst.msk [vmem:[%s145 + $0x8] sm:$0xff] %vm2025, %v1980
      %2028 = vst.msk [vmem:[%s145 + $0x10] sm:$0xff] %vm2025, %v1982
      %2029 = vst.msk [vmem:[%s145 + $0x18] sm:$0xff] %vm2025, %v1984
      %2030 = vst.msk [vmem:[%s145 + $0x20] sm:$0xff] %vm2025, %v1986
      %2031 = vst.msk [vmem:[%s145 + $0x28] sm:$0xff] %vm2025, %v1988
      %2032 = vst.msk [vmem:[%s145 + $0x30] sm:$0xff] %vm2025, %v1990
      %2033 = vst.msk [vmem:[%s145 + $0x38] sm:$0xff] %vm2025, %v1992
      %2034 = vst.msk [vmem:[%s145 + $0x40] sm:$0xff] %vm2025, %v1994
      %2035 = vst.msk [vmem:[%s145 + $0x48] sm:$0xff] %vm2025, %v1996
      %2036 = vst.msk [vmem:[%s145 + $0x50] sm:$0xff] %vm2025, %v1998
      %2037 = vst.msk [vmem:[%s145 + $0x58] sm:$0xff] %vm2025, %v2000
      %2038 = vst.msk [vmem:[%s145 + $0x60] sm:$0xff] %vm2025, %v2002
      %2039 = vst.msk [vmem:[%s145 + $0x68] sm:$0xff] %vm2025, %v2004
      %2040 = vst.msk [vmem:[%s145 + $0x70] sm:$0xff] %vm2025, %v2006
      %2041 = vst.msk [vmem:[%s145 + $0x78] sm:$0xff] %vm2025, %v2008
      %v2042 = vand.u32 2147483647, %v281
      %vm2043 = vcmp.le.f32.partialorder %v2042, 0.7853982
      %vm2044 = vcmp.lt.s32.totalorder %v281, 0
      %v2045 = vand.u32 %v281, 2139095040
      %v2046 = vshrl.u32 %v2045, 23
      %v2047 = vsub.s32 %v2046, 127
      %v2048 = vand.u32 2147483647, %v281
      %v2049 = vand.u32 %v2048, 8388607
      %v2050 = vor.u32 %v2049, 8388608
      %v2051 = vsub.s32 0, %v2050
      %v2052 = vadd.s32 %v2047, 1
      %vm2053 = vcmp.gt.s32.totalorder %v2052, 0
      %v2054 = vsel %vm2053, %v2052, 0
      %v2055 = vshrl.u32 %v2054, 5
      %v2056 = vand.u32 %v2054, 31
      %v2057 = vsub.s32 32, %v2056
      %v2058 = vshrl.u32 683565275, %v2057
      %v2059 = vshll.u32 683565275, %v2056
      %v2060 = vshrl.u32 2475754826, %v2057
      %v2061 = vor.u32 %v2059, %v2060
      %v2062 = vshll.u32 2475754826, %v2056
      %v2063 = vshrl.u32 2131351028, %v2057
      %v2064 = vor.u32 %v2062, %v2063
      %v2065 = vshll.u32 2131351028, %v2056
      %v2066 = vshrl.u32 2102212464, %v2057
      %v2067 = vor.u32 %v2065, %v2066
      %v2068 = vshll.u32 2102212464, %v2056
      %v2069 = vshrl.u32 920167782, %v2057
      %v2070 = vor.u32 %v2068, %v2069
      %v2071 = vshll.u32 920167782, %v2056
      %v2072 = vshrl.u32 1326507024, %v2057
      %v2073 = vor.u32 %v2071, %v2072
      %vm2074 = vcmp.lt.s32.totalorder %v2055, 1
      %vm2075 = vcmp.lt.s32.totalorder %v2055, 2
      %vm2076 = vcmp.lt.s32.totalorder %v2055, 3
      %vm2077 = vcmp.lt.s32.totalorder %v2055, 4
      %v2078 = vsel %vm2074, %v2058, %v2061
      %v2079 = vsel %vm2077, %v2067, 2102212464
      %v2080 = vsel %vm2076, %v2064, %v2079
      %v2081 = vsel %vm2075, %v2078, %v2080
      %v2082 = vsel %vm2074, %v2061, %v2064
      %v2083 = vsel %vm2077, %v2070, 920167782
      %v2084 = vsel %vm2076, %v2067, %v2083
      %v2085 = vsel %vm2075, %v2082, %v2084
      %v2086 = vsel %vm2074, %v2064, %v2067
      %v2087 = vsel %vm2077, %v2073, 1326507024
      %v2088 = vsel %vm2076, %v2070, %v2087
      %v2089 = vsel %vm2075, %v2086, %v2088
      %v2090 = vshll.u32 %v2050, 8
      %v2091 = vmul.u32.u64.compose %v2090, %v2089
      %v2092 = vextract.low.u32 %v2091
      %v2093 = vextract.high.u32 %v2091
      %v2094 = vmul.u32.u64.compose %v2090, %v2085
      %v2095 = vextract.low.u32 %v2094
      %v2096 = vextract.high.u32 %v2094
      %v2097 = vmul.u32 %v2090, %v2081
      %v2098 = vadd.s32 %v2093, %v2095
      %vm2099 = vc.u32 %v2093, %v2095
      %v2100 = vadd.s32 %v2096, 1
      %v2101 = vsel %vm2099, %v2100, %v2096
      %v2102 = vadd.s32 %v2097, %v2101
      %v2103 = vadd.s32 %v2102, 536870912
      %v2104 = vshrl.u32 %v2103, 30
      %v2105 = vshll.u32 %v2104, 30
      %v2106 = vsub.s32 %v2102, %v2105
      %vm2107 = vcmp.lt.s32.totalorder %v2106, 0
      %v2108 = vsub.s32 0, %v2106
      %v2109 = vsel %vm2107, %v2108, %v2106
      %v2110 = vclz %v2109
      %v2111 = vsub.s32 %v2110, 2
      %vm2112 = vcmp.gt.s32.totalorder 0, %v2111
      %v2113 = vsel %vm2112, 0, %v2111
      %v2114 = vsub.s32 32, %v2113
      %v2115 = vshll.u32 %v2106, %v2113
      %v2116 = vshrl.u32 %v2098, %v2114
      %v2117 = vor.u32 %v2115, %v2116
      %v2118 = vsub.s32 4294967266, %v2113
      %v2119 = vadd.s32 %v2118, 127
      %v2120 = vshll.u32 %v2119, 23
      %v2121 = vor.u32 4788187, %v2120
      %v2122 = vand.u32 2147483647, %v2121
      %v2124 = vcvt.s32.f32 %v2117
      %v2125 = vmul.f32 %v2124, %v2122
      %v2126 = vxor.u32 %v2125, 2147483648
      %v2127 = vsel %vm2044, %v2126, %v2125
      %v2128 = vsub.s32 4, %v2104
      %v2129 = vsel %vm2044, %v2128, %v2104
      %v2130 = vsel %vm2043, %v281, %v2127
      %v2131 = vsel %vm2043, 0, %v2129
      %v2132 = vcosq.f32.pop %v2130
      %v2133 = vsinq.f32.pop %v2130
      %vm2134 = vweird.f32 %v281
      %v2135 = vand.u32 %v2131, 3
      %vm2136 = vcmp.lt.s32.totalorder %v2135, 2
      %vm2137 = vcmp.eq.s32.totalorder %v2135, 0
      %v2138 = vxor.u32 %v2133, 2147483648
      %v2139 = vsel %vm2137, %v2132, %v2138
      %vm2140 = vcmp.eq.s32.totalorder %v2135, 2
      %v2141 = vxor.u32 %v2132, 2147483648
      %v2142 = vsel %vm2140, %v2141, %v2133
      %v2143 = vsel %vm2136, %v2139, %v2142
      %v2144 = vsel %vm2134, nan, %v2143
      %v2145 = vand.u32 2147483647, %v282
      %vm2146 = vcmp.le.f32.partialorder %v2145, 0.7853982
      %vm2147 = vcmp.lt.s32.totalorder %v282, 0
      %v2148 = vand.u32 %v282, 2139095040
      %v2149 = vshrl.u32 %v2148, 23
      %v2150 = vsub.s32 %v2149, 127
      %v2151 = vand.u32 2147483647, %v282
      %v2152 = vand.u32 %v2151, 8388607
      %v2153 = vor.u32 %v2152, 8388608
      %v2154 = vsub.s32 0, %v2153
      %v2155 = vadd.s32 %v2150, 1
      %vm2156 = vcmp.gt.s32.totalorder %v2155, 0
      %v2157 = vsel %vm2156, %v2155, 0
      %v2158 = vshrl.u32 %v2157, 5
      %v2159 = vand.u32 %v2157, 31
      %v2160 = vsub.s32 32, %v2159
      %v2161 = vshrl.u32 683565275, %v2160
      %v2162 = vshll.u32 683565275, %v2159
      %v2163 = vshrl.u32 2475754826, %v2160
      %v2164 = vor.u32 %v2162, %v2163
      %v2165 = vshll.u32 2475754826, %v2159
      %v2166 = vshrl.u32 2131351028, %v2160
      %v2167 = vor.u32 %v2165, %v2166
      %v2168 = vshll.u32 2131351028, %v2159
      %v2169 = vshrl.u32 2102212464, %v2160
      %v2170 = vor.u32 %v2168, %v2169
      %v2171 = vshll.u32 2102212464, %v2159
      %v2172 = vshrl.u32 920167782, %v2160
      %v2173 = vor.u32 %v2171, %v2172
      %v2174 = vshll.u32 920167782, %v2159
      %v2175 = vshrl.u32 1326507024, %v2160
      %v2176 = vor.u32 %v2174, %v2175
      %vm2177 = vcmp.lt.s32.totalorder %v2158, 1
      %vm2178 = vcmp.lt.s32.totalorder %v2158, 2
      %vm2179 = vcmp.lt.s32.totalorder %v2158, 3
      %vm2180 = vcmp.lt.s32.totalorder %v2158, 4
      %v2181 = vsel %vm2177, %v2161, %v2164
      %v2182 = vsel %vm2180, %v2170, 2102212464
      %v2183 = vsel %vm2179, %v2167, %v2182
      %v2184 = vsel %vm2178, %v2181, %v2183
      %v2185 = vsel %vm2177, %v2164, %v2167
      %v2186 = vsel %vm2180, %v2173, 920167782
      %v2187 = vsel %vm2179, %v2170, %v2186
      %v2188 = vsel %vm2178, %v2185, %v2187
      %v2189 = vsel %vm2177, %v2167, %v2170
      %v2190 = vsel %vm2180, %v2176, 1326507024
      %v2191 = vsel %vm2179, %v2173, %v2190
      %v2192 = vsel %vm2178, %v2189, %v2191
      %v2193 = vshll.u32 %v2153, 8
      %v2194 = vmul.u32.u64.compose %v2193, %v2192
      %v2195 = vextract.low.u32 %v2194
      %v2196 = vextract.high.u32 %v2194
      %v2197 = vmul.u32.u64.compose %v2193, %v2188
      %v2198 = vextract.low.u32 %v2197
      %v2199 = vextract.high.u32 %v2197
      %v2200 = vmul.u32 %v2193, %v2184
      %v2201 = vadd.s32 %v2196, %v2198
      %vm2202 = vc.u32 %v2196, %v2198
      %v2203 = vadd.s32 %v2199, 1
      %v2204 = vsel %vm2202, %v2203, %v2199
      %v2205 = vadd.s32 %v2200, %v2204
      %v2206 = vadd.s32 %v2205, 536870912
      %v2207 = vshrl.u32 %v2206, 30
      %v2208 = vshll.u32 %v2207, 30
      %v2209 = vsub.s32 %v2205, %v2208
      %vm2210 = vcmp.lt.s32.totalorder %v2209, 0
      %v2211 = vsub.s32 0, %v2209
      %v2212 = vsel %vm2210, %v2211, %v2209
      %v2213 = vclz %v2212
      %v2214 = vsub.s32 %v2213, 2
      %vm2215 = vcmp.gt.s32.totalorder 0, %v2214
      %v2216 = vsel %vm2215, 0, %v2214
      %v2217 = vsub.s32 32, %v2216
      %v2218 = vshll.u32 %v2209, %v2216
      %v2219 = vshrl.u32 %v2201, %v2217
      %v2220 = vor.u32 %v2218, %v2219
      %v2221 = vsub.s32 4294967266, %v2216
      %v2222 = vadd.s32 %v2221, 127
      %v2223 = vshll.u32 %v2222, 23
      %v2224 = vor.u32 4788187, %v2223
      %v2225 = vand.u32 2147483647, %v2224
      %v2227 = vcvt.s32.f32 %v2220
      %v2228 = vmul.f32 %v2227, %v2225
      %v2229 = vxor.u32 %v2228, 2147483648
      %v2230 = vsel %vm2147, %v2229, %v2228
      %v2231 = vsub.s32 4, %v2207
      %v2232 = vsel %vm2147, %v2231, %v2207
      %v2233 = vsel %vm2146, %v282, %v2230
      %v2234 = vsel %vm2146, 0, %v2232
      %v2235 = vcosq.f32.pop %v2233
      %v2236 = vsinq.f32.pop %v2233
      %vm2237 = vweird.f32 %v282
      %v2238 = vand.u32 %v2234, 3
      %vm2239 = vcmp.lt.s32.totalorder %v2238, 2
      %vm2240 = vcmp.eq.s32.totalorder %v2238, 0
      %v2241 = vxor.u32 %v2236, 2147483648
      %v2242 = vsel %vm2240, %v2235, %v2241
      %vm2243 = vcmp.eq.s32.totalorder %v2238, 2
      %v2244 = vxor.u32 %v2235, 2147483648
      %v2245 = vsel %vm2243, %v2244, %v2236
      %v2246 = vsel %vm2239, %v2242, %v2245
      %v2247 = vsel %vm2237, nan, %v2246
      %v2248 = vand.u32 2147483647, %v283
      %vm2249 = vcmp.le.f32.partialorder %v2248, 0.7853982
      %vm2250 = vcmp.lt.s32.totalorder %v283, 0
      %v2251 = vand.u32 %v283, 2139095040
      %v2252 = vshrl.u32 %v2251, 23
      %v2253 = vsub.s32 %v2252, 127
      %v2254 = vand.u32 2147483647, %v283
      %v2255 = vand.u32 %v2254, 8388607
      %v2256 = vor.u32 %v2255, 8388608
      %v2257 = vsub.s32 0, %v2256
      %v2258 = vadd.s32 %v2253, 1
      %vm2259 = vcmp.gt.s32.totalorder %v2258, 0
      %v2260 = vsel %vm2259, %v2258, 0
      %v2261 = vshrl.u32 %v2260, 5
      %v2262 = vand.u32 %v2260, 31
      %v2263 = vsub.s32 32, %v2262
      %v2264 = vshrl.u32 683565275, %v2263
      %v2265 = vshll.u32 683565275, %v2262
      %v2266 = vshrl.u32 2475754826, %v2263
      %v2267 = vor.u32 %v2265, %v2266
      %v2268 = vshll.u32 2475754826, %v2262
      %v2269 = vshrl.u32 2131351028, %v2263
      %v2270 = vor.u32 %v2268, %v2269
      %v2271 = vshll.u32 2131351028, %v2262
      %v2272 = vshrl.u32 2102212464, %v2263
      %v2273 = vor.u32 %v2271, %v2272
      %v2274 = vshll.u32 2102212464, %v2262
      %v2275 = vshrl.u32 920167782, %v2263
      %v2276 = vor.u32 %v2274, %v2275
      %v2277 = vshll.u32 920167782, %v2262
      %v2278 = vshrl.u32 1326507024, %v2263
      %v2279 = vor.u32 %v2277, %v2278
      %vm2280 = vcmp.lt.s32.totalorder %v2261, 1
      %vm2281 = vcmp.lt.s32.totalorder %v2261, 2
      %vm2282 = vcmp.lt.s32.totalorder %v2261, 3
      %vm2283 = vcmp.lt.s32.totalorder %v2261, 4
      %v2284 = vsel %vm2280, %v2264, %v2267
      %v2285 = vsel %vm2283, %v2273, 2102212464
      %v2286 = vsel %vm2282, %v2270, %v2285
      %v2287 = vsel %vm2281, %v2284, %v2286
      %v2288 = vsel %vm2280, %v2267, %v2270
      %v2289 = vsel %vm2283, %v2276, 920167782
      %v2290 = vsel %vm2282, %v2273, %v2289
      %v2291 = vsel %vm2281, %v2288, %v2290
      %v2292 = vsel %vm2280, %v2270, %v2273
      %v2293 = vsel %vm2283, %v2279, 1326507024
      %v2294 = vsel %vm2282, %v2276, %v2293
      %v2295 = vsel %vm2281, %v2292, %v2294
      %v2296 = vshll.u32 %v2256, 8
      %v2297 = vmul.u32.u64.compose %v2296, %v2295
      %v2298 = vextract.low.u32 %v2297
      %v2299 = vextract.high.u32 %v2297
      %v2300 = vmul.u32.u64.compose %v2296, %v2291
      %v2301 = vextract.low.u32 %v2300
      %v2302 = vextract.high.u32 %v2300
      %v2303 = vmul.u32 %v2296, %v2287
      %v2304 = vadd.s32 %v2299, %v2301
      %vm2305 = vc.u32 %v2299, %v2301
      %v2306 = vadd.s32 %v2302, 1
      %v2307 = vsel %vm2305, %v2306, %v2302
      %v2308 = vadd.s32 %v2303, %v2307
      %v2309 = vadd.s32 %v2308, 536870912
      %v2310 = vshrl.u32 %v2309, 30
      %v2311 = vshll.u32 %v2310, 30
      %v2312 = vsub.s32 %v2308, %v2311
      %vm2313 = vcmp.lt.s32.totalorder %v2312, 0
      %v2314 = vsub.s32 0, %v2312
      %v2315 = vsel %vm2313, %v2314, %v2312
      %v2316 = vclz %v2315
      %v2317 = vsub.s32 %v2316, 2
      %vm2318 = vcmp.gt.s32.totalorder 0, %v2317
      %v2319 = vsel %vm2318, 0, %v2317
      %v2320 = vsub.s32 32, %v2319
      %v2321 = vshll.u32 %v2312, %v2319
      %v2322 = vshrl.u32 %v2304, %v2320
      %v2323 = vor.u32 %v2321, %v2322
      %v2324 = vsub.s32 4294967266, %v2319
      %v2325 = vadd.s32 %v2324, 127
      %v2326 = vshll.u32 %v2325, 23
      %v2327 = vor.u32 4788187, %v2326
      %v2328 = vand.u32 2147483647, %v2327
      %v2330 = vcvt.s32.f32 %v2323
      %v2331 = vmul.f32 %v2330, %v2328
      %v2332 = vxor.u32 %v2331, 2147483648
      %v2333 = vsel %vm2250, %v2332, %v2331
      %v2334 = vsub.s32 4, %v2310
      %v2335 = vsel %vm2250, %v2334, %v2310
      %v2336 = vsel %vm2249, %v283, %v2333
      %v2337 = vsel %vm2249, 0, %v2335
      %v2338 = vcosq.f32.pop %v2336
      %v2339 = vsinq.f32.pop %v2336
      %vm2340 = vweird.f32 %v283
      %v2341 = vand.u32 %v2337, 3
      %vm2342 = vcmp.lt.s32.totalorder %v2341, 2
      %vm2343 = vcmp.eq.s32.totalorder %v2341, 0
      %v2344 = vxor.u32 %v2339, 2147483648
      %v2345 = vsel %vm2343, %v2338, %v2344
      %vm2346 = vcmp.eq.s32.totalorder %v2341, 2
      %v2347 = vxor.u32 %v2338, 2147483648
      %v2348 = vsel %vm2346, %v2347, %v2339
      %v2349 = vsel %vm2342, %v2345, %v2348
      %v2350 = vsel %vm2340, nan, %v2349
      %v2351 = vand.u32 2147483647, %v284
      %vm2352 = vcmp.le.f32.partialorder %v2351, 0.7853982
      %vm2353 = vcmp.lt.s32.totalorder %v284, 0
      %v2354 = vand.u32 %v284, 2139095040
      %v2355 = vshrl.u32 %v2354, 23
      %v2356 = vsub.s32 %v2355, 127
      %v2357 = vand.u32 2147483647, %v284
      %v2358 = vand.u32 %v2357, 8388607
      %v2359 = vor.u32 %v2358, 8388608
      %v2360 = vsub.s32 0, %v2359
      %v2361 = vadd.s32 %v2356, 1
      %vm2362 = vcmp.gt.s32.totalorder %v2361, 0
      %v2363 = vsel %vm2362, %v2361, 0
      %v2364 = vshrl.u32 %v2363, 5
      %v2365 = vand.u32 %v2363, 31
      %v2366 = vsub.s32 32, %v2365
      %v2367 = vshrl.u32 683565275, %v2366
      %v2368 = vshll.u32 683565275, %v2365
      %v2369 = vshrl.u32 2475754826, %v2366
      %v2370 = vor.u32 %v2368, %v2369
      %v2371 = vshll.u32 2475754826, %v2365
      %v2372 = vshrl.u32 2131351028, %v2366
      %v2373 = vor.u32 %v2371, %v2372
      %v2374 = vshll.u32 2131351028, %v2365
      %v2375 = vshrl.u32 2102212464, %v2366
      %v2376 = vor.u32 %v2374, %v2375
      %v2377 = vshll.u32 2102212464, %v2365
      %v2378 = vshrl.u32 920167782, %v2366
      %v2379 = vor.u32 %v2377, %v2378
      %v2380 = vshll.u32 920167782, %v2365
      %v2381 = vshrl.u32 1326507024, %v2366
      %v2382 = vor.u32 %v2380, %v2381
      %vm2383 = vcmp.lt.s32.totalorder %v2364, 1
      %vm2384 = vcmp.lt.s32.totalorder %v2364, 2
      %vm2385 = vcmp.lt.s32.totalorder %v2364, 3
      %vm2386 = vcmp.lt.s32.totalorder %v2364, 4
      %v2387 = vsel %vm2383, %v2367, %v2370
      %v2388 = vsel %vm2386, %v2376, 2102212464
      %v2389 = vsel %vm2385, %v2373, %v2388
      %v2390 = vsel %vm2384, %v2387, %v2389
      %v2391 = vsel %vm2383, %v2370, %v2373
      %v2392 = vsel %vm2386, %v2379, 920167782
      %v2393 = vsel %vm2385, %v2376, %v2392
      %v2394 = vsel %vm2384, %v2391, %v2393
      %v2395 = vsel %vm2383, %v2373, %v2376
      %v2396 = vsel %vm2386, %v2382, 1326507024
      %v2397 = vsel %vm2385, %v2379, %v2396
      %v2398 = vsel %vm2384, %v2395, %v2397
      %v2399 = vshll.u32 %v2359, 8
      %v2400 = vmul.u32.u64.compose %v2399, %v2398
      %v2401 = vextract.low.u32 %v2400
      %v2402 = vextract.high.u32 %v2400
      %v2403 = vmul.u32.u64.compose %v2399, %v2394
      %v2404 = vextract.low.u32 %v2403
      %v2405 = vextract.high.u32 %v2403
      %v2406 = vmul.u32 %v2399, %v2390
      %v2407 = vadd.s32 %v2402, %v2404
      %vm2408 = vc.u32 %v2402, %v2404
      %v2409 = vadd.s32 %v2405, 1
      %v2410 = vsel %vm2408, %v2409, %v2405
      %v2411 = vadd.s32 %v2406, %v2410
      %v2412 = vadd.s32 %v2411, 536870912
      %v2413 = vshrl.u32 %v2412, 30
      %v2414 = vshll.u32 %v2413, 30
      %v2415 = vsub.s32 %v2411, %v2414
      %vm2416 = vcmp.lt.s32.totalorder %v2415, 0
      %v2417 = vsub.s32 0, %v2415
      %v2418 = vsel %vm2416, %v2417, %v2415
      %v2419 = vclz %v2418
      %v2420 = vsub.s32 %v2419, 2
      %vm2421 = vcmp.gt.s32.totalorder 0, %v2420
      %v2422 = vsel %vm2421, 0, %v2420
      %v2423 = vsub.s32 32, %v2422
      %v2424 = vshll.u32 %v2415, %v2422
      %v2425 = vshrl.u32 %v2407, %v2423
      %v2426 = vor.u32 %v2424, %v2425
      %v2427 = vsub.s32 4294967266, %v2422
      %v2428 = vadd.s32 %v2427, 127
      %v2429 = vshll.u32 %v2428, 23
      %v2430 = vor.u32 4788187, %v2429
      %v2431 = vand.u32 2147483647, %v2430
      %v2433 = vcvt.s32.f32 %v2426
      %v2434 = vmul.f32 %v2433, %v2431
      %v2435 = vxor.u32 %v2434, 2147483648
      %v2436 = vsel %vm2353, %v2435, %v2434
      %v2437 = vsub.s32 4, %v2413
      %v2438 = vsel %vm2353, %v2437, %v2413
      %v2439 = vsel %vm2352, %v284, %v2436
      %v2440 = vsel %vm2352, 0, %v2438
      %v2441 = vcosq.f32.pop %v2439
      %v2442 = vsinq.f32.pop %v2439
      %vm2443 = vweird.f32 %v284
      %v2444 = vand.u32 %v2440, 3
      %vm2445 = vcmp.lt.s32.totalorder %v2444, 2
      %vm2446 = vcmp.eq.s32.totalorder %v2444, 0
      %v2447 = vxor.u32 %v2442, 2147483648
      %v2448 = vsel %vm2446, %v2441, %v2447
      %vm2449 = vcmp.eq.s32.totalorder %v2444, 2
      %v2450 = vxor.u32 %v2441, 2147483648
      %v2451 = vsel %vm2449, %v2450, %v2442
      %v2452 = vsel %vm2445, %v2448, %v2451
      %v2453 = vsel %vm2443, nan, %v2452
      %v2454 = vand.u32 2147483647, %v285
      %vm2455 = vcmp.le.f32.partialorder %v2454, 0.7853982
      %vm2456 = vcmp.lt.s32.totalorder %v285, 0
      %v2457 = vand.u32 %v285, 2139095040
      %v2458 = vshrl.u32 %v2457, 23
      %v2459 = vsub.s32 %v2458, 127
      %v2460 = vand.u32 2147483647, %v285
      %v2461 = vand.u32 %v2460, 8388607
      %v2462 = vor.u32 %v2461, 8388608
      %v2463 = vsub.s32 0, %v2462
      %v2464 = vadd.s32 %v2459, 1
      %vm2465 = vcmp.gt.s32.totalorder %v2464, 0
      %v2466 = vsel %vm2465, %v2464, 0
      %v2467 = vshrl.u32 %v2466, 5
      %v2468 = vand.u32 %v2466, 31
      %v2469 = vsub.s32 32, %v2468
      %v2470 = vshrl.u32 683565275, %v2469
      %v2471 = vshll.u32 683565275, %v2468
      %v2472 = vshrl.u32 2475754826, %v2469
      %v2473 = vor.u32 %v2471, %v2472
      %v2474 = vshll.u32 2475754826, %v2468
      %v2475 = vshrl.u32 2131351028, %v2469
      %v2476 = vor.u32 %v2474, %v2475
      %v2477 = vshll.u32 2131351028, %v2468
      %v2478 = vshrl.u32 2102212464, %v2469
      %v2479 = vor.u32 %v2477, %v2478
      %v2480 = vshll.u32 2102212464, %v2468
      %v2481 = vshrl.u32 920167782, %v2469
      %v2482 = vor.u32 %v2480, %v2481
      %v2483 = vshll.u32 920167782, %v2468
      %v2484 = vshrl.u32 1326507024, %v2469
      %v2485 = vor.u32 %v2483, %v2484
      %vm2486 = vcmp.lt.s32.totalorder %v2467, 1
      %vm2487 = vcmp.lt.s32.totalorder %v2467, 2
      %vm2488 = vcmp.lt.s32.totalorder %v2467, 3
      %vm2489 = vcmp.lt.s32.totalorder %v2467, 4
      %v2490 = vsel %vm2486, %v2470, %v2473
      %v2491 = vsel %vm2489, %v2479, 2102212464
      %v2492 = vsel %vm2488, %v2476, %v2491
      %v2493 = vsel %vm2487, %v2490, %v2492
      %v2494 = vsel %vm2486, %v2473, %v2476
      %v2495 = vsel %vm2489, %v2482, 920167782
      %v2496 = vsel %vm2488, %v2479, %v2495
      %v2497 = vsel %vm2487, %v2494, %v2496
      %v2498 = vsel %vm2486, %v2476, %v2479
      %v2499 = vsel %vm2489, %v2485, 1326507024
      %v2500 = vsel %vm2488, %v2482, %v2499
      %v2501 = vsel %vm2487, %v2498, %v2500
      %v2502 = vshll.u32 %v2462, 8
      %v2503 = vmul.u32.u64.compose %v2502, %v2501
      %v2504 = vextract.low.u32 %v2503
      %v2505 = vextract.high.u32 %v2503
      %v2506 = vmul.u32.u64.compose %v2502, %v2497
      %v2507 = vextract.low.u32 %v2506
      %v2508 = vextract.high.u32 %v2506
      %v2509 = vmul.u32 %v2502, %v2493
      %v2510 = vadd.s32 %v2505, %v2507
      %vm2511 = vc.u32 %v2505, %v2507
      %v2512 = vadd.s32 %v2508, 1
      %v2513 = vsel %vm2511, %v2512, %v2508
      %v2514 = vadd.s32 %v2509, %v2513
      %v2515 = vadd.s32 %v2514, 536870912
      %v2516 = vshrl.u32 %v2515, 30
      %v2517 = vshll.u32 %v2516, 30
      %v2518 = vsub.s32 %v2514, %v2517
      %vm2519 = vcmp.lt.s32.totalorder %v2518, 0
      %v2520 = vsub.s32 0, %v2518
      %v2521 = vsel %vm2519, %v2520, %v2518
      %v2522 = vclz %v2521
      %v2523 = vsub.s32 %v2522, 2
      %vm2524 = vcmp.gt.s32.totalorder 0, %v2523
      %v2525 = vsel %vm2524, 0, %v2523
      %v2526 = vsub.s32 32, %v2525
      %v2527 = vshll.u32 %v2518, %v2525
      %v2528 = vshrl.u32 %v2510, %v2526
      %v2529 = vor.u32 %v2527, %v2528
      %v2530 = vsub.s32 4294967266, %v2525
      %v2531 = vadd.s32 %v2530, 127
      %v2532 = vshll.u32 %v2531, 23
      %v2533 = vor.u32 4788187, %v2532
      %v2534 = vand.u32 2147483647, %v2533
      %v2536 = vcvt.s32.f32 %v2529
      %v2537 = vmul.f32 %v2536, %v2534
      %v2538 = vxor.u32 %v2537, 2147483648
      %v2539 = vsel %vm2456, %v2538, %v2537
      %v2540 = vsub.s32 4, %v2516
      %v2541 = vsel %vm2456, %v2540, %v2516
      %v2542 = vsel %vm2455, %v285, %v2539
      %v2543 = vsel %vm2455, 0, %v2541
      %v2544 = vcosq.f32.pop %v2542
      %v2545 = vsinq.f32.pop %v2542
      %vm2546 = vweird.f32 %v285
      %v2547 = vand.u32 %v2543, 3
      %vm2548 = vcmp.lt.s32.totalorder %v2547, 2
      %vm2549 = vcmp.eq.s32.totalorder %v2547, 0
      %v2550 = vxor.u32 %v2545, 2147483648
      %v2551 = vsel %vm2549, %v2544, %v2550
      %vm2552 = vcmp.eq.s32.totalorder %v2547, 2
      %v2553 = vxor.u32 %v2544, 2147483648
      %v2554 = vsel %vm2552, %v2553, %v2545
      %v2555 = vsel %vm2548, %v2551, %v2554
      %v2556 = vsel %vm2546, nan, %v2555
      %v2557 = vand.u32 2147483647, %v286
      %vm2558 = vcmp.le.f32.partialorder %v2557, 0.7853982
      %vm2559 = vcmp.lt.s32.totalorder %v286, 0
      %v2560 = vand.u32 %v286, 2139095040
      %v2561 = vshrl.u32 %v2560, 23
      %v2562 = vsub.s32 %v2561, 127
      %v2563 = vand.u32 2147483647, %v286
      %v2564 = vand.u32 %v2563, 8388607
      %v2565 = vor.u32 %v2564, 8388608
      %v2566 = vsub.s32 0, %v2565
      %v2567 = vadd.s32 %v2562, 1
      %vm2568 = vcmp.gt.s32.totalorder %v2567, 0
      %v2569 = vsel %vm2568, %v2567, 0
      %v2570 = vshrl.u32 %v2569, 5
      %v2571 = vand.u32 %v2569, 31
      %v2572 = vsub.s32 32, %v2571
      %v2573 = vshrl.u32 683565275, %v2572
      %v2574 = vshll.u32 683565275, %v2571
      %v2575 = vshrl.u32 2475754826, %v2572
      %v2576 = vor.u32 %v2574, %v2575
      %v2577 = vshll.u32 2475754826, %v2571
      %v2578 = vshrl.u32 2131351028, %v2572
      %v2579 = vor.u32 %v2577, %v2578
      %v2580 = vshll.u32 2131351028, %v2571
      %v2581 = vshrl.u32 2102212464, %v2572
      %v2582 = vor.u32 %v2580, %v2581
      %v2583 = vshll.u32 2102212464, %v2571
      %v2584 = vshrl.u32 920167782, %v2572
      %v2585 = vor.u32 %v2583, %v2584
      %v2586 = vshll.u32 920167782, %v2571
      %v2587 = vshrl.u32 1326507024, %v2572
      %v2588 = vor.u32 %v2586, %v2587
      %vm2589 = vcmp.lt.s32.totalorder %v2570, 1
      %vm2590 = vcmp.lt.s32.totalorder %v2570, 2
      %vm2591 = vcmp.lt.s32.totalorder %v2570, 3
      %vm2592 = vcmp.lt.s32.totalorder %v2570, 4
      %v2593 = vsel %vm2589, %v2573, %v2576
      %v2594 = vsel %vm2592, %v2582, 2102212464
      %v2595 = vsel %vm2591, %v2579, %v2594
      %v2596 = vsel %vm2590, %v2593, %v2595
      %v2597 = vsel %vm2589, %v2576, %v2579
      %v2598 = vsel %vm2592, %v2585, 920167782
      %v2599 = vsel %vm2591, %v2582, %v2598
      %v2600 = vsel %vm2590, %v2597, %v2599
      %v2601 = vsel %vm2589, %v2579, %v2582
      %v2602 = vsel %vm2592, %v2588, 1326507024
      %v2603 = vsel %vm2591, %v2585, %v2602
      %v2604 = vsel %vm2590, %v2601, %v2603
      %v2605 = vshll.u32 %v2565, 8
      %v2606 = vmul.u32.u64.compose %v2605, %v2604
      %v2607 = vextract.low.u32 %v2606
      %v2608 = vextract.high.u32 %v2606
      %v2609 = vmul.u32.u64.compose %v2605, %v2600
      %v2610 = vextract.low.u32 %v2609
      %v2611 = vextract.high.u32 %v2609
      %v2612 = vmul.u32 %v2605, %v2596
      %v2613 = vadd.s32 %v2608, %v2610
      %vm2614 = vc.u32 %v2608, %v2610
      %v2615 = vadd.s32 %v2611, 1
      %v2616 = vsel %vm2614, %v2615, %v2611
      %v2617 = vadd.s32 %v2612, %v2616
      %v2618 = vadd.s32 %v2617, 536870912
      %v2619 = vshrl.u32 %v2618, 30
      %v2620 = vshll.u32 %v2619, 30
      %v2621 = vsub.s32 %v2617, %v2620
      %vm2622 = vcmp.lt.s32.totalorder %v2621, 0
      %v2623 = vsub.s32 0, %v2621
      %v2624 = vsel %vm2622, %v2623, %v2621
      %v2625 = vclz %v2624
      %v2626 = vsub.s32 %v2625, 2
      %vm2627 = vcmp.gt.s32.totalorder 0, %v2626
      %v2628 = vsel %vm2627, 0, %v2626
      %v2629 = vsub.s32 32, %v2628
      %v2630 = vshll.u32 %v2621, %v2628
      %v2631 = vshrl.u32 %v2613, %v2629
      %v2632 = vor.u32 %v2630, %v2631
      %v2633 = vsub.s32 4294967266, %v2628
      %v2634 = vadd.s32 %v2633, 127
      %v2635 = vshll.u32 %v2634, 23
      %v2636 = vor.u32 4788187, %v2635
      %v2637 = vand.u32 2147483647, %v2636
      %v2639 = vcvt.s32.f32 %v2632
      %v2640 = vmul.f32 %v2639, %v2637
      %v2641 = vxor.u32 %v2640, 2147483648
      %v2642 = vsel %vm2559, %v2641, %v2640
      %v2643 = vsub.s32 4, %v2619
      %v2644 = vsel %vm2559, %v2643, %v2619
      %v2645 = vsel %vm2558, %v286, %v2642
      %v2646 = vsel %vm2558, 0, %v2644
      %v2647 = vcosq.f32.pop %v2645
      %v2648 = vsinq.f32.pop %v2645
      %vm2649 = vweird.f32 %v286
      %v2650 = vand.u32 %v2646, 3
      %vm2651 = vcmp.lt.s32.totalorder %v2650, 2
      %vm2652 = vcmp.eq.s32.totalorder %v2650, 0
      %v2653 = vxor.u32 %v2648, 2147483648
      %v2654 = vsel %vm2652, %v2647, %v2653
      %vm2655 = vcmp.eq.s32.totalorder %v2650, 2
      %v2656 = vxor.u32 %v2647, 2147483648
      %v2657 = vsel %vm2655, %v2656, %v2648
      %v2658 = vsel %vm2651, %v2654, %v2657
      %v2659 = vsel %vm2649, nan, %v2658
      %v2660 = vand.u32 2147483647, %v287
      %vm2661 = vcmp.le.f32.partialorder %v2660, 0.7853982
      %vm2662 = vcmp.lt.s32.totalorder %v287, 0
      %v2663 = vand.u32 %v287, 2139095040
      %v2664 = vshrl.u32 %v2663, 23
      %v2665 = vsub.s32 %v2664, 127
      %v2666 = vand.u32 2147483647, %v287
      %v2667 = vand.u32 %v2666, 8388607
      %v2668 = vor.u32 %v2667, 8388608
      %v2669 = vsub.s32 0, %v2668
      %v2670 = vadd.s32 %v2665, 1
      %vm2671 = vcmp.gt.s32.totalorder %v2670, 0
      %v2672 = vsel %vm2671, %v2670, 0
      %v2673 = vshrl.u32 %v2672, 5
      %v2674 = vand.u32 %v2672, 31
      %v2675 = vsub.s32 32, %v2674
      %v2676 = vshrl.u32 683565275, %v2675
      %v2677 = vshll.u32 683565275, %v2674
      %v2678 = vshrl.u32 2475754826, %v2675
      %v2679 = vor.u32 %v2677, %v2678
      %v2680 = vshll.u32 2475754826, %v2674
      %v2681 = vshrl.u32 2131351028, %v2675
      %v2682 = vor.u32 %v2680, %v2681
      %v2683 = vshll.u32 2131351028, %v2674
      %v2684 = vshrl.u32 2102212464, %v2675
      %v2685 = vor.u32 %v2683, %v2684
      %v2686 = vshll.u32 2102212464, %v2674
      %v2687 = vshrl.u32 920167782, %v2675
      %v2688 = vor.u32 %v2686, %v2687
      %v2689 = vshll.u32 920167782, %v2674
      %v2690 = vshrl.u32 1326507024, %v2675
      %v2691 = vor.u32 %v2689, %v2690
      %vm2692 = vcmp.lt.s32.totalorder %v2673, 1
      %vm2693 = vcmp.lt.s32.totalorder %v2673, 2
      %vm2694 = vcmp.lt.s32.totalorder %v2673, 3
      %vm2695 = vcmp.lt.s32.totalorder %v2673, 4
      %v2696 = vsel %vm2692, %v2676, %v2679
      %v2697 = vsel %vm2695, %v2685, 2102212464
      %v2698 = vsel %vm2694, %v2682, %v2697
      %v2699 = vsel %vm2693, %v2696, %v2698
      %v2700 = vsel %vm2692, %v2679, %v2682
      %v2701 = vsel %vm2695, %v2688, 920167782
      %v2702 = vsel %vm2694, %v2685, %v2701
      %v2703 = vsel %vm2693, %v2700, %v2702
      %v2704 = vsel %vm2692, %v2682, %v2685
      %v2705 = vsel %vm2695, %v2691, 1326507024
      %v2706 = vsel %vm2694, %v2688, %v2705
      %v2707 = vsel %vm2693, %v2704, %v2706
      %v2708 = vshll.u32 %v2668, 8
      %v2709 = vmul.u32.u64.compose %v2708, %v2707
      %v2710 = vextract.low.u32 %v2709
      %v2711 = vextract.high.u32 %v2709
      %v2712 = vmul.u32.u64.compose %v2708, %v2703
      %v2713 = vextract.low.u32 %v2712
      %v2714 = vextract.high.u32 %v2712
      %v2715 = vmul.u32 %v2708, %v2699
      %v2716 = vadd.s32 %v2711, %v2713
      %vm2717 = vc.u32 %v2711, %v2713
      %v2718 = vadd.s32 %v2714, 1
      %v2719 = vsel %vm2717, %v2718, %v2714
      %v2720 = vadd.s32 %v2715, %v2719
      %v2721 = vadd.s32 %v2720, 536870912
      %v2722 = vshrl.u32 %v2721, 30
      %v2723 = vshll.u32 %v2722, 30
      %v2724 = vsub.s32 %v2720, %v2723
      %vm2725 = vcmp.lt.s32.totalorder %v2724, 0
      %v2726 = vsub.s32 0, %v2724
      %v2727 = vsel %vm2725, %v2726, %v2724
      %v2728 = vclz %v2727
      %v2729 = vsub.s32 %v2728, 2
      %vm2730 = vcmp.gt.s32.totalorder 0, %v2729
      %v2731 = vsel %vm2730, 0, %v2729
      %v2732 = vsub.s32 32, %v2731
      %v2733 = vshll.u32 %v2724, %v2731
      %v2734 = vshrl.u32 %v2716, %v2732
      %v2735 = vor.u32 %v2733, %v2734
      %v2736 = vsub.s32 4294967266, %v2731
      %v2737 = vadd.s32 %v2736, 127
      %v2738 = vshll.u32 %v2737, 23
      %v2739 = vor.u32 4788187, %v2738
      %v2740 = vand.u32 2147483647, %v2739
      %v2742 = vcvt.s32.f32 %v2735
      %v2743 = vmul.f32 %v2742, %v2740
      %v2744 = vxor.u32 %v2743, 2147483648
      %v2745 = vsel %vm2662, %v2744, %v2743
      %v2746 = vsub.s32 4, %v2722
      %v2747 = vsel %vm2662, %v2746, %v2722
      %v2748 = vsel %vm2661, %v287, %v2745
      %v2749 = vsel %vm2661, 0, %v2747
      %v2750 = vcosq.f32.pop %v2748
      %v2751 = vsinq.f32.pop %v2748
      %vm2752 = vweird.f32 %v287
      %v2753 = vand.u32 %v2749, 3
      %vm2754 = vcmp.lt.s32.totalorder %v2753, 2
      %vm2755 = vcmp.eq.s32.totalorder %v2753, 0
      %v2756 = vxor.u32 %v2751, 2147483648
      %v2757 = vsel %vm2755, %v2750, %v2756
      %vm2758 = vcmp.eq.s32.totalorder %v2753, 2
      %v2759 = vxor.u32 %v2750, 2147483648
      %v2760 = vsel %vm2758, %v2759, %v2751
      %v2761 = vsel %vm2754, %v2757, %v2760
      %v2762 = vsel %vm2752, nan, %v2761
      %v2763 = vand.u32 2147483647, %v288
      %vm2764 = vcmp.le.f32.partialorder %v2763, 0.7853982
      %vm2765 = vcmp.lt.s32.totalorder %v288, 0
      %v2766 = vand.u32 %v288, 2139095040
      %v2767 = vshrl.u32 %v2766, 23
      %v2768 = vsub.s32 %v2767, 127
      %v2769 = vand.u32 2147483647, %v288
      %v2770 = vand.u32 %v2769, 8388607
      %v2771 = vor.u32 %v2770, 8388608
      %v2772 = vsub.s32 0, %v2771
      %v2773 = vadd.s32 %v2768, 1
      %vm2774 = vcmp.gt.s32.totalorder %v2773, 0
      %v2775 = vsel %vm2774, %v2773, 0
      %v2776 = vshrl.u32 %v2775, 5
      %v2777 = vand.u32 %v2775, 31
      %v2778 = vsub.s32 32, %v2777
      %v2779 = vshrl.u32 683565275, %v2778
      %v2780 = vshll.u32 683565275, %v2777
      %v2781 = vshrl.u32 2475754826, %v2778
      %v2782 = vor.u32 %v2780, %v2781
      %v2783 = vshll.u32 2475754826, %v2777
      %v2784 = vshrl.u32 2131351028, %v2778
      %v2785 = vor.u32 %v2783, %v2784
      %v2786 = vshll.u32 2131351028, %v2777
      %v2787 = vshrl.u32 2102212464, %v2778
      %v2788 = vor.u32 %v2786, %v2787
      %v2789 = vshll.u32 2102212464, %v2777
      %v2790 = vshrl.u32 920167782, %v2778
      %v2791 = vor.u32 %v2789, %v2790
      %v2792 = vshll.u32 920167782, %v2777
      %v2793 = vshrl.u32 1326507024, %v2778
      %v2794 = vor.u32 %v2792, %v2793
      %vm2795 = vcmp.lt.s32.totalorder %v2776, 1
      %vm2796 = vcmp.lt.s32.totalorder %v2776, 2
      %vm2797 = vcmp.lt.s32.totalorder %v2776, 3
      %vm2798 = vcmp.lt.s32.totalorder %v2776, 4
      %v2799 = vsel %vm2795, %v2779, %v2782
      %v2800 = vsel %vm2798, %v2788, 2102212464
      %v2801 = vsel %vm2797, %v2785, %v2800
      %v2802 = vsel %vm2796, %v2799, %v2801
      %v2803 = vsel %vm2795, %v2782, %v2785
      %v2804 = vsel %vm2798, %v2791, 920167782
      %v2805 = vsel %vm2797, %v2788, %v2804
      %v2806 = vsel %vm2796, %v2803, %v2805
      %v2807 = vsel %vm2795, %v2785, %v2788
      %v2808 = vsel %vm2798, %v2794, 1326507024
      %v2809 = vsel %vm2797, %v2791, %v2808
      %v2810 = vsel %vm2796, %v2807, %v2809
      %v2811 = vshll.u32 %v2771, 8
      %v2812 = vmul.u32.u64.compose %v2811, %v2810
      %v2813 = vextract.low.u32 %v2812
      %v2814 = vextract.high.u32 %v2812
      %v2815 = vmul.u32.u64.compose %v2811, %v2806
      %v2816 = vextract.low.u32 %v2815
      %v2817 = vextract.high.u32 %v2815
      %v2818 = vmul.u32 %v2811, %v2802
      %v2819 = vadd.s32 %v2814, %v2816
      %vm2820 = vc.u32 %v2814, %v2816
      %v2821 = vadd.s32 %v2817, 1
      %v2822 = vsel %vm2820, %v2821, %v2817
      %v2823 = vadd.s32 %v2818, %v2822
      %v2824 = vadd.s32 %v2823, 536870912
      %v2825 = vshrl.u32 %v2824, 30
      %v2826 = vshll.u32 %v2825, 30
      %v2827 = vsub.s32 %v2823, %v2826
      %vm2828 = vcmp.lt.s32.totalorder %v2827, 0
      %v2829 = vsub.s32 0, %v2827
      %v2830 = vsel %vm2828, %v2829, %v2827
      %v2831 = vclz %v2830
      %v2832 = vsub.s32 %v2831, 2
      %vm2833 = vcmp.gt.s32.totalorder 0, %v2832
      %v2834 = vsel %vm2833, 0, %v2832
      %v2835 = vsub.s32 32, %v2834
      %v2836 = vshll.u32 %v2827, %v2834
      %v2837 = vshrl.u32 %v2819, %v2835
      %v2838 = vor.u32 %v2836, %v2837
      %v2839 = vsub.s32 4294967266, %v2834
      %v2840 = vadd.s32 %v2839, 127
      %v2841 = vshll.u32 %v2840, 23
      %v2842 = vor.u32 4788187, %v2841
      %v2843 = vand.u32 2147483647, %v2842
      %v2845 = vcvt.s32.f32 %v2838
      %v2846 = vmul.f32 %v2845, %v2843
      %v2847 = vxor.u32 %v2846, 2147483648
      %v2848 = vsel %vm2765, %v2847, %v2846
      %v2849 = vsub.s32 4, %v2825
      %v2850 = vsel %vm2765, %v2849, %v2825
      %v2851 = vsel %vm2764, %v288, %v2848
      %v2852 = vsel %vm2764, 0, %v2850
      %v2853 = vcosq.f32.pop %v2851
      %v2854 = vsinq.f32.pop %v2851
      %vm2855 = vweird.f32 %v288
      %v2856 = vand.u32 %v2852, 3
      %vm2857 = vcmp.lt.s32.totalorder %v2856, 2
      %vm2858 = vcmp.eq.s32.totalorder %v2856, 0
      %v2859 = vxor.u32 %v2854, 2147483648
      %v2860 = vsel %vm2858, %v2853, %v2859
      %vm2861 = vcmp.eq.s32.totalorder %v2856, 2
      %v2862 = vxor.u32 %v2853, 2147483648
      %v2863 = vsel %vm2861, %v2862, %v2854
      %v2864 = vsel %vm2857, %v2860, %v2863
      %v2865 = vsel %vm2855, nan, %v2864
      %v2866 = vand.u32 2147483647, %v289
      %vm2867 = vcmp.le.f32.partialorder %v2866, 0.7853982
      %vm2868 = vcmp.lt.s32.totalorder %v289, 0
      %v2869 = vand.u32 %v289, 2139095040
      %v2870 = vshrl.u32 %v2869, 23
      %v2871 = vsub.s32 %v2870, 127
      %v2872 = vand.u32 2147483647, %v289
      %v2873 = vand.u32 %v2872, 8388607
      %v2874 = vor.u32 %v2873, 8388608
      %v2875 = vsub.s32 0, %v2874
      %v2876 = vadd.s32 %v2871, 1
      %vm2877 = vcmp.gt.s32.totalorder %v2876, 0
      %v2878 = vsel %vm2877, %v2876, 0
      %v2879 = vshrl.u32 %v2878, 5
      %v2880 = vand.u32 %v2878, 31
      %v2881 = vsub.s32 32, %v2880
      %v2882 = vshrl.u32 683565275, %v2881
      %v2883 = vshll.u32 683565275, %v2880
      %v2884 = vshrl.u32 2475754826, %v2881
      %v2885 = vor.u32 %v2883, %v2884
      %v2886 = vshll.u32 2475754826, %v2880
      %v2887 = vshrl.u32 2131351028, %v2881
      %v2888 = vor.u32 %v2886, %v2887
      %v2889 = vshll.u32 2131351028, %v2880
      %v2890 = vshrl.u32 2102212464, %v2881
      %v2891 = vor.u32 %v2889, %v2890
      %v2892 = vshll.u32 2102212464, %v2880
      %v2893 = vshrl.u32 920167782, %v2881
      %v2894 = vor.u32 %v2892, %v2893
      %v2895 = vshll.u32 920167782, %v2880
      %v2896 = vshrl.u32 1326507024, %v2881
      %v2897 = vor.u32 %v2895, %v2896
      %vm2898 = vcmp.lt.s32.totalorder %v2879, 1
      %vm2899 = vcmp.lt.s32.totalorder %v2879, 2
      %vm2900 = vcmp.lt.s32.totalorder %v2879, 3
      %vm2901 = vcmp.lt.s32.totalorder %v2879, 4
      %v2902 = vsel %vm2898, %v2882, %v2885
      %v2903 = vsel %vm2901, %v2891, 2102212464
      %v2904 = vsel %vm2900, %v2888, %v2903
      %v2905 = vsel %vm2899, %v2902, %v2904
      %v2906 = vsel %vm2898, %v2885, %v2888
      %v2907 = vsel %vm2901, %v2894, 920167782
      %v2908 = vsel %vm2900, %v2891, %v2907
      %v2909 = vsel %vm2899, %v2906, %v2908
      %v2910 = vsel %vm2898, %v2888, %v2891
      %v2911 = vsel %vm2901, %v2897, 1326507024
      %v2912 = vsel %vm2900, %v2894, %v2911
      %v2913 = vsel %vm2899, %v2910, %v2912
      %v2914 = vshll.u32 %v2874, 8
      %v2915 = vmul.u32.u64.compose %v2914, %v2913
      %v2916 = vextract.low.u32 %v2915
      %v2917 = vextract.high.u32 %v2915
      %v2918 = vmul.u32.u64.compose %v2914, %v2909
      %v2919 = vextract.low.u32 %v2918
      %v2920 = vextract.high.u32 %v2918
      %v2921 = vmul.u32 %v2914, %v2905
      %v2922 = vadd.s32 %v2917, %v2919
      %vm2923 = vc.u32 %v2917, %v2919
      %v2924 = vadd.s32 %v2920, 1
      %v2925 = vsel %vm2923, %v2924, %v2920
      %v2926 = vadd.s32 %v2921, %v2925
      %v2927 = vadd.s32 %v2926, 536870912
      %v2928 = vshrl.u32 %v2927, 30
      %v2929 = vshll.u32 %v2928, 30
      %v2930 = vsub.s32 %v2926, %v2929
      %vm2931 = vcmp.lt.s32.totalorder %v2930, 0
      %v2932 = vsub.s32 0, %v2930
      %v2933 = vsel %vm2931, %v2932, %v2930
      %v2934 = vclz %v2933
      %v2935 = vsub.s32 %v2934, 2
      %vm2936 = vcmp.gt.s32.totalorder 0, %v2935
      %v2937 = vsel %vm2936, 0, %v2935
      %v2938 = vsub.s32 32, %v2937
      %v2939 = vshll.u32 %v2930, %v2937
      %v2940 = vshrl.u32 %v2922, %v2938
      %v2941 = vor.u32 %v2939, %v2940
      %v2942 = vsub.s32 4294967266, %v2937
      %v2943 = vadd.s32 %v2942, 127
      %v2944 = vshll.u32 %v2943, 23
      %v2945 = vor.u32 4788187, %v2944
      %v2946 = vand.u32 2147483647, %v2945
      %v2948 = vcvt.s32.f32 %v2941
      %v2949 = vmul.f32 %v2948, %v2946
      %v2950 = vxor.u32 %v2949, 2147483648
      %v2951 = vsel %vm2868, %v2950, %v2949
      %v2952 = vsub.s32 4, %v2928
      %v2953 = vsel %vm2868, %v2952, %v2928
      %v2954 = vsel %vm2867, %v289, %v2951
      %v2955 = vsel %vm2867, 0, %v2953
      %v2956 = vcosq.f32.pop %v2954
      %v2957 = vsinq.f32.pop %v2954
      %vm2958 = vweird.f32 %v289
      %v2959 = vand.u32 %v2955, 3
      %vm2960 = vcmp.lt.s32.totalorder %v2959, 2
      %vm2961 = vcmp.eq.s32.totalorder %v2959, 0
      %v2962 = vxor.u32 %v2957, 2147483648
      %v2963 = vsel %vm2961, %v2956, %v2962
      %vm2964 = vcmp.eq.s32.totalorder %v2959, 2
      %v2965 = vxor.u32 %v2956, 2147483648
      %v2966 = vsel %vm2964, %v2965, %v2957
      %v2967 = vsel %vm2960, %v2963, %v2966
      %v2968 = vsel %vm2958, nan, %v2967
      %v2969 = vand.u32 2147483647, %v290
      %vm2970 = vcmp.le.f32.partialorder %v2969, 0.7853982
      %vm2971 = vcmp.lt.s32.totalorder %v290, 0
      %v2972 = vand.u32 %v290, 2139095040
      %v2973 = vshrl.u32 %v2972, 23
      %v2974 = vsub.s32 %v2973, 127
      %v2975 = vand.u32 2147483647, %v290
      %v2976 = vand.u32 %v2975, 8388607
      %v2977 = vor.u32 %v2976, 8388608
      %v2978 = vsub.s32 0, %v2977
      %v2979 = vadd.s32 %v2974, 1
      %vm2980 = vcmp.gt.s32.totalorder %v2979, 0
      %v2981 = vsel %vm2980, %v2979, 0
      %v2982 = vshrl.u32 %v2981, 5
      %v2983 = vand.u32 %v2981, 31
      %v2984 = vsub.s32 32, %v2983
      %v2985 = vshrl.u32 683565275, %v2984
      %v2986 = vshll.u32 683565275, %v2983
      %v2987 = vshrl.u32 2475754826, %v2984
      %v2988 = vor.u32 %v2986, %v2987
      %v2989 = vshll.u32 2475754826, %v2983
      %v2990 = vshrl.u32 2131351028, %v2984
      %v2991 = vor.u32 %v2989, %v2990
      %v2992 = vshll.u32 2131351028, %v2983
      %v2993 = vshrl.u32 2102212464, %v2984
      %v2994 = vor.u32 %v2992, %v2993
      %v2995 = vshll.u32 2102212464, %v2983
      %v2996 = vshrl.u32 920167782, %v2984
      %v2997 = vor.u32 %v2995, %v2996
      %v2998 = vshll.u32 920167782, %v2983
      %v2999 = vshrl.u32 1326507024, %v2984
      %v3000 = vor.u32 %v2998, %v2999
      %vm3001 = vcmp.lt.s32.totalorder %v2982, 1
      %vm3002 = vcmp.lt.s32.totalorder %v2982, 2
      %vm3003 = vcmp.lt.s32.totalorder %v2982, 3
      %vm3004 = vcmp.lt.s32.totalorder %v2982, 4
      %v3005 = vsel %vm3001, %v2985, %v2988
      %v3006 = vsel %vm3004, %v2994, 2102212464
      %v3007 = vsel %vm3003, %v2991, %v3006
      %v3008 = vsel %vm3002, %v3005, %v3007
      %v3009 = vsel %vm3001, %v2988, %v2991
      %v3010 = vsel %vm3004, %v2997, 920167782
      %v3011 = vsel %vm3003, %v2994, %v3010
      %v3012 = vsel %vm3002, %v3009, %v3011
      %v3013 = vsel %vm3001, %v2991, %v2994
      %v3014 = vsel %vm3004, %v3000, 1326507024
      %v3015 = vsel %vm3003, %v2997, %v3014
      %v3016 = vsel %vm3002, %v3013, %v3015
      %v3017 = vshll.u32 %v2977, 8
      %v3018 = vmul.u32.u64.compose %v3017, %v3016
      %v3019 = vextract.low.u32 %v3018
      %v3020 = vextract.high.u32 %v3018
      %v3021 = vmul.u32.u64.compose %v3017, %v3012
      %v3022 = vextract.low.u32 %v3021
      %v3023 = vextract.high.u32 %v3021
      %v3024 = vmul.u32 %v3017, %v3008
      %v3025 = vadd.s32 %v3020, %v3022
      %vm3026 = vc.u32 %v3020, %v3022
      %v3027 = vadd.s32 %v3023, 1
      %v3028 = vsel %vm3026, %v3027, %v3023
      %v3029 = vadd.s32 %v3024, %v3028
      %v3030 = vadd.s32 %v3029, 536870912
      %v3031 = vshrl.u32 %v3030, 30
      %v3032 = vshll.u32 %v3031, 30
      %v3033 = vsub.s32 %v3029, %v3032
      %vm3034 = vcmp.lt.s32.totalorder %v3033, 0
      %v3035 = vsub.s32 0, %v3033
      %v3036 = vsel %vm3034, %v3035, %v3033
      %v3037 = vclz %v3036
      %v3038 = vsub.s32 %v3037, 2
      %vm3039 = vcmp.gt.s32.totalorder 0, %v3038
      %v3040 = vsel %vm3039, 0, %v3038
      %v3041 = vsub.s32 32, %v3040
      %v3042 = vshll.u32 %v3033, %v3040
      %v3043 = vshrl.u32 %v3025, %v3041
      %v3044 = vor.u32 %v3042, %v3043
      %v3045 = vsub.s32 4294967266, %v3040
      %v3046 = vadd.s32 %v3045, 127
      %v3047 = vshll.u32 %v3046, 23
      %v3048 = vor.u32 4788187, %v3047
      %v3049 = vand.u32 2147483647, %v3048
      %v3051 = vcvt.s32.f32 %v3044
      %v3052 = vmul.f32 %v3051, %v3049
      %v3053 = vxor.u32 %v3052, 2147483648
      %v3054 = vsel %vm2971, %v3053, %v3052
      %v3055 = vsub.s32 4, %v3031
      %v3056 = vsel %vm2971, %v3055, %v3031
      %v3057 = vsel %vm2970, %v290, %v3054
      %v3058 = vsel %vm2970, 0, %v3056
      %v3059 = vcosq.f32.pop %v3057
      %v3060 = vsinq.f32.pop %v3057
      %vm3061 = vweird.f32 %v290
      %v3062 = vand.u32 %v3058, 3
      %vm3063 = vcmp.lt.s32.totalorder %v3062, 2
      %vm3064 = vcmp.eq.s32.totalorder %v3062, 0
      %v3065 = vxor.u32 %v3060, 2147483648
      %v3066 = vsel %vm3064, %v3059, %v3065
      %vm3067 = vcmp.eq.s32.totalorder %v3062, 2
      %v3068 = vxor.u32 %v3059, 2147483648
      %v3069 = vsel %vm3067, %v3068, %v3060
      %v3070 = vsel %vm3063, %v3066, %v3069
      %v3071 = vsel %vm3061, nan, %v3070
      %v3072 = vand.u32 2147483647, %v291
      %vm3073 = vcmp.le.f32.partialorder %v3072, 0.7853982
      %vm3074 = vcmp.lt.s32.totalorder %v291, 0
      %v3075 = vand.u32 %v291, 2139095040
      %v3076 = vshrl.u32 %v3075, 23
      %v3077 = vsub.s32 %v3076, 127
      %v3078 = vand.u32 2147483647, %v291
      %v3079 = vand.u32 %v3078, 8388607
      %v3080 = vor.u32 %v3079, 8388608
      %v3081 = vsub.s32 0, %v3080
      %v3082 = vadd.s32 %v3077, 1
      %vm3083 = vcmp.gt.s32.totalorder %v3082, 0
      %v3084 = vsel %vm3083, %v3082, 0
      %v3085 = vshrl.u32 %v3084, 5
      %v3086 = vand.u32 %v3084, 31
      %v3087 = vsub.s32 32, %v3086
      %v3088 = vshrl.u32 683565275, %v3087
      %v3089 = vshll.u32 683565275, %v3086
      %v3090 = vshrl.u32 2475754826, %v3087
      %v3091 = vor.u32 %v3089, %v3090
      %v3092 = vshll.u32 2475754826, %v3086
      %v3093 = vshrl.u32 2131351028, %v3087
      %v3094 = vor.u32 %v3092, %v3093
      %v3095 = vshll.u32 2131351028, %v3086
      %v3096 = vshrl.u32 2102212464, %v3087
      %v3097 = vor.u32 %v3095, %v3096
      %v3098 = vshll.u32 2102212464, %v3086
      %v3099 = vshrl.u32 920167782, %v3087
      %v3100 = vor.u32 %v3098, %v3099
      %v3101 = vshll.u32 920167782, %v3086
      %v3102 = vshrl.u32 1326507024, %v3087
      %v3103 = vor.u32 %v3101, %v3102
      %vm3104 = vcmp.lt.s32.totalorder %v3085, 1
      %vm3105 = vcmp.lt.s32.totalorder %v3085, 2
      %vm3106 = vcmp.lt.s32.totalorder %v3085, 3
      %vm3107 = vcmp.lt.s32.totalorder %v3085, 4
      %v3108 = vsel %vm3104, %v3088, %v3091
      %v3109 = vsel %vm3107, %v3097, 2102212464
      %v3110 = vsel %vm3106, %v3094, %v3109
      %v3111 = vsel %vm3105, %v3108, %v3110
      %v3112 = vsel %vm3104, %v3091, %v3094
      %v3113 = vsel %vm3107, %v3100, 920167782
      %v3114 = vsel %vm3106, %v3097, %v3113
      %v3115 = vsel %vm3105, %v3112, %v3114
      %v3116 = vsel %vm3104, %v3094, %v3097
      %v3117 = vsel %vm3107, %v3103, 1326507024
      %v3118 = vsel %vm3106, %v3100, %v3117
      %v3119 = vsel %vm3105, %v3116, %v3118
      %v3120 = vshll.u32 %v3080, 8
      %v3121 = vmul.u32.u64.compose %v3120, %v3119
      %v3122 = vextract.low.u32 %v3121
      %v3123 = vextract.high.u32 %v3121
      %v3124 = vmul.u32.u64.compose %v3120, %v3115
      %v3125 = vextract.low.u32 %v3124
      %v3126 = vextract.high.u32 %v3124
      %v3127 = vmul.u32 %v3120, %v3111
      %v3128 = vadd.s32 %v3123, %v3125
      %vm3129 = vc.u32 %v3123, %v3125
      %v3130 = vadd.s32 %v3126, 1
      %v3131 = vsel %vm3129, %v3130, %v3126
      %v3132 = vadd.s32 %v3127, %v3131
      %v3133 = vadd.s32 %v3132, 536870912
      %v3134 = vshrl.u32 %v3133, 30
      %v3135 = vshll.u32 %v3134, 30
      %v3136 = vsub.s32 %v3132, %v3135
      %vm3137 = vcmp.lt.s32.totalorder %v3136, 0
      %v3138 = vsub.s32 0, %v3136
      %v3139 = vsel %vm3137, %v3138, %v3136
      %v3140 = vclz %v3139
      %v3141 = vsub.s32 %v3140, 2
      %vm3142 = vcmp.gt.s32.totalorder 0, %v3141
      %v3143 = vsel %vm3142, 0, %v3141
      %v3144 = vsub.s32 32, %v3143
      %v3145 = vshll.u32 %v3136, %v3143
      %v3146 = vshrl.u32 %v3128, %v3144
      %v3147 = vor.u32 %v3145, %v3146
      %v3148 = vsub.s32 4294967266, %v3143
      %v3149 = vadd.s32 %v3148, 127
      %v3150 = vshll.u32 %v3149, 23
      %v3151 = vor.u32 4788187, %v3150
      %v3152 = vand.u32 2147483647, %v3151
      %v3154 = vcvt.s32.f32 %v3147
      %v3155 = vmul.f32 %v3154, %v3152
      %v3156 = vxor.u32 %v3155, 2147483648
      %v3157 = vsel %vm3074, %v3156, %v3155
      %v3158 = vsub.s32 4, %v3134
      %v3159 = vsel %vm3074, %v3158, %v3134
      %v3160 = vsel %vm3073, %v291, %v3157
      %v3161 = vsel %vm3073, 0, %v3159
      %v3162 = vcosq.f32.pop %v3160
      %v3163 = vsinq.f32.pop %v3160
      %vm3164 = vweird.f32 %v291
      %v3165 = vand.u32 %v3161, 3
      %vm3166 = vcmp.lt.s32.totalorder %v3165, 2
      %vm3167 = vcmp.eq.s32.totalorder %v3165, 0
      %v3168 = vxor.u32 %v3163, 2147483648
      %v3169 = vsel %vm3167, %v3162, %v3168
      %vm3170 = vcmp.eq.s32.totalorder %v3165, 2
      %v3171 = vxor.u32 %v3162, 2147483648
      %v3172 = vsel %vm3170, %v3171, %v3163
      %v3173 = vsel %vm3166, %v3169, %v3172
      %v3174 = vsel %vm3164, nan, %v3173
      %v3175 = vand.u32 2147483647, %v292
      %vm3176 = vcmp.le.f32.partialorder %v3175, 0.7853982
      %vm3177 = vcmp.lt.s32.totalorder %v292, 0
      %v3178 = vand.u32 %v292, 2139095040
      %v3179 = vshrl.u32 %v3178, 23
      %v3180 = vsub.s32 %v3179, 127
      %v3181 = vand.u32 2147483647, %v292
      %v3182 = vand.u32 %v3181, 8388607
      %v3183 = vor.u32 %v3182, 8388608
      %v3184 = vsub.s32 0, %v3183
      %v3185 = vadd.s32 %v3180, 1
      %vm3186 = vcmp.gt.s32.totalorder %v3185, 0
      %v3187 = vsel %vm3186, %v3185, 0
      %v3188 = vshrl.u32 %v3187, 5
      %v3189 = vand.u32 %v3187, 31
      %v3190 = vsub.s32 32, %v3189
      %v3191 = vshrl.u32 683565275, %v3190
      %v3192 = vshll.u32 683565275, %v3189
      %v3193 = vshrl.u32 2475754826, %v3190
      %v3194 = vor.u32 %v3192, %v3193
      %v3195 = vshll.u32 2475754826, %v3189
      %v3196 = vshrl.u32 2131351028, %v3190
      %v3197 = vor.u32 %v3195, %v3196
      %v3198 = vshll.u32 2131351028, %v3189
      %v3199 = vshrl.u32 2102212464, %v3190
      %v3200 = vor.u32 %v3198, %v3199
      %v3201 = vshll.u32 2102212464, %v3189
      %v3202 = vshrl.u32 920167782, %v3190
      %v3203 = vor.u32 %v3201, %v3202
      %v3204 = vshll.u32 920167782, %v3189
      %v3205 = vshrl.u32 1326507024, %v3190
      %v3206 = vor.u32 %v3204, %v3205
      %vm3207 = vcmp.lt.s32.totalorder %v3188, 1
      %vm3208 = vcmp.lt.s32.totalorder %v3188, 2
      %vm3209 = vcmp.lt.s32.totalorder %v3188, 3
      %vm3210 = vcmp.lt.s32.totalorder %v3188, 4
      %v3211 = vsel %vm3207, %v3191, %v3194
      %v3212 = vsel %vm3210, %v3200, 2102212464
      %v3213 = vsel %vm3209, %v3197, %v3212
      %v3214 = vsel %vm3208, %v3211, %v3213
      %v3215 = vsel %vm3207, %v3194, %v3197
      %v3216 = vsel %vm3210, %v3203, 920167782
      %v3217 = vsel %vm3209, %v3200, %v3216
      %v3218 = vsel %vm3208, %v3215, %v3217
      %v3219 = vsel %vm3207, %v3197, %v3200
      %v3220 = vsel %vm3210, %v3206, 1326507024
      %v3221 = vsel %vm3209, %v3203, %v3220
      %v3222 = vsel %vm3208, %v3219, %v3221
      %v3223 = vshll.u32 %v3183, 8
      %v3224 = vmul.u32.u64.compose %v3223, %v3222
      %v3225 = vextract.low.u32 %v3224
      %v3226 = vextract.high.u32 %v3224
      %v3227 = vmul.u32.u64.compose %v3223, %v3218
      %v3228 = vextract.low.u32 %v3227
      %v3229 = vextract.high.u32 %v3227
      %v3230 = vmul.u32 %v3223, %v3214
      %v3231 = vadd.s32 %v3226, %v3228
      %vm3232 = vc.u32 %v3226, %v3228
      %v3233 = vadd.s32 %v3229, 1
      %v3234 = vsel %vm3232, %v3233, %v3229
      %v3235 = vadd.s32 %v3230, %v3234
      %v3236 = vadd.s32 %v3235, 536870912
      %v3237 = vshrl.u32 %v3236, 30
      %v3238 = vshll.u32 %v3237, 30
      %v3239 = vsub.s32 %v3235, %v3238
      %vm3240 = vcmp.lt.s32.totalorder %v3239, 0
      %v3241 = vsub.s32 0, %v3239
      %v3242 = vsel %vm3240, %v3241, %v3239
      %v3243 = vclz %v3242
      %v3244 = vsub.s32 %v3243, 2
      %vm3245 = vcmp.gt.s32.totalorder 0, %v3244
      %v3246 = vsel %vm3245, 0, %v3244
      %v3247 = vsub.s32 32, %v3246
      %v3248 = vshll.u32 %v3239, %v3246
      %v3249 = vshrl.u32 %v3231, %v3247
      %v3250 = vor.u32 %v3248, %v3249
      %v3251 = vsub.s32 4294967266, %v3246
      %v3252 = vadd.s32 %v3251, 127
      %v3253 = vshll.u32 %v3252, 23
      %v3254 = vor.u32 4788187, %v3253
      %v3255 = vand.u32 2147483647, %v3254
      %v3257 = vcvt.s32.f32 %v3250
      %v3258 = vmul.f32 %v3257, %v3255
      %v3259 = vxor.u32 %v3258, 2147483648
      %v3260 = vsel %vm3177, %v3259, %v3258
      %v3261 = vsub.s32 4, %v3237
      %v3262 = vsel %vm3177, %v3261, %v3237
      %v3263 = vsel %vm3176, %v292, %v3260
      %v3264 = vsel %vm3176, 0, %v3262
      %v3265 = vcosq.f32.pop %v3263
      %v3266 = vsinq.f32.pop %v3263
      %vm3267 = vweird.f32 %v292
      %v3268 = vand.u32 %v3264, 3
      %vm3269 = vcmp.lt.s32.totalorder %v3268, 2
      %vm3270 = vcmp.eq.s32.totalorder %v3268, 0
      %v3271 = vxor.u32 %v3266, 2147483648
      %v3272 = vsel %vm3270, %v3265, %v3271
      %vm3273 = vcmp.eq.s32.totalorder %v3268, 2
      %v3274 = vxor.u32 %v3265, 2147483648
      %v3275 = vsel %vm3273, %v3274, %v3266
      %v3276 = vsel %vm3269, %v3272, %v3275
      %v3277 = vsel %vm3267, nan, %v3276
      %v3278 = vand.u32 2147483647, %v293
      %vm3279 = vcmp.le.f32.partialorder %v3278, 0.7853982
      %vm3280 = vcmp.lt.s32.totalorder %v293, 0
      %v3281 = vand.u32 %v293, 2139095040
      %v3282 = vshrl.u32 %v3281, 23
      %v3283 = vsub.s32 %v3282, 127
      %v3284 = vand.u32 2147483647, %v293
      %v3285 = vand.u32 %v3284, 8388607
      %v3286 = vor.u32 %v3285, 8388608
      %v3287 = vsub.s32 0, %v3286
      %v3288 = vadd.s32 %v3283, 1
      %vm3289 = vcmp.gt.s32.totalorder %v3288, 0
      %v3290 = vsel %vm3289, %v3288, 0
      %v3291 = vshrl.u32 %v3290, 5
      %v3292 = vand.u32 %v3290, 31
      %v3293 = vsub.s32 32, %v3292
      %v3294 = vshrl.u32 683565275, %v3293
      %v3295 = vshll.u32 683565275, %v3292
      %v3296 = vshrl.u32 2475754826, %v3293
      %v3297 = vor.u32 %v3295, %v3296
      %v3298 = vshll.u32 2475754826, %v3292
      %v3299 = vshrl.u32 2131351028, %v3293
      %v3300 = vor.u32 %v3298, %v3299
      %v3301 = vshll.u32 2131351028, %v3292
      %v3302 = vshrl.u32 2102212464, %v3293
      %v3303 = vor.u32 %v3301, %v3302
      %v3304 = vshll.u32 2102212464, %v3292
      %v3305 = vshrl.u32 920167782, %v3293
      %v3306 = vor.u32 %v3304, %v3305
      %v3307 = vshll.u32 920167782, %v3292
      %v3308 = vshrl.u32 1326507024, %v3293
      %v3309 = vor.u32 %v3307, %v3308
      %vm3310 = vcmp.lt.s32.totalorder %v3291, 1
      %vm3311 = vcmp.lt.s32.totalorder %v3291, 2
      %vm3312 = vcmp.lt.s32.totalorder %v3291, 3
      %vm3313 = vcmp.lt.s32.totalorder %v3291, 4
      %v3314 = vsel %vm3310, %v3294, %v3297
      %v3315 = vsel %vm3313, %v3303, 2102212464
      %v3316 = vsel %vm3312, %v3300, %v3315
      %v3317 = vsel %vm3311, %v3314, %v3316
      %v3318 = vsel %vm3310, %v3297, %v3300
      %v3319 = vsel %vm3313, %v3306, 920167782
      %v3320 = vsel %vm3312, %v3303, %v3319
      %v3321 = vsel %vm3311, %v3318, %v3320
      %v3322 = vsel %vm3310, %v3300, %v3303
      %v3323 = vsel %vm3313, %v3309, 1326507024
      %v3324 = vsel %vm3312, %v3306, %v3323
      %v3325 = vsel %vm3311, %v3322, %v3324
      %v3326 = vshll.u32 %v3286, 8
      %v3327 = vmul.u32.u64.compose %v3326, %v3325
      %v3328 = vextract.low.u32 %v3327
      %v3329 = vextract.high.u32 %v3327
      %v3330 = vmul.u32.u64.compose %v3326, %v3321
      %v3331 = vextract.low.u32 %v3330
      %v3332 = vextract.high.u32 %v3330
      %v3333 = vmul.u32 %v3326, %v3317
      %v3334 = vadd.s32 %v3329, %v3331
      %vm3335 = vc.u32 %v3329, %v3331
      %v3336 = vadd.s32 %v3332, 1
      %v3337 = vsel %vm3335, %v3336, %v3332
      %v3338 = vadd.s32 %v3333, %v3337
      %v3339 = vadd.s32 %v3338, 536870912
      %v3340 = vshrl.u32 %v3339, 30
      %v3341 = vshll.u32 %v3340, 30
      %v3342 = vsub.s32 %v3338, %v3341
      %vm3343 = vcmp.lt.s32.totalorder %v3342, 0
      %v3344 = vsub.s32 0, %v3342
      %v3345 = vsel %vm3343, %v3344, %v3342
      %v3346 = vclz %v3345
      %v3347 = vsub.s32 %v3346, 2
      %vm3348 = vcmp.gt.s32.totalorder 0, %v3347
      %v3349 = vsel %vm3348, 0, %v3347
      %v3350 = vsub.s32 32, %v3349
      %v3351 = vshll.u32 %v3342, %v3349
      %v3352 = vshrl.u32 %v3334, %v3350
      %v3353 = vor.u32 %v3351, %v3352
      %v3354 = vsub.s32 4294967266, %v3349
      %v3355 = vadd.s32 %v3354, 127
      %v3356 = vshll.u32 %v3355, 23
      %v3357 = vor.u32 4788187, %v3356
      %v3358 = vand.u32 2147483647, %v3357
      %v3360 = vcvt.s32.f32 %v3353
      %v3361 = vmul.f32 %v3360, %v3358
      %v3362 = vxor.u32 %v3361, 2147483648
      %v3363 = vsel %vm3280, %v3362, %v3361
      %v3364 = vsub.s32 4, %v3340
      %v3365 = vsel %vm3280, %v3364, %v3340
      %v3366 = vsel %vm3279, %v293, %v3363
      %v3367 = vsel %vm3279, 0, %v3365
      %v3368 = vcosq.f32.pop %v3366
      %v3369 = vsinq.f32.pop %v3366
      %vm3370 = vweird.f32 %v293
      %v3371 = vand.u32 %v3367, 3
      %vm3372 = vcmp.lt.s32.totalorder %v3371, 2
      %vm3373 = vcmp.eq.s32.totalorder %v3371, 0
      %v3374 = vxor.u32 %v3369, 2147483648
      %v3375 = vsel %vm3373, %v3368, %v3374
      %vm3376 = vcmp.eq.s32.totalorder %v3371, 2
      %v3377 = vxor.u32 %v3368, 2147483648
      %v3378 = vsel %vm3376, %v3377, %v3369
      %v3379 = vsel %vm3372, %v3375, %v3378
      %v3380 = vsel %vm3370, nan, %v3379
      %v3381 = vand.u32 2147483647, %v294
      %vm3382 = vcmp.le.f32.partialorder %v3381, 0.7853982
      %vm3383 = vcmp.lt.s32.totalorder %v294, 0
      %v3384 = vand.u32 %v294, 2139095040
      %v3385 = vshrl.u32 %v3384, 23
      %v3386 = vsub.s32 %v3385, 127
      %v3387 = vand.u32 2147483647, %v294
      %v3388 = vand.u32 %v3387, 8388607
      %v3389 = vor.u32 %v3388, 8388608
      %v3390 = vsub.s32 0, %v3389
      %v3391 = vadd.s32 %v3386, 1
      %vm3392 = vcmp.gt.s32.totalorder %v3391, 0
      %v3393 = vsel %vm3392, %v3391, 0
      %v3394 = vshrl.u32 %v3393, 5
      %v3395 = vand.u32 %v3393, 31
      %v3396 = vsub.s32 32, %v3395
      %v3397 = vshrl.u32 683565275, %v3396
      %v3398 = vshll.u32 683565275, %v3395
      %v3399 = vshrl.u32 2475754826, %v3396
      %v3400 = vor.u32 %v3398, %v3399
      %v3401 = vshll.u32 2475754826, %v3395
      %v3402 = vshrl.u32 2131351028, %v3396
      %v3403 = vor.u32 %v3401, %v3402
      %v3404 = vshll.u32 2131351028, %v3395
      %v3405 = vshrl.u32 2102212464, %v3396
      %v3406 = vor.u32 %v3404, %v3405
      %v3407 = vshll.u32 2102212464, %v3395
      %v3408 = vshrl.u32 920167782, %v3396
      %v3409 = vor.u32 %v3407, %v3408
      %v3410 = vshll.u32 920167782, %v3395
      %v3411 = vshrl.u32 1326507024, %v3396
      %v3412 = vor.u32 %v3410, %v3411
      %vm3413 = vcmp.lt.s32.totalorder %v3394, 1
      %vm3414 = vcmp.lt.s32.totalorder %v3394, 2
      %vm3415 = vcmp.lt.s32.totalorder %v3394, 3
      %vm3416 = vcmp.lt.s32.totalorder %v3394, 4
      %v3417 = vsel %vm3413, %v3397, %v3400
      %v3418 = vsel %vm3416, %v3406, 2102212464
      %v3419 = vsel %vm3415, %v3403, %v3418
      %v3420 = vsel %vm3414, %v3417, %v3419
      %v3421 = vsel %vm3413, %v3400, %v3403
      %v3422 = vsel %vm3416, %v3409, 920167782
      %v3423 = vsel %vm3415, %v3406, %v3422
      %v3424 = vsel %vm3414, %v3421, %v3423
      %v3425 = vsel %vm3413, %v3403, %v3406
      %v3426 = vsel %vm3416, %v3412, 1326507024
      %v3427 = vsel %vm3415, %v3409, %v3426
      %v3428 = vsel %vm3414, %v3425, %v3427
      %v3429 = vshll.u32 %v3389, 8
      %v3430 = vmul.u32.u64.compose %v3429, %v3428
      %v3431 = vextract.low.u32 %v3430
      %v3432 = vextract.high.u32 %v3430
      %v3433 = vmul.u32.u64.compose %v3429, %v3424
      %v3434 = vextract.low.u32 %v3433
      %v3435 = vextract.high.u32 %v3433
      %v3436 = vmul.u32 %v3429, %v3420
      %v3437 = vadd.s32 %v3432, %v3434
      %vm3438 = vc.u32 %v3432, %v3434
      %v3439 = vadd.s32 %v3435, 1
      %v3440 = vsel %vm3438, %v3439, %v3435
      %v3441 = vadd.s32 %v3436, %v3440
      %v3442 = vadd.s32 %v3441, 536870912
      %v3443 = vshrl.u32 %v3442, 30
      %v3444 = vshll.u32 %v3443, 30
      %v3445 = vsub.s32 %v3441, %v3444
      %vm3446 = vcmp.lt.s32.totalorder %v3445, 0
      %v3447 = vsub.s32 0, %v3445
      %v3448 = vsel %vm3446, %v3447, %v3445
      %v3449 = vclz %v3448
      %v3450 = vsub.s32 %v3449, 2
      %vm3451 = vcmp.gt.s32.totalorder 0, %v3450
      %v3452 = vsel %vm3451, 0, %v3450
      %v3453 = vsub.s32 32, %v3452
      %v3454 = vshll.u32 %v3445, %v3452
      %v3455 = vshrl.u32 %v3437, %v3453
      %v3456 = vor.u32 %v3454, %v3455
      %v3457 = vsub.s32 4294967266, %v3452
      %v3458 = vadd.s32 %v3457, 127
      %v3459 = vshll.u32 %v3458, 23
      %v3460 = vor.u32 4788187, %v3459
      %v3461 = vand.u32 2147483647, %v3460
      %v3463 = vcvt.s32.f32 %v3456
      %v3464 = vmul.f32 %v3463, %v3461
      %v3465 = vxor.u32 %v3464, 2147483648
      %v3466 = vsel %vm3383, %v3465, %v3464
      %v3467 = vsub.s32 4, %v3443
      %v3468 = vsel %vm3383, %v3467, %v3443
      %v3469 = vsel %vm3382, %v294, %v3466
      %v3470 = vsel %vm3382, 0, %v3468
      %v3471 = vcosq.f32.pop %v3469
      %v3472 = vsinq.f32.pop %v3469
      %vm3473 = vweird.f32 %v294
      %v3474 = vand.u32 %v3470, 3
      %vm3475 = vcmp.lt.s32.totalorder %v3474, 2
      %vm3476 = vcmp.eq.s32.totalorder %v3474, 0
      %v3477 = vxor.u32 %v3472, 2147483648
      %v3478 = vsel %vm3476, %v3471, %v3477
      %vm3479 = vcmp.eq.s32.totalorder %v3474, 2
      %v3480 = vxor.u32 %v3471, 2147483648
      %v3481 = vsel %vm3479, %v3480, %v3472
      %v3482 = vsel %vm3475, %v3478, %v3481
      %v3483 = vsel %vm3473, nan, %v3482
      %v3484 = vand.u32 2147483647, %v295
      %vm3485 = vcmp.le.f32.partialorder %v3484, 0.7853982
      %vm3486 = vcmp.lt.s32.totalorder %v295, 0
      %v3487 = vand.u32 %v295, 2139095040
      %v3488 = vshrl.u32 %v3487, 23
      %v3489 = vsub.s32 %v3488, 127
      %v3490 = vand.u32 2147483647, %v295
      %v3491 = vand.u32 %v3490, 8388607
      %v3492 = vor.u32 %v3491, 8388608
      %v3493 = vsub.s32 0, %v3492
      %v3494 = vadd.s32 %v3489, 1
      %vm3495 = vcmp.gt.s32.totalorder %v3494, 0
      %v3496 = vsel %vm3495, %v3494, 0
      %v3497 = vshrl.u32 %v3496, 5
      %v3498 = vand.u32 %v3496, 31
      %v3499 = vsub.s32 32, %v3498
      %v3500 = vshrl.u32 683565275, %v3499
      %v3501 = vshll.u32 683565275, %v3498
      %v3502 = vshrl.u32 2475754826, %v3499
      %v3503 = vor.u32 %v3501, %v3502
      %v3504 = vshll.u32 2475754826, %v3498
      %v3505 = vshrl.u32 2131351028, %v3499
      %v3506 = vor.u32 %v3504, %v3505
      %v3507 = vshll.u32 2131351028, %v3498
      %v3508 = vshrl.u32 2102212464, %v3499
      %v3509 = vor.u32 %v3507, %v3508
      %v3510 = vshll.u32 2102212464, %v3498
      %v3511 = vshrl.u32 920167782, %v3499
      %v3512 = vor.u32 %v3510, %v3511
      %v3513 = vshll.u32 920167782, %v3498
      %v3514 = vshrl.u32 1326507024, %v3499
      %v3515 = vor.u32 %v3513, %v3514
      %vm3516 = vcmp.lt.s32.totalorder %v3497, 1
      %vm3517 = vcmp.lt.s32.totalorder %v3497, 2
      %vm3518 = vcmp.lt.s32.totalorder %v3497, 3
      %vm3519 = vcmp.lt.s32.totalorder %v3497, 4
      %v3520 = vsel %vm3516, %v3500, %v3503
      %v3521 = vsel %vm3519, %v3509, 2102212464
      %v3522 = vsel %vm3518, %v3506, %v3521
      %v3523 = vsel %vm3517, %v3520, %v3522
      %v3524 = vsel %vm3516, %v3503, %v3506
      %v3525 = vsel %vm3519, %v3512, 920167782
      %v3526 = vsel %vm3518, %v3509, %v3525
      %v3527 = vsel %vm3517, %v3524, %v3526
      %v3528 = vsel %vm3516, %v3506, %v3509
      %v3529 = vsel %vm3519, %v3515, 1326507024
      %v3530 = vsel %vm3518, %v3512, %v3529
      %v3531 = vsel %vm3517, %v3528, %v3530
      %v3532 = vshll.u32 %v3492, 8
      %v3533 = vmul.u32.u64.compose %v3532, %v3531
      %v3534 = vextract.low.u32 %v3533
      %v3535 = vextract.high.u32 %v3533
      %v3536 = vmul.u32.u64.compose %v3532, %v3527
      %v3537 = vextract.low.u32 %v3536
      %v3538 = vextract.high.u32 %v3536
      %v3539 = vmul.u32 %v3532, %v3523
      %v3540 = vadd.s32 %v3535, %v3537
      %vm3541 = vc.u32 %v3535, %v3537
      %v3542 = vadd.s32 %v3538, 1
      %v3543 = vsel %vm3541, %v3542, %v3538
      %v3544 = vadd.s32 %v3539, %v3543
      %v3545 = vadd.s32 %v3544, 536870912
      %v3546 = vshrl.u32 %v3545, 30
      %v3547 = vshll.u32 %v3546, 30
      %v3548 = vsub.s32 %v3544, %v3547
      %vm3549 = vcmp.lt.s32.totalorder %v3548, 0
      %v3550 = vsub.s32 0, %v3548
      %v3551 = vsel %vm3549, %v3550, %v3548
      %v3552 = vclz %v3551
      %v3553 = vsub.s32 %v3552, 2
      %vm3554 = vcmp.gt.s32.totalorder 0, %v3553
      %v3555 = vsel %vm3554, 0, %v3553
      %v3556 = vsub.s32 32, %v3555
      %v3557 = vshll.u32 %v3548, %v3555
      %v3558 = vshrl.u32 %v3540, %v3556
      %v3559 = vor.u32 %v3557, %v3558
      %v3560 = vsub.s32 4294967266, %v3555
      %v3561 = vadd.s32 %v3560, 127
      %v3562 = vshll.u32 %v3561, 23
      %v3563 = vor.u32 4788187, %v3562
      %v3564 = vand.u32 2147483647, %v3563
      %v3566 = vcvt.s32.f32 %v3559
      %v3567 = vmul.f32 %v3566, %v3564
      %v3568 = vxor.u32 %v3567, 2147483648
      %v3569 = vsel %vm3486, %v3568, %v3567
      %v3570 = vsub.s32 4, %v3546
      %v3571 = vsel %vm3486, %v3570, %v3546
      %v3572 = vsel %vm3485, %v295, %v3569
      %v3573 = vsel %vm3485, 0, %v3571
      %v3574 = vcosq.f32.pop %v3572
      %v3575 = vsinq.f32.pop %v3572
      %vm3576 = vweird.f32 %v295
      %v3577 = vand.u32 %v3573, 3
      %vm3578 = vcmp.lt.s32.totalorder %v3577, 2
      %vm3579 = vcmp.eq.s32.totalorder %v3577, 0
      %v3580 = vxor.u32 %v3575, 2147483648
      %v3581 = vsel %vm3579, %v3574, %v3580
      %vm3582 = vcmp.eq.s32.totalorder %v3577, 2
      %v3583 = vxor.u32 %v3574, 2147483648
      %v3584 = vsel %vm3582, %v3583, %v3575
      %v3585 = vsel %vm3578, %v3581, %v3584
      %v3586 = vsel %vm3576, nan, %v3585
      %v3587 = vand.u32 2147483647, %v296
      %vm3588 = vcmp.le.f32.partialorder %v3587, 0.7853982
      %vm3589 = vcmp.lt.s32.totalorder %v296, 0
      %v3590 = vand.u32 %v296, 2139095040
      %v3591 = vshrl.u32 %v3590, 23
      %v3592 = vsub.s32 %v3591, 127
      %v3593 = vand.u32 2147483647, %v296
      %v3594 = vand.u32 %v3593, 8388607
      %v3595 = vor.u32 %v3594, 8388608
      %v3596 = vsub.s32 0, %v3595
      %v3597 = vadd.s32 %v3592, 1
      %vm3598 = vcmp.gt.s32.totalorder %v3597, 0
      %v3599 = vsel %vm3598, %v3597, 0
      %v3600 = vshrl.u32 %v3599, 5
      %v3601 = vand.u32 %v3599, 31
      %v3602 = vsub.s32 32, %v3601
      %v3603 = vshrl.u32 683565275, %v3602
      %v3604 = vshll.u32 683565275, %v3601
      %v3605 = vshrl.u32 2475754826, %v3602
      %v3606 = vor.u32 %v3604, %v3605
      %v3607 = vshll.u32 2475754826, %v3601
      %v3608 = vshrl.u32 2131351028, %v3602
      %v3609 = vor.u32 %v3607, %v3608
      %v3610 = vshll.u32 2131351028, %v3601
      %v3611 = vshrl.u32 2102212464, %v3602
      %v3612 = vor.u32 %v3610, %v3611
      %v3613 = vshll.u32 2102212464, %v3601
      %v3614 = vshrl.u32 920167782, %v3602
      %v3615 = vor.u32 %v3613, %v3614
      %v3616 = vshll.u32 920167782, %v3601
      %v3617 = vshrl.u32 1326507024, %v3602
      %v3618 = vor.u32 %v3616, %v3617
      %vm3619 = vcmp.lt.s32.totalorder %v3600, 1
      %vm3620 = vcmp.lt.s32.totalorder %v3600, 2
      %vm3621 = vcmp.lt.s32.totalorder %v3600, 3
      %vm3622 = vcmp.lt.s32.totalorder %v3600, 4
      %v3623 = vsel %vm3619, %v3603, %v3606
      %v3624 = vsel %vm3622, %v3612, 2102212464
      %v3625 = vsel %vm3621, %v3609, %v3624
      %v3626 = vsel %vm3620, %v3623, %v3625
      %v3627 = vsel %vm3619, %v3606, %v3609
      %v3628 = vsel %vm3622, %v3615, 920167782
      %v3629 = vsel %vm3621, %v3612, %v3628
      %v3630 = vsel %vm3620, %v3627, %v3629
      %v3631 = vsel %vm3619, %v3609, %v3612
      %v3632 = vsel %vm3622, %v3618, 1326507024
      %v3633 = vsel %vm3621, %v3615, %v3632
      %v3634 = vsel %vm3620, %v3631, %v3633
      %v3635 = vshll.u32 %v3595, 8
      %v3636 = vmul.u32.u64.compose %v3635, %v3634
      %v3637 = vextract.low.u32 %v3636
      %v3638 = vextract.high.u32 %v3636
      %v3639 = vmul.u32.u64.compose %v3635, %v3630
      %v3640 = vextract.low.u32 %v3639
      %v3641 = vextract.high.u32 %v3639
      %v3642 = vmul.u32 %v3635, %v3626
      %v3643 = vadd.s32 %v3638, %v3640
      %vm3644 = vc.u32 %v3638, %v3640
      %v3645 = vadd.s32 %v3641, 1
      %v3646 = vsel %vm3644, %v3645, %v3641
      %v3647 = vadd.s32 %v3642, %v3646
      %v3648 = vadd.s32 %v3647, 536870912
      %v3649 = vshrl.u32 %v3648, 30
      %v3650 = vshll.u32 %v3649, 30
      %v3651 = vsub.s32 %v3647, %v3650
      %vm3652 = vcmp.lt.s32.totalorder %v3651, 0
      %v3653 = vsub.s32 0, %v3651
      %v3654 = vsel %vm3652, %v3653, %v3651
      %v3655 = vclz %v3654
      %v3656 = vsub.s32 %v3655, 2
      %vm3657 = vcmp.gt.s32.totalorder 0, %v3656
      %v3658 = vsel %vm3657, 0, %v3656
      %v3659 = vsub.s32 32, %v3658
      %v3660 = vshll.u32 %v3651, %v3658
      %v3661 = vshrl.u32 %v3643, %v3659
      %v3662 = vor.u32 %v3660, %v3661
      %v3663 = vsub.s32 4294967266, %v3658
      %v3664 = vadd.s32 %v3663, 127
      %v3665 = vshll.u32 %v3664, 23
      %v3666 = vor.u32 4788187, %v3665
      %v3667 = vand.u32 2147483647, %v3666
      %v3669 = vcvt.s32.f32 %v3662
      %v3670 = vmul.f32 %v3669, %v3667
      %v3671 = vxor.u32 %v3670, 2147483648
      %v3672 = vsel %vm3589, %v3671, %v3670
      %v3673 = vsub.s32 4, %v3649
      %v3674 = vsel %vm3589, %v3673, %v3649
      %v3675 = vsel %vm3588, %v296, %v3672
      %v3676 = vsel %vm3588, 0, %v3674
      %v3677 = vcosq.f32.pop %v3675
      %v3678 = vsinq.f32.pop %v3675
      %vm3679 = vweird.f32 %v296
      %v3680 = vand.u32 %v3676, 3
      %vm3681 = vcmp.lt.s32.totalorder %v3680, 2
      %vm3682 = vcmp.eq.s32.totalorder %v3680, 0
      %v3683 = vxor.u32 %v3678, 2147483648
      %v3684 = vsel %vm3682, %v3677, %v3683
      %vm3685 = vcmp.eq.s32.totalorder %v3680, 2
      %v3686 = vxor.u32 %v3677, 2147483648
      %v3687 = vsel %vm3685, %v3686, %v3678
      %v3688 = vsel %vm3681, %v3684, %v3687
      %v3689 = vsel %vm3679, nan, %v3688
      %3706 = vrot.lane.b32.xlu0 %v2144, 10
      %v3707 = vpop.permute.xlu0 %3706
      %3708 = vrot.lane.b32.xlu0 %v2247, 10
      %v3709 = vpop.permute.xlu0 %3708
      %3710 = vrot.lane.b32.xlu0 %v2350, 10
      %v3711 = vpop.permute.xlu0 %3710
      %3712 = vrot.lane.b32.xlu0 %v2453, 10
      %v3713 = vpop.permute.xlu0 %3712
      %3714 = vrot.lane.b32.xlu0 %v2556, 10
      %v3715 = vpop.permute.xlu0 %3714
      %3716 = vrot.lane.b32.xlu0 %v2659, 10
      %v3717 = vpop.permute.xlu0 %3716
      %3718 = vrot.lane.b32.xlu0 %v2762, 10
      %v3719 = vpop.permute.xlu0 %3718
      %3720 = vrot.lane.b32.xlu0 %v2865, 10
      %v3721 = vpop.permute.xlu0 %3720
      %3722 = vrot.lane.b32.xlu0 %v2968, 10
      %v3723 = vpop.permute.xlu0 %3722
      %3724 = vrot.lane.b32.xlu0 %v3071, 10
      %v3725 = vpop.permute.xlu0 %3724
      %3726 = vrot.lane.b32.xlu0 %v3174, 10
      %v3727 = vpop.permute.xlu0 %3726
      %3728 = vrot.lane.b32.xlu0 %v3277, 10
      %v3729 = vpop.permute.xlu0 %3728
      %3730 = vrot.lane.b32.xlu0 %v3380, 10
      %v3731 = vpop.permute.xlu0 %3730
      %3732 = vrot.lane.b32.xlu0 %v3483, 10
      %v3733 = vpop.permute.xlu0 %3732
      %3734 = vrot.lane.b32.xlu0 %v3586, 10
      %v3735 = vpop.permute.xlu0 %3734
      %3736 = vrot.lane.b32.xlu0 %v3689, 10
      %v3737 = vpop.permute.xlu0 %3736
      %vm3754 = vcmask 113744
      %3755 = vst.msk [vmem:[%s145] sm:$0xff] %vm3754, %v3707
      %3756 = vst.msk [vmem:[%s145 + $0x8] sm:$0xff] %vm3754, %v3709
      %3757 = vst.msk [vmem:[%s145 + $0x10] sm:$0xff] %vm3754, %v3711
      %3758 = vst.msk [vmem:[%s145 + $0x18] sm:$0xff] %vm3754, %v3713
      %3759 = vst.msk [vmem:[%s145 + $0x20] sm:$0xff] %vm3754, %v3715
      %3760 = vst.msk [vmem:[%s145 + $0x28] sm:$0xff] %vm3754, %v3717
      %3761 = vst.msk [vmem:[%s145 + $0x30] sm:$0xff] %vm3754, %v3719
      %3762 = vst.msk [vmem:[%s145 + $0x38] sm:$0xff] %vm3754, %v3721
      %3763 = vst.msk [vmem:[%s145 + $0x40] sm:$0xff] %vm3754, %v3723
      %3764 = vst.msk [vmem:[%s145 + $0x48] sm:$0xff] %vm3754, %v3725
      %3765 = vst.msk [vmem:[%s145 + $0x50] sm:$0xff] %vm3754, %v3727
      %3766 = vst.msk [vmem:[%s145 + $0x58] sm:$0xff] %vm3754, %v3729
      %3767 = vst.msk [vmem:[%s145 + $0x60] sm:$0xff] %vm3754, %v3731
      %3768 = vst.msk [vmem:[%s145 + $0x68] sm:$0xff] %vm3754, %v3733
      %3769 = vst.msk [vmem:[%s145 + $0x70] sm:$0xff] %vm3754, %v3735
      %3770 = vst.msk [vmem:[%s145 + $0x78] sm:$0xff] %vm3754, %v3737
      %v3771 = vld [vmem:[%s1 + $0x1] sm:$0x1]
      %v3772 = vld [vmem:[%s139] sm:$0xff]
      %v3773 = vld [vmem:[%s139 + $0x8] sm:$0xff]
      %v3774 = vld [vmem:[%s139 + $0x10] sm:$0xff]
      %v3775 = vld [vmem:[%s139 + $0x18] sm:$0xff]
      %v3776 = vld [vmem:[%s139 + $0x20] sm:$0xff]
      %v3777 = vld [vmem:[%s139 + $0x28] sm:$0xff]
      %v3778 = vld [vmem:[%s139 + $0x30] sm:$0xff]
      %v3779 = vld [vmem:[%s139 + $0x38] sm:$0xff]
      %v3780 = vld [vmem:[%s139 + $0x40] sm:$0xff]
      %v3781 = vld [vmem:[%s139 + $0x48] sm:$0xff]
      %v3782 = vld [vmem:[%s139 + $0x50] sm:$0xff]
      %v3783 = vld [vmem:[%s139 + $0x58] sm:$0xff]
      %v3784 = vld [vmem:[%s139 + $0x60] sm:$0xff]
      %v3785 = vld [vmem:[%s139 + $0x68] sm:$0xff]
      %v3786 = vld [vmem:[%s139 + $0x70] sm:$0xff]
      %v3787 = vld [vmem:[%s139 + $0x78] sm:$0xff]
      %3789 = vset.pattern.permute.xlu0 1
      %3790 = vperm.xlu0 %3789, %v3772
      %v3791 = vpop.permute.xlu0 %3790
      %3794 = vset.pattern.permute.xlu0 1
      %3795 = vperm.xlu0 %3794, %v3773
      %v3796 = vpop.permute.xlu0 %3795
      %3799 = vset.pattern.permute.xlu0 1
      %3800 = vperm.xlu0 %3799, %v3774
      %v3801 = vpop.permute.xlu0 %3800
      %3804 = vset.pattern.permute.xlu0 1
      %3805 = vperm.xlu0 %3804, %v3775
      %v3806 = vpop.permute.xlu0 %3805
      %3809 = vset.pattern.permute.xlu0 1
      %3810 = vperm.xlu0 %3809, %v3776
      %v3811 = vpop.permute.xlu0 %3810
      %3814 = vset.pattern.permute.xlu0 1
      %3815 = vperm.xlu0 %3814, %v3777
      %v3816 = vpop.permute.xlu0 %3815
      %3819 = vset.pattern.permute.xlu0 1
      %3820 = vperm.xlu0 %3819, %v3778
      %v3821 = vpop.permute.xlu0 %3820
      %3824 = vset.pattern.permute.xlu0 1
      %3825 = vperm.xlu0 %3824, %v3779
      %v3826 = vpop.permute.xlu0 %3825
      %3829 = vset.pattern.permute.xlu0 1
      %3830 = vperm.xlu0 %3829, %v3780
      %v3831 = vpop.permute.xlu0 %3830
      %3834 = vset.pattern.permute.xlu0 1
      %3835 = vperm.xlu0 %3834, %v3781
      %v3836 = vpop.permute.xlu0 %3835
      %3839 = vset.pattern.permute.xlu0 1
      %3840 = vperm.xlu0 %3839, %v3782
      %v3841 = vpop.permute.xlu0 %3840
      %3844 = vset.pattern.permute.xlu0 1
      %3845 = vperm.xlu0 %3844, %v3783
      %v3846 = vpop.permute.xlu0 %3845
      %3849 = vset.pattern.permute.xlu0 1
      %3850 = vperm.xlu0 %3849, %v3784
      %v3851 = vpop.permute.xlu0 %3850
      %3854 = vset.pattern.permute.xlu0 1
      %3855 = vperm.xlu0 %3854, %v3785
      %v3856 = vpop.permute.xlu0 %3855
      %3859 = vset.pattern.permute.xlu0 1
      %3860 = vperm.xlu0 %3859, %v3786
      %v3861 = vpop.permute.xlu0 %3860
      %3864 = vset.pattern.permute.xlu0 1
      %3865 = vperm.xlu0 %3864, %v3787
      %v3866 = vpop.permute.xlu0 %3865
      %v3868 = vlaneseq
      %v3869 = vshrl.u32 %v3868, 7
      %v3870 = vsub.s32 0, %v3869
      %v3871 = vrot.slane %v3771, %v3870
      %v3872 = vmul.f32 %v3791, %v3871
      %v3873 = vmul.f32 %v3796, %v3871
      %v3874 = vmul.f32 %v3801, %v3871
      %v3875 = vmul.f32 %v3806, %v3871
      %v3876 = vmul.f32 %v3811, %v3871
      %v3877 = vmul.f32 %v3816, %v3871
      %v3878 = vmul.f32 %v3821, %v3871
      %v3879 = vmul.f32 %v3826, %v3871
      %v3880 = vmul.f32 %v3831, %v3871
      %v3881 = vmul.f32 %v3836, %v3871
      %v3882 = vmul.f32 %v3841, %v3871
      %v3883 = vmul.f32 %v3846, %v3871
      %v3884 = vmul.f32 %v3851, %v3871
      %v3885 = vmul.f32 %v3856, %v3871
      %v3886 = vmul.f32 %v3861, %v3871
      %v3887 = vmul.f32 %v3866, %v3871
      %v3888 = vand.u32 2147483647, %v3872
      %vm3889 = vcmp.le.f32.partialorder %v3888, 0.7853982
      %vm3890 = vcmp.lt.s32.totalorder %v3872, 0
      %v3891 = vand.u32 %v3872, 2139095040
      %v3892 = vshrl.u32 %v3891, 23
      %v3893 = vsub.s32 %v3892, 127
      %v3894 = vand.u32 2147483647, %v3872
      %v3895 = vand.u32 %v3894, 8388607
      %v3896 = vor.u32 %v3895, 8388608
      %v3897 = vsub.s32 0, %v3896
      %v3898 = vadd.s32 %v3893, 1
      %vm3899 = vcmp.gt.s32.totalorder %v3898, 0
      %v3900 = vsel %vm3899, %v3898, 0
      %v3901 = vshrl.u32 %v3900, 5
      %v3902 = vand.u32 %v3900, 31
      %v3903 = vsub.s32 32, %v3902
      %v3904 = vshrl.u32 683565275, %v3903
      %v3905 = vshll.u32 683565275, %v3902
      %v3906 = vshrl.u32 2475754826, %v3903
      %v3907 = vor.u32 %v3905, %v3906
      %v3908 = vshll.u32 2475754826, %v3902
      %v3909 = vshrl.u32 2131351028, %v3903
      %v3910 = vor.u32 %v3908, %v3909
      %v3911 = vshll.u32 2131351028, %v3902
      %v3912 = vshrl.u32 2102212464, %v3903
      %v3913 = vor.u32 %v3911, %v3912
      %v3914 = vshll.u32 2102212464, %v3902
      %v3915 = vshrl.u32 920167782, %v3903
      %v3916 = vor.u32 %v3914, %v3915
      %v3917 = vshll.u32 920167782, %v3902
      %v3918 = vshrl.u32 1326507024, %v3903
      %v3919 = vor.u32 %v3917, %v3918
      %vm3920 = vcmp.lt.s32.totalorder %v3901, 1
      %vm3921 = vcmp.lt.s32.totalorder %v3901, 2
      %vm3922 = vcmp.lt.s32.totalorder %v3901, 3
      %vm3923 = vcmp.lt.s32.totalorder %v3901, 4
      %v3924 = vsel %vm3920, %v3904, %v3907
      %v3925 = vsel %vm3923, %v3913, 2102212464
      %v3926 = vsel %vm3922, %v3910, %v3925
      %v3927 = vsel %vm3921, %v3924, %v3926
      %v3928 = vsel %vm3920, %v3907, %v3910
      %v3929 = vsel %vm3923, %v3916, 920167782
      %v3930 = vsel %vm3922, %v3913, %v3929
      %v3931 = vsel %vm3921, %v3928, %v3930
      %v3932 = vsel %vm3920, %v3910, %v3913
      %v3933 = vsel %vm3923, %v3919, 1326507024
      %v3934 = vsel %vm3922, %v3916, %v3933
      %v3935 = vsel %vm3921, %v3932, %v3934
      %v3936 = vshll.u32 %v3896, 8
      %v3937 = vmul.u32.u64.compose %v3936, %v3935
      %v3938 = vextract.low.u32 %v3937
      %v3939 = vextract.high.u32 %v3937
      %v3940 = vmul.u32.u64.compose %v3936, %v3931
      %v3941 = vextract.low.u32 %v3940
      %v3942 = vextract.high.u32 %v3940
      %v3943 = vmul.u32 %v3936, %v3927
      %v3944 = vadd.s32 %v3939, %v3941
      %vm3945 = vc.u32 %v3939, %v3941
      %v3946 = vadd.s32 %v3942, 1
      %v3947 = vsel %vm3945, %v3946, %v3942
      %v3948 = vadd.s32 %v3943, %v3947
      %v3949 = vadd.s32 %v3948, 536870912
      %v3950 = vshrl.u32 %v3949, 30
      %v3951 = vshll.u32 %v3950, 30
      %v3952 = vsub.s32 %v3948, %v3951
      %vm3953 = vcmp.lt.s32.totalorder %v3952, 0
      %v3954 = vsub.s32 0, %v3952
      %v3955 = vsel %vm3953, %v3954, %v3952
      %v3956 = vclz %v3955
      %v3957 = vsub.s32 %v3956, 2
      %vm3958 = vcmp.gt.s32.totalorder 0, %v3957
      %v3959 = vsel %vm3958, 0, %v3957
      %v3960 = vsub.s32 32, %v3959
      %v3961 = vshll.u32 %v3952, %v3959
      %v3962 = vshrl.u32 %v3944, %v3960
      %v3963 = vor.u32 %v3961, %v3962
      %v3964 = vsub.s32 4294967266, %v3959
      %v3965 = vadd.s32 %v3964, 127
      %v3966 = vshll.u32 %v3965, 23
      %v3967 = vor.u32 4788187, %v3966
      %v3968 = vand.u32 2147483647, %v3967
      %v3970 = vcvt.s32.f32 %v3963
      %v3971 = vmul.f32 %v3970, %v3968
      %v3972 = vxor.u32 %v3971, 2147483648
      %v3973 = vsel %vm3890, %v3972, %v3971
      %v3974 = vsub.s32 4, %v3950
      %v3975 = vsel %vm3890, %v3974, %v3950
      %v3976 = vsel %vm3889, %v3872, %v3973
      %v3977 = vsel %vm3889, 0, %v3975
      %v3978 = vcosq.f32.pop %v3976
      %v3979 = vsinq.f32.pop %v3976
      %vm3980 = vweird.f32 %v3872
      %v3981 = vadd.s32 %v3977, 3
      %v3982 = vand.u32 %v3981, 3
      %vm3983 = vcmp.lt.s32.totalorder %v3982, 2
      %vm3984 = vcmp.eq.s32.totalorder %v3982, 0
      %v3985 = vxor.u32 %v3979, 2147483648
      %v3986 = vsel %vm3984, %v3978, %v3985
      %vm3987 = vcmp.eq.s32.totalorder %v3982, 2
      %v3988 = vxor.u32 %v3978, 2147483648
      %v3989 = vsel %vm3987, %v3988, %v3979
      %v3990 = vsel %vm3983, %v3986, %v3989
      %v3991 = vsel %vm3980, nan, %v3990
      %v3992 = vand.u32 2147483647, %v3873
      %vm3993 = vcmp.le.f32.partialorder %v3992, 0.7853982
      %vm3994 = vcmp.lt.s32.totalorder %v3873, 0
      %v3995 = vand.u32 %v3873, 2139095040
      %v3996 = vshrl.u32 %v3995, 23
      %v3997 = vsub.s32 %v3996, 127
      %v3998 = vand.u32 2147483647, %v3873
      %v3999 = vand.u32 %v3998, 8388607
      %v4000 = vor.u32 %v3999, 8388608
      %v4001 = vsub.s32 0, %v4000
      %v4002 = vadd.s32 %v3997, 1
      %vm4003 = vcmp.gt.s32.totalorder %v4002, 0
      %v4004 = vsel %vm4003, %v4002, 0
      %v4005 = vshrl.u32 %v4004, 5
      %v4006 = vand.u32 %v4004, 31
      %v4007 = vsub.s32 32, %v4006
      %v4008 = vshrl.u32 683565275, %v4007
      %v4009 = vshll.u32 683565275, %v4006
      %v4010 = vshrl.u32 2475754826, %v4007
      %v4011 = vor.u32 %v4009, %v4010
      %v4012 = vshll.u32 2475754826, %v4006
      %v4013 = vshrl.u32 2131351028, %v4007
      %v4014 = vor.u32 %v4012, %v4013
      %v4015 = vshll.u32 2131351028, %v4006
      %v4016 = vshrl.u32 2102212464, %v4007
      %v4017 = vor.u32 %v4015, %v4016
      %v4018 = vshll.u32 2102212464, %v4006
      %v4019 = vshrl.u32 920167782, %v4007
      %v4020 = vor.u32 %v4018, %v4019
      %v4021 = vshll.u32 920167782, %v4006
      %v4022 = vshrl.u32 1326507024, %v4007
      %v4023 = vor.u32 %v4021, %v4022
      %vm4024 = vcmp.lt.s32.totalorder %v4005, 1
      %vm4025 = vcmp.lt.s32.totalorder %v4005, 2
      %vm4026 = vcmp.lt.s32.totalorder %v4005, 3
      %vm4027 = vcmp.lt.s32.totalorder %v4005, 4
      %v4028 = vsel %vm4024, %v4008, %v4011
      %v4029 = vsel %vm4027, %v4017, 2102212464
      %v4030 = vsel %vm4026, %v4014, %v4029
      %v4031 = vsel %vm4025, %v4028, %v4030
      %v4032 = vsel %vm4024, %v4011, %v4014
      %v4033 = vsel %vm4027, %v4020, 920167782
      %v4034 = vsel %vm4026, %v4017, %v4033
      %v4035 = vsel %vm4025, %v4032, %v4034
      %v4036 = vsel %vm4024, %v4014, %v4017
      %v4037 = vsel %vm4027, %v4023, 1326507024
      %v4038 = vsel %vm4026, %v4020, %v4037
      %v4039 = vsel %vm4025, %v4036, %v4038
      %v4040 = vshll.u32 %v4000, 8
      %v4041 = vmul.u32.u64.compose %v4040, %v4039
      %v4042 = vextract.low.u32 %v4041
      %v4043 = vextract.high.u32 %v4041
      %v4044 = vmul.u32.u64.compose %v4040, %v4035
      %v4045 = vextract.low.u32 %v4044
      %v4046 = vextract.high.u32 %v4044
      %v4047 = vmul.u32 %v4040, %v4031
      %v4048 = vadd.s32 %v4043, %v4045
      %vm4049 = vc.u32 %v4043, %v4045
      %v4050 = vadd.s32 %v4046, 1
      %v4051 = vsel %vm4049, %v4050, %v4046
      %v4052 = vadd.s32 %v4047, %v4051
      %v4053 = vadd.s32 %v4052, 536870912
      %v4054 = vshrl.u32 %v4053, 30
      %v4055 = vshll.u32 %v4054, 30
      %v4056 = vsub.s32 %v4052, %v4055
      %vm4057 = vcmp.lt.s32.totalorder %v4056, 0
      %v4058 = vsub.s32 0, %v4056
      %v4059 = vsel %vm4057, %v4058, %v4056
      %v4060 = vclz %v4059
      %v4061 = vsub.s32 %v4060, 2
      %vm4062 = vcmp.gt.s32.totalorder 0, %v4061
      %v4063 = vsel %vm4062, 0, %v4061
      %v4064 = vsub.s32 32, %v4063
      %v4065 = vshll.u32 %v4056, %v4063
      %v4066 = vshrl.u32 %v4048, %v4064
      %v4067 = vor.u32 %v4065, %v4066
      %v4068 = vsub.s32 4294967266, %v4063
      %v4069 = vadd.s32 %v4068, 127
      %v4070 = vshll.u32 %v4069, 23
      %v4071 = vor.u32 4788187, %v4070
      %v4072 = vand.u32 2147483647, %v4071
      %v4074 = vcvt.s32.f32 %v4067
      %v4075 = vmul.f32 %v4074, %v4072
      %v4076 = vxor.u32 %v4075, 2147483648
      %v4077 = vsel %vm3994, %v4076, %v4075
      %v4078 = vsub.s32 4, %v4054
      %v4079 = vsel %vm3994, %v4078, %v4054
      %v4080 = vsel %vm3993, %v3873, %v4077
      %v4081 = vsel %vm3993, 0, %v4079
      %v4082 = vcosq.f32.pop %v4080
      %v4083 = vsinq.f32.pop %v4080
      %vm4084 = vweird.f32 %v3873
      %v4085 = vadd.s32 %v4081, 3
      %v4086 = vand.u32 %v4085, 3
      %vm4087 = vcmp.lt.s32.totalorder %v4086, 2
      %vm4088 = vcmp.eq.s32.totalorder %v4086, 0
      %v4089 = vxor.u32 %v4083, 2147483648
      %v4090 = vsel %vm4088, %v4082, %v4089
      %vm4091 = vcmp.eq.s32.totalorder %v4086, 2
      %v4092 = vxor.u32 %v4082, 2147483648
      %v4093 = vsel %vm4091, %v4092, %v4083
      %v4094 = vsel %vm4087, %v4090, %v4093
      %v4095 = vsel %vm4084, nan, %v4094
      %v4096 = vand.u32 2147483647, %v3874
      %vm4097 = vcmp.le.f32.partialorder %v4096, 0.7853982
      %vm4098 = vcmp.lt.s32.totalorder %v3874, 0
      %v4099 = vand.u32 %v3874, 2139095040
      %v4100 = vshrl.u32 %v4099, 23
      %v4101 = vsub.s32 %v4100, 127
      %v4102 = vand.u32 2147483647, %v3874
      %v4103 = vand.u32 %v4102, 8388607
      %v4104 = vor.u32 %v4103, 8388608
      %v4105 = vsub.s32 0, %v4104
      %v4106 = vadd.s32 %v4101, 1
      %vm4107 = vcmp.gt.s32.totalorder %v4106, 0
      %v4108 = vsel %vm4107, %v4106, 0
      %v4109 = vshrl.u32 %v4108, 5
      %v4110 = vand.u32 %v4108, 31
      %v4111 = vsub.s32 32, %v4110
      %v4112 = vshrl.u32 683565275, %v4111
      %v4113 = vshll.u32 683565275, %v4110
      %v4114 = vshrl.u32 2475754826, %v4111
      %v4115 = vor.u32 %v4113, %v4114
      %v4116 = vshll.u32 2475754826, %v4110
      %v4117 = vshrl.u32 2131351028, %v4111
      %v4118 = vor.u32 %v4116, %v4117
      %v4119 = vshll.u32 2131351028, %v4110
      %v4120 = vshrl.u32 2102212464, %v4111
      %v4121 = vor.u32 %v4119, %v4120
      %v4122 = vshll.u32 2102212464, %v4110
      %v4123 = vshrl.u32 920167782, %v4111
      %v4124 = vor.u32 %v4122, %v4123
      %v4125 = vshll.u32 920167782, %v4110
      %v4126 = vshrl.u32 1326507024, %v4111
      %v4127 = vor.u32 %v4125, %v4126
      %vm4128 = vcmp.lt.s32.totalorder %v4109, 1
      %vm4129 = vcmp.lt.s32.totalorder %v4109, 2
      %vm4130 = vcmp.lt.s32.totalorder %v4109, 3
      %vm4131 = vcmp.lt.s32.totalorder %v4109, 4
      %v4132 = vsel %vm4128, %v4112, %v4115
      %v4133 = vsel %vm4131, %v4121, 2102212464
      %v4134 = vsel %vm4130, %v4118, %v4133
      %v4135 = vsel %vm4129, %v4132, %v4134
      %v4136 = vsel %vm4128, %v4115, %v4118
      %v4137 = vsel %vm4131, %v4124, 920167782
      %v4138 = vsel %vm4130, %v4121, %v4137
      %v4139 = vsel %vm4129, %v4136, %v4138
      %v4140 = vsel %vm4128, %v4118, %v4121
      %v4141 = vsel %vm4131, %v4127, 1326507024
      %v4142 = vsel %vm4130, %v4124, %v4141
      %v4143 = vsel %vm4129, %v4140, %v4142
      %v4144 = vshll.u32 %v4104, 8
      %v4145 = vmul.u32.u64.compose %v4144, %v4143
      %v4146 = vextract.low.u32 %v4145
      %v4147 = vextract.high.u32 %v4145
      %v4148 = vmul.u32.u64.compose %v4144, %v4139
      %v4149 = vextract.low.u32 %v4148
      %v4150 = vextract.high.u32 %v4148
      %v4151 = vmul.u32 %v4144, %v4135
      %v4152 = vadd.s32 %v4147, %v4149
      %vm4153 = vc.u32 %v4147, %v4149
      %v4154 = vadd.s32 %v4150, 1
      %v4155 = vsel %vm4153, %v4154, %v4150
      %v4156 = vadd.s32 %v4151, %v4155
      %v4157 = vadd.s32 %v4156, 536870912
      %v4158 = vshrl.u32 %v4157, 30
      %v4159 = vshll.u32 %v4158, 30
      %v4160 = vsub.s32 %v4156, %v4159
      %vm4161 = vcmp.lt.s32.totalorder %v4160, 0
      %v4162 = vsub.s32 0, %v4160
      %v4163 = vsel %vm4161, %v4162, %v4160
      %v4164 = vclz %v4163
      %v4165 = vsub.s32 %v4164, 2
      %vm4166 = vcmp.gt.s32.totalorder 0, %v4165
      %v4167 = vsel %vm4166, 0, %v4165
      %v4168 = vsub.s32 32, %v4167
      %v4169 = vshll.u32 %v4160, %v4167
      %v4170 = vshrl.u32 %v4152, %v4168
      %v4171 = vor.u32 %v4169, %v4170
      %v4172 = vsub.s32 4294967266, %v4167
      %v4173 = vadd.s32 %v4172, 127
      %v4174 = vshll.u32 %v4173, 23
      %v4175 = vor.u32 4788187, %v4174
      %v4176 = vand.u32 2147483647, %v4175
      %v4178 = vcvt.s32.f32 %v4171
      %v4179 = vmul.f32 %v4178, %v4176
      %v4180 = vxor.u32 %v4179, 2147483648
      %v4181 = vsel %vm4098, %v4180, %v4179
      %v4182 = vsub.s32 4, %v4158
      %v4183 = vsel %vm4098, %v4182, %v4158
      %v4184 = vsel %vm4097, %v3874, %v4181
      %v4185 = vsel %vm4097, 0, %v4183
      %v4186 = vcosq.f32.pop %v4184
      %v4187 = vsinq.f32.pop %v4184
      %vm4188 = vweird.f32 %v3874
      %v4189 = vadd.s32 %v4185, 3
      %v4190 = vand.u32 %v4189, 3
      %vm4191 = vcmp.lt.s32.totalorder %v4190, 2
      %vm4192 = vcmp.eq.s32.totalorder %v4190, 0
      %v4193 = vxor.u32 %v4187, 2147483648
      %v4194 = vsel %vm4192, %v4186, %v4193
      %vm4195 = vcmp.eq.s32.totalorder %v4190, 2
      %v4196 = vxor.u32 %v4186, 2147483648
      %v4197 = vsel %vm4195, %v4196, %v4187
      %v4198 = vsel %vm4191, %v4194, %v4197
      %v4199 = vsel %vm4188, nan, %v4198
      %v4200 = vand.u32 2147483647, %v3875
      %vm4201 = vcmp.le.f32.partialorder %v4200, 0.7853982
      %vm4202 = vcmp.lt.s32.totalorder %v3875, 0
      %v4203 = vand.u32 %v3875, 2139095040
      %v4204 = vshrl.u32 %v4203, 23
      %v4205 = vsub.s32 %v4204, 127
      %v4206 = vand.u32 2147483647, %v3875
      %v4207 = vand.u32 %v4206, 8388607
      %v4208 = vor.u32 %v4207, 8388608
      %v4209 = vsub.s32 0, %v4208
      %v4210 = vadd.s32 %v4205, 1
      %vm4211 = vcmp.gt.s32.totalorder %v4210, 0
      %v4212 = vsel %vm4211, %v4210, 0
      %v4213 = vshrl.u32 %v4212, 5
      %v4214 = vand.u32 %v4212, 31
      %v4215 = vsub.s32 32, %v4214
      %v4216 = vshrl.u32 683565275, %v4215
      %v4217 = vshll.u32 683565275, %v4214
      %v4218 = vshrl.u32 2475754826, %v4215
      %v4219 = vor.u32 %v4217, %v4218
      %v4220 = vshll.u32 2475754826, %v4214
      %v4221 = vshrl.u32 2131351028, %v4215
      %v4222 = vor.u32 %v4220, %v4221
      %v4223 = vshll.u32 2131351028, %v4214
      %v4224 = vshrl.u32 2102212464, %v4215
      %v4225 = vor.u32 %v4223, %v4224
      %v4226 = vshll.u32 2102212464, %v4214
      %v4227 = vshrl.u32 920167782, %v4215
      %v4228 = vor.u32 %v4226, %v4227
      %v4229 = vshll.u32 920167782, %v4214
      %v4230 = vshrl.u32 1326507024, %v4215
      %v4231 = vor.u32 %v4229, %v4230
      %vm4232 = vcmp.lt.s32.totalorder %v4213, 1
      %vm4233 = vcmp.lt.s32.totalorder %v4213, 2
      %vm4234 = vcmp.lt.s32.totalorder %v4213, 3
      %vm4235 = vcmp.lt.s32.totalorder %v4213, 4
      %v4236 = vsel %vm4232, %v4216, %v4219
      %v4237 = vsel %vm4235, %v4225, 2102212464
      %v4238 = vsel %vm4234, %v4222, %v4237
      %v4239 = vsel %vm4233, %v4236, %v4238
      %v4240 = vsel %vm4232, %v4219, %v4222
      %v4241 = vsel %vm4235, %v4228, 920167782
      %v4242 = vsel %vm4234, %v4225, %v4241
      %v4243 = vsel %vm4233, %v4240, %v4242
      %v4244 = vsel %vm4232, %v4222, %v4225
      %v4245 = vsel %vm4235, %v4231, 1326507024
      %v4246 = vsel %vm4234, %v4228, %v4245
      %v4247 = vsel %vm4233, %v4244, %v4246
      %v4248 = vshll.u32 %v4208, 8
      %v4249 = vmul.u32.u64.compose %v4248, %v4247
      %v4250 = vextract.low.u32 %v4249
      %v4251 = vextract.high.u32 %v4249
      %v4252 = vmul.u32.u64.compose %v4248, %v4243
      %v4253 = vextract.low.u32 %v4252
      %v4254 = vextract.high.u32 %v4252
      %v4255 = vmul.u32 %v4248, %v4239
      %v4256 = vadd.s32 %v4251, %v4253
      %vm4257 = vc.u32 %v4251, %v4253
      %v4258 = vadd.s32 %v4254, 1
      %v4259 = vsel %vm4257, %v4258, %v4254
      %v4260 = vadd.s32 %v4255, %v4259
      %v4261 = vadd.s32 %v4260, 536870912
      %v4262 = vshrl.u32 %v4261, 30
      %v4263 = vshll.u32 %v4262, 30
      %v4264 = vsub.s32 %v4260, %v4263
      %vm4265 = vcmp.lt.s32.totalorder %v4264, 0
      %v4266 = vsub.s32 0, %v4264
      %v4267 = vsel %vm4265, %v4266, %v4264
      %v4268 = vclz %v4267
      %v4269 = vsub.s32 %v4268, 2
      %vm4270 = vcmp.gt.s32.totalorder 0, %v4269
      %v4271 = vsel %vm4270, 0, %v4269
      %v4272 = vsub.s32 32, %v4271
      %v4273 = vshll.u32 %v4264, %v4271
      %v4274 = vshrl.u32 %v4256, %v4272
      %v4275 = vor.u32 %v4273, %v4274
      %v4276 = vsub.s32 4294967266, %v4271
      %v4277 = vadd.s32 %v4276, 127
      %v4278 = vshll.u32 %v4277, 23
      %v4279 = vor.u32 4788187, %v4278
      %v4280 = vand.u32 2147483647, %v4279
      %v4282 = vcvt.s32.f32 %v4275
      %v4283 = vmul.f32 %v4282, %v4280
      %v4284 = vxor.u32 %v4283, 2147483648
      %v4285 = vsel %vm4202, %v4284, %v4283
      %v4286 = vsub.s32 4, %v4262
      %v4287 = vsel %vm4202, %v4286, %v4262
      %v4288 = vsel %vm4201, %v3875, %v4285
      %v4289 = vsel %vm4201, 0, %v4287
      %v4290 = vcosq.f32.pop %v4288
      %v4291 = vsinq.f32.pop %v4288
      %vm4292 = vweird.f32 %v3875
      %v4293 = vadd.s32 %v4289, 3
      %v4294 = vand.u32 %v4293, 3
      %vm4295 = vcmp.lt.s32.totalorder %v4294, 2
      %vm4296 = vcmp.eq.s32.totalorder %v4294, 0
      %v4297 = vxor.u32 %v4291, 2147483648
      %v4298 = vsel %vm4296, %v4290, %v4297
      %vm4299 = vcmp.eq.s32.totalorder %v4294, 2
      %v4300 = vxor.u32 %v4290, 2147483648
      %v4301 = vsel %vm4299, %v4300, %v4291
      %v4302 = vsel %vm4295, %v4298, %v4301
      %v4303 = vsel %vm4292, nan, %v4302
      %v4304 = vand.u32 2147483647, %v3876
      %vm4305 = vcmp.le.f32.partialorder %v4304, 0.7853982
      %vm4306 = vcmp.lt.s32.totalorder %v3876, 0
      %v4307 = vand.u32 %v3876, 2139095040
      %v4308 = vshrl.u32 %v4307, 23
      %v4309 = vsub.s32 %v4308, 127
      %v4310 = vand.u32 2147483647, %v3876
      %v4311 = vand.u32 %v4310, 8388607
      %v4312 = vor.u32 %v4311, 8388608
      %v4313 = vsub.s32 0, %v4312
      %v4314 = vadd.s32 %v4309, 1
      %vm4315 = vcmp.gt.s32.totalorder %v4314, 0
      %v4316 = vsel %vm4315, %v4314, 0
      %v4317 = vshrl.u32 %v4316, 5
      %v4318 = vand.u32 %v4316, 31
      %v4319 = vsub.s32 32, %v4318
      %v4320 = vshrl.u32 683565275, %v4319
      %v4321 = vshll.u32 683565275, %v4318
      %v4322 = vshrl.u32 2475754826, %v4319
      %v4323 = vor.u32 %v4321, %v4322
      %v4324 = vshll.u32 2475754826, %v4318
      %v4325 = vshrl.u32 2131351028, %v4319
      %v4326 = vor.u32 %v4324, %v4325
      %v4327 = vshll.u32 2131351028, %v4318
      %v4328 = vshrl.u32 2102212464, %v4319
      %v4329 = vor.u32 %v4327, %v4328
      %v4330 = vshll.u32 2102212464, %v4318
      %v4331 = vshrl.u32 920167782, %v4319
      %v4332 = vor.u32 %v4330, %v4331
      %v4333 = vshll.u32 920167782, %v4318
      %v4334 = vshrl.u32 1326507024, %v4319
      %v4335 = vor.u32 %v4333, %v4334
      %vm4336 = vcmp.lt.s32.totalorder %v4317, 1
      %vm4337 = vcmp.lt.s32.totalorder %v4317, 2
      %vm4338 = vcmp.lt.s32.totalorder %v4317, 3
      %vm4339 = vcmp.lt.s32.totalorder %v4317, 4
      %v4340 = vsel %vm4336, %v4320, %v4323
      %v4341 = vsel %vm4339, %v4329, 2102212464
      %v4342 = vsel %vm4338, %v4326, %v4341
      %v4343 = vsel %vm4337, %v4340, %v4342
      %v4344 = vsel %vm4336, %v4323, %v4326
      %v4345 = vsel %vm4339, %v4332, 920167782
      %v4346 = vsel %vm4338, %v4329, %v4345
      %v4347 = vsel %vm4337, %v4344, %v4346
      %v4348 = vsel %vm4336, %v4326, %v4329
      %v4349 = vsel %vm4339, %v4335, 1326507024
      %v4350 = vsel %vm4338, %v4332, %v4349
      %v4351 = vsel %vm4337, %v4348, %v4350
      %v4352 = vshll.u32 %v4312, 8
      %v4353 = vmul.u32.u64.compose %v4352, %v4351
      %v4354 = vextract.low.u32 %v4353
      %v4355 = vextract.high.u32 %v4353
      %v4356 = vmul.u32.u64.compose %v4352, %v4347
      %v4357 = vextract.low.u32 %v4356
      %v4358 = vextract.high.u32 %v4356
      %v4359 = vmul.u32 %v4352, %v4343
      %v4360 = vadd.s32 %v4355, %v4357
      %vm4361 = vc.u32 %v4355, %v4357
      %v4362 = vadd.s32 %v4358, 1
      %v4363 = vsel %vm4361, %v4362, %v4358
      %v4364 = vadd.s32 %v4359, %v4363
      %v4365 = vadd.s32 %v4364, 536870912
      %v4366 = vshrl.u32 %v4365, 30
      %v4367 = vshll.u32 %v4366, 30
      %v4368 = vsub.s32 %v4364, %v4367
      %vm4369 = vcmp.lt.s32.totalorder %v4368, 0
      %v4370 = vsub.s32 0, %v4368
      %v4371 = vsel %vm4369, %v4370, %v4368
      %v4372 = vclz %v4371
      %v4373 = vsub.s32 %v4372, 2
      %vm4374 = vcmp.gt.s32.totalorder 0, %v4373
      %v4375 = vsel %vm4374, 0, %v4373
      %v4376 = vsub.s32 32, %v4375
      %v4377 = vshll.u32 %v4368, %v4375
      %v4378 = vshrl.u32 %v4360, %v4376
      %v4379 = vor.u32 %v4377, %v4378
      %v4380 = vsub.s32 4294967266, %v4375
      %v4381 = vadd.s32 %v4380, 127
      %v4382 = vshll.u32 %v4381, 23
      %v4383 = vor.u32 4788187, %v4382
      %v4384 = vand.u32 2147483647, %v4383
      %v4386 = vcvt.s32.f32 %v4379
      %v4387 = vmul.f32 %v4386, %v4384
      %v4388 = vxor.u32 %v4387, 2147483648
      %v4389 = vsel %vm4306, %v4388, %v4387
      %v4390 = vsub.s32 4, %v4366
      %v4391 = vsel %vm4306, %v4390, %v4366
      %v4392 = vsel %vm4305, %v3876, %v4389
      %v4393 = vsel %vm4305, 0, %v4391
      %v4394 = vcosq.f32.pop %v4392
      %v4395 = vsinq.f32.pop %v4392
      %vm4396 = vweird.f32 %v3876
      %v4397 = vadd.s32 %v4393, 3
      %v4398 = vand.u32 %v4397, 3
      %vm4399 = vcmp.lt.s32.totalorder %v4398, 2
      %vm4400 = vcmp.eq.s32.totalorder %v4398, 0
      %v4401 = vxor.u32 %v4395, 2147483648
      %v4402 = vsel %vm4400, %v4394, %v4401
      %vm4403 = vcmp.eq.s32.totalorder %v4398, 2
      %v4404 = vxor.u32 %v4394, 2147483648
      %v4405 = vsel %vm4403, %v4404, %v4395
      %v4406 = vsel %vm4399, %v4402, %v4405
      %v4407 = vsel %vm4396, nan, %v4406
      %v4408 = vand.u32 2147483647, %v3877
      %vm4409 = vcmp.le.f32.partialorder %v4408, 0.7853982
      %vm4410 = vcmp.lt.s32.totalorder %v3877, 0
      %v4411 = vand.u32 %v3877, 2139095040
      %v4412 = vshrl.u32 %v4411, 23
      %v4413 = vsub.s32 %v4412, 127
      %v4414 = vand.u32 2147483647, %v3877
      %v4415 = vand.u32 %v4414, 8388607
      %v4416 = vor.u32 %v4415, 8388608
      %v4417 = vsub.s32 0, %v4416
      %v4418 = vadd.s32 %v4413, 1
      %vm4419 = vcmp.gt.s32.totalorder %v4418, 0
      %v4420 = vsel %vm4419, %v4418, 0
      %v4421 = vshrl.u32 %v4420, 5
      %v4422 = vand.u32 %v4420, 31
      %v4423 = vsub.s32 32, %v4422
      %v4424 = vshrl.u32 683565275, %v4423
      %v4425 = vshll.u32 683565275, %v4422
      %v4426 = vshrl.u32 2475754826, %v4423
      %v4427 = vor.u32 %v4425, %v4426
      %v4428 = vshll.u32 2475754826, %v4422
      %v4429 = vshrl.u32 2131351028, %v4423
      %v4430 = vor.u32 %v4428, %v4429
      %v4431 = vshll.u32 2131351028, %v4422
      %v4432 = vshrl.u32 2102212464, %v4423
      %v4433 = vor.u32 %v4431, %v4432
      %v4434 = vshll.u32 2102212464, %v4422
      %v4435 = vshrl.u32 920167782, %v4423
      %v4436 = vor.u32 %v4434, %v4435
      %v4437 = vshll.u32 920167782, %v4422
      %v4438 = vshrl.u32 1326507024, %v4423
      %v4439 = vor.u32 %v4437, %v4438
      %vm4440 = vcmp.lt.s32.totalorder %v4421, 1
      %vm4441 = vcmp.lt.s32.totalorder %v4421, 2
      %vm4442 = vcmp.lt.s32.totalorder %v4421, 3
      %vm4443 = vcmp.lt.s32.totalorder %v4421, 4
      %v4444 = vsel %vm4440, %v4424, %v4427
      %v4445 = vsel %vm4443, %v4433, 2102212464
      %v4446 = vsel %vm4442, %v4430, %v4445
      %v4447 = vsel %vm4441, %v4444, %v4446
      %v4448 = vsel %vm4440, %v4427, %v4430
      %v4449 = vsel %vm4443, %v4436, 920167782
      %v4450 = vsel %vm4442, %v4433, %v4449
      %v4451 = vsel %vm4441, %v4448, %v4450
      %v4452 = vsel %vm4440, %v4430, %v4433
      %v4453 = vsel %vm4443, %v4439, 1326507024
      %v4454 = vsel %vm4442, %v4436, %v4453
      %v4455 = vsel %vm4441, %v4452, %v4454
      %v4456 = vshll.u32 %v4416, 8
      %v4457 = vmul.u32.u64.compose %v4456, %v4455
      %v4458 = vextract.low.u32 %v4457
      %v4459 = vextract.high.u32 %v4457
      %v4460 = vmul.u32.u64.compose %v4456, %v4451
      %v4461 = vextract.low.u32 %v4460
      %v4462 = vextract.high.u32 %v4460
      %v4463 = vmul.u32 %v4456, %v4447
      %v4464 = vadd.s32 %v4459, %v4461
      %vm4465 = vc.u32 %v4459, %v4461
      %v4466 = vadd.s32 %v4462, 1
      %v4467 = vsel %vm4465, %v4466, %v4462
      %v4468 = vadd.s32 %v4463, %v4467
      %v4469 = vadd.s32 %v4468, 536870912
      %v4470 = vshrl.u32 %v4469, 30
      %v4471 = vshll.u32 %v4470, 30
      %v4472 = vsub.s32 %v4468, %v4471
      %vm4473 = vcmp.lt.s32.totalorder %v4472, 0
      %v4474 = vsub.s32 0, %v4472
      %v4475 = vsel %vm4473, %v4474, %v4472
      %v4476 = vclz %v4475
      %v4477 = vsub.s32 %v4476, 2
      %vm4478 = vcmp.gt.s32.totalorder 0, %v4477
      %v4479 = vsel %vm4478, 0, %v4477
      %v4480 = vsub.s32 32, %v4479
      %v4481 = vshll.u32 %v4472, %v4479
      %v4482 = vshrl.u32 %v4464, %v4480
      %v4483 = vor.u32 %v4481, %v4482
      %v4484 = vsub.s32 4294967266, %v4479
      %v4485 = vadd.s32 %v4484, 127
      %v4486 = vshll.u32 %v4485, 23
      %v4487 = vor.u32 4788187, %v4486
      %v4488 = vand.u32 2147483647, %v4487
      %v4490 = vcvt.s32.f32 %v4483
      %v4491 = vmul.f32 %v4490, %v4488
      %v4492 = vxor.u32 %v4491, 2147483648
      %v4493 = vsel %vm4410, %v4492, %v4491
      %v4494 = vsub.s32 4, %v4470
      %v4495 = vsel %vm4410, %v4494, %v4470
      %v4496 = vsel %vm4409, %v3877, %v4493
      %v4497 = vsel %vm4409, 0, %v4495
      %v4498 = vcosq.f32.pop %v4496
      %v4499 = vsinq.f32.pop %v4496
      %vm4500 = vweird.f32 %v3877
      %v4501 = vadd.s32 %v4497, 3
      %v4502 = vand.u32 %v4501, 3
      %vm4503 = vcmp.lt.s32.totalorder %v4502, 2
      %vm4504 = vcmp.eq.s32.totalorder %v4502, 0
      %v4505 = vxor.u32 %v4499, 2147483648
      %v4506 = vsel %vm4504, %v4498, %v4505
      %vm4507 = vcmp.eq.s32.totalorder %v4502, 2
      %v4508 = vxor.u32 %v4498, 2147483648
      %v4509 = vsel %vm4507, %v4508, %v4499
      %v4510 = vsel %vm4503, %v4506, %v4509
      %v4511 = vsel %vm4500, nan, %v4510
      %v4512 = vand.u32 2147483647, %v3878
      %vm4513 = vcmp.le.f32.partialorder %v4512, 0.7853982
      %vm4514 = vcmp.lt.s32.totalorder %v3878, 0
      %v4515 = vand.u32 %v3878, 2139095040
      %v4516 = vshrl.u32 %v4515, 23
      %v4517 = vsub.s32 %v4516, 127
      %v4518 = vand.u32 2147483647, %v3878
      %v4519 = vand.u32 %v4518, 8388607
      %v4520 = vor.u32 %v4519, 8388608
      %v4521 = vsub.s32 0, %v4520
      %v4522 = vadd.s32 %v4517, 1
      %vm4523 = vcmp.gt.s32.totalorder %v4522, 0
      %v4524 = vsel %vm4523, %v4522, 0
      %v4525 = vshrl.u32 %v4524, 5
      %v4526 = vand.u32 %v4524, 31
      %v4527 = vsub.s32 32, %v4526
      %v4528 = vshrl.u32 683565275, %v4527
      %v4529 = vshll.u32 683565275, %v4526
      %v4530 = vshrl.u32 2475754826, %v4527
      %v4531 = vor.u32 %v4529, %v4530
      %v4532 = vshll.u32 2475754826, %v4526
      %v4533 = vshrl.u32 2131351028, %v4527
      %v4534 = vor.u32 %v4532, %v4533
      %v4535 = vshll.u32 2131351028, %v4526
      %v4536 = vshrl.u32 2102212464, %v4527
      %v4537 = vor.u32 %v4535, %v4536
      %v4538 = vshll.u32 2102212464, %v4526
      %v4539 = vshrl.u32 920167782, %v4527
      %v4540 = vor.u32 %v4538, %v4539
      %v4541 = vshll.u32 920167782, %v4526
      %v4542 = vshrl.u32 1326507024, %v4527
      %v4543 = vor.u32 %v4541, %v4542
      %vm4544 = vcmp.lt.s32.totalorder %v4525, 1
      %vm4545 = vcmp.lt.s32.totalorder %v4525, 2
      %vm4546 = vcmp.lt.s32.totalorder %v4525, 3
      %vm4547 = vcmp.lt.s32.totalorder %v4525, 4
      %v4548 = vsel %vm4544, %v4528, %v4531
      %v4549 = vsel %vm4547, %v4537, 2102212464
      %v4550 = vsel %vm4546, %v4534, %v4549
      %v4551 = vsel %vm4545, %v4548, %v4550
      %v4552 = vsel %vm4544, %v4531, %v4534
      %v4553 = vsel %vm4547, %v4540, 920167782
      %v4554 = vsel %vm4546, %v4537, %v4553
      %v4555 = vsel %vm4545, %v4552, %v4554
      %v4556 = vsel %vm4544, %v4534, %v4537
      %v4557 = vsel %vm4547, %v4543, 1326507024
      %v4558 = vsel %vm4546, %v4540, %v4557
      %v4559 = vsel %vm4545, %v4556, %v4558
      %v4560 = vshll.u32 %v4520, 8
      %v4561 = vmul.u32.u64.compose %v4560, %v4559
      %v4562 = vextract.low.u32 %v4561
      %v4563 = vextract.high.u32 %v4561
      %v4564 = vmul.u32.u64.compose %v4560, %v4555
      %v4565 = vextract.low.u32 %v4564
      %v4566 = vextract.high.u32 %v4564
      %v4567 = vmul.u32 %v4560, %v4551
      %v4568 = vadd.s32 %v4563, %v4565
      %vm4569 = vc.u32 %v4563, %v4565
      %v4570 = vadd.s32 %v4566, 1
      %v4571 = vsel %vm4569, %v4570, %v4566
      %v4572 = vadd.s32 %v4567, %v4571
      %v4573 = vadd.s32 %v4572, 536870912
      %v4574 = vshrl.u32 %v4573, 30
      %v4575 = vshll.u32 %v4574, 30
      %v4576 = vsub.s32 %v4572, %v4575
      %vm4577 = vcmp.lt.s32.totalorder %v4576, 0
      %v4578 = vsub.s32 0, %v4576
      %v4579 = vsel %vm4577, %v4578, %v4576
      %v4580 = vclz %v4579
      %v4581 = vsub.s32 %v4580, 2
      %vm4582 = vcmp.gt.s32.totalorder 0, %v4581
      %v4583 = vsel %vm4582, 0, %v4581
      %v4584 = vsub.s32 32, %v4583
      %v4585 = vshll.u32 %v4576, %v4583
      %v4586 = vshrl.u32 %v4568, %v4584
      %v4587 = vor.u32 %v4585, %v4586
      %v4588 = vsub.s32 4294967266, %v4583
      %v4589 = vadd.s32 %v4588, 127
      %v4590 = vshll.u32 %v4589, 23
      %v4591 = vor.u32 4788187, %v4590
      %v4592 = vand.u32 2147483647, %v4591
      %v4594 = vcvt.s32.f32 %v4587
      %v4595 = vmul.f32 %v4594, %v4592
      %v4596 = vxor.u32 %v4595, 2147483648
      %v4597 = vsel %vm4514, %v4596, %v4595
      %v4598 = vsub.s32 4, %v4574
      %v4599 = vsel %vm4514, %v4598, %v4574
      %v4600 = vsel %vm4513, %v3878, %v4597
      %v4601 = vsel %vm4513, 0, %v4599
      %v4602 = vcosq.f32.pop %v4600
      %v4603 = vsinq.f32.pop %v4600
      %vm4604 = vweird.f32 %v3878
      %v4605 = vadd.s32 %v4601, 3
      %v4606 = vand.u32 %v4605, 3
      %vm4607 = vcmp.lt.s32.totalorder %v4606, 2
      %vm4608 = vcmp.eq.s32.totalorder %v4606, 0
      %v4609 = vxor.u32 %v4603, 2147483648
      %v4610 = vsel %vm4608, %v4602, %v4609
      %vm4611 = vcmp.eq.s32.totalorder %v4606, 2
      %v4612 = vxor.u32 %v4602, 2147483648
      %v4613 = vsel %vm4611, %v4612, %v4603
      %v4614 = vsel %vm4607, %v4610, %v4613
      %v4615 = vsel %vm4604, nan, %v4614
      %v4616 = vand.u32 2147483647, %v3879
      %vm4617 = vcmp.le.f32.partialorder %v4616, 0.7853982
      %vm4618 = vcmp.lt.s32.totalorder %v3879, 0
      %v4619 = vand.u32 %v3879, 2139095040
      %v4620 = vshrl.u32 %v4619, 23
      %v4621 = vsub.s32 %v4620, 127
      %v4622 = vand.u32 2147483647, %v3879
      %v4623 = vand.u32 %v4622, 8388607
      %v4624 = vor.u32 %v4623, 8388608
      %v4625 = vsub.s32 0, %v4624
      %v4626 = vadd.s32 %v4621, 1
      %vm4627 = vcmp.gt.s32.totalorder %v4626, 0
      %v4628 = vsel %vm4627, %v4626, 0
      %v4629 = vshrl.u32 %v4628, 5
      %v4630 = vand.u32 %v4628, 31
      %v4631 = vsub.s32 32, %v4630
      %v4632 = vshrl.u32 683565275, %v4631
      %v4633 = vshll.u32 683565275, %v4630
      %v4634 = vshrl.u32 2475754826, %v4631
      %v4635 = vor.u32 %v4633, %v4634
      %v4636 = vshll.u32 2475754826, %v4630
      %v4637 = vshrl.u32 2131351028, %v4631
      %v4638 = vor.u32 %v4636, %v4637
      %v4639 = vshll.u32 2131351028, %v4630
      %v4640 = vshrl.u32 2102212464, %v4631
      %v4641 = vor.u32 %v4639, %v4640
      %v4642 = vshll.u32 2102212464, %v4630
      %v4643 = vshrl.u32 920167782, %v4631
      %v4644 = vor.u32 %v4642, %v4643
      %v4645 = vshll.u32 920167782, %v4630
      %v4646 = vshrl.u32 1326507024, %v4631
      %v4647 = vor.u32 %v4645, %v4646
      %vm4648 = vcmp.lt.s32.totalorder %v4629, 1
      %vm4649 = vcmp.lt.s32.totalorder %v4629, 2
      %vm4650 = vcmp.lt.s32.totalorder %v4629, 3
      %vm4651 = vcmp.lt.s32.totalorder %v4629, 4
      %v4652 = vsel %vm4648, %v4632, %v4635
      %v4653 = vsel %vm4651, %v4641, 2102212464
      %v4654 = vsel %vm4650, %v4638, %v4653
      %v4655 = vsel %vm4649, %v4652, %v4654
      %v4656 = vsel %vm4648, %v4635, %v4638
      %v4657 = vsel %vm4651, %v4644, 920167782
      %v4658 = vsel %vm4650, %v4641, %v4657
      %v4659 = vsel %vm4649, %v4656, %v4658
      %v4660 = vsel %vm4648, %v4638, %v4641
      %v4661 = vsel %vm4651, %v4647, 1326507024
      %v4662 = vsel %vm4650, %v4644, %v4661
      %v4663 = vsel %vm4649, %v4660, %v4662
      %v4664 = vshll.u32 %v4624, 8
      %v4665 = vmul.u32.u64.compose %v4664, %v4663
      %v4666 = vextract.low.u32 %v4665
      %v4667 = vextract.high.u32 %v4665
      %v4668 = vmul.u32.u64.compose %v4664, %v4659
      %v4669 = vextract.low.u32 %v4668
      %v4670 = vextract.high.u32 %v4668
      %v4671 = vmul.u32 %v4664, %v4655
      %v4672 = vadd.s32 %v4667, %v4669
      %vm4673 = vc.u32 %v4667, %v4669
      %v4674 = vadd.s32 %v4670, 1
      %v4675 = vsel %vm4673, %v4674, %v4670
      %v4676 = vadd.s32 %v4671, %v4675
      %v4677 = vadd.s32 %v4676, 536870912
      %v4678 = vshrl.u32 %v4677, 30
      %v4679 = vshll.u32 %v4678, 30
      %v4680 = vsub.s32 %v4676, %v4679
      %vm4681 = vcmp.lt.s32.totalorder %v4680, 0
      %v4682 = vsub.s32 0, %v4680
      %v4683 = vsel %vm4681, %v4682, %v4680
      %v4684 = vclz %v4683
      %v4685 = vsub.s32 %v4684, 2
      %vm4686 = vcmp.gt.s32.totalorder 0, %v4685
      %v4687 = vsel %vm4686, 0, %v4685
      %v4688 = vsub.s32 32, %v4687
      %v4689 = vshll.u32 %v4680, %v4687
      %v4690 = vshrl.u32 %v4672, %v4688
      %v4691 = vor.u32 %v4689, %v4690
      %v4692 = vsub.s32 4294967266, %v4687
      %v4693 = vadd.s32 %v4692, 127
      %v4694 = vshll.u32 %v4693, 23
      %v4695 = vor.u32 4788187, %v4694
      %v4696 = vand.u32 2147483647, %v4695
      %v4698 = vcvt.s32.f32 %v4691
      %v4699 = vmul.f32 %v4698, %v4696
      %v4700 = vxor.u32 %v4699, 2147483648
      %v4701 = vsel %vm4618, %v4700, %v4699
      %v4702 = vsub.s32 4, %v4678
      %v4703 = vsel %vm4618, %v4702, %v4678
      %v4704 = vsel %vm4617, %v3879, %v4701
      %v4705 = vsel %vm4617, 0, %v4703
      %v4706 = vcosq.f32.pop %v4704
      %v4707 = vsinq.f32.pop %v4704
      %vm4708 = vweird.f32 %v3879
      %v4709 = vadd.s32 %v4705, 3
      %v4710 = vand.u32 %v4709, 3
      %vm4711 = vcmp.lt.s32.totalorder %v4710, 2
      %vm4712 = vcmp.eq.s32.totalorder %v4710, 0
      %v4713 = vxor.u32 %v4707, 2147483648
      %v4714 = vsel %vm4712, %v4706, %v4713
      %vm4715 = vcmp.eq.s32.totalorder %v4710, 2
      %v4716 = vxor.u32 %v4706, 2147483648
      %v4717 = vsel %vm4715, %v4716, %v4707
      %v4718 = vsel %vm4711, %v4714, %v4717
      %v4719 = vsel %vm4708, nan, %v4718
      %v4720 = vand.u32 2147483647, %v3880
      %vm4721 = vcmp.le.f32.partialorder %v4720, 0.7853982
      %vm4722 = vcmp.lt.s32.totalorder %v3880, 0
      %v4723 = vand.u32 %v3880, 2139095040
      %v4724 = vshrl.u32 %v4723, 23
      %v4725 = vsub.s32 %v4724, 127
      %v4726 = vand.u32 2147483647, %v3880
      %v4727 = vand.u32 %v4726, 8388607
      %v4728 = vor.u32 %v4727, 8388608
      %v4729 = vsub.s32 0, %v4728
      %v4730 = vadd.s32 %v4725, 1
      %vm4731 = vcmp.gt.s32.totalorder %v4730, 0
      %v4732 = vsel %vm4731, %v4730, 0
      %v4733 = vshrl.u32 %v4732, 5
      %v4734 = vand.u32 %v4732, 31
      %v4735 = vsub.s32 32, %v4734
      %v4736 = vshrl.u32 683565275, %v4735
      %v4737 = vshll.u32 683565275, %v4734
      %v4738 = vshrl.u32 2475754826, %v4735
      %v4739 = vor.u32 %v4737, %v4738
      %v4740 = vshll.u32 2475754826, %v4734
      %v4741 = vshrl.u32 2131351028, %v4735
      %v4742 = vor.u32 %v4740, %v4741
      %v4743 = vshll.u32 2131351028, %v4734
      %v4744 = vshrl.u32 2102212464, %v4735
      %v4745 = vor.u32 %v4743, %v4744
      %v4746 = vshll.u32 2102212464, %v4734
      %v4747 = vshrl.u32 920167782, %v4735
      %v4748 = vor.u32 %v4746, %v4747
      %v4749 = vshll.u32 920167782, %v4734
      %v4750 = vshrl.u32 1326507024, %v4735
      %v4751 = vor.u32 %v4749, %v4750
      %vm4752 = vcmp.lt.s32.totalorder %v4733, 1
      %vm4753 = vcmp.lt.s32.totalorder %v4733, 2
      %vm4754 = vcmp.lt.s32.totalorder %v4733, 3
      %vm4755 = vcmp.lt.s32.totalorder %v4733, 4
      %v4756 = vsel %vm4752, %v4736, %v4739
      %v4757 = vsel %vm4755, %v4745, 2102212464
      %v4758 = vsel %vm4754, %v4742, %v4757
      %v4759 = vsel %vm4753, %v4756, %v4758
      %v4760 = vsel %vm4752, %v4739, %v4742
      %v4761 = vsel %vm4755, %v4748, 920167782
      %v4762 = vsel %vm4754, %v4745, %v4761
      %v4763 = vsel %vm4753, %v4760, %v4762
      %v4764 = vsel %vm4752, %v4742, %v4745
      %v4765 = vsel %vm4755, %v4751, 1326507024
      %v4766 = vsel %vm4754, %v4748, %v4765
      %v4767 = vsel %vm4753, %v4764, %v4766
      %v4768 = vshll.u32 %v4728, 8
      %v4769 = vmul.u32.u64.compose %v4768, %v4767
      %v4770 = vextract.low.u32 %v4769
      %v4771 = vextract.high.u32 %v4769
      %v4772 = vmul.u32.u64.compose %v4768, %v4763
      %v4773 = vextract.low.u32 %v4772
      %v4774 = vextract.high.u32 %v4772
      %v4775 = vmul.u32 %v4768, %v4759
      %v4776 = vadd.s32 %v4771, %v4773
      %vm4777 = vc.u32 %v4771, %v4773
      %v4778 = vadd.s32 %v4774, 1
      %v4779 = vsel %vm4777, %v4778, %v4774
      %v4780 = vadd.s32 %v4775, %v4779
      %v4781 = vadd.s32 %v4780, 536870912
      %v4782 = vshrl.u32 %v4781, 30
      %v4783 = vshll.u32 %v4782, 30
      %v4784 = vsub.s32 %v4780, %v4783
      %vm4785 = vcmp.lt.s32.totalorder %v4784, 0
      %v4786 = vsub.s32 0, %v4784
      %v4787 = vsel %vm4785, %v4786, %v4784
      %v4788 = vclz %v4787
      %v4789 = vsub.s32 %v4788, 2
      %vm4790 = vcmp.gt.s32.totalorder 0, %v4789
      %v4791 = vsel %vm4790, 0, %v4789
      %v4792 = vsub.s32 32, %v4791
      %v4793 = vshll.u32 %v4784, %v4791
      %v4794 = vshrl.u32 %v4776, %v4792
      %v4795 = vor.u32 %v4793, %v4794
      %v4796 = vsub.s32 4294967266, %v4791
      %v4797 = vadd.s32 %v4796, 127
      %v4798 = vshll.u32 %v4797, 23
      %v4799 = vor.u32 4788187, %v4798
      %v4800 = vand.u32 2147483647, %v4799
      %v4802 = vcvt.s32.f32 %v4795
      %v4803 = vmul.f32 %v4802, %v4800
      %v4804 = vxor.u32 %v4803, 2147483648
      %v4805 = vsel %vm4722, %v4804, %v4803
      %v4806 = vsub.s32 4, %v4782
      %v4807 = vsel %vm4722, %v4806, %v4782
      %v4808 = vsel %vm4721, %v3880, %v4805
      %v4809 = vsel %vm4721, 0, %v4807
      %v4810 = vcosq.f32.pop %v4808
      %v4811 = vsinq.f32.pop %v4808
      %vm4812 = vweird.f32 %v3880
      %v4813 = vadd.s32 %v4809, 3
      %v4814 = vand.u32 %v4813, 3
      %vm4815 = vcmp.lt.s32.totalorder %v4814, 2
      %vm4816 = vcmp.eq.s32.totalorder %v4814, 0
      %v4817 = vxor.u32 %v4811, 2147483648
      %v4818 = vsel %vm4816, %v4810, %v4817
      %vm4819 = vcmp.eq.s32.totalorder %v4814, 2
      %v4820 = vxor.u32 %v4810, 2147483648
      %v4821 = vsel %vm4819, %v4820, %v4811
      %v4822 = vsel %vm4815, %v4818, %v4821
      %v4823 = vsel %vm4812, nan, %v4822
      %v4824 = vand.u32 2147483647, %v3881
      %vm4825 = vcmp.le.f32.partialorder %v4824, 0.7853982
      %vm4826 = vcmp.lt.s32.totalorder %v3881, 0
      %v4827 = vand.u32 %v3881, 2139095040
      %v4828 = vshrl.u32 %v4827, 23
      %v4829 = vsub.s32 %v4828, 127
      %v4830 = vand.u32 2147483647, %v3881
      %v4831 = vand.u32 %v4830, 8388607
      %v4832 = vor.u32 %v4831, 8388608
      %v4833 = vsub.s32 0, %v4832
      %v4834 = vadd.s32 %v4829, 1
      %vm4835 = vcmp.gt.s32.totalorder %v4834, 0
      %v4836 = vsel %vm4835, %v4834, 0
      %v4837 = vshrl.u32 %v4836, 5
      %v4838 = vand.u32 %v4836, 31
      %v4839 = vsub.s32 32, %v4838
      %v4840 = vshrl.u32 683565275, %v4839
      %v4841 = vshll.u32 683565275, %v4838
      %v4842 = vshrl.u32 2475754826, %v4839
      %v4843 = vor.u32 %v4841, %v4842
      %v4844 = vshll.u32 2475754826, %v4838
      %v4845 = vshrl.u32 2131351028, %v4839
      %v4846 = vor.u32 %v4844, %v4845
      %v4847 = vshll.u32 2131351028, %v4838
      %v4848 = vshrl.u32 2102212464, %v4839
      %v4849 = vor.u32 %v4847, %v4848
      %v4850 = vshll.u32 2102212464, %v4838
      %v4851 = vshrl.u32 920167782, %v4839
      %v4852 = vor.u32 %v4850, %v4851
      %v4853 = vshll.u32 920167782, %v4838
      %v4854 = vshrl.u32 1326507024, %v4839
      %v4855 = vor.u32 %v4853, %v4854
      %vm4856 = vcmp.lt.s32.totalorder %v4837, 1
      %vm4857 = vcmp.lt.s32.totalorder %v4837, 2
      %vm4858 = vcmp.lt.s32.totalorder %v4837, 3
      %vm4859 = vcmp.lt.s32.totalorder %v4837, 4
      %v4860 = vsel %vm4856, %v4840, %v4843
      %v4861 = vsel %vm4859, %v4849, 2102212464
      %v4862 = vsel %vm4858, %v4846, %v4861
      %v4863 = vsel %vm4857, %v4860, %v4862
      %v4864 = vsel %vm4856, %v4843, %v4846
      %v4865 = vsel %vm4859, %v4852, 920167782
      %v4866 = vsel %vm4858, %v4849, %v4865
      %v4867 = vsel %vm4857, %v4864, %v4866
      %v4868 = vsel %vm4856, %v4846, %v4849
      %v4869 = vsel %vm4859, %v4855, 1326507024
      %v4870 = vsel %vm4858, %v4852, %v4869
      %v4871 = vsel %vm4857, %v4868, %v4870
      %v4872 = vshll.u32 %v4832, 8
      %v4873 = vmul.u32.u64.compose %v4872, %v4871
      %v4874 = vextract.low.u32 %v4873
      %v4875 = vextract.high.u32 %v4873
      %v4876 = vmul.u32.u64.compose %v4872, %v4867
      %v4877 = vextract.low.u32 %v4876
      %v4878 = vextract.high.u32 %v4876
      %v4879 = vmul.u32 %v4872, %v4863
      %v4880 = vadd.s32 %v4875, %v4877
      %vm4881 = vc.u32 %v4875, %v4877
      %v4882 = vadd.s32 %v4878, 1
      %v4883 = vsel %vm4881, %v4882, %v4878
      %v4884 = vadd.s32 %v4879, %v4883
      %v4885 = vadd.s32 %v4884, 536870912
      %v4886 = vshrl.u32 %v4885, 30
      %v4887 = vshll.u32 %v4886, 30
      %v4888 = vsub.s32 %v4884, %v4887
      %vm4889 = vcmp.lt.s32.totalorder %v4888, 0
      %v4890 = vsub.s32 0, %v4888
      %v4891 = vsel %vm4889, %v4890, %v4888
      %v4892 = vclz %v4891
      %v4893 = vsub.s32 %v4892, 2
      %vm4894 = vcmp.gt.s32.totalorder 0, %v4893
      %v4895 = vsel %vm4894, 0, %v4893
      %v4896 = vsub.s32 32, %v4895
      %v4897 = vshll.u32 %v4888, %v4895
      %v4898 = vshrl.u32 %v4880, %v4896
      %v4899 = vor.u32 %v4897, %v4898
      %v4900 = vsub.s32 4294967266, %v4895
      %v4901 = vadd.s32 %v4900, 127
      %v4902 = vshll.u32 %v4901, 23
      %v4903 = vor.u32 4788187, %v4902
      %v4904 = vand.u32 2147483647, %v4903
      %v4906 = vcvt.s32.f32 %v4899
      %v4907 = vmul.f32 %v4906, %v4904
      %v4908 = vxor.u32 %v4907, 2147483648
      %v4909 = vsel %vm4826, %v4908, %v4907
      %v4910 = vsub.s32 4, %v4886
      %v4911 = vsel %vm4826, %v4910, %v4886
      %v4912 = vsel %vm4825, %v3881, %v4909
      %v4913 = vsel %vm4825, 0, %v4911
      %v4914 = vcosq.f32.pop %v4912
      %v4915 = vsinq.f32.pop %v4912
      %vm4916 = vweird.f32 %v3881
      %v4917 = vadd.s32 %v4913, 3
      %v4918 = vand.u32 %v4917, 3
      %vm4919 = vcmp.lt.s32.totalorder %v4918, 2
      %vm4920 = vcmp.eq.s32.totalorder %v4918, 0
      %v4921 = vxor.u32 %v4915, 2147483648
      %v4922 = vsel %vm4920, %v4914, %v4921
      %vm4923 = vcmp.eq.s32.totalorder %v4918, 2
      %v4924 = vxor.u32 %v4914, 2147483648
      %v4925 = vsel %vm4923, %v4924, %v4915
      %v4926 = vsel %vm4919, %v4922, %v4925
      %v4927 = vsel %vm4916, nan, %v4926
      %v4928 = vand.u32 2147483647, %v3882
      %vm4929 = vcmp.le.f32.partialorder %v4928, 0.7853982
      %vm4930 = vcmp.lt.s32.totalorder %v3882, 0
      %v4931 = vand.u32 %v3882, 2139095040
      %v4932 = vshrl.u32 %v4931, 23
      %v4933 = vsub.s32 %v4932, 127
      %v4934 = vand.u32 2147483647, %v3882
      %v4935 = vand.u32 %v4934, 8388607
      %v4936 = vor.u32 %v4935, 8388608
      %v4937 = vsub.s32 0, %v4936
      %v4938 = vadd.s32 %v4933, 1
      %vm4939 = vcmp.gt.s32.totalorder %v4938, 0
      %v4940 = vsel %vm4939, %v4938, 0
      %v4941 = vshrl.u32 %v4940, 5
      %v4942 = vand.u32 %v4940, 31
      %v4943 = vsub.s32 32, %v4942
      %v4944 = vshrl.u32 683565275, %v4943
      %v4945 = vshll.u32 683565275, %v4942
      %v4946 = vshrl.u32 2475754826, %v4943
      %v4947 = vor.u32 %v4945, %v4946
      %v4948 = vshll.u32 2475754826, %v4942
      %v4949 = vshrl.u32 2131351028, %v4943
      %v4950 = vor.u32 %v4948, %v4949
      %v4951 = vshll.u32 2131351028, %v4942
      %v4952 = vshrl.u32 2102212464, %v4943
      %v4953 = vor.u32 %v4951, %v4952
      %v4954 = vshll.u32 2102212464, %v4942
      %v4955 = vshrl.u32 920167782, %v4943
      %v4956 = vor.u32 %v4954, %v4955
      %v4957 = vshll.u32 920167782, %v4942
      %v4958 = vshrl.u32 1326507024, %v4943
      %v4959 = vor.u32 %v4957, %v4958
      %vm4960 = vcmp.lt.s32.totalorder %v4941, 1
      %vm4961 = vcmp.lt.s32.totalorder %v4941, 2
      %vm4962 = vcmp.lt.s32.totalorder %v4941, 3
      %vm4963 = vcmp.lt.s32.totalorder %v4941, 4
      %v4964 = vsel %vm4960, %v4944, %v4947
      %v4965 = vsel %vm4963, %v4953, 2102212464
      %v4966 = vsel %vm4962, %v4950, %v4965
      %v4967 = vsel %vm4961, %v4964, %v4966
      %v4968 = vsel %vm4960, %v4947, %v4950
      %v4969 = vsel %vm4963, %v4956, 920167782
      %v4970 = vsel %vm4962, %v4953, %v4969
      %v4971 = vsel %vm4961, %v4968, %v4970
      %v4972 = vsel %vm4960, %v4950, %v4953
      %v4973 = vsel %vm4963, %v4959, 1326507024
      %v4974 = vsel %vm4962, %v4956, %v4973
      %v4975 = vsel %vm4961, %v4972, %v4974
      %v4976 = vshll.u32 %v4936, 8
      %v4977 = vmul.u32.u64.compose %v4976, %v4975
      %v4978 = vextract.low.u32 %v4977
      %v4979 = vextract.high.u32 %v4977
      %v4980 = vmul.u32.u64.compose %v4976, %v4971
      %v4981 = vextract.low.u32 %v4980
      %v4982 = vextract.high.u32 %v4980
      %v4983 = vmul.u32 %v4976, %v4967
      %v4984 = vadd.s32 %v4979, %v4981
      %vm4985 = vc.u32 %v4979, %v4981
      %v4986 = vadd.s32 %v4982, 1
      %v4987 = vsel %vm4985, %v4986, %v4982
      %v4988 = vadd.s32 %v4983, %v4987
      %v4989 = vadd.s32 %v4988, 536870912
      %v4990 = vshrl.u32 %v4989, 30
      %v4991 = vshll.u32 %v4990, 30
      %v4992 = vsub.s32 %v4988, %v4991
      %vm4993 = vcmp.lt.s32.totalorder %v4992, 0
      %v4994 = vsub.s32 0, %v4992
      %v4995 = vsel %vm4993, %v4994, %v4992
      %v4996 = vclz %v4995
      %v4997 = vsub.s32 %v4996, 2
      %vm4998 = vcmp.gt.s32.totalorder 0, %v4997
      %v4999 = vsel %vm4998, 0, %v4997
      %v5000 = vsub.s32 32, %v4999
      %v5001 = vshll.u32 %v4992, %v4999
      %v5002 = vshrl.u32 %v4984, %v5000
      %v5003 = vor.u32 %v5001, %v5002
      %v5004 = vsub.s32 4294967266, %v4999
      %v5005 = vadd.s32 %v5004, 127
      %v5006 = vshll.u32 %v5005, 23
      %v5007 = vor.u32 4788187, %v5006
      %v5008 = vand.u32 2147483647, %v5007
      %v5010 = vcvt.s32.f32 %v5003
      %v5011 = vmul.f32 %v5010, %v5008
      %v5012 = vxor.u32 %v5011, 2147483648
      %v5013 = vsel %vm4930, %v5012, %v5011
      %v5014 = vsub.s32 4, %v4990
      %v5015 = vsel %vm4930, %v5014, %v4990
      %v5016 = vsel %vm4929, %v3882, %v5013
      %v5017 = vsel %vm4929, 0, %v5015
      %v5018 = vcosq.f32.pop %v5016
      %v5019 = vsinq.f32.pop %v5016
      %vm5020 = vweird.f32 %v3882
      %v5021 = vadd.s32 %v5017, 3
      %v5022 = vand.u32 %v5021, 3
      %vm5023 = vcmp.lt.s32.totalorder %v5022, 2
      %vm5024 = vcmp.eq.s32.totalorder %v5022, 0
      %v5025 = vxor.u32 %v5019, 2147483648
      %v5026 = vsel %vm5024, %v5018, %v5025
      %vm5027 = vcmp.eq.s32.totalorder %v5022, 2
      %v5028 = vxor.u32 %v5018, 2147483648
      %v5029 = vsel %vm5027, %v5028, %v5019
      %v5030 = vsel %vm5023, %v5026, %v5029
      %v5031 = vsel %vm5020, nan, %v5030
      %v5032 = vand.u32 2147483647, %v3883
      %vm5033 = vcmp.le.f32.partialorder %v5032, 0.7853982
      %vm5034 = vcmp.lt.s32.totalorder %v3883, 0
      %v5035 = vand.u32 %v3883, 2139095040
      %v5036 = vshrl.u32 %v5035, 23
      %v5037 = vsub.s32 %v5036, 127
      %v5038 = vand.u32 2147483647, %v3883
      %v5039 = vand.u32 %v5038, 8388607
      %v5040 = vor.u32 %v5039, 8388608
      %v5041 = vsub.s32 0, %v5040
      %v5042 = vadd.s32 %v5037, 1
      %vm5043 = vcmp.gt.s32.totalorder %v5042, 0
      %v5044 = vsel %vm5043, %v5042, 0
      %v5045 = vshrl.u32 %v5044, 5
      %v5046 = vand.u32 %v5044, 31
      %v5047 = vsub.s32 32, %v5046
      %v5048 = vshrl.u32 683565275, %v5047
      %v5049 = vshll.u32 683565275, %v5046
      %v5050 = vshrl.u32 2475754826, %v5047
      %v5051 = vor.u32 %v5049, %v5050
      %v5052 = vshll.u32 2475754826, %v5046
      %v5053 = vshrl.u32 2131351028, %v5047
      %v5054 = vor.u32 %v5052, %v5053
      %v5055 = vshll.u32 2131351028, %v5046
      %v5056 = vshrl.u32 2102212464, %v5047
      %v5057 = vor.u32 %v5055, %v5056
      %v5058 = vshll.u32 2102212464, %v5046
      %v5059 = vshrl.u32 920167782, %v5047
      %v5060 = vor.u32 %v5058, %v5059
      %v5061 = vshll.u32 920167782, %v5046
      %v5062 = vshrl.u32 1326507024, %v5047
      %v5063 = vor.u32 %v5061, %v5062
      %vm5064 = vcmp.lt.s32.totalorder %v5045, 1
      %vm5065 = vcmp.lt.s32.totalorder %v5045, 2
      %vm5066 = vcmp.lt.s32.totalorder %v5045, 3
      %vm5067 = vcmp.lt.s32.totalorder %v5045, 4
      %v5068 = vsel %vm5064, %v5048, %v5051
      %v5069 = vsel %vm5067, %v5057, 2102212464
      %v5070 = vsel %vm5066, %v5054, %v5069
      %v5071 = vsel %vm5065, %v5068, %v5070
      %v5072 = vsel %vm5064, %v5051, %v5054
      %v5073 = vsel %vm5067, %v5060, 920167782
      %v5074 = vsel %vm5066, %v5057, %v5073
      %v5075 = vsel %vm5065, %v5072, %v5074
      %v5076 = vsel %vm5064, %v5054, %v5057
      %v5077 = vsel %vm5067, %v5063, 1326507024
      %v5078 = vsel %vm5066, %v5060, %v5077
      %v5079 = vsel %vm5065, %v5076, %v5078
      %v5080 = vshll.u32 %v5040, 8
      %v5081 = vmul.u32.u64.compose %v5080, %v5079
      %v5082 = vextract.low.u32 %v5081
      %v5083 = vextract.high.u32 %v5081
      %v5084 = vmul.u32.u64.compose %v5080, %v5075
      %v5085 = vextract.low.u32 %v5084
      %v5086 = vextract.high.u32 %v5084
      %v5087 = vmul.u32 %v5080, %v5071
      %v5088 = vadd.s32 %v5083, %v5085
      %vm5089 = vc.u32 %v5083, %v5085
      %v5090 = vadd.s32 %v5086, 1
      %v5091 = vsel %vm5089, %v5090, %v5086
      %v5092 = vadd.s32 %v5087, %v5091
      %v5093 = vadd.s32 %v5092, 536870912
      %v5094 = vshrl.u32 %v5093, 30
      %v5095 = vshll.u32 %v5094, 30
      %v5096 = vsub.s32 %v5092, %v5095
      %vm5097 = vcmp.lt.s32.totalorder %v5096, 0
      %v5098 = vsub.s32 0, %v5096
      %v5099 = vsel %vm5097, %v5098, %v5096
      %v5100 = vclz %v5099
      %v5101 = vsub.s32 %v5100, 2
      %vm5102 = vcmp.gt.s32.totalorder 0, %v5101
      %v5103 = vsel %vm5102, 0, %v5101
      %v5104 = vsub.s32 32, %v5103
      %v5105 = vshll.u32 %v5096, %v5103
      %v5106 = vshrl.u32 %v5088, %v5104
      %v5107 = vor.u32 %v5105, %v5106
      %v5108 = vsub.s32 4294967266, %v5103
      %v5109 = vadd.s32 %v5108, 127
      %v5110 = vshll.u32 %v5109, 23
      %v5111 = vor.u32 4788187, %v5110
      %v5112 = vand.u32 2147483647, %v5111
      %v5114 = vcvt.s32.f32 %v5107
      %v5115 = vmul.f32 %v5114, %v5112
      %v5116 = vxor.u32 %v5115, 2147483648
      %v5117 = vsel %vm5034, %v5116, %v5115
      %v5118 = vsub.s32 4, %v5094
      %v5119 = vsel %vm5034, %v5118, %v5094
      %v5120 = vsel %vm5033, %v3883, %v5117
      %v5121 = vsel %vm5033, 0, %v5119
      %v5122 = vcosq.f32.pop %v5120
      %v5123 = vsinq.f32.pop %v5120
      %vm5124 = vweird.f32 %v3883
      %v5125 = vadd.s32 %v5121, 3
      %v5126 = vand.u32 %v5125, 3
      %vm5127 = vcmp.lt.s32.totalorder %v5126, 2
      %vm5128 = vcmp.eq.s32.totalorder %v5126, 0
      %v5129 = vxor.u32 %v5123, 2147483648
      %v5130 = vsel %vm5128, %v5122, %v5129
      %vm5131 = vcmp.eq.s32.totalorder %v5126, 2
      %v5132 = vxor.u32 %v5122, 2147483648
      %v5133 = vsel %vm5131, %v5132, %v5123
      %v5134 = vsel %vm5127, %v5130, %v5133
      %v5135 = vsel %vm5124, nan, %v5134
      %v5136 = vand.u32 2147483647, %v3884
      %vm5137 = vcmp.le.f32.partialorder %v5136, 0.7853982
      %vm5138 = vcmp.lt.s32.totalorder %v3884, 0
      %v5139 = vand.u32 %v3884, 2139095040
      %v5140 = vshrl.u32 %v5139, 23
      %v5141 = vsub.s32 %v5140, 127
      %v5142 = vand.u32 2147483647, %v3884
      %v5143 = vand.u32 %v5142, 8388607
      %v5144 = vor.u32 %v5143, 8388608
      %v5145 = vsub.s32 0, %v5144
      %v5146 = vadd.s32 %v5141, 1
      %vm5147 = vcmp.gt.s32.totalorder %v5146, 0
      %v5148 = vsel %vm5147, %v5146, 0
      %v5149 = vshrl.u32 %v5148, 5
      %v5150 = vand.u32 %v5148, 31
      %v5151 = vsub.s32 32, %v5150
      %v5152 = vshrl.u32 683565275, %v5151
      %v5153 = vshll.u32 683565275, %v5150
      %v5154 = vshrl.u32 2475754826, %v5151
      %v5155 = vor.u32 %v5153, %v5154
      %v5156 = vshll.u32 2475754826, %v5150
      %v5157 = vshrl.u32 2131351028, %v5151
      %v5158 = vor.u32 %v5156, %v5157
      %v5159 = vshll.u32 2131351028, %v5150
      %v5160 = vshrl.u32 2102212464, %v5151
      %v5161 = vor.u32 %v5159, %v5160
      %v5162 = vshll.u32 2102212464, %v5150
      %v5163 = vshrl.u32 920167782, %v5151
      %v5164 = vor.u32 %v5162, %v5163
      %v5165 = vshll.u32 920167782, %v5150
      %v5166 = vshrl.u32 1326507024, %v5151
      %v5167 = vor.u32 %v5165, %v5166
      %vm5168 = vcmp.lt.s32.totalorder %v5149, 1
      %vm5169 = vcmp.lt.s32.totalorder %v5149, 2
      %vm5170 = vcmp.lt.s32.totalorder %v5149, 3
      %vm5171 = vcmp.lt.s32.totalorder %v5149, 4
      %v5172 = vsel %vm5168, %v5152, %v5155
      %v5173 = vsel %vm5171, %v5161, 2102212464
      %v5174 = vsel %vm5170, %v5158, %v5173
      %v5175 = vsel %vm5169, %v5172, %v5174
      %v5176 = vsel %vm5168, %v5155, %v5158
      %v5177 = vsel %vm5171, %v5164, 920167782
      %v5178 = vsel %vm5170, %v5161, %v5177
      %v5179 = vsel %vm5169, %v5176, %v5178
      %v5180 = vsel %vm5168, %v5158, %v5161
      %v5181 = vsel %vm5171, %v5167, 1326507024
      %v5182 = vsel %vm5170, %v5164, %v5181
      %v5183 = vsel %vm5169, %v5180, %v5182
      %v5184 = vshll.u32 %v5144, 8
      %v5185 = vmul.u32.u64.compose %v5184, %v5183
      %v5186 = vextract.low.u32 %v5185
      %v5187 = vextract.high.u32 %v5185
      %v5188 = vmul.u32.u64.compose %v5184, %v5179
      %v5189 = vextract.low.u32 %v5188
      %v5190 = vextract.high.u32 %v5188
      %v5191 = vmul.u32 %v5184, %v5175
      %v5192 = vadd.s32 %v5187, %v5189
      %vm5193 = vc.u32 %v5187, %v5189
      %v5194 = vadd.s32 %v5190, 1
      %v5195 = vsel %vm5193, %v5194, %v5190
      %v5196 = vadd.s32 %v5191, %v5195
      %v5197 = vadd.s32 %v5196, 536870912
      %v5198 = vshrl.u32 %v5197, 30
      %v5199 = vshll.u32 %v5198, 30
      %v5200 = vsub.s32 %v5196, %v5199
      %vm5201 = vcmp.lt.s32.totalorder %v5200, 0
      %v5202 = vsub.s32 0, %v5200
      %v5203 = vsel %vm5201, %v5202, %v5200
      %v5204 = vclz %v5203
      %v5205 = vsub.s32 %v5204, 2
      %vm5206 = vcmp.gt.s32.totalorder 0, %v5205
      %v5207 = vsel %vm5206, 0, %v5205
      %v5208 = vsub.s32 32, %v5207
      %v5209 = vshll.u32 %v5200, %v5207
      %v5210 = vshrl.u32 %v5192, %v5208
      %v5211 = vor.u32 %v5209, %v5210
      %v5212 = vsub.s32 4294967266, %v5207
      %v5213 = vadd.s32 %v5212, 127
      %v5214 = vshll.u32 %v5213, 23
      %v5215 = vor.u32 4788187, %v5214
      %v5216 = vand.u32 2147483647, %v5215
      %v5218 = vcvt.s32.f32 %v5211
      %v5219 = vmul.f32 %v5218, %v5216
      %v5220 = vxor.u32 %v5219, 2147483648
      %v5221 = vsel %vm5138, %v5220, %v5219
      %v5222 = vsub.s32 4, %v5198
      %v5223 = vsel %vm5138, %v5222, %v5198
      %v5224 = vsel %vm5137, %v3884, %v5221
      %v5225 = vsel %vm5137, 0, %v5223
      %v5226 = vcosq.f32.pop %v5224
      %v5227 = vsinq.f32.pop %v5224
      %vm5228 = vweird.f32 %v3884
      %v5229 = vadd.s32 %v5225, 3
      %v5230 = vand.u32 %v5229, 3
      %vm5231 = vcmp.lt.s32.totalorder %v5230, 2
      %vm5232 = vcmp.eq.s32.totalorder %v5230, 0
      %v5233 = vxor.u32 %v5227, 2147483648
      %v5234 = vsel %vm5232, %v5226, %v5233
      %vm5235 = vcmp.eq.s32.totalorder %v5230, 2
      %v5236 = vxor.u32 %v5226, 2147483648
      %v5237 = vsel %vm5235, %v5236, %v5227
      %v5238 = vsel %vm5231, %v5234, %v5237
      %v5239 = vsel %vm5228, nan, %v5238
      %v5240 = vand.u32 2147483647, %v3885
      %vm5241 = vcmp.le.f32.partialorder %v5240, 0.7853982
      %vm5242 = vcmp.lt.s32.totalorder %v3885, 0
      %v5243 = vand.u32 %v3885, 2139095040
      %v5244 = vshrl.u32 %v5243, 23
      %v5245 = vsub.s32 %v5244, 127
      %v5246 = vand.u32 2147483647, %v3885
      %v5247 = vand.u32 %v5246, 8388607
      %v5248 = vor.u32 %v5247, 8388608
      %v5249 = vsub.s32 0, %v5248
      %v5250 = vadd.s32 %v5245, 1
      %vm5251 = vcmp.gt.s32.totalorder %v5250, 0
      %v5252 = vsel %vm5251, %v5250, 0
      %v5253 = vshrl.u32 %v5252, 5
      %v5254 = vand.u32 %v5252, 31
      %v5255 = vsub.s32 32, %v5254
      %v5256 = vshrl.u32 683565275, %v5255
      %v5257 = vshll.u32 683565275, %v5254
      %v5258 = vshrl.u32 2475754826, %v5255
      %v5259 = vor.u32 %v5257, %v5258
      %v5260 = vshll.u32 2475754826, %v5254
      %v5261 = vshrl.u32 2131351028, %v5255
      %v5262 = vor.u32 %v5260, %v5261
      %v5263 = vshll.u32 2131351028, %v5254
      %v5264 = vshrl.u32 2102212464, %v5255
      %v5265 = vor.u32 %v5263, %v5264
      %v5266 = vshll.u32 2102212464, %v5254
      %v5267 = vshrl.u32 920167782, %v5255
      %v5268 = vor.u32 %v5266, %v5267
      %v5269 = vshll.u32 920167782, %v5254
      %v5270 = vshrl.u32 1326507024, %v5255
      %v5271 = vor.u32 %v5269, %v5270
      %vm5272 = vcmp.lt.s32.totalorder %v5253, 1
      %vm5273 = vcmp.lt.s32.totalorder %v5253, 2
      %vm5274 = vcmp.lt.s32.totalorder %v5253, 3
      %vm5275 = vcmp.lt.s32.totalorder %v5253, 4
      %v5276 = vsel %vm5272, %v5256, %v5259
      %v5277 = vsel %vm5275, %v5265, 2102212464
      %v5278 = vsel %vm5274, %v5262, %v5277
      %v5279 = vsel %vm5273, %v5276, %v5278
      %v5280 = vsel %vm5272, %v5259, %v5262
      %v5281 = vsel %vm5275, %v5268, 920167782
      %v5282 = vsel %vm5274, %v5265, %v5281
      %v5283 = vsel %vm5273, %v5280, %v5282
      %v5284 = vsel %vm5272, %v5262, %v5265
      %v5285 = vsel %vm5275, %v5271, 1326507024
      %v5286 = vsel %vm5274, %v5268, %v5285
      %v5287 = vsel %vm5273, %v5284, %v5286
      %v5288 = vshll.u32 %v5248, 8
      %v5289 = vmul.u32.u64.compose %v5288, %v5287
      %v5290 = vextract.low.u32 %v5289
      %v5291 = vextract.high.u32 %v5289
      %v5292 = vmul.u32.u64.compose %v5288, %v5283
      %v5293 = vextract.low.u32 %v5292
      %v5294 = vextract.high.u32 %v5292
      %v5295 = vmul.u32 %v5288, %v5279
      %v5296 = vadd.s32 %v5291, %v5293
      %vm5297 = vc.u32 %v5291, %v5293
      %v5298 = vadd.s32 %v5294, 1
      %v5299 = vsel %vm5297, %v5298, %v5294
      %v5300 = vadd.s32 %v5295, %v5299
      %v5301 = vadd.s32 %v5300, 536870912
      %v5302 = vshrl.u32 %v5301, 30
      %v5303 = vshll.u32 %v5302, 30
      %v5304 = vsub.s32 %v5300, %v5303
      %vm5305 = vcmp.lt.s32.totalorder %v5304, 0
      %v5306 = vsub.s32 0, %v5304
      %v5307 = vsel %vm5305, %v5306, %v5304
      %v5308 = vclz %v5307
      %v5309 = vsub.s32 %v5308, 2
      %vm5310 = vcmp.gt.s32.totalorder 0, %v5309
      %v5311 = vsel %vm5310, 0, %v5309
      %v5312 = vsub.s32 32, %v5311
      %v5313 = vshll.u32 %v5304, %v5311
      %v5314 = vshrl.u32 %v5296, %v5312
      %v5315 = vor.u32 %v5313, %v5314
      %v5316 = vsub.s32 4294967266, %v5311
      %v5317 = vadd.s32 %v5316, 127
      %v5318 = vshll.u32 %v5317, 23
      %v5319 = vor.u32 4788187, %v5318
      %v5320 = vand.u32 2147483647, %v5319
      %v5322 = vcvt.s32.f32 %v5315
      %v5323 = vmul.f32 %v5322, %v5320
      %v5324 = vxor.u32 %v5323, 2147483648
      %v5325 = vsel %vm5242, %v5324, %v5323
      %v5326 = vsub.s32 4, %v5302
      %v5327 = vsel %vm5242, %v5326, %v5302
      %v5328 = vsel %vm5241, %v3885, %v5325
      %v5329 = vsel %vm5241, 0, %v5327
      %v5330 = vcosq.f32.pop %v5328
      %v5331 = vsinq.f32.pop %v5328
      %vm5332 = vweird.f32 %v3885
      %v5333 = vadd.s32 %v5329, 3
      %v5334 = vand.u32 %v5333, 3
      %vm5335 = vcmp.lt.s32.totalorder %v5334, 2
      %vm5336 = vcmp.eq.s32.totalorder %v5334, 0
      %v5337 = vxor.u32 %v5331, 2147483648
      %v5338 = vsel %vm5336, %v5330, %v5337
      %vm5339 = vcmp.eq.s32.totalorder %v5334, 2
      %v5340 = vxor.u32 %v5330, 2147483648
      %v5341 = vsel %vm5339, %v5340, %v5331
      %v5342 = vsel %vm5335, %v5338, %v5341
      %v5343 = vsel %vm5332, nan, %v5342
      %v5344 = vand.u32 2147483647, %v3886
      %vm5345 = vcmp.le.f32.partialorder %v5344, 0.7853982
      %vm5346 = vcmp.lt.s32.totalorder %v3886, 0
      %v5347 = vand.u32 %v3886, 2139095040
      %v5348 = vshrl.u32 %v5347, 23
      %v5349 = vsub.s32 %v5348, 127
      %v5350 = vand.u32 2147483647, %v3886
      %v5351 = vand.u32 %v5350, 8388607
      %v5352 = vor.u32 %v5351, 8388608
      %v5353 = vsub.s32 0, %v5352
      %v5354 = vadd.s32 %v5349, 1
      %vm5355 = vcmp.gt.s32.totalorder %v5354, 0
      %v5356 = vsel %vm5355, %v5354, 0
      %v5357 = vshrl.u32 %v5356, 5
      %v5358 = vand.u32 %v5356, 31
      %v5359 = vsub.s32 32, %v5358
      %v5360 = vshrl.u32 683565275, %v5359
      %v5361 = vshll.u32 683565275, %v5358
      %v5362 = vshrl.u32 2475754826, %v5359
      %v5363 = vor.u32 %v5361, %v5362
      %v5364 = vshll.u32 2475754826, %v5358
      %v5365 = vshrl.u32 2131351028, %v5359
      %v5366 = vor.u32 %v5364, %v5365
      %v5367 = vshll.u32 2131351028, %v5358
      %v5368 = vshrl.u32 2102212464, %v5359
      %v5369 = vor.u32 %v5367, %v5368
      %v5370 = vshll.u32 2102212464, %v5358
      %v5371 = vshrl.u32 920167782, %v5359
      %v5372 = vor.u32 %v5370, %v5371
      %v5373 = vshll.u32 920167782, %v5358
      %v5374 = vshrl.u32 1326507024, %v5359
      %v5375 = vor.u32 %v5373, %v5374
      %vm5376 = vcmp.lt.s32.totalorder %v5357, 1
      %vm5377 = vcmp.lt.s32.totalorder %v5357, 2
      %vm5378 = vcmp.lt.s32.totalorder %v5357, 3
      %vm5379 = vcmp.lt.s32.totalorder %v5357, 4
      %v5380 = vsel %vm5376, %v5360, %v5363
      %v5381 = vsel %vm5379, %v5369, 2102212464
      %v5382 = vsel %vm5378, %v5366, %v5381
      %v5383 = vsel %vm5377, %v5380, %v5382
      %v5384 = vsel %vm5376, %v5363, %v5366
      %v5385 = vsel %vm5379, %v5372, 920167782
      %v5386 = vsel %vm5378, %v5369, %v5385
      %v5387 = vsel %vm5377, %v5384, %v5386
      %v5388 = vsel %vm5376, %v5366, %v5369
      %v5389 = vsel %vm5379, %v5375, 1326507024
      %v5390 = vsel %vm5378, %v5372, %v5389
      %v5391 = vsel %vm5377, %v5388, %v5390
      %v5392 = vshll.u32 %v5352, 8
      %v5393 = vmul.u32.u64.compose %v5392, %v5391
      %v5394 = vextract.low.u32 %v5393
      %v5395 = vextract.high.u32 %v5393
      %v5396 = vmul.u32.u64.compose %v5392, %v5387
      %v5397 = vextract.low.u32 %v5396
      %v5398 = vextract.high.u32 %v5396
      %v5399 = vmul.u32 %v5392, %v5383
      %v5400 = vadd.s32 %v5395, %v5397
      %vm5401 = vc.u32 %v5395, %v5397
      %v5402 = vadd.s32 %v5398, 1
      %v5403 = vsel %vm5401, %v5402, %v5398
      %v5404 = vadd.s32 %v5399, %v5403
      %v5405 = vadd.s32 %v5404, 536870912
      %v5406 = vshrl.u32 %v5405, 30
      %v5407 = vshll.u32 %v5406, 30
      %v5408 = vsub.s32 %v5404, %v5407
      %vm5409 = vcmp.lt.s32.totalorder %v5408, 0
      %v5410 = vsub.s32 0, %v5408
      %v5411 = vsel %vm5409, %v5410, %v5408
      %v5412 = vclz %v5411
      %v5413 = vsub.s32 %v5412, 2
      %vm5414 = vcmp.gt.s32.totalorder 0, %v5413
      %v5415 = vsel %vm5414, 0, %v5413
      %v5416 = vsub.s32 32, %v5415
      %v5417 = vshll.u32 %v5408, %v5415
      %v5418 = vshrl.u32 %v5400, %v5416
      %v5419 = vor.u32 %v5417, %v5418
      %v5420 = vsub.s32 4294967266, %v5415
      %v5421 = vadd.s32 %v5420, 127
      %v5422 = vshll.u32 %v5421, 23
      %v5423 = vor.u32 4788187, %v5422
      %v5424 = vand.u32 2147483647, %v5423
      %v5426 = vcvt.s32.f32 %v5419
      %v5427 = vmul.f32 %v5426, %v5424
      %v5428 = vxor.u32 %v5427, 2147483648
      %v5429 = vsel %vm5346, %v5428, %v5427
      %v5430 = vsub.s32 4, %v5406
      %v5431 = vsel %vm5346, %v5430, %v5406
      %v5432 = vsel %vm5345, %v3886, %v5429
      %v5433 = vsel %vm5345, 0, %v5431
      %v5434 = vcosq.f32.pop %v5432
      %v5435 = vsinq.f32.pop %v5432
      %vm5436 = vweird.f32 %v3886
      %v5437 = vadd.s32 %v5433, 3
      %v5438 = vand.u32 %v5437, 3
      %vm5439 = vcmp.lt.s32.totalorder %v5438, 2
      %vm5440 = vcmp.eq.s32.totalorder %v5438, 0
      %v5441 = vxor.u32 %v5435, 2147483648
      %v5442 = vsel %vm5440, %v5434, %v5441
      %vm5443 = vcmp.eq.s32.totalorder %v5438, 2
      %v5444 = vxor.u32 %v5434, 2147483648
      %v5445 = vsel %vm5443, %v5444, %v5435
      %v5446 = vsel %vm5439, %v5442, %v5445
      %v5447 = vsel %vm5436, nan, %v5446
      %v5448 = vand.u32 2147483647, %v3887
      %vm5449 = vcmp.le.f32.partialorder %v5448, 0.7853982
      %vm5450 = vcmp.lt.s32.totalorder %v3887, 0
      %v5451 = vand.u32 %v3887, 2139095040
      %v5452 = vshrl.u32 %v5451, 23
      %v5453 = vsub.s32 %v5452, 127
      %v5454 = vand.u32 2147483647, %v3887
      %v5455 = vand.u32 %v5454, 8388607
      %v5456 = vor.u32 %v5455, 8388608
      %v5457 = vsub.s32 0, %v5456
      %v5458 = vadd.s32 %v5453, 1
      %vm5459 = vcmp.gt.s32.totalorder %v5458, 0
      %v5460 = vsel %vm5459, %v5458, 0
      %v5461 = vshrl.u32 %v5460, 5
      %v5462 = vand.u32 %v5460, 31
      %v5463 = vsub.s32 32, %v5462
      %v5464 = vshrl.u32 683565275, %v5463
      %v5465 = vshll.u32 683565275, %v5462
      %v5466 = vshrl.u32 2475754826, %v5463
      %v5467 = vor.u32 %v5465, %v5466
      %v5468 = vshll.u32 2475754826, %v5462
      %v5469 = vshrl.u32 2131351028, %v5463
      %v5470 = vor.u32 %v5468, %v5469
      %v5471 = vshll.u32 2131351028, %v5462
      %v5472 = vshrl.u32 2102212464, %v5463
      %v5473 = vor.u32 %v5471, %v5472
      %v5474 = vshll.u32 2102212464, %v5462
      %v5475 = vshrl.u32 920167782, %v5463
      %v5476 = vor.u32 %v5474, %v5475
      %v5477 = vshll.u32 920167782, %v5462
      %v5478 = vshrl.u32 1326507024, %v5463
      %v5479 = vor.u32 %v5477, %v5478
      %vm5480 = vcmp.lt.s32.totalorder %v5461, 1
      %vm5481 = vcmp.lt.s32.totalorder %v5461, 2
      %vm5482 = vcmp.lt.s32.totalorder %v5461, 3
      %vm5483 = vcmp.lt.s32.totalorder %v5461, 4
      %v5484 = vsel %vm5480, %v5464, %v5467
      %v5485 = vsel %vm5483, %v5473, 2102212464
      %v5486 = vsel %vm5482, %v5470, %v5485
      %v5487 = vsel %vm5481, %v5484, %v5486
      %v5488 = vsel %vm5480, %v5467, %v5470
      %v5489 = vsel %vm5483, %v5476, 920167782
      %v5490 = vsel %vm5482, %v5473, %v5489
      %v5491 = vsel %vm5481, %v5488, %v5490
      %v5492 = vsel %vm5480, %v5470, %v5473
      %v5493 = vsel %vm5483, %v5479, 1326507024
      %v5494 = vsel %vm5482, %v5476, %v5493
      %v5495 = vsel %vm5481, %v5492, %v5494
      %v5496 = vshll.u32 %v5456, 8
      %v5497 = vmul.u32.u64.compose %v5496, %v5495
      %v5498 = vextract.low.u32 %v5497
      %v5499 = vextract.high.u32 %v5497
      %v5500 = vmul.u32.u64.compose %v5496, %v5491
      %v5501 = vextract.low.u32 %v5500
      %v5502 = vextract.high.u32 %v5500
      %v5503 = vmul.u32 %v5496, %v5487
      %v5504 = vadd.s32 %v5499, %v5501
      %vm5505 = vc.u32 %v5499, %v5501
      %v5506 = vadd.s32 %v5502, 1
      %v5507 = vsel %vm5505, %v5506, %v5502
      %v5508 = vadd.s32 %v5503, %v5507
      %v5509 = vadd.s32 %v5508, 536870912
      %v5510 = vshrl.u32 %v5509, 30
      %v5511 = vshll.u32 %v5510, 30
      %v5512 = vsub.s32 %v5508, %v5511
      %vm5513 = vcmp.lt.s32.totalorder %v5512, 0
      %v5514 = vsub.s32 0, %v5512
      %v5515 = vsel %vm5513, %v5514, %v5512
      %v5516 = vclz %v5515
      %v5517 = vsub.s32 %v5516, 2
      %vm5518 = vcmp.gt.s32.totalorder 0, %v5517
      %v5519 = vsel %vm5518, 0, %v5517
      %v5520 = vsub.s32 32, %v5519
      %v5521 = vshll.u32 %v5512, %v5519
      %v5522 = vshrl.u32 %v5504, %v5520
      %v5523 = vor.u32 %v5521, %v5522
      %v5524 = vsub.s32 4294967266, %v5519
      %v5525 = vadd.s32 %v5524, 127
      %v5526 = vshll.u32 %v5525, 23
      %v5527 = vor.u32 4788187, %v5526
      %v5528 = vand.u32 2147483647, %v5527
      %v5530 = vcvt.s32.f32 %v5523
      %v5531 = vmul.f32 %v5530, %v5528
      %v5532 = vxor.u32 %v5531, 2147483648
      %v5533 = vsel %vm5450, %v5532, %v5531
      %v5534 = vsub.s32 4, %v5510
      %v5535 = vsel %vm5450, %v5534, %v5510
      %v5536 = vsel %vm5449, %v3887, %v5533
      %v5537 = vsel %vm5449, 0, %v5535
      %v5538 = vcosq.f32.pop %v5536
      %v5539 = vsinq.f32.pop %v5536
      %vm5540 = vweird.f32 %v3887
      %v5541 = vadd.s32 %v5537, 3
      %v5542 = vand.u32 %v5541, 3
      %vm5543 = vcmp.lt.s32.totalorder %v5542, 2
      %vm5544 = vcmp.eq.s32.totalorder %v5542, 0
      %v5545 = vxor.u32 %v5539, 2147483648
      %v5546 = vsel %vm5544, %v5538, %v5545
      %vm5547 = vcmp.eq.s32.totalorder %v5542, 2
      %v5548 = vxor.u32 %v5538, 2147483648
      %v5549 = vsel %vm5547, %v5548, %v5539
      %v5550 = vsel %vm5543, %v5546, %v5549
      %v5551 = vsel %vm5540, nan, %v5550
      %5568 = vrot.lane.b32.xlu0 %v3991, 6
      %v5569 = vpop.permute.xlu0 %5568
      %5570 = vrot.lane.b32.xlu0 %v4095, 6
      %v5571 = vpop.permute.xlu0 %5570
      %5572 = vrot.lane.b32.xlu0 %v4199, 6
      %v5573 = vpop.permute.xlu0 %5572
      %5574 = vrot.lane.b32.xlu0 %v4303, 6
      %v5575 = vpop.permute.xlu0 %5574
      %5576 = vrot.lane.b32.xlu0 %v4407, 6
      %v5577 = vpop.permute.xlu0 %5576
      %5578 = vrot.lane.b32.xlu0 %v4511, 6
      %v5579 = vpop.permute.xlu0 %5578
      %5580 = vrot.lane.b32.xlu0 %v4615, 6
      %v5581 = vpop.permute.xlu0 %5580
      %5582 = vrot.lane.b32.xlu0 %v4719, 6
      %v5583 = vpop.permute.xlu0 %5582
      %5584 = vrot.lane.b32.xlu0 %v4823, 6
      %v5585 = vpop.permute.xlu0 %5584
      %5586 = vrot.lane.b32.xlu0 %v4927, 6
      %v5587 = vpop.permute.xlu0 %5586
      %5588 = vrot.lane.b32.xlu0 %v5031, 6
      %v5589 = vpop.permute.xlu0 %5588
      %5590 = vrot.lane.b32.xlu0 %v5135, 6
      %v5591 = vpop.permute.xlu0 %5590
      %5592 = vrot.lane.b32.xlu0 %v5239, 6
      %v5593 = vpop.permute.xlu0 %5592
      %5594 = vrot.lane.b32.xlu0 %v5343, 6
      %v5595 = vpop.permute.xlu0 %5594
      %5596 = vrot.lane.b32.xlu0 %v5447, 6
      %v5597 = vpop.permute.xlu0 %5596
      %5598 = vrot.lane.b32.xlu0 %v5551, 6
      %v5599 = vpop.permute.xlu0 %5598
      %vm5616 = vcmask 80944
      %5617 = vst.msk [vmem:[%s145] sm:$0xff] %vm5616, %v5569
      %5618 = vst.msk [vmem:[%s145 + $0x8] sm:$0xff] %vm5616, %v5571
      %5619 = vst.msk [vmem:[%s145 + $0x10] sm:$0xff] %vm5616, %v5573
      %5620 = vst.msk [vmem:[%s145 + $0x18] sm:$0xff] %vm5616, %v5575
      %5621 = vst.msk [vmem:[%s145 + $0x20] sm:$0xff] %vm5616, %v5577
      %5622 = vst.msk [vmem:[%s145 + $0x28] sm:$0xff] %vm5616, %v5579
      %5623 = vst.msk [vmem:[%s145 + $0x30] sm:$0xff] %vm5616, %v5581
      %5624 = vst.msk [vmem:[%s145 + $0x38] sm:$0xff] %vm5616, %v5583
      %5625 = vst.msk [vmem:[%s145 + $0x40] sm:$0xff] %vm5616, %v5585
      %5626 = vst.msk [vmem:[%s145 + $0x48] sm:$0xff] %vm5616, %v5587
      %5627 = vst.msk [vmem:[%s145 + $0x50] sm:$0xff] %vm5616, %v5589
      %5628 = vst.msk [vmem:[%s145 + $0x58] sm:$0xff] %vm5616, %v5591
      %5629 = vst.msk [vmem:[%s145 + $0x60] sm:$0xff] %vm5616, %v5593
      %5630 = vst.msk [vmem:[%s145 + $0x68] sm:$0xff] %vm5616, %v5595
      %5631 = vst.msk [vmem:[%s145 + $0x70] sm:$0xff] %vm5616, %v5597
      %5632 = vst.msk [vmem:[%s145 + $0x78] sm:$0xff] %vm5616, %v5599
      %v5633 = vand.u32 2147483647, %v3872
      %vm5634 = vcmp.le.f32.partialorder %v5633, 0.7853982
      %vm5635 = vcmp.lt.s32.totalorder %v3872, 0
      %v5636 = vand.u32 %v3872, 2139095040
      %v5637 = vshrl.u32 %v5636, 23
      %v5638 = vsub.s32 %v5637, 127
      %v5639 = vand.u32 2147483647, %v3872
      %v5640 = vand.u32 %v5639, 8388607
      %v5641 = vor.u32 %v5640, 8388608
      %v5642 = vsub.s32 0, %v5641
      %v5643 = vadd.s32 %v5638, 1
      %vm5644 = vcmp.gt.s32.totalorder %v5643, 0
      %v5645 = vsel %vm5644, %v5643, 0
      %v5646 = vshrl.u32 %v5645, 5
      %v5647 = vand.u32 %v5645, 31
      %v5648 = vsub.s32 32, %v5647
      %v5649 = vshrl.u32 683565275, %v5648
      %v5650 = vshll.u32 683565275, %v5647
      %v5651 = vshrl.u32 2475754826, %v5648
      %v5652 = vor.u32 %v5650, %v5651
      %v5653 = vshll.u32 2475754826, %v5647
      %v5654 = vshrl.u32 2131351028, %v5648
      %v5655 = vor.u32 %v5653, %v5654
      %v5656 = vshll.u32 2131351028, %v5647
      %v5657 = vshrl.u32 2102212464, %v5648
      %v5658 = vor.u32 %v5656, %v5657
      %v5659 = vshll.u32 2102212464, %v5647
      %v5660 = vshrl.u32 920167782, %v5648
      %v5661 = vor.u32 %v5659, %v5660
      %v5662 = vshll.u32 920167782, %v5647
      %v5663 = vshrl.u32 1326507024, %v5648
      %v5664 = vor.u32 %v5662, %v5663
      %vm5665 = vcmp.lt.s32.totalorder %v5646, 1
      %vm5666 = vcmp.lt.s32.totalorder %v5646, 2
      %vm5667 = vcmp.lt.s32.totalorder %v5646, 3
      %vm5668 = vcmp.lt.s32.totalorder %v5646, 4
      %v5669 = vsel %vm5665, %v5649, %v5652
      %v5670 = vsel %vm5668, %v5658, 2102212464
      %v5671 = vsel %vm5667, %v5655, %v5670
      %v5672 = vsel %vm5666, %v5669, %v5671
      %v5673 = vsel %vm5665, %v5652, %v5655
      %v5674 = vsel %vm5668, %v5661, 920167782
      %v5675 = vsel %vm5667, %v5658, %v5674
      %v5676 = vsel %vm5666, %v5673, %v5675
      %v5677 = vsel %vm5665, %v5655, %v5658
      %v5678 = vsel %vm5668, %v5664, 1326507024
      %v5679 = vsel %vm5667, %v5661, %v5678
      %v5680 = vsel %vm5666, %v5677, %v5679
      %v5681 = vshll.u32 %v5641, 8
      %v5682 = vmul.u32.u64.compose %v5681, %v5680
      %v5683 = vextract.low.u32 %v5682
      %v5684 = vextract.high.u32 %v5682
      %v5685 = vmul.u32.u64.compose %v5681, %v5676
      %v5686 = vextract.low.u32 %v5685
      %v5687 = vextract.high.u32 %v5685
      %v5688 = vmul.u32 %v5681, %v5672
      %v5689 = vadd.s32 %v5684, %v5686
      %vm5690 = vc.u32 %v5684, %v5686
      %v5691 = vadd.s32 %v5687, 1
      %v5692 = vsel %vm5690, %v5691, %v5687
      %v5693 = vadd.s32 %v5688, %v5692
      %v5694 = vadd.s32 %v5693, 536870912
      %v5695 = vshrl.u32 %v5694, 30
      %v5696 = vshll.u32 %v5695, 30
      %v5697 = vsub.s32 %v5693, %v5696
      %vm5698 = vcmp.lt.s32.totalorder %v5697, 0
      %v5699 = vsub.s32 0, %v5697
      %v5700 = vsel %vm5698, %v5699, %v5697
      %v5701 = vclz %v5700
      %v5702 = vsub.s32 %v5701, 2
      %vm5703 = vcmp.gt.s32.totalorder 0, %v5702
      %v5704 = vsel %vm5703, 0, %v5702
      %v5705 = vsub.s32 32, %v5704
      %v5706 = vshll.u32 %v5697, %v5704
      %v5707 = vshrl.u32 %v5689, %v5705
      %v5708 = vor.u32 %v5706, %v5707
      %v5709 = vsub.s32 4294967266, %v5704
      %v5710 = vadd.s32 %v5709, 127
      %v5711 = vshll.u32 %v5710, 23
      %v5712 = vor.u32 4788187, %v5711
      %v5713 = vand.u32 2147483647, %v5712
      %v5715 = vcvt.s32.f32 %v5708
      %v5716 = vmul.f32 %v5715, %v5713
      %v5717 = vxor.u32 %v5716, 2147483648
      %v5718 = vsel %vm5635, %v5717, %v5716
      %v5719 = vsub.s32 4, %v5695
      %v5720 = vsel %vm5635, %v5719, %v5695
      %v5721 = vsel %vm5634, %v3872, %v5718
      %v5722 = vsel %vm5634, 0, %v5720
      %v5723 = vcosq.f32.pop %v5721
      %v5724 = vsinq.f32.pop %v5721
      %vm5725 = vweird.f32 %v3872
      %v5726 = vand.u32 %v5722, 3
      %vm5727 = vcmp.lt.s32.totalorder %v5726, 2
      %vm5728 = vcmp.eq.s32.totalorder %v5726, 0
      %v5729 = vxor.u32 %v5724, 2147483648
      %v5730 = vsel %vm5728, %v5723, %v5729
      %vm5731 = vcmp.eq.s32.totalorder %v5726, 2
      %v5732 = vxor.u32 %v5723, 2147483648
      %v5733 = vsel %vm5731, %v5732, %v5724
      %v5734 = vsel %vm5727, %v5730, %v5733
      %v5735 = vsel %vm5725, nan, %v5734
      %v5736 = vand.u32 2147483647, %v3873
      %vm5737 = vcmp.le.f32.partialorder %v5736, 0.7853982
      %vm5738 = vcmp.lt.s32.totalorder %v3873, 0
      %v5739 = vand.u32 %v3873, 2139095040
      %v5740 = vshrl.u32 %v5739, 23
      %v5741 = vsub.s32 %v5740, 127
      %v5742 = vand.u32 2147483647, %v3873
      %v5743 = vand.u32 %v5742, 8388607
      %v5744 = vor.u32 %v5743, 8388608
      %v5745 = vsub.s32 0, %v5744
      %v5746 = vadd.s32 %v5741, 1
      %vm5747 = vcmp.gt.s32.totalorder %v5746, 0
      %v5748 = vsel %vm5747, %v5746, 0
      %v5749 = vshrl.u32 %v5748, 5
      %v5750 = vand.u32 %v5748, 31
      %v5751 = vsub.s32 32, %v5750
      %v5752 = vshrl.u32 683565275, %v5751
      %v5753 = vshll.u32 683565275, %v5750
      %v5754 = vshrl.u32 2475754826, %v5751
      %v5755 = vor.u32 %v5753, %v5754
      %v5756 = vshll.u32 2475754826, %v5750
      %v5757 = vshrl.u32 2131351028, %v5751
      %v5758 = vor.u32 %v5756, %v5757
      %v5759 = vshll.u32 2131351028, %v5750
      %v5760 = vshrl.u32 2102212464, %v5751
      %v5761 = vor.u32 %v5759, %v5760
      %v5762 = vshll.u32 2102212464, %v5750
      %v5763 = vshrl.u32 920167782, %v5751
      %v5764 = vor.u32 %v5762, %v5763
      %v5765 = vshll.u32 920167782, %v5750
      %v5766 = vshrl.u32 1326507024, %v5751
      %v5767 = vor.u32 %v5765, %v5766
      %vm5768 = vcmp.lt.s32.totalorder %v5749, 1
      %vm5769 = vcmp.lt.s32.totalorder %v5749, 2
      %vm5770 = vcmp.lt.s32.totalorder %v5749, 3
      %vm5771 = vcmp.lt.s32.totalorder %v5749, 4
      %v5772 = vsel %vm5768, %v5752, %v5755
      %v5773 = vsel %vm5771, %v5761, 2102212464
      %v5774 = vsel %vm5770, %v5758, %v5773
      %v5775 = vsel %vm5769, %v5772, %v5774
      %v5776 = vsel %vm5768, %v5755, %v5758
      %v5777 = vsel %vm5771, %v5764, 920167782
      %v5778 = vsel %vm5770, %v5761, %v5777
      %v5779 = vsel %vm5769, %v5776, %v5778
      %v5780 = vsel %vm5768, %v5758, %v5761
      %v5781 = vsel %vm5771, %v5767, 1326507024
      %v5782 = vsel %vm5770, %v5764, %v5781
      %v5783 = vsel %vm5769, %v5780, %v5782
      %v5784 = vshll.u32 %v5744, 8
      %v5785 = vmul.u32.u64.compose %v5784, %v5783
      %v5786 = vextract.low.u32 %v5785
      %v5787 = vextract.high.u32 %v5785
      %v5788 = vmul.u32.u64.compose %v5784, %v5779
      %v5789 = vextract.low.u32 %v5788
      %v5790 = vextract.high.u32 %v5788
      %v5791 = vmul.u32 %v5784, %v5775
      %v5792 = vadd.s32 %v5787, %v5789
      %vm5793 = vc.u32 %v5787, %v5789
      %v5794 = vadd.s32 %v5790, 1
      %v5795 = vsel %vm5793, %v5794, %v5790
      %v5796 = vadd.s32 %v5791, %v5795
      %v5797 = vadd.s32 %v5796, 536870912
      %v5798 = vshrl.u32 %v5797, 30
      %v5799 = vshll.u32 %v5798, 30
      %v5800 = vsub.s32 %v5796, %v5799
      %vm5801 = vcmp.lt.s32.totalorder %v5800, 0
      %v5802 = vsub.s32 0, %v5800
      %v5803 = vsel %vm5801, %v5802, %v5800
      %v5804 = vclz %v5803
      %v5805 = vsub.s32 %v5804, 2
      %vm5806 = vcmp.gt.s32.totalorder 0, %v5805
      %v5807 = vsel %vm5806, 0, %v5805
      %v5808 = vsub.s32 32, %v5807
      %v5809 = vshll.u32 %v5800, %v5807
      %v5810 = vshrl.u32 %v5792, %v5808
      %v5811 = vor.u32 %v5809, %v5810
      %v5812 = vsub.s32 4294967266, %v5807
      %v5813 = vadd.s32 %v5812, 127
      %v5814 = vshll.u32 %v5813, 23
      %v5815 = vor.u32 4788187, %v5814
      %v5816 = vand.u32 2147483647, %v5815
      %v5818 = vcvt.s32.f32 %v5811
      %v5819 = vmul.f32 %v5818, %v5816
      %v5820 = vxor.u32 %v5819, 2147483648
      %v5821 = vsel %vm5738, %v5820, %v5819
      %v5822 = vsub.s32 4, %v5798
      %v5823 = vsel %vm5738, %v5822, %v5798
      %v5824 = vsel %vm5737, %v3873, %v5821
      %v5825 = vsel %vm5737, 0, %v5823
      %v5826 = vcosq.f32.pop %v5824
      %v5827 = vsinq.f32.pop %v5824
      %vm5828 = vweird.f32 %v3873
      %v5829 = vand.u32 %v5825, 3
      %vm5830 = vcmp.lt.s32.totalorder %v5829, 2
      %vm5831 = vcmp.eq.s32.totalorder %v5829, 0
      %v5832 = vxor.u32 %v5827, 2147483648
      %v5833 = vsel %vm5831, %v5826, %v5832
      %vm5834 = vcmp.eq.s32.totalorder %v5829, 2
      %v5835 = vxor.u32 %v5826, 2147483648
      %v5836 = vsel %vm5834, %v5835, %v5827
      %v5837 = vsel %vm5830, %v5833, %v5836
      %v5838 = vsel %vm5828, nan, %v5837
      %v5839 = vand.u32 2147483647, %v3874
      %vm5840 = vcmp.le.f32.partialorder %v5839, 0.7853982
      %vm5841 = vcmp.lt.s32.totalorder %v3874, 0
      %v5842 = vand.u32 %v3874, 2139095040
      %v5843 = vshrl.u32 %v5842, 23
      %v5844 = vsub.s32 %v5843, 127
      %v5845 = vand.u32 2147483647, %v3874
      %v5846 = vand.u32 %v5845, 8388607
      %v5847 = vor.u32 %v5846, 8388608
      %v5848 = vsub.s32 0, %v5847
      %v5849 = vadd.s32 %v5844, 1
      %vm5850 = vcmp.gt.s32.totalorder %v5849, 0
      %v5851 = vsel %vm5850, %v5849, 0
      %v5852 = vshrl.u32 %v5851, 5
      %v5853 = vand.u32 %v5851, 31
      %v5854 = vsub.s32 32, %v5853
      %v5855 = vshrl.u32 683565275, %v5854
      %v5856 = vshll.u32 683565275, %v5853
      %v5857 = vshrl.u32 2475754826, %v5854
      %v5858 = vor.u32 %v5856, %v5857
      %v5859 = vshll.u32 2475754826, %v5853
      %v5860 = vshrl.u32 2131351028, %v5854
      %v5861 = vor.u32 %v5859, %v5860
      %v5862 = vshll.u32 2131351028, %v5853
      %v5863 = vshrl.u32 2102212464, %v5854
      %v5864 = vor.u32 %v5862, %v5863
      %v5865 = vshll.u32 2102212464, %v5853
      %v5866 = vshrl.u32 920167782, %v5854
      %v5867 = vor.u32 %v5865, %v5866
      %v5868 = vshll.u32 920167782, %v5853
      %v5869 = vshrl.u32 1326507024, %v5854
      %v5870 = vor.u32 %v5868, %v5869
      %vm5871 = vcmp.lt.s32.totalorder %v5852, 1
      %vm5872 = vcmp.lt.s32.totalorder %v5852, 2
      %vm5873 = vcmp.lt.s32.totalorder %v5852, 3
      %vm5874 = vcmp.lt.s32.totalorder %v5852, 4
      %v5875 = vsel %vm5871, %v5855, %v5858
      %v5876 = vsel %vm5874, %v5864, 2102212464
      %v5877 = vsel %vm5873, %v5861, %v5876
      %v5878 = vsel %vm5872, %v5875, %v5877
      %v5879 = vsel %vm5871, %v5858, %v5861
      %v5880 = vsel %vm5874, %v5867, 920167782
      %v5881 = vsel %vm5873, %v5864, %v5880
      %v5882 = vsel %vm5872, %v5879, %v5881
      %v5883 = vsel %vm5871, %v5861, %v5864
      %v5884 = vsel %vm5874, %v5870, 1326507024
      %v5885 = vsel %vm5873, %v5867, %v5884
      %v5886 = vsel %vm5872, %v5883, %v5885
      %v5887 = vshll.u32 %v5847, 8
      %v5888 = vmul.u32.u64.compose %v5887, %v5886
      %v5889 = vextract.low.u32 %v5888
      %v5890 = vextract.high.u32 %v5888
      %v5891 = vmul.u32.u64.compose %v5887, %v5882
      %v5892 = vextract.low.u32 %v5891
      %v5893 = vextract.high.u32 %v5891
      %v5894 = vmul.u32 %v5887, %v5878
      %v5895 = vadd.s32 %v5890, %v5892
      %vm5896 = vc.u32 %v5890, %v5892
      %v5897 = vadd.s32 %v5893, 1
      %v5898 = vsel %vm5896, %v5897, %v5893
      %v5899 = vadd.s32 %v5894, %v5898
      %v5900 = vadd.s32 %v5899, 536870912
      %v5901 = vshrl.u32 %v5900, 30
      %v5902 = vshll.u32 %v5901, 30
      %v5903 = vsub.s32 %v5899, %v5902
      %vm5904 = vcmp.lt.s32.totalorder %v5903, 0
      %v5905 = vsub.s32 0, %v5903
      %v5906 = vsel %vm5904, %v5905, %v5903
      %v5907 = vclz %v5906
      %v5908 = vsub.s32 %v5907, 2
      %vm5909 = vcmp.gt.s32.totalorder 0, %v5908
      %v5910 = vsel %vm5909, 0, %v5908
      %v5911 = vsub.s32 32, %v5910
      %v5912 = vshll.u32 %v5903, %v5910
      %v5913 = vshrl.u32 %v5895, %v5911
      %v5914 = vor.u32 %v5912, %v5913
      %v5915 = vsub.s32 4294967266, %v5910
      %v5916 = vadd.s32 %v5915, 127
      %v5917 = vshll.u32 %v5916, 23
      %v5918 = vor.u32 4788187, %v5917
      %v5919 = vand.u32 2147483647, %v5918
      %v5921 = vcvt.s32.f32 %v5914
      %v5922 = vmul.f32 %v5921, %v5919
      %v5923 = vxor.u32 %v5922, 2147483648
      %v5924 = vsel %vm5841, %v5923, %v5922
      %v5925 = vsub.s32 4, %v5901
      %v5926 = vsel %vm5841, %v5925, %v5901
      %v5927 = vsel %vm5840, %v3874, %v5924
      %v5928 = vsel %vm5840, 0, %v5926
      %v5929 = vcosq.f32.pop %v5927
      %v5930 = vsinq.f32.pop %v5927
      %vm5931 = vweird.f32 %v3874
      %v5932 = vand.u32 %v5928, 3
      %vm5933 = vcmp.lt.s32.totalorder %v5932, 2
      %vm5934 = vcmp.eq.s32.totalorder %v5932, 0
      %v5935 = vxor.u32 %v5930, 2147483648
      %v5936 = vsel %vm5934, %v5929, %v5935
      %vm5937 = vcmp.eq.s32.totalorder %v5932, 2
      %v5938 = vxor.u32 %v5929, 2147483648
      %v5939 = vsel %vm5937, %v5938, %v5930
      %v5940 = vsel %vm5933, %v5936, %v5939
      %v5941 = vsel %vm5931, nan, %v5940
      %v5942 = vand.u32 2147483647, %v3875
      %vm5943 = vcmp.le.f32.partialorder %v5942, 0.7853982
      %vm5944 = vcmp.lt.s32.totalorder %v3875, 0
      %v5945 = vand.u32 %v3875, 2139095040
      %v5946 = vshrl.u32 %v5945, 23
      %v5947 = vsub.s32 %v5946, 127
      %v5948 = vand.u32 2147483647, %v3875
      %v5949 = vand.u32 %v5948, 8388607
      %v5950 = vor.u32 %v5949, 8388608
      %v5951 = vsub.s32 0, %v5950
      %v5952 = vadd.s32 %v5947, 1
      %vm5953 = vcmp.gt.s32.totalorder %v5952, 0
      %v5954 = vsel %vm5953, %v5952, 0
      %v5955 = vshrl.u32 %v5954, 5
      %v5956 = vand.u32 %v5954, 31
      %v5957 = vsub.s32 32, %v5956
      %v5958 = vshrl.u32 683565275, %v5957
      %v5959 = vshll.u32 683565275, %v5956
      %v5960 = vshrl.u32 2475754826, %v5957
      %v5961 = vor.u32 %v5959, %v5960
      %v5962 = vshll.u32 2475754826, %v5956
      %v5963 = vshrl.u32 2131351028, %v5957
      %v5964 = vor.u32 %v5962, %v5963
      %v5965 = vshll.u32 2131351028, %v5956
      %v5966 = vshrl.u32 2102212464, %v5957
      %v5967 = vor.u32 %v5965, %v5966
      %v5968 = vshll.u32 2102212464, %v5956
      %v5969 = vshrl.u32 920167782, %v5957
      %v5970 = vor.u32 %v5968, %v5969
      %v5971 = vshll.u32 920167782, %v5956
      %v5972 = vshrl.u32 1326507024, %v5957
      %v5973 = vor.u32 %v5971, %v5972
      %vm5974 = vcmp.lt.s32.totalorder %v5955, 1
      %vm5975 = vcmp.lt.s32.totalorder %v5955, 2
      %vm5976 = vcmp.lt.s32.totalorder %v5955, 3
      %vm5977 = vcmp.lt.s32.totalorder %v5955, 4
      %v5978 = vsel %vm5974, %v5958, %v5961
      %v5979 = vsel %vm5977, %v5967, 2102212464
      %v5980 = vsel %vm5976, %v5964, %v5979
      %v5981 = vsel %vm5975, %v5978, %v5980
      %v5982 = vsel %vm5974, %v5961, %v5964
      %v5983 = vsel %vm5977, %v5970, 920167782
      %v5984 = vsel %vm5976, %v5967, %v5983
      %v5985 = vsel %vm5975, %v5982, %v5984
      %v5986 = vsel %vm5974, %v5964, %v5967
      %v5987 = vsel %vm5977, %v5973, 1326507024
      %v5988 = vsel %vm5976, %v5970, %v5987
      %v5989 = vsel %vm5975, %v5986, %v5988
      %v5990 = vshll.u32 %v5950, 8
      %v5991 = vmul.u32.u64.compose %v5990, %v5989
      %v5992 = vextract.low.u32 %v5991
      %v5993 = vextract.high.u32 %v5991
      %v5994 = vmul.u32.u64.compose %v5990, %v5985
      %v5995 = vextract.low.u32 %v5994
      %v5996 = vextract.high.u32 %v5994
      %v5997 = vmul.u32 %v5990, %v5981
      %v5998 = vadd.s32 %v5993, %v5995
      %vm5999 = vc.u32 %v5993, %v5995
      %v6000 = vadd.s32 %v5996, 1
      %v6001 = vsel %vm5999, %v6000, %v5996
      %v6002 = vadd.s32 %v5997, %v6001
      %v6003 = vadd.s32 %v6002, 536870912
      %v6004 = vshrl.u32 %v6003, 30
      %v6005 = vshll.u32 %v6004, 30
      %v6006 = vsub.s32 %v6002, %v6005
      %vm6007 = vcmp.lt.s32.totalorder %v6006, 0
      %v6008 = vsub.s32 0, %v6006
      %v6009 = vsel %vm6007, %v6008, %v6006
      %v6010 = vclz %v6009
      %v6011 = vsub.s32 %v6010, 2
      %vm6012 = vcmp.gt.s32.totalorder 0, %v6011
      %v6013 = vsel %vm6012, 0, %v6011
      %v6014 = vsub.s32 32, %v6013
      %v6015 = vshll.u32 %v6006, %v6013
      %v6016 = vshrl.u32 %v5998, %v6014
      %v6017 = vor.u32 %v6015, %v6016
      %v6018 = vsub.s32 4294967266, %v6013
      %v6019 = vadd.s32 %v6018, 127
      %v6020 = vshll.u32 %v6019, 23
      %v6021 = vor.u32 4788187, %v6020
      %v6022 = vand.u32 2147483647, %v6021
      %v6024 = vcvt.s32.f32 %v6017
      %v6025 = vmul.f32 %v6024, %v6022
      %v6026 = vxor.u32 %v6025, 2147483648
      %v6027 = vsel %vm5944, %v6026, %v6025
      %v6028 = vsub.s32 4, %v6004
      %v6029 = vsel %vm5944, %v6028, %v6004
      %v6030 = vsel %vm5943, %v3875, %v6027
      %v6031 = vsel %vm5943, 0, %v6029
      %v6032 = vcosq.f32.pop %v6030
      %v6033 = vsinq.f32.pop %v6030
      %vm6034 = vweird.f32 %v3875
      %v6035 = vand.u32 %v6031, 3
      %vm6036 = vcmp.lt.s32.totalorder %v6035, 2
      %vm6037 = vcmp.eq.s32.totalorder %v6035, 0
      %v6038 = vxor.u32 %v6033, 2147483648
      %v6039 = vsel %vm6037, %v6032, %v6038
      %vm6040 = vcmp.eq.s32.totalorder %v6035, 2
      %v6041 = vxor.u32 %v6032, 2147483648
      %v6042 = vsel %vm6040, %v6041, %v6033
      %v6043 = vsel %vm6036, %v6039, %v6042
      %v6044 = vsel %vm6034, nan, %v6043
      %v6045 = vand.u32 2147483647, %v3876
      %vm6046 = vcmp.le.f32.partialorder %v6045, 0.7853982
      %vm6047 = vcmp.lt.s32.totalorder %v3876, 0
      %v6048 = vand.u32 %v3876, 2139095040
      %v6049 = vshrl.u32 %v6048, 23
      %v6050 = vsub.s32 %v6049, 127
      %v6051 = vand.u32 2147483647, %v3876
      %v6052 = vand.u32 %v6051, 8388607
      %v6053 = vor.u32 %v6052, 8388608
      %v6054 = vsub.s32 0, %v6053
      %v6055 = vadd.s32 %v6050, 1
      %vm6056 = vcmp.gt.s32.totalorder %v6055, 0
      %v6057 = vsel %vm6056, %v6055, 0
      %v6058 = vshrl.u32 %v6057, 5
      %v6059 = vand.u32 %v6057, 31
      %v6060 = vsub.s32 32, %v6059
      %v6061 = vshrl.u32 683565275, %v6060
      %v6062 = vshll.u32 683565275, %v6059
      %v6063 = vshrl.u32 2475754826, %v6060
      %v6064 = vor.u32 %v6062, %v6063
      %v6065 = vshll.u32 2475754826, %v6059
      %v6066 = vshrl.u32 2131351028, %v6060
      %v6067 = vor.u32 %v6065, %v6066
      %v6068 = vshll.u32 2131351028, %v6059
      %v6069 = vshrl.u32 2102212464, %v6060
      %v6070 = vor.u32 %v6068, %v6069
      %v6071 = vshll.u32 2102212464, %v6059
      %v6072 = vshrl.u32 920167782, %v6060
      %v6073 = vor.u32 %v6071, %v6072
      %v6074 = vshll.u32 920167782, %v6059
      %v6075 = vshrl.u32 1326507024, %v6060
      %v6076 = vor.u32 %v6074, %v6075
      %vm6077 = vcmp.lt.s32.totalorder %v6058, 1
      %vm6078 = vcmp.lt.s32.totalorder %v6058, 2
      %vm6079 = vcmp.lt.s32.totalorder %v6058, 3
      %vm6080 = vcmp.lt.s32.totalorder %v6058, 4
      %v6081 = vsel %vm6077, %v6061, %v6064
      %v6082 = vsel %vm6080, %v6070, 2102212464
      %v6083 = vsel %vm6079, %v6067, %v6082
      %v6084 = vsel %vm6078, %v6081, %v6083
      %v6085 = vsel %vm6077, %v6064, %v6067
      %v6086 = vsel %vm6080, %v6073, 920167782
      %v6087 = vsel %vm6079, %v6070, %v6086
      %v6088 = vsel %vm6078, %v6085, %v6087
      %v6089 = vsel %vm6077, %v6067, %v6070
      %v6090 = vsel %vm6080, %v6076, 1326507024
      %v6091 = vsel %vm6079, %v6073, %v6090
      %v6092 = vsel %vm6078, %v6089, %v6091
      %v6093 = vshll.u32 %v6053, 8
      %v6094 = vmul.u32.u64.compose %v6093, %v6092
      %v6095 = vextract.low.u32 %v6094
      %v6096 = vextract.high.u32 %v6094
      %v6097 = vmul.u32.u64.compose %v6093, %v6088
      %v6098 = vextract.low.u32 %v6097
      %v6099 = vextract.high.u32 %v6097
      %v6100 = vmul.u32 %v6093, %v6084
      %v6101 = vadd.s32 %v6096, %v6098
      %vm6102 = vc.u32 %v6096, %v6098
      %v6103 = vadd.s32 %v6099, 1
      %v6104 = vsel %vm6102, %v6103, %v6099
      %v6105 = vadd.s32 %v6100, %v6104
      %v6106 = vadd.s32 %v6105, 536870912
      %v6107 = vshrl.u32 %v6106, 30
      %v6108 = vshll.u32 %v6107, 30
      %v6109 = vsub.s32 %v6105, %v6108
      %vm6110 = vcmp.lt.s32.totalorder %v6109, 0
      %v6111 = vsub.s32 0, %v6109
      %v6112 = vsel %vm6110, %v6111, %v6109
      %v6113 = vclz %v6112
      %v6114 = vsub.s32 %v6113, 2
      %vm6115 = vcmp.gt.s32.totalorder 0, %v6114
      %v6116 = vsel %vm6115, 0, %v6114
      %v6117 = vsub.s32 32, %v6116
      %v6118 = vshll.u32 %v6109, %v6116
      %v6119 = vshrl.u32 %v6101, %v6117
      %v6120 = vor.u32 %v6118, %v6119
      %v6121 = vsub.s32 4294967266, %v6116
      %v6122 = vadd.s32 %v6121, 127
      %v6123 = vshll.u32 %v6122, 23
      %v6124 = vor.u32 4788187, %v6123
      %v6125 = vand.u32 2147483647, %v6124
      %v6127 = vcvt.s32.f32 %v6120
      %v6128 = vmul.f32 %v6127, %v6125
      %v6129 = vxor.u32 %v6128, 2147483648
      %v6130 = vsel %vm6047, %v6129, %v6128
      %v6131 = vsub.s32 4, %v6107
      %v6132 = vsel %vm6047, %v6131, %v6107
      %v6133 = vsel %vm6046, %v3876, %v6130
      %v6134 = vsel %vm6046, 0, %v6132
      %v6135 = vcosq.f32.pop %v6133
      %v6136 = vsinq.f32.pop %v6133
      %vm6137 = vweird.f32 %v3876
      %v6138 = vand.u32 %v6134, 3
      %vm6139 = vcmp.lt.s32.totalorder %v6138, 2
      %vm6140 = vcmp.eq.s32.totalorder %v6138, 0
      %v6141 = vxor.u32 %v6136, 2147483648
      %v6142 = vsel %vm6140, %v6135, %v6141
      %vm6143 = vcmp.eq.s32.totalorder %v6138, 2
      %v6144 = vxor.u32 %v6135, 2147483648
      %v6145 = vsel %vm6143, %v6144, %v6136
      %v6146 = vsel %vm6139, %v6142, %v6145
      %v6147 = vsel %vm6137, nan, %v6146
      %v6148 = vand.u32 2147483647, %v3877
      %vm6149 = vcmp.le.f32.partialorder %v6148, 0.7853982
      %vm6150 = vcmp.lt.s32.totalorder %v3877, 0
      %v6151 = vand.u32 %v3877, 2139095040
      %v6152 = vshrl.u32 %v6151, 23
      %v6153 = vsub.s32 %v6152, 127
      %v6154 = vand.u32 2147483647, %v3877
      %v6155 = vand.u32 %v6154, 8388607
      %v6156 = vor.u32 %v6155, 8388608
      %v6157 = vsub.s32 0, %v6156
      %v6158 = vadd.s32 %v6153, 1
      %vm6159 = vcmp.gt.s32.totalorder %v6158, 0
      %v6160 = vsel %vm6159, %v6158, 0
      %v6161 = vshrl.u32 %v6160, 5
      %v6162 = vand.u32 %v6160, 31
      %v6163 = vsub.s32 32, %v6162
      %v6164 = vshrl.u32 683565275, %v6163
      %v6165 = vshll.u32 683565275, %v6162
      %v6166 = vshrl.u32 2475754826, %v6163
      %v6167 = vor.u32 %v6165, %v6166
      %v6168 = vshll.u32 2475754826, %v6162
      %v6169 = vshrl.u32 2131351028, %v6163
      %v6170 = vor.u32 %v6168, %v6169
      %v6171 = vshll.u32 2131351028, %v6162
      %v6172 = vshrl.u32 2102212464, %v6163
      %v6173 = vor.u32 %v6171, %v6172
      %v6174 = vshll.u32 2102212464, %v6162
      %v6175 = vshrl.u32 920167782, %v6163
      %v6176 = vor.u32 %v6174, %v6175
      %v6177 = vshll.u32 920167782, %v6162
      %v6178 = vshrl.u32 1326507024, %v6163
      %v6179 = vor.u32 %v6177, %v6178
      %vm6180 = vcmp.lt.s32.totalorder %v6161, 1
      %vm6181 = vcmp.lt.s32.totalorder %v6161, 2
      %vm6182 = vcmp.lt.s32.totalorder %v6161, 3
      %vm6183 = vcmp.lt.s32.totalorder %v6161, 4
      %v6184 = vsel %vm6180, %v6164, %v6167
      %v6185 = vsel %vm6183, %v6173, 2102212464
      %v6186 = vsel %vm6182, %v6170, %v6185
      %v6187 = vsel %vm6181, %v6184, %v6186
      %v6188 = vsel %vm6180, %v6167, %v6170
      %v6189 = vsel %vm6183, %v6176, 920167782
      %v6190 = vsel %vm6182, %v6173, %v6189
      %v6191 = vsel %vm6181, %v6188, %v6190
      %v6192 = vsel %vm6180, %v6170, %v6173
      %v6193 = vsel %vm6183, %v6179, 1326507024
      %v6194 = vsel %vm6182, %v6176, %v6193
      %v6195 = vsel %vm6181, %v6192, %v6194
      %v6196 = vshll.u32 %v6156, 8
      %v6197 = vmul.u32.u64.compose %v6196, %v6195
      %v6198 = vextract.low.u32 %v6197
      %v6199 = vextract.high.u32 %v6197
      %v6200 = vmul.u32.u64.compose %v6196, %v6191
      %v6201 = vextract.low.u32 %v6200
      %v6202 = vextract.high.u32 %v6200
      %v6203 = vmul.u32 %v6196, %v6187
      %v6204 = vadd.s32 %v6199, %v6201
      %vm6205 = vc.u32 %v6199, %v6201
      %v6206 = vadd.s32 %v6202, 1
      %v6207 = vsel %vm6205, %v6206, %v6202
      %v6208 = vadd.s32 %v6203, %v6207
      %v6209 = vadd.s32 %v6208, 536870912
      %v6210 = vshrl.u32 %v6209, 30
      %v6211 = vshll.u32 %v6210, 30
      %v6212 = vsub.s32 %v6208, %v6211
      %vm6213 = vcmp.lt.s32.totalorder %v6212, 0
      %v6214 = vsub.s32 0, %v6212
      %v6215 = vsel %vm6213, %v6214, %v6212
      %v6216 = vclz %v6215
      %v6217 = vsub.s32 %v6216, 2
      %vm6218 = vcmp.gt.s32.totalorder 0, %v6217
      %v6219 = vsel %vm6218, 0, %v6217
      %v6220 = vsub.s32 32, %v6219
      %v6221 = vshll.u32 %v6212, %v6219
      %v6222 = vshrl.u32 %v6204, %v6220
      %v6223 = vor.u32 %v6221, %v6222
      %v6224 = vsub.s32 4294967266, %v6219
      %v6225 = vadd.s32 %v6224, 127
      %v6226 = vshll.u32 %v6225, 23
      %v6227 = vor.u32 4788187, %v6226
      %v6228 = vand.u32 2147483647, %v6227
      %v6230 = vcvt.s32.f32 %v6223
      %v6231 = vmul.f32 %v6230, %v6228
      %v6232 = vxor.u32 %v6231, 2147483648
      %v6233 = vsel %vm6150, %v6232, %v6231
      %v6234 = vsub.s32 4, %v6210
      %v6235 = vsel %vm6150, %v6234, %v6210
      %v6236 = vsel %vm6149, %v3877, %v6233
      %v6237 = vsel %vm6149, 0, %v6235
      %v6238 = vcosq.f32.pop %v6236
      %v6239 = vsinq.f32.pop %v6236
      %vm6240 = vweird.f32 %v3877
      %v6241 = vand.u32 %v6237, 3
      %vm6242 = vcmp.lt.s32.totalorder %v6241, 2
      %vm6243 = vcmp.eq.s32.totalorder %v6241, 0
      %v6244 = vxor.u32 %v6239, 2147483648
      %v6245 = vsel %vm6243, %v6238, %v6244
      %vm6246 = vcmp.eq.s32.totalorder %v6241, 2
      %v6247 = vxor.u32 %v6238, 2147483648
      %v6248 = vsel %vm6246, %v6247, %v6239
      %v6249 = vsel %vm6242, %v6245, %v6248
      %v6250 = vsel %vm6240, nan, %v6249
      %v6251 = vand.u32 2147483647, %v3878
      %vm6252 = vcmp.le.f32.partialorder %v6251, 0.7853982
      %vm6253 = vcmp.lt.s32.totalorder %v3878, 0
      %v6254 = vand.u32 %v3878, 2139095040
      %v6255 = vshrl.u32 %v6254, 23
      %v6256 = vsub.s32 %v6255, 127
      %v6257 = vand.u32 2147483647, %v3878
      %v6258 = vand.u32 %v6257, 8388607
      %v6259 = vor.u32 %v6258, 8388608
      %v6260 = vsub.s32 0, %v6259
      %v6261 = vadd.s32 %v6256, 1
      %vm6262 = vcmp.gt.s32.totalorder %v6261, 0
      %v6263 = vsel %vm6262, %v6261, 0
      %v6264 = vshrl.u32 %v6263, 5
      %v6265 = vand.u32 %v6263, 31
      %v6266 = vsub.s32 32, %v6265
      %v6267 = vshrl.u32 683565275, %v6266
      %v6268 = vshll.u32 683565275, %v6265
      %v6269 = vshrl.u32 2475754826, %v6266
      %v6270 = vor.u32 %v6268, %v6269
      %v6271 = vshll.u32 2475754826, %v6265
      %v6272 = vshrl.u32 2131351028, %v6266
      %v6273 = vor.u32 %v6271, %v6272
      %v6274 = vshll.u32 2131351028, %v6265
      %v6275 = vshrl.u32 2102212464, %v6266
      %v6276 = vor.u32 %v6274, %v6275
      %v6277 = vshll.u32 2102212464, %v6265
      %v6278 = vshrl.u32 920167782, %v6266
      %v6279 = vor.u32 %v6277, %v6278
      %v6280 = vshll.u32 920167782, %v6265
      %v6281 = vshrl.u32 1326507024, %v6266
      %v6282 = vor.u32 %v6280, %v6281
      %vm6283 = vcmp.lt.s32.totalorder %v6264, 1
      %vm6284 = vcmp.lt.s32.totalorder %v6264, 2
      %vm6285 = vcmp.lt.s32.totalorder %v6264, 3
      %vm6286 = vcmp.lt.s32.totalorder %v6264, 4
      %v6287 = vsel %vm6283, %v6267, %v6270
      %v6288 = vsel %vm6286, %v6276, 2102212464
      %v6289 = vsel %vm6285, %v6273, %v6288
      %v6290 = vsel %vm6284, %v6287, %v6289
      %v6291 = vsel %vm6283, %v6270, %v6273
      %v6292 = vsel %vm6286, %v6279, 920167782
      %v6293 = vsel %vm6285, %v6276, %v6292
      %v6294 = vsel %vm6284, %v6291, %v6293
      %v6295 = vsel %vm6283, %v6273, %v6276
      %v6296 = vsel %vm6286, %v6282, 1326507024
      %v6297 = vsel %vm6285, %v6279, %v6296
      %v6298 = vsel %vm6284, %v6295, %v6297
      %v6299 = vshll.u32 %v6259, 8
      %v6300 = vmul.u32.u64.compose %v6299, %v6298
      %v6301 = vextract.low.u32 %v6300
      %v6302 = vextract.high.u32 %v6300
      %v6303 = vmul.u32.u64.compose %v6299, %v6294
      %v6304 = vextract.low.u32 %v6303
      %v6305 = vextract.high.u32 %v6303
      %v6306 = vmul.u32 %v6299, %v6290
      %v6307 = vadd.s32 %v6302, %v6304
      %vm6308 = vc.u32 %v6302, %v6304
      %v6309 = vadd.s32 %v6305, 1
      %v6310 = vsel %vm6308, %v6309, %v6305
      %v6311 = vadd.s32 %v6306, %v6310
      %v6312 = vadd.s32 %v6311, 536870912
      %v6313 = vshrl.u32 %v6312, 30
      %v6314 = vshll.u32 %v6313, 30
      %v6315 = vsub.s32 %v6311, %v6314
      %vm6316 = vcmp.lt.s32.totalorder %v6315, 0
      %v6317 = vsub.s32 0, %v6315
      %v6318 = vsel %vm6316, %v6317, %v6315
      %v6319 = vclz %v6318
      %v6320 = vsub.s32 %v6319, 2
      %vm6321 = vcmp.gt.s32.totalorder 0, %v6320
      %v6322 = vsel %vm6321, 0, %v6320
      %v6323 = vsub.s32 32, %v6322
      %v6324 = vshll.u32 %v6315, %v6322
      %v6325 = vshrl.u32 %v6307, %v6323
      %v6326 = vor.u32 %v6324, %v6325
      %v6327 = vsub.s32 4294967266, %v6322
      %v6328 = vadd.s32 %v6327, 127
      %v6329 = vshll.u32 %v6328, 23
      %v6330 = vor.u32 4788187, %v6329
      %v6331 = vand.u32 2147483647, %v6330
      %v6333 = vcvt.s32.f32 %v6326
      %v6334 = vmul.f32 %v6333, %v6331
      %v6335 = vxor.u32 %v6334, 2147483648
      %v6336 = vsel %vm6253, %v6335, %v6334
      %v6337 = vsub.s32 4, %v6313
      %v6338 = vsel %vm6253, %v6337, %v6313
      %v6339 = vsel %vm6252, %v3878, %v6336
      %v6340 = vsel %vm6252, 0, %v6338
      %v6341 = vcosq.f32.pop %v6339
      %v6342 = vsinq.f32.pop %v6339
      %vm6343 = vweird.f32 %v3878
      %v6344 = vand.u32 %v6340, 3
      %vm6345 = vcmp.lt.s32.totalorder %v6344, 2
      %vm6346 = vcmp.eq.s32.totalorder %v6344, 0
      %v6347 = vxor.u32 %v6342, 2147483648
      %v6348 = vsel %vm6346, %v6341, %v6347
      %vm6349 = vcmp.eq.s32.totalorder %v6344, 2
      %v6350 = vxor.u32 %v6341, 2147483648
      %v6351 = vsel %vm6349, %v6350, %v6342
      %v6352 = vsel %vm6345, %v6348, %v6351
      %v6353 = vsel %vm6343, nan, %v6352
      %v6354 = vand.u32 2147483647, %v3879
      %vm6355 = vcmp.le.f32.partialorder %v6354, 0.7853982
      %vm6356 = vcmp.lt.s32.totalorder %v3879, 0
      %v6357 = vand.u32 %v3879, 2139095040
      %v6358 = vshrl.u32 %v6357, 23
      %v6359 = vsub.s32 %v6358, 127
      %v6360 = vand.u32 2147483647, %v3879
      %v6361 = vand.u32 %v6360, 8388607
      %v6362 = vor.u32 %v6361, 8388608
      %v6363 = vsub.s32 0, %v6362
      %v6364 = vadd.s32 %v6359, 1
      %vm6365 = vcmp.gt.s32.totalorder %v6364, 0
      %v6366 = vsel %vm6365, %v6364, 0
      %v6367 = vshrl.u32 %v6366, 5
      %v6368 = vand.u32 %v6366, 31
      %v6369 = vsub.s32 32, %v6368
      %v6370 = vshrl.u32 683565275, %v6369
      %v6371 = vshll.u32 683565275, %v6368
      %v6372 = vshrl.u32 2475754826, %v6369
      %v6373 = vor.u32 %v6371, %v6372
      %v6374 = vshll.u32 2475754826, %v6368
      %v6375 = vshrl.u32 2131351028, %v6369
      %v6376 = vor.u32 %v6374, %v6375
      %v6377 = vshll.u32 2131351028, %v6368
      %v6378 = vshrl.u32 2102212464, %v6369
      %v6379 = vor.u32 %v6377, %v6378
      %v6380 = vshll.u32 2102212464, %v6368
      %v6381 = vshrl.u32 920167782, %v6369
      %v6382 = vor.u32 %v6380, %v6381
      %v6383 = vshll.u32 920167782, %v6368
      %v6384 = vshrl.u32 1326507024, %v6369
      %v6385 = vor.u32 %v6383, %v6384
      %vm6386 = vcmp.lt.s32.totalorder %v6367, 1
      %vm6387 = vcmp.lt.s32.totalorder %v6367, 2
      %vm6388 = vcmp.lt.s32.totalorder %v6367, 3
      %vm6389 = vcmp.lt.s32.totalorder %v6367, 4
      %v6390 = vsel %vm6386, %v6370, %v6373
      %v6391 = vsel %vm6389, %v6379, 2102212464
      %v6392 = vsel %vm6388, %v6376, %v6391
      %v6393 = vsel %vm6387, %v6390, %v6392
      %v6394 = vsel %vm6386, %v6373, %v6376
      %v6395 = vsel %vm6389, %v6382, 920167782
      %v6396 = vsel %vm6388, %v6379, %v6395
      %v6397 = vsel %vm6387, %v6394, %v6396
      %v6398 = vsel %vm6386, %v6376, %v6379
      %v6399 = vsel %vm6389, %v6385, 1326507024
      %v6400 = vsel %vm6388, %v6382, %v6399
      %v6401 = vsel %vm6387, %v6398, %v6400
      %v6402 = vshll.u32 %v6362, 8
      %v6403 = vmul.u32.u64.compose %v6402, %v6401
      %v6404 = vextract.low.u32 %v6403
      %v6405 = vextract.high.u32 %v6403
      %v6406 = vmul.u32.u64.compose %v6402, %v6397
      %v6407 = vextract.low.u32 %v6406
      %v6408 = vextract.high.u32 %v6406
      %v6409 = vmul.u32 %v6402, %v6393
      %v6410 = vadd.s32 %v6405, %v6407
      %vm6411 = vc.u32 %v6405, %v6407
      %v6412 = vadd.s32 %v6408, 1
      %v6413 = vsel %vm6411, %v6412, %v6408
      %v6414 = vadd.s32 %v6409, %v6413
      %v6415 = vadd.s32 %v6414, 536870912
      %v6416 = vshrl.u32 %v6415, 30
      %v6417 = vshll.u32 %v6416, 30
      %v6418 = vsub.s32 %v6414, %v6417
      %vm6419 = vcmp.lt.s32.totalorder %v6418, 0
      %v6420 = vsub.s32 0, %v6418
      %v6421 = vsel %vm6419, %v6420, %v6418
      %v6422 = vclz %v6421
      %v6423 = vsub.s32 %v6422, 2
      %vm6424 = vcmp.gt.s32.totalorder 0, %v6423
      %v6425 = vsel %vm6424, 0, %v6423
      %v6426 = vsub.s32 32, %v6425
      %v6427 = vshll.u32 %v6418, %v6425
      %v6428 = vshrl.u32 %v6410, %v6426
      %v6429 = vor.u32 %v6427, %v6428
      %v6430 = vsub.s32 4294967266, %v6425
      %v6431 = vadd.s32 %v6430, 127
      %v6432 = vshll.u32 %v6431, 23
      %v6433 = vor.u32 4788187, %v6432
      %v6434 = vand.u32 2147483647, %v6433
      %v6436 = vcvt.s32.f32 %v6429
      %v6437 = vmul.f32 %v6436, %v6434
      %v6438 = vxor.u32 %v6437, 2147483648
      %v6439 = vsel %vm6356, %v6438, %v6437
      %v6440 = vsub.s32 4, %v6416
      %v6441 = vsel %vm6356, %v6440, %v6416
      %v6442 = vsel %vm6355, %v3879, %v6439
      %v6443 = vsel %vm6355, 0, %v6441
      %v6444 = vcosq.f32.pop %v6442
      %v6445 = vsinq.f32.pop %v6442
      %vm6446 = vweird.f32 %v3879
      %v6447 = vand.u32 %v6443, 3
      %vm6448 = vcmp.lt.s32.totalorder %v6447, 2
      %vm6449 = vcmp.eq.s32.totalorder %v6447, 0
      %v6450 = vxor.u32 %v6445, 2147483648
      %v6451 = vsel %vm6449, %v6444, %v6450
      %vm6452 = vcmp.eq.s32.totalorder %v6447, 2
      %v6453 = vxor.u32 %v6444, 2147483648
      %v6454 = vsel %vm6452, %v6453, %v6445
      %v6455 = vsel %vm6448, %v6451, %v6454
      %v6456 = vsel %vm6446, nan, %v6455
      %v6457 = vand.u32 2147483647, %v3880
      %vm6458 = vcmp.le.f32.partialorder %v6457, 0.7853982
      %vm6459 = vcmp.lt.s32.totalorder %v3880, 0
      %v6460 = vand.u32 %v3880, 2139095040
      %v6461 = vshrl.u32 %v6460, 23
      %v6462 = vsub.s32 %v6461, 127
      %v6463 = vand.u32 2147483647, %v3880
      %v6464 = vand.u32 %v6463, 8388607
      %v6465 = vor.u32 %v6464, 8388608
      %v6466 = vsub.s32 0, %v6465
      %v6467 = vadd.s32 %v6462, 1
      %vm6468 = vcmp.gt.s32.totalorder %v6467, 0
      %v6469 = vsel %vm6468, %v6467, 0
      %v6470 = vshrl.u32 %v6469, 5
      %v6471 = vand.u32 %v6469, 31
      %v6472 = vsub.s32 32, %v6471
      %v6473 = vshrl.u32 683565275, %v6472
      %v6474 = vshll.u32 683565275, %v6471
      %v6475 = vshrl.u32 2475754826, %v6472
      %v6476 = vor.u32 %v6474, %v6475
      %v6477 = vshll.u32 2475754826, %v6471
      %v6478 = vshrl.u32 2131351028, %v6472
      %v6479 = vor.u32 %v6477, %v6478
      %v6480 = vshll.u32 2131351028, %v6471
      %v6481 = vshrl.u32 2102212464, %v6472
      %v6482 = vor.u32 %v6480, %v6481
      %v6483 = vshll.u32 2102212464, %v6471
      %v6484 = vshrl.u32 920167782, %v6472
      %v6485 = vor.u32 %v6483, %v6484
      %v6486 = vshll.u32 920167782, %v6471
      %v6487 = vshrl.u32 1326507024, %v6472
      %v6488 = vor.u32 %v6486, %v6487
      %vm6489 = vcmp.lt.s32.totalorder %v6470, 1
      %vm6490 = vcmp.lt.s32.totalorder %v6470, 2
      %vm6491 = vcmp.lt.s32.totalorder %v6470, 3
      %vm6492 = vcmp.lt.s32.totalorder %v6470, 4
      %v6493 = vsel %vm6489, %v6473, %v6476
      %v6494 = vsel %vm6492, %v6482, 2102212464
      %v6495 = vsel %vm6491, %v6479, %v6494
      %v6496 = vsel %vm6490, %v6493, %v6495
      %v6497 = vsel %vm6489, %v6476, %v6479
      %v6498 = vsel %vm6492, %v6485, 920167782
      %v6499 = vsel %vm6491, %v6482, %v6498
      %v6500 = vsel %vm6490, %v6497, %v6499
      %v6501 = vsel %vm6489, %v6479, %v6482
      %v6502 = vsel %vm6492, %v6488, 1326507024
      %v6503 = vsel %vm6491, %v6485, %v6502
      %v6504 = vsel %vm6490, %v6501, %v6503
      %v6505 = vshll.u32 %v6465, 8
      %v6506 = vmul.u32.u64.compose %v6505, %v6504
      %v6507 = vextract.low.u32 %v6506
      %v6508 = vextract.high.u32 %v6506
      %v6509 = vmul.u32.u64.compose %v6505, %v6500
      %v6510 = vextract.low.u32 %v6509
      %v6511 = vextract.high.u32 %v6509
      %v6512 = vmul.u32 %v6505, %v6496
      %v6513 = vadd.s32 %v6508, %v6510
      %vm6514 = vc.u32 %v6508, %v6510
      %v6515 = vadd.s32 %v6511, 1
      %v6516 = vsel %vm6514, %v6515, %v6511
      %v6517 = vadd.s32 %v6512, %v6516
      %v6518 = vadd.s32 %v6517, 536870912
      %v6519 = vshrl.u32 %v6518, 30
      %v6520 = vshll.u32 %v6519, 30
      %v6521 = vsub.s32 %v6517, %v6520
      %vm6522 = vcmp.lt.s32.totalorder %v6521, 0
      %v6523 = vsub.s32 0, %v6521
      %v6524 = vsel %vm6522, %v6523, %v6521
      %v6525 = vclz %v6524
      %v6526 = vsub.s32 %v6525, 2
      %vm6527 = vcmp.gt.s32.totalorder 0, %v6526
      %v6528 = vsel %vm6527, 0, %v6526
      %v6529 = vsub.s32 32, %v6528
      %v6530 = vshll.u32 %v6521, %v6528
      %v6531 = vshrl.u32 %v6513, %v6529
      %v6532 = vor.u32 %v6530, %v6531
      %v6533 = vsub.s32 4294967266, %v6528
      %v6534 = vadd.s32 %v6533, 127
      %v6535 = vshll.u32 %v6534, 23
      %v6536 = vor.u32 4788187, %v6535
      %v6537 = vand.u32 2147483647, %v6536
      %v6539 = vcvt.s32.f32 %v6532
      %v6540 = vmul.f32 %v6539, %v6537
      %v6541 = vxor.u32 %v6540, 2147483648
      %v6542 = vsel %vm6459, %v6541, %v6540
      %v6543 = vsub.s32 4, %v6519
      %v6544 = vsel %vm6459, %v6543, %v6519
      %v6545 = vsel %vm6458, %v3880, %v6542
      %v6546 = vsel %vm6458, 0, %v6544
      %v6547 = vcosq.f32.pop %v6545
      %v6548 = vsinq.f32.pop %v6545
      %vm6549 = vweird.f32 %v3880
      %v6550 = vand.u32 %v6546, 3
      %vm6551 = vcmp.lt.s32.totalorder %v6550, 2
      %vm6552 = vcmp.eq.s32.totalorder %v6550, 0
      %v6553 = vxor.u32 %v6548, 2147483648
      %v6554 = vsel %vm6552, %v6547, %v6553
      %vm6555 = vcmp.eq.s32.totalorder %v6550, 2
      %v6556 = vxor.u32 %v6547, 2147483648
      %v6557 = vsel %vm6555, %v6556, %v6548
      %v6558 = vsel %vm6551, %v6554, %v6557
      %v6559 = vsel %vm6549, nan, %v6558
      %v6560 = vand.u32 2147483647, %v3881
      %vm6561 = vcmp.le.f32.partialorder %v6560, 0.7853982
      %vm6562 = vcmp.lt.s32.totalorder %v3881, 0
      %v6563 = vand.u32 %v3881, 2139095040
      %v6564 = vshrl.u32 %v6563, 23
      %v6565 = vsub.s32 %v6564, 127
      %v6566 = vand.u32 2147483647, %v3881
      %v6567 = vand.u32 %v6566, 8388607
      %v6568 = vor.u32 %v6567, 8388608
      %v6569 = vsub.s32 0, %v6568
      %v6570 = vadd.s32 %v6565, 1
      %vm6571 = vcmp.gt.s32.totalorder %v6570, 0
      %v6572 = vsel %vm6571, %v6570, 0
      %v6573 = vshrl.u32 %v6572, 5
      %v6574 = vand.u32 %v6572, 31
      %v6575 = vsub.s32 32, %v6574
      %v6576 = vshrl.u32 683565275, %v6575
      %v6577 = vshll.u32 683565275, %v6574
      %v6578 = vshrl.u32 2475754826, %v6575
      %v6579 = vor.u32 %v6577, %v6578
      %v6580 = vshll.u32 2475754826, %v6574
      %v6581 = vshrl.u32 2131351028, %v6575
      %v6582 = vor.u32 %v6580, %v6581
      %v6583 = vshll.u32 2131351028, %v6574
      %v6584 = vshrl.u32 2102212464, %v6575
      %v6585 = vor.u32 %v6583, %v6584
      %v6586 = vshll.u32 2102212464, %v6574
      %v6587 = vshrl.u32 920167782, %v6575
      %v6588 = vor.u32 %v6586, %v6587
      %v6589 = vshll.u32 920167782, %v6574
      %v6590 = vshrl.u32 1326507024, %v6575
      %v6591 = vor.u32 %v6589, %v6590
      %vm6592 = vcmp.lt.s32.totalorder %v6573, 1
      %vm6593 = vcmp.lt.s32.totalorder %v6573, 2
      %vm6594 = vcmp.lt.s32.totalorder %v6573, 3
      %vm6595 = vcmp.lt.s32.totalorder %v6573, 4
      %v6596 = vsel %vm6592, %v6576, %v6579
      %v6597 = vsel %vm6595, %v6585, 2102212464
      %v6598 = vsel %vm6594, %v6582, %v6597
      %v6599 = vsel %vm6593, %v6596, %v6598
      %v6600 = vsel %vm6592, %v6579, %v6582
      %v6601 = vsel %vm6595, %v6588, 920167782
      %v6602 = vsel %vm6594, %v6585, %v6601
      %v6603 = vsel %vm6593, %v6600, %v6602
      %v6604 = vsel %vm6592, %v6582, %v6585
      %v6605 = vsel %vm6595, %v6591, 1326507024
      %v6606 = vsel %vm6594, %v6588, %v6605
      %v6607 = vsel %vm6593, %v6604, %v6606
      %v6608 = vshll.u32 %v6568, 8
      %v6609 = vmul.u32.u64.compose %v6608, %v6607
      %v6610 = vextract.low.u32 %v6609
      %v6611 = vextract.high.u32 %v6609
      %v6612 = vmul.u32.u64.compose %v6608, %v6603
      %v6613 = vextract.low.u32 %v6612
      %v6614 = vextract.high.u32 %v6612
      %v6615 = vmul.u32 %v6608, %v6599
      %v6616 = vadd.s32 %v6611, %v6613
      %vm6617 = vc.u32 %v6611, %v6613
      %v6618 = vadd.s32 %v6614, 1
      %v6619 = vsel %vm6617, %v6618, %v6614
      %v6620 = vadd.s32 %v6615, %v6619
      %v6621 = vadd.s32 %v6620, 536870912
      %v6622 = vshrl.u32 %v6621, 30
      %v6623 = vshll.u32 %v6622, 30
      %v6624 = vsub.s32 %v6620, %v6623
      %vm6625 = vcmp.lt.s32.totalorder %v6624, 0
      %v6626 = vsub.s32 0, %v6624
      %v6627 = vsel %vm6625, %v6626, %v6624
      %v6628 = vclz %v6627
      %v6629 = vsub.s32 %v6628, 2
      %vm6630 = vcmp.gt.s32.totalorder 0, %v6629
      %v6631 = vsel %vm6630, 0, %v6629
      %v6632 = vsub.s32 32, %v6631
      %v6633 = vshll.u32 %v6624, %v6631
      %v6634 = vshrl.u32 %v6616, %v6632
      %v6635 = vor.u32 %v6633, %v6634
      %v6636 = vsub.s32 4294967266, %v6631
      %v6637 = vadd.s32 %v6636, 127
      %v6638 = vshll.u32 %v6637, 23
      %v6639 = vor.u32 4788187, %v6638
      %v6640 = vand.u32 2147483647, %v6639
      %v6642 = vcvt.s32.f32 %v6635
      %v6643 = vmul.f32 %v6642, %v6640
      %v6644 = vxor.u32 %v6643, 2147483648
      %v6645 = vsel %vm6562, %v6644, %v6643
      %v6646 = vsub.s32 4, %v6622
      %v6647 = vsel %vm6562, %v6646, %v6622
      %v6648 = vsel %vm6561, %v3881, %v6645
      %v6649 = vsel %vm6561, 0, %v6647
      %v6650 = vcosq.f32.pop %v6648
      %v6651 = vsinq.f32.pop %v6648
      %vm6652 = vweird.f32 %v3881
      %v6653 = vand.u32 %v6649, 3
      %vm6654 = vcmp.lt.s32.totalorder %v6653, 2
      %vm6655 = vcmp.eq.s32.totalorder %v6653, 0
      %v6656 = vxor.u32 %v6651, 2147483648
      %v6657 = vsel %vm6655, %v6650, %v6656
      %vm6658 = vcmp.eq.s32.totalorder %v6653, 2
      %v6659 = vxor.u32 %v6650, 2147483648
      %v6660 = vsel %vm6658, %v6659, %v6651
      %v6661 = vsel %vm6654, %v6657, %v6660
      %v6662 = vsel %vm6652, nan, %v6661
      %v6663 = vand.u32 2147483647, %v3882
      %vm6664 = vcmp.le.f32.partialorder %v6663, 0.7853982
      %vm6665 = vcmp.lt.s32.totalorder %v3882, 0
      %v6666 = vand.u32 %v3882, 2139095040
      %v6667 = vshrl.u32 %v6666, 23
      %v6668 = vsub.s32 %v6667, 127
      %v6669 = vand.u32 2147483647, %v3882
      %v6670 = vand.u32 %v6669, 8388607
      %v6671 = vor.u32 %v6670, 8388608
      %v6672 = vsub.s32 0, %v6671
      %v6673 = vadd.s32 %v6668, 1
      %vm6674 = vcmp.gt.s32.totalorder %v6673, 0
      %v6675 = vsel %vm6674, %v6673, 0
      %v6676 = vshrl.u32 %v6675, 5
      %v6677 = vand.u32 %v6675, 31
      %v6678 = vsub.s32 32, %v6677
      %v6679 = vshrl.u32 683565275, %v6678
      %v6680 = vshll.u32 683565275, %v6677
      %v6681 = vshrl.u32 2475754826, %v6678
      %v6682 = vor.u32 %v6680, %v6681
      %v6683 = vshll.u32 2475754826, %v6677
      %v6684 = vshrl.u32 2131351028, %v6678
      %v6685 = vor.u32 %v6683, %v6684
      %v6686 = vshll.u32 2131351028, %v6677
      %v6687 = vshrl.u32 2102212464, %v6678
      %v6688 = vor.u32 %v6686, %v6687
      %v6689 = vshll.u32 2102212464, %v6677
      %v6690 = vshrl.u32 920167782, %v6678
      %v6691 = vor.u32 %v6689, %v6690
      %v6692 = vshll.u32 920167782, %v6677
      %v6693 = vshrl.u32 1326507024, %v6678
      %v6694 = vor.u32 %v6692, %v6693
      %vm6695 = vcmp.lt.s32.totalorder %v6676, 1
      %vm6696 = vcmp.lt.s32.totalorder %v6676, 2
      %vm6697 = vcmp.lt.s32.totalorder %v6676, 3
      %vm6698 = vcmp.lt.s32.totalorder %v6676, 4
      %v6699 = vsel %vm6695, %v6679, %v6682
      %v6700 = vsel %vm6698, %v6688, 2102212464
      %v6701 = vsel %vm6697, %v6685, %v6700
      %v6702 = vsel %vm6696, %v6699, %v6701
      %v6703 = vsel %vm6695, %v6682, %v6685
      %v6704 = vsel %vm6698, %v6691, 920167782
      %v6705 = vsel %vm6697, %v6688, %v6704
      %v6706 = vsel %vm6696, %v6703, %v6705
      %v6707 = vsel %vm6695, %v6685, %v6688
      %v6708 = vsel %vm6698, %v6694, 1326507024
      %v6709 = vsel %vm6697, %v6691, %v6708
      %v6710 = vsel %vm6696, %v6707, %v6709
      %v6711 = vshll.u32 %v6671, 8
      %v6712 = vmul.u32.u64.compose %v6711, %v6710
      %v6713 = vextract.low.u32 %v6712
      %v6714 = vextract.high.u32 %v6712
      %v6715 = vmul.u32.u64.compose %v6711, %v6706
      %v6716 = vextract.low.u32 %v6715
      %v6717 = vextract.high.u32 %v6715
      %v6718 = vmul.u32 %v6711, %v6702
      %v6719 = vadd.s32 %v6714, %v6716
      %vm6720 = vc.u32 %v6714, %v6716
      %v6721 = vadd.s32 %v6717, 1
      %v6722 = vsel %vm6720, %v6721, %v6717
      %v6723 = vadd.s32 %v6718, %v6722
      %v6724 = vadd.s32 %v6723, 536870912
      %v6725 = vshrl.u32 %v6724, 30
      %v6726 = vshll.u32 %v6725, 30
      %v6727 = vsub.s32 %v6723, %v6726
      %vm6728 = vcmp.lt.s32.totalorder %v6727, 0
      %v6729 = vsub.s32 0, %v6727
      %v6730 = vsel %vm6728, %v6729, %v6727
      %v6731 = vclz %v6730
      %v6732 = vsub.s32 %v6731, 2
      %vm6733 = vcmp.gt.s32.totalorder 0, %v6732
      %v6734 = vsel %vm6733, 0, %v6732
      %v6735 = vsub.s32 32, %v6734
      %v6736 = vshll.u32 %v6727, %v6734
      %v6737 = vshrl.u32 %v6719, %v6735
      %v6738 = vor.u32 %v6736, %v6737
      %v6739 = vsub.s32 4294967266, %v6734
      %v6740 = vadd.s32 %v6739, 127
      %v6741 = vshll.u32 %v6740, 23
      %v6742 = vor.u32 4788187, %v6741
      %v6743 = vand.u32 2147483647, %v6742
      %v6745 = vcvt.s32.f32 %v6738
      %v6746 = vmul.f32 %v6745, %v6743
      %v6747 = vxor.u32 %v6746, 2147483648
      %v6748 = vsel %vm6665, %v6747, %v6746
      %v6749 = vsub.s32 4, %v6725
      %v6750 = vsel %vm6665, %v6749, %v6725
      %v6751 = vsel %vm6664, %v3882, %v6748
      %v6752 = vsel %vm6664, 0, %v6750
      %v6753 = vcosq.f32.pop %v6751
      %v6754 = vsinq.f32.pop %v6751
      %vm6755 = vweird.f32 %v3882
      %v6756 = vand.u32 %v6752, 3
      %vm6757 = vcmp.lt.s32.totalorder %v6756, 2
      %vm6758 = vcmp.eq.s32.totalorder %v6756, 0
      %v6759 = vxor.u32 %v6754, 2147483648
      %v6760 = vsel %vm6758, %v6753, %v6759
      %vm6761 = vcmp.eq.s32.totalorder %v6756, 2
      %v6762 = vxor.u32 %v6753, 2147483648
      %v6763 = vsel %vm6761, %v6762, %v6754
      %v6764 = vsel %vm6757, %v6760, %v6763
      %v6765 = vsel %vm6755, nan, %v6764
      %v6766 = vand.u32 2147483647, %v3883
      %vm6767 = vcmp.le.f32.partialorder %v6766, 0.7853982
      %vm6768 = vcmp.lt.s32.totalorder %v3883, 0
      %v6769 = vand.u32 %v3883, 2139095040
      %v6770 = vshrl.u32 %v6769, 23
      %v6771 = vsub.s32 %v6770, 127
      %v6772 = vand.u32 2147483647, %v3883
      %v6773 = vand.u32 %v6772, 8388607
      %v6774 = vor.u32 %v6773, 8388608
      %v6775 = vsub.s32 0, %v6774
      %v6776 = vadd.s32 %v6771, 1
      %vm6777 = vcmp.gt.s32.totalorder %v6776, 0
      %v6778 = vsel %vm6777, %v6776, 0
      %v6779 = vshrl.u32 %v6778, 5
      %v6780 = vand.u32 %v6778, 31
      %v6781 = vsub.s32 32, %v6780
      %v6782 = vshrl.u32 683565275, %v6781
      %v6783 = vshll.u32 683565275, %v6780
      %v6784 = vshrl.u32 2475754826, %v6781
      %v6785 = vor.u32 %v6783, %v6784
      %v6786 = vshll.u32 2475754826, %v6780
      %v6787 = vshrl.u32 2131351028, %v6781
      %v6788 = vor.u32 %v6786, %v6787
      %v6789 = vshll.u32 2131351028, %v6780
      %v6790 = vshrl.u32 2102212464, %v6781
      %v6791 = vor.u32 %v6789, %v6790
      %v6792 = vshll.u32 2102212464, %v6780
      %v6793 = vshrl.u32 920167782, %v6781
      %v6794 = vor.u32 %v6792, %v6793
      %v6795 = vshll.u32 920167782, %v6780
      %v6796 = vshrl.u32 1326507024, %v6781
      %v6797 = vor.u32 %v6795, %v6796
      %vm6798 = vcmp.lt.s32.totalorder %v6779, 1
      %vm6799 = vcmp.lt.s32.totalorder %v6779, 2
      %vm6800 = vcmp.lt.s32.totalorder %v6779, 3
      %vm6801 = vcmp.lt.s32.totalorder %v6779, 4
      %v6802 = vsel %vm6798, %v6782, %v6785
      %v6803 = vsel %vm6801, %v6791, 2102212464
      %v6804 = vsel %vm6800, %v6788, %v6803
      %v6805 = vsel %vm6799, %v6802, %v6804
      %v6806 = vsel %vm6798, %v6785, %v6788
      %v6807 = vsel %vm6801, %v6794, 920167782
      %v6808 = vsel %vm6800, %v6791, %v6807
      %v6809 = vsel %vm6799, %v6806, %v6808
      %v6810 = vsel %vm6798, %v6788, %v6791
      %v6811 = vsel %vm6801, %v6797, 1326507024
      %v6812 = vsel %vm6800, %v6794, %v6811
      %v6813 = vsel %vm6799, %v6810, %v6812
      %v6814 = vshll.u32 %v6774, 8
      %v6815 = vmul.u32.u64.compose %v6814, %v6813
      %v6816 = vextract.low.u32 %v6815
      %v6817 = vextract.high.u32 %v6815
      %v6818 = vmul.u32.u64.compose %v6814, %v6809
      %v6819 = vextract.low.u32 %v6818
      %v6820 = vextract.high.u32 %v6818
      %v6821 = vmul.u32 %v6814, %v6805
      %v6822 = vadd.s32 %v6817, %v6819
      %vm6823 = vc.u32 %v6817, %v6819
      %v6824 = vadd.s32 %v6820, 1
      %v6825 = vsel %vm6823, %v6824, %v6820
      %v6826 = vadd.s32 %v6821, %v6825
      %v6827 = vadd.s32 %v6826, 536870912
      %v6828 = vshrl.u32 %v6827, 30
      %v6829 = vshll.u32 %v6828, 30
      %v6830 = vsub.s32 %v6826, %v6829
      %vm6831 = vcmp.lt.s32.totalorder %v6830, 0
      %v6832 = vsub.s32 0, %v6830
      %v6833 = vsel %vm6831, %v6832, %v6830
      %v6834 = vclz %v6833
      %v6835 = vsub.s32 %v6834, 2
      %vm6836 = vcmp.gt.s32.totalorder 0, %v6835
      %v6837 = vsel %vm6836, 0, %v6835
      %v6838 = vsub.s32 32, %v6837
      %v6839 = vshll.u32 %v6830, %v6837
      %v6840 = vshrl.u32 %v6822, %v6838
      %v6841 = vor.u32 %v6839, %v6840
      %v6842 = vsub.s32 4294967266, %v6837
      %v6843 = vadd.s32 %v6842, 127
      %v6844 = vshll.u32 %v6843, 23
      %v6845 = vor.u32 4788187, %v6844
      %v6846 = vand.u32 2147483647, %v6845
      %v6848 = vcvt.s32.f32 %v6841
      %v6849 = vmul.f32 %v6848, %v6846
      %v6850 = vxor.u32 %v6849, 2147483648
      %v6851 = vsel %vm6768, %v6850, %v6849
      %v6852 = vsub.s32 4, %v6828
      %v6853 = vsel %vm6768, %v6852, %v6828
      %v6854 = vsel %vm6767, %v3883, %v6851
      %v6855 = vsel %vm6767, 0, %v6853
      %v6856 = vcosq.f32.pop %v6854
      %v6857 = vsinq.f32.pop %v6854
      %vm6858 = vweird.f32 %v3883
      %v6859 = vand.u32 %v6855, 3
      %vm6860 = vcmp.lt.s32.totalorder %v6859, 2
      %vm6861 = vcmp.eq.s32.totalorder %v6859, 0
      %v6862 = vxor.u32 %v6857, 2147483648
      %v6863 = vsel %vm6861, %v6856, %v6862
      %vm6864 = vcmp.eq.s32.totalorder %v6859, 2
      %v6865 = vxor.u32 %v6856, 2147483648
      %v6866 = vsel %vm6864, %v6865, %v6857
      %v6867 = vsel %vm6860, %v6863, %v6866
      %v6868 = vsel %vm6858, nan, %v6867
      %v6869 = vand.u32 2147483647, %v3884
      %vm6870 = vcmp.le.f32.partialorder %v6869, 0.7853982
      %vm6871 = vcmp.lt.s32.totalorder %v3884, 0
      %v6872 = vand.u32 %v3884, 2139095040
      %v6873 = vshrl.u32 %v6872, 23
      %v6874 = vsub.s32 %v6873, 127
      %v6875 = vand.u32 2147483647, %v3884
      %v6876 = vand.u32 %v6875, 8388607
      %v6877 = vor.u32 %v6876, 8388608
      %v6878 = vsub.s32 0, %v6877
      %v6879 = vadd.s32 %v6874, 1
      %vm6880 = vcmp.gt.s32.totalorder %v6879, 0
      %v6881 = vsel %vm6880, %v6879, 0
      %v6882 = vshrl.u32 %v6881, 5
      %v6883 = vand.u32 %v6881, 31
      %v6884 = vsub.s32 32, %v6883
      %v6885 = vshrl.u32 683565275, %v6884
      %v6886 = vshll.u32 683565275, %v6883
      %v6887 = vshrl.u32 2475754826, %v6884
      %v6888 = vor.u32 %v6886, %v6887
      %v6889 = vshll.u32 2475754826, %v6883
      %v6890 = vshrl.u32 2131351028, %v6884
      %v6891 = vor.u32 %v6889, %v6890
      %v6892 = vshll.u32 2131351028, %v6883
      %v6893 = vshrl.u32 2102212464, %v6884
      %v6894 = vor.u32 %v6892, %v6893
      %v6895 = vshll.u32 2102212464, %v6883
      %v6896 = vshrl.u32 920167782, %v6884
      %v6897 = vor.u32 %v6895, %v6896
      %v6898 = vshll.u32 920167782, %v6883
      %v6899 = vshrl.u32 1326507024, %v6884
      %v6900 = vor.u32 %v6898, %v6899
      %vm6901 = vcmp.lt.s32.totalorder %v6882, 1
      %vm6902 = vcmp.lt.s32.totalorder %v6882, 2
      %vm6903 = vcmp.lt.s32.totalorder %v6882, 3
      %vm6904 = vcmp.lt.s32.totalorder %v6882, 4
      %v6905 = vsel %vm6901, %v6885, %v6888
      %v6906 = vsel %vm6904, %v6894, 2102212464
      %v6907 = vsel %vm6903, %v6891, %v6906
      %v6908 = vsel %vm6902, %v6905, %v6907
      %v6909 = vsel %vm6901, %v6888, %v6891
      %v6910 = vsel %vm6904, %v6897, 920167782
      %v6911 = vsel %vm6903, %v6894, %v6910
      %v6912 = vsel %vm6902, %v6909, %v6911
      %v6913 = vsel %vm6901, %v6891, %v6894
      %v6914 = vsel %vm6904, %v6900, 1326507024
      %v6915 = vsel %vm6903, %v6897, %v6914
      %v6916 = vsel %vm6902, %v6913, %v6915
      %v6917 = vshll.u32 %v6877, 8
      %v6918 = vmul.u32.u64.compose %v6917, %v6916
      %v6919 = vextract.low.u32 %v6918
      %v6920 = vextract.high.u32 %v6918
      %v6921 = vmul.u32.u64.compose %v6917, %v6912
      %v6922 = vextract.low.u32 %v6921
      %v6923 = vextract.high.u32 %v6921
      %v6924 = vmul.u32 %v6917, %v6908
      %v6925 = vadd.s32 %v6920, %v6922
      %vm6926 = vc.u32 %v6920, %v6922
      %v6927 = vadd.s32 %v6923, 1
      %v6928 = vsel %vm6926, %v6927, %v6923
      %v6929 = vadd.s32 %v6924, %v6928
      %v6930 = vadd.s32 %v6929, 536870912
      %v6931 = vshrl.u32 %v6930, 30
      %v6932 = vshll.u32 %v6931, 30
      %v6933 = vsub.s32 %v6929, %v6932
      %vm6934 = vcmp.lt.s32.totalorder %v6933, 0
      %v6935 = vsub.s32 0, %v6933
      %v6936 = vsel %vm6934, %v6935, %v6933
      %v6937 = vclz %v6936
      %v6938 = vsub.s32 %v6937, 2
      %vm6939 = vcmp.gt.s32.totalorder 0, %v6938
      %v6940 = vsel %vm6939, 0, %v6938
      %v6941 = vsub.s32 32, %v6940
      %v6942 = vshll.u32 %v6933, %v6940
      %v6943 = vshrl.u32 %v6925, %v6941
      %v6944 = vor.u32 %v6942, %v6943
      %v6945 = vsub.s32 4294967266, %v6940
      %v6946 = vadd.s32 %v6945, 127
      %v6947 = vshll.u32 %v6946, 23
      %v6948 = vor.u32 4788187, %v6947
      %v6949 = vand.u32 2147483647, %v6948
      %v6951 = vcvt.s32.f32 %v6944
      %v6952 = vmul.f32 %v6951, %v6949
      %v6953 = vxor.u32 %v6952, 2147483648
      %v6954 = vsel %vm6871, %v6953, %v6952
      %v6955 = vsub.s32 4, %v6931
      %v6956 = vsel %vm6871, %v6955, %v6931
      %v6957 = vsel %vm6870, %v3884, %v6954
      %v6958 = vsel %vm6870, 0, %v6956
      %v6959 = vcosq.f32.pop %v6957
      %v6960 = vsinq.f32.pop %v6957
      %vm6961 = vweird.f32 %v3884
      %v6962 = vand.u32 %v6958, 3
      %vm6963 = vcmp.lt.s32.totalorder %v6962, 2
      %vm6964 = vcmp.eq.s32.totalorder %v6962, 0
      %v6965 = vxor.u32 %v6960, 2147483648
      %v6966 = vsel %vm6964, %v6959, %v6965
      %vm6967 = vcmp.eq.s32.totalorder %v6962, 2
      %v6968 = vxor.u32 %v6959, 2147483648
      %v6969 = vsel %vm6967, %v6968, %v6960
      %v6970 = vsel %vm6963, %v6966, %v6969
      %v6971 = vsel %vm6961, nan, %v6970
      %v6972 = vand.u32 2147483647, %v3885
      %vm6973 = vcmp.le.f32.partialorder %v6972, 0.7853982
      %vm6974 = vcmp.lt.s32.totalorder %v3885, 0
      %v6975 = vand.u32 %v3885, 2139095040
      %v6976 = vshrl.u32 %v6975, 23
      %v6977 = vsub.s32 %v6976, 127
      %v6978 = vand.u32 2147483647, %v3885
      %v6979 = vand.u32 %v6978, 8388607
      %v6980 = vor.u32 %v6979, 8388608
      %v6981 = vsub.s32 0, %v6980
      %v6982 = vadd.s32 %v6977, 1
      %vm6983 = vcmp.gt.s32.totalorder %v6982, 0
      %v6984 = vsel %vm6983, %v6982, 0
      %v6985 = vshrl.u32 %v6984, 5
      %v6986 = vand.u32 %v6984, 31
      %v6987 = vsub.s32 32, %v6986
      %v6988 = vshrl.u32 683565275, %v6987
      %v6989 = vshll.u32 683565275, %v6986
      %v6990 = vshrl.u32 2475754826, %v6987
      %v6991 = vor.u32 %v6989, %v6990
      %v6992 = vshll.u32 2475754826, %v6986
      %v6993 = vshrl.u32 2131351028, %v6987
      %v6994 = vor.u32 %v6992, %v6993
      %v6995 = vshll.u32 2131351028, %v6986
      %v6996 = vshrl.u32 2102212464, %v6987
      %v6997 = vor.u32 %v6995, %v6996
      %v6998 = vshll.u32 2102212464, %v6986
      %v6999 = vshrl.u32 920167782, %v6987
      %v7000 = vor.u32 %v6998, %v6999
      %v7001 = vshll.u32 920167782, %v6986
      %v7002 = vshrl.u32 1326507024, %v6987
      %v7003 = vor.u32 %v7001, %v7002
      %vm7004 = vcmp.lt.s32.totalorder %v6985, 1
      %vm7005 = vcmp.lt.s32.totalorder %v6985, 2
      %vm7006 = vcmp.lt.s32.totalorder %v6985, 3
      %vm7007 = vcmp.lt.s32.totalorder %v6985, 4
      %v7008 = vsel %vm7004, %v6988, %v6991
      %v7009 = vsel %vm7007, %v6997, 2102212464
      %v7010 = vsel %vm7006, %v6994, %v7009
      %v7011 = vsel %vm7005, %v7008, %v7010
      %v7012 = vsel %vm7004, %v6991, %v6994
      %v7013 = vsel %vm7007, %v7000, 920167782
      %v7014 = vsel %vm7006, %v6997, %v7013
      %v7015 = vsel %vm7005, %v7012, %v7014
      %v7016 = vsel %vm7004, %v6994, %v6997
      %v7017 = vsel %vm7007, %v7003, 1326507024
      %v7018 = vsel %vm7006, %v7000, %v7017
      %v7019 = vsel %vm7005, %v7016, %v7018
      %v7020 = vshll.u32 %v6980, 8
      %v7021 = vmul.u32.u64.compose %v7020, %v7019
      %v7022 = vextract.low.u32 %v7021
      %v7023 = vextract.high.u32 %v7021
      %v7024 = vmul.u32.u64.compose %v7020, %v7015
      %v7025 = vextract.low.u32 %v7024
      %v7026 = vextract.high.u32 %v7024
      %v7027 = vmul.u32 %v7020, %v7011
      %v7028 = vadd.s32 %v7023, %v7025
      %vm7029 = vc.u32 %v7023, %v7025
      %v7030 = vadd.s32 %v7026, 1
      %v7031 = vsel %vm7029, %v7030, %v7026
      %v7032 = vadd.s32 %v7027, %v7031
      %v7033 = vadd.s32 %v7032, 536870912
      %v7034 = vshrl.u32 %v7033, 30
      %v7035 = vshll.u32 %v7034, 30
      %v7036 = vsub.s32 %v7032, %v7035
      %vm7037 = vcmp.lt.s32.totalorder %v7036, 0
      %v7038 = vsub.s32 0, %v7036
      %v7039 = vsel %vm7037, %v7038, %v7036
      %v7040 = vclz %v7039
      %v7041 = vsub.s32 %v7040, 2
      %vm7042 = vcmp.gt.s32.totalorder 0, %v7041
      %v7043 = vsel %vm7042, 0, %v7041
      %v7044 = vsub.s32 32, %v7043
      %v7045 = vshll.u32 %v7036, %v7043
      %v7046 = vshrl.u32 %v7028, %v7044
      %v7047 = vor.u32 %v7045, %v7046
      %v7048 = vsub.s32 4294967266, %v7043
      %v7049 = vadd.s32 %v7048, 127
      %v7050 = vshll.u32 %v7049, 23
      %v7051 = vor.u32 4788187, %v7050
      %v7052 = vand.u32 2147483647, %v7051
      %v7054 = vcvt.s32.f32 %v7047
      %v7055 = vmul.f32 %v7054, %v7052
      %v7056 = vxor.u32 %v7055, 2147483648
      %v7057 = vsel %vm6974, %v7056, %v7055
      %v7058 = vsub.s32 4, %v7034
      %v7059 = vsel %vm6974, %v7058, %v7034
      %v7060 = vsel %vm6973, %v3885, %v7057
      %v7061 = vsel %vm6973, 0, %v7059
      %v7062 = vcosq.f32.pop %v7060
      %v7063 = vsinq.f32.pop %v7060
      %vm7064 = vweird.f32 %v3885
      %v7065 = vand.u32 %v7061, 3
      %vm7066 = vcmp.lt.s32.totalorder %v7065, 2
      %vm7067 = vcmp.eq.s32.totalorder %v7065, 0
      %v7068 = vxor.u32 %v7063, 2147483648
      %v7069 = vsel %vm7067, %v7062, %v7068
      %vm7070 = vcmp.eq.s32.totalorder %v7065, 2
      %v7071 = vxor.u32 %v7062, 2147483648
      %v7072 = vsel %vm7070, %v7071, %v7063
      %v7073 = vsel %vm7066, %v7069, %v7072
      %v7074 = vsel %vm7064, nan, %v7073
      %v7075 = vand.u32 2147483647, %v3886
      %vm7076 = vcmp.le.f32.partialorder %v7075, 0.7853982
      %vm7077 = vcmp.lt.s32.totalorder %v3886, 0
      %v7078 = vand.u32 %v3886, 2139095040
      %v7079 = vshrl.u32 %v7078, 23
      %v7080 = vsub.s32 %v7079, 127
      %v7081 = vand.u32 2147483647, %v3886
      %v7082 = vand.u32 %v7081, 8388607
      %v7083 = vor.u32 %v7082, 8388608
      %v7084 = vsub.s32 0, %v7083
      %v7085 = vadd.s32 %v7080, 1
      %vm7086 = vcmp.gt.s32.totalorder %v7085, 0
      %v7087 = vsel %vm7086, %v7085, 0
      %v7088 = vshrl.u32 %v7087, 5
      %v7089 = vand.u32 %v7087, 31
      %v7090 = vsub.s32 32, %v7089
      %v7091 = vshrl.u32 683565275, %v7090
      %v7092 = vshll.u32 683565275, %v7089
      %v7093 = vshrl.u32 2475754826, %v7090
      %v7094 = vor.u32 %v7092, %v7093
      %v7095 = vshll.u32 2475754826, %v7089
      %v7096 = vshrl.u32 2131351028, %v7090
      %v7097 = vor.u32 %v7095, %v7096
      %v7098 = vshll.u32 2131351028, %v7089
      %v7099 = vshrl.u32 2102212464, %v7090
      %v7100 = vor.u32 %v7098, %v7099
      %v7101 = vshll.u32 2102212464, %v7089
      %v7102 = vshrl.u32 920167782, %v7090
      %v7103 = vor.u32 %v7101, %v7102
      %v7104 = vshll.u32 920167782, %v7089
      %v7105 = vshrl.u32 1326507024, %v7090
      %v7106 = vor.u32 %v7104, %v7105
      %vm7107 = vcmp.lt.s32.totalorder %v7088, 1
      %vm7108 = vcmp.lt.s32.totalorder %v7088, 2
      %vm7109 = vcmp.lt.s32.totalorder %v7088, 3
      %vm7110 = vcmp.lt.s32.totalorder %v7088, 4
      %v7111 = vsel %vm7107, %v7091, %v7094
      %v7112 = vsel %vm7110, %v7100, 2102212464
      %v7113 = vsel %vm7109, %v7097, %v7112
      %v7114 = vsel %vm7108, %v7111, %v7113
      %v7115 = vsel %vm7107, %v7094, %v7097
      %v7116 = vsel %vm7110, %v7103, 920167782
      %v7117 = vsel %vm7109, %v7100, %v7116
      %v7118 = vsel %vm7108, %v7115, %v7117
      %v7119 = vsel %vm7107, %v7097, %v7100
      %v7120 = vsel %vm7110, %v7106, 1326507024
      %v7121 = vsel %vm7109, %v7103, %v7120
      %v7122 = vsel %vm7108, %v7119, %v7121
      %v7123 = vshll.u32 %v7083, 8
      %v7124 = vmul.u32.u64.compose %v7123, %v7122
      %v7125 = vextract.low.u32 %v7124
      %v7126 = vextract.high.u32 %v7124
      %v7127 = vmul.u32.u64.compose %v7123, %v7118
      %v7128 = vextract.low.u32 %v7127
      %v7129 = vextract.high.u32 %v7127
      %v7130 = vmul.u32 %v7123, %v7114
      %v7131 = vadd.s32 %v7126, %v7128
      %vm7132 = vc.u32 %v7126, %v7128
      %v7133 = vadd.s32 %v7129, 1
      %v7134 = vsel %vm7132, %v7133, %v7129
      %v7135 = vadd.s32 %v7130, %v7134
      %v7136 = vadd.s32 %v7135, 536870912
      %v7137 = vshrl.u32 %v7136, 30
      %v7138 = vshll.u32 %v7137, 30
      %v7139 = vsub.s32 %v7135, %v7138
      %vm7140 = vcmp.lt.s32.totalorder %v7139, 0
      %v7141 = vsub.s32 0, %v7139
      %v7142 = vsel %vm7140, %v7141, %v7139
      %v7143 = vclz %v7142
      %v7144 = vsub.s32 %v7143, 2
      %vm7145 = vcmp.gt.s32.totalorder 0, %v7144
      %v7146 = vsel %vm7145, 0, %v7144
      %v7147 = vsub.s32 32, %v7146
      %v7148 = vshll.u32 %v7139, %v7146
      %v7149 = vshrl.u32 %v7131, %v7147
      %v7150 = vor.u32 %v7148, %v7149
      %v7151 = vsub.s32 4294967266, %v7146
      %v7152 = vadd.s32 %v7151, 127
      %v7153 = vshll.u32 %v7152, 23
      %v7154 = vor.u32 4788187, %v7153
      %v7155 = vand.u32 2147483647, %v7154
      %v7157 = vcvt.s32.f32 %v7150
      %v7158 = vmul.f32 %v7157, %v7155
      %v7159 = vxor.u32 %v7158, 2147483648
      %v7160 = vsel %vm7077, %v7159, %v7158
      %v7161 = vsub.s32 4, %v7137
      %v7162 = vsel %vm7077, %v7161, %v7137
      %v7163 = vsel %vm7076, %v3886, %v7160
      %v7164 = vsel %vm7076, 0, %v7162
      %v7165 = vcosq.f32.pop %v7163
      %v7166 = vsinq.f32.pop %v7163
      %vm7167 = vweird.f32 %v3886
      %v7168 = vand.u32 %v7164, 3
      %vm7169 = vcmp.lt.s32.totalorder %v7168, 2
      %vm7170 = vcmp.eq.s32.totalorder %v7168, 0
      %v7171 = vxor.u32 %v7166, 2147483648
      %v7172 = vsel %vm7170, %v7165, %v7171
      %vm7173 = vcmp.eq.s32.totalorder %v7168, 2
      %v7174 = vxor.u32 %v7165, 2147483648
      %v7175 = vsel %vm7173, %v7174, %v7166
      %v7176 = vsel %vm7169, %v7172, %v7175
      %v7177 = vsel %vm7167, nan, %v7176
      %v7178 = vand.u32 2147483647, %v3887
      %vm7179 = vcmp.le.f32.partialorder %v7178, 0.7853982
      %vm7180 = vcmp.lt.s32.totalorder %v3887, 0
      %v7181 = vand.u32 %v3887, 2139095040
      %v7182 = vshrl.u32 %v7181, 23
      %v7183 = vsub.s32 %v7182, 127
      %v7184 = vand.u32 2147483647, %v3887
      %v7185 = vand.u32 %v7184, 8388607
      %v7186 = vor.u32 %v7185, 8388608
      %v7187 = vsub.s32 0, %v7186
      %v7188 = vadd.s32 %v7183, 1
      %vm7189 = vcmp.gt.s32.totalorder %v7188, 0
      %v7190 = vsel %vm7189, %v7188, 0
      %v7191 = vshrl.u32 %v7190, 5
      %v7192 = vand.u32 %v7190, 31
      %v7193 = vsub.s32 32, %v7192
      %v7194 = vshrl.u32 683565275, %v7193
      %v7195 = vshll.u32 683565275, %v7192
      %v7196 = vshrl.u32 2475754826, %v7193
      %v7197 = vor.u32 %v7195, %v7196
      %v7198 = vshll.u32 2475754826, %v7192
      %v7199 = vshrl.u32 2131351028, %v7193
      %v7200 = vor.u32 %v7198, %v7199
      %v7201 = vshll.u32 2131351028, %v7192
      %v7202 = vshrl.u32 2102212464, %v7193
      %v7203 = vor.u32 %v7201, %v7202
      %v7204 = vshll.u32 2102212464, %v7192
      %v7205 = vshrl.u32 920167782, %v7193
      %v7206 = vor.u32 %v7204, %v7205
      %v7207 = vshll.u32 920167782, %v7192
      %v7208 = vshrl.u32 1326507024, %v7193
      %v7209 = vor.u32 %v7207, %v7208
      %vm7210 = vcmp.lt.s32.totalorder %v7191, 1
      %vm7211 = vcmp.lt.s32.totalorder %v7191, 2
      %vm7212 = vcmp.lt.s32.totalorder %v7191, 3
      %vm7213 = vcmp.lt.s32.totalorder %v7191, 4
      %v7214 = vsel %vm7210, %v7194, %v7197
      %v7215 = vsel %vm7213, %v7203, 2102212464
      %v7216 = vsel %vm7212, %v7200, %v7215
      %v7217 = vsel %vm7211, %v7214, %v7216
      %v7218 = vsel %vm7210, %v7197, %v7200
      %v7219 = vsel %vm7213, %v7206, 920167782
      %v7220 = vsel %vm7212, %v7203, %v7219
      %v7221 = vsel %vm7211, %v7218, %v7220
      %v7222 = vsel %vm7210, %v7200, %v7203
      %v7223 = vsel %vm7213, %v7209, 1326507024
      %v7224 = vsel %vm7212, %v7206, %v7223
      %v7225 = vsel %vm7211, %v7222, %v7224
      %v7226 = vshll.u32 %v7186, 8
      %v7227 = vmul.u32.u64.compose %v7226, %v7225
      %v7228 = vextract.low.u32 %v7227
      %v7229 = vextract.high.u32 %v7227
      %v7230 = vmul.u32.u64.compose %v7226, %v7221
      %v7231 = vextract.low.u32 %v7230
      %v7232 = vextract.high.u32 %v7230
      %v7233 = vmul.u32 %v7226, %v7217
      %v7234 = vadd.s32 %v7229, %v7231
      %vm7235 = vc.u32 %v7229, %v7231
      %v7236 = vadd.s32 %v7232, 1
      %v7237 = vsel %vm7235, %v7236, %v7232
      %v7238 = vadd.s32 %v7233, %v7237
      %v7239 = vadd.s32 %v7238, 536870912
      %v7240 = vshrl.u32 %v7239, 30
      %v7241 = vshll.u32 %v7240, 30
      %v7242 = vsub.s32 %v7238, %v7241
      %vm7243 = vcmp.lt.s32.totalorder %v7242, 0
      %v7244 = vsub.s32 0, %v7242
      %v7245 = vsel %vm7243, %v7244, %v7242
      %v7246 = vclz %v7245
      %v7247 = vsub.s32 %v7246, 2
      %vm7248 = vcmp.gt.s32.totalorder 0, %v7247
      %v7249 = vsel %vm7248, 0, %v7247
      %v7250 = vsub.s32 32, %v7249
      %v7251 = vshll.u32 %v7242, %v7249
      %v7252 = vshrl.u32 %v7234, %v7250
      %v7253 = vor.u32 %v7251, %v7252
      %v7254 = vsub.s32 4294967266, %v7249
      %v7255 = vadd.s32 %v7254, 127
      %v7256 = vshll.u32 %v7255, 23
      %v7257 = vor.u32 4788187, %v7256
      %v7258 = vand.u32 2147483647, %v7257
      %v7260 = vcvt.s32.f32 %v7253
      %v7261 = vmul.f32 %v7260, %v7258
      %v7262 = vxor.u32 %v7261, 2147483648
      %v7263 = vsel %vm7180, %v7262, %v7261
      %v7264 = vsub.s32 4, %v7240
      %v7265 = vsel %vm7180, %v7264, %v7240
      %v7266 = vsel %vm7179, %v3887, %v7263
      %v7267 = vsel %vm7179, 0, %v7265
      %v7268 = vcosq.f32.pop %v7266
      %v7269 = vsinq.f32.pop %v7266
      %vm7270 = vweird.f32 %v3887
      %v7271 = vand.u32 %v7267, 3
      %vm7272 = vcmp.lt.s32.totalorder %v7271, 2
      %vm7273 = vcmp.eq.s32.totalorder %v7271, 0
      %v7274 = vxor.u32 %v7269, 2147483648
      %v7275 = vsel %vm7273, %v7268, %v7274
      %vm7276 = vcmp.eq.s32.totalorder %v7271, 2
      %v7277 = vxor.u32 %v7268, 2147483648
      %v7278 = vsel %vm7276, %v7277, %v7269
      %v7279 = vsel %vm7272, %v7275, %v7278
      %v7280 = vsel %vm7270, nan, %v7279
      %7297 = vrot.lane.b32.xlu0 %v5735, 14
      %v7298 = vpop.permute.xlu0 %7297
      %7299 = vrot.lane.b32.xlu0 %v5838, 14
      %v7300 = vpop.permute.xlu0 %7299
      %7301 = vrot.lane.b32.xlu0 %v5941, 14
      %v7302 = vpop.permute.xlu0 %7301
      %7303 = vrot.lane.b32.xlu0 %v6044, 14
      %v7304 = vpop.permute.xlu0 %7303
      %7305 = vrot.lane.b32.xlu0 %v6147, 14
      %v7306 = vpop.permute.xlu0 %7305
      %7307 = vrot.lane.b32.xlu0 %v6250, 14
      %v7308 = vpop.permute.xlu0 %7307
      %7309 = vrot.lane.b32.xlu0 %v6353, 14
      %v7310 = vpop.permute.xlu0 %7309
      %7311 = vrot.lane.b32.xlu0 %v6456, 14
      %v7312 = vpop.permute.xlu0 %7311
      %7313 = vrot.lane.b32.xlu0 %v6559, 14
      %v7314 = vpop.permute.xlu0 %7313
      %7315 = vrot.lane.b32.xlu0 %v6662, 14
      %v7316 = vpop.permute.xlu0 %7315
      %7317 = vrot.lane.b32.xlu0 %v6765, 14
      %v7318 = vpop.permute.xlu0 %7317
      %7319 = vrot.lane.b32.xlu0 %v6868, 14
      %v7320 = vpop.permute.xlu0 %7319
      %7321 = vrot.lane.b32.xlu0 %v6971, 14
      %v7322 = vpop.permute.xlu0 %7321
      %7323 = vrot.lane.b32.xlu0 %v7074, 14
      %v7324 = vpop.permute.xlu0 %7323
      %7325 = vrot.lane.b32.xlu0 %v7177, 14
      %v7326 = vpop.permute.xlu0 %7325
      %7327 = vrot.lane.b32.xlu0 %v7280, 14
      %v7328 = vpop.permute.xlu0 %7327
      %vm7345 = vcmask 146544
      %7346 = vst.msk [vmem:[%s145] sm:$0xff] %vm7345, %v7298
      %7347 = vst.msk [vmem:[%s145 + $0x8] sm:$0xff] %vm7345, %v7300
      %7348 = vst.msk [vmem:[%s145 + $0x10] sm:$0xff] %vm7345, %v7302
      %7349 = vst.msk [vmem:[%s145 + $0x18] sm:$0xff] %vm7345, %v7304
      %7350 = vst.msk [vmem:[%s145 + $0x20] sm:$0xff] %vm7345, %v7306
      %7351 = vst.msk [vmem:[%s145 + $0x28] sm:$0xff] %vm7345, %v7308
      %7352 = vst.msk [vmem:[%s145 + $0x30] sm:$0xff] %vm7345, %v7310
      %7353 = vst.msk [vmem:[%s145 + $0x38] sm:$0xff] %vm7345, %v7312
      %7354 = vst.msk [vmem:[%s145 + $0x40] sm:$0xff] %vm7345, %v7314
      %7355 = vst.msk [vmem:[%s145 + $0x48] sm:$0xff] %vm7345, %v7316
      %7356 = vst.msk [vmem:[%s145 + $0x50] sm:$0xff] %vm7345, %v7318
      %7357 = vst.msk [vmem:[%s145 + $0x58] sm:$0xff] %vm7345, %v7320
      %7358 = vst.msk [vmem:[%s145 + $0x60] sm:$0xff] %vm7345, %v7322
      %7359 = vst.msk [vmem:[%s145 + $0x68] sm:$0xff] %vm7345, %v7324
      %7360 = vst.msk [vmem:[%s145 + $0x70] sm:$0xff] %vm7345, %v7326
      %7361 = vst.msk [vmem:[%s145 + $0x78] sm:$0xff] %vm7345, %v7328
      %s7362 = smul.u32 16, %s13
      %p7363 = scmp.lt.s32.totalorder %s7362, 31
      %s7364 = scalar_select %p7363, %s7362, 31
      %s7365 = smul.addr %s7364, 8
      %s7366 = scalar_lea.vmem %s2, %s7365
      // Predicated region
      $region29: #{tpu_custom_call.1} parent=27 // pred_check
        %p7367 = pneg %p78
      $region30: #{tpu_custom_call.1} parent=27 // pred_check_branch
        %7369 = sbr.rel (%p7367) target = $region32
      $region31: #{tpu_custom_call.1} parent=27 // pred_region
        %s7370 = smul.u32 16, %s13
      $region32: #{tpu_custom_call.1} parent=27 // pred_fallthru
        _
    $region28: #{tpu_custom_call.1} parent=5 // pred_fallthru
      _
    %p7371 = scmp.le.s32.totalorder 2, %s8
    // Predicated region
    $region33: #{tpu_custom_call.1} parent=5 // pred_check
      %p7372 = pneg %p7371
    $region34: #{tpu_custom_call.1} parent=5 // pred_check_branch
      %7374 = sbr.rel (%p7372) target = $region36
    $region35: #{tpu_custom_call.1} parent=5 // pred_region
      %s7375 = ssub.s32 %s8, 2
      // Predicated region
      $region37: #{tpu_custom_call.1} parent=35 // pred_check
        %p7376 = pneg %p84
      $region38: #{tpu_custom_call.1} parent=35 // pred_check_branch
        %7378 = sbr.rel (%p7376) target = $region40
      $region39: #{tpu_custom_call.1} parent=35 // pred_region
        %s7379 = smul.u32 16, %s14
        %p7380 = scmp.lt.s32.totalorder %s7379, 31
        %s7381 = scalar_select %p7380, %s7379, 31
        %s7382 = smul.addr %s7381, 8
        %s7383 = scalar_lea.vmem %s2, %s7382
      $region40: #{tpu_custom_call.1} parent=35 // pred_fallthru
        _
    $region36: #{tpu_custom_call.1} parent=5 // pred_fallthru
      _
  $region6: #{tpu_custom_call.1} parent=0 // loop_footer
    %s12 = sadd.s32 1, %s8
  $region7: #{tpu_custom_call.1} parent=0 // loop_footer_branch
    %7 = sbr.rel target = $region3
  $region8: #{tpu_custom_call.1} parent=0 // loop_exit
    _

</llo_original>
